<compile_context>
chip_gen: v7x
topology: tpu7x:2x2x1
jax: 0.10.0
libtpu: 0.0.40
codegen_flags: <defaults>
</compile_context>

<pallas_src>
import functools
import numpy as np

import jax
import jax.numpy as jnp
from jax.experimental import pallas as pl
from jax.experimental.pallas import tpu as pltpu


# ----------------------------------------------------------------------------
# Static architecture description: BackBone(input_channel, layers=[1,1,1,1])
# ----------------------------------------------------------------------------
BRANCH_SPECS = ((3, 16), (5, 11), (7, 6))           # (conv kernel K, avg-pool k)
LAYER_CFG = ((32, 1), (32, 1), (48, 2), (64, 2))    # (planes, stride), inplanes=32
BRANCH_NAMES = ("b3", "b5", "b7")
SLAB_W = 64          # lane width of weight/bias slabs (max Cout)
ROW_ALIGN = 16       # bf16 sublane tile -> align every weight block to 16 rows


def _conv_out_len(L, K, stride, pad):
    return (L + 2 * pad - K) // stride + 1


def _build_plan():
    plan = []
    for K, pool_k in BRANCH_SPECS:
        inpl = 32
        blocks = []
        for planes, stride in LAYER_CFG:
            has_ds = (stride != 1) or (inpl != planes)
            blocks.append(dict(K=K, stride=stride, has_ds=has_ds,
                               cin=inpl, cout=planes))
            inpl = planes
        plan.append(dict(K=K, pool_k=pool_k, blocks=blocks))
    return plan


PLAN = _build_plan()


def _enumerate_convs(input_channel):
    """All convs in traversal order as (K, cin, cout)."""
    convs = [(7, input_channel, 32)]                          # stem
    for br in PLAN:
        for blk in br["blocks"]:
            convs.append((blk["K"], blk["cin"], blk["cout"]))    # conv1
            convs.append((blk["K"], blk["cout"], blk["cout"]))   # conv2
            if blk["has_ds"]:
                convs.append((1, blk["cin"], blk["cout"]))       # 1x1 downsample
    return convs


def _weight_layout(input_channel):
    """Static (row_offset, rows, cout) of every conv inside the packed slab."""
    layout, row = [], 0
    for K, cin, cout in _enumerate_convs(input_channel):
        rows = K * cin
        layout.append((row, rows, cout))
        row += -(-rows // ROW_ALIGN) * ROW_ALIGN
    return layout, row


# ----------------------------------------------------------------------------
# Host-side (one-time) parameter packing: fold BN, pack into two flat slabs
# ----------------------------------------------------------------------------
def pack_params(params, input_channel, eps=1e-5):
    """Returns (w_slab bf16 (R, 64), b_slab f32 (nconv_pad, 64)).

    Conv j occupies rows layout[j] of w_slab, already reshaped to
    (K*Cin, Cout) (tap-major, cin-minor) with the inference-BN scale folded in;
    row j of b_slab holds the folded BN bias.
    """
    layout, total_rows = _weight_layout(input_channel)

    entries = [(params["stem"]["w"], params["stem"]["bn"])]
    for bi, br in enumerate(PLAN):
        bp = params[BRANCH_NAMES[bi]]
        for li, blk in enumerate(br["blocks"]):
            p = bp[li]
            entries.append((p["w1"], p["bn1"]))
            entries.append((p["w2"], p["bn2"]))
            if blk["has_ds"]:
                entries.append((p["wd"], p["bnd"]))

    n = len(entries)
    w_slab = np.zeros((total_rows, SLAB_W), np.float32)
    b_slab = np.zeros((-(-n // 8) * 8, SLAB_W), np.float32)
    for j, ((w, bn), (off, rows, cout)) in enumerate(zip(entries, layout)):
        w = np.asarray(w, np.float32)                        # (Cout, Cin, K)
        gamma, beta, mean, var = (np.asarray(a, np.float32) for a in bn)
        scale = gamma / np.sqrt(var + eps)
        wf = w * scale[:, None, None]
        cout_w, cin, K = wf.shape
        w2 = np.transpose(wf, (2, 1, 0)).reshape(K * cin, cout_w)
        assert w2.shape == (rows, cout), (w2.shape, rows, cout)
        w_slab[off:off + rows, :cout] = w2
        b_slab[j, :cout] = beta - mean * scale
    return jnp.asarray(w_slab, jnp.bfloat16), jnp.asarray(b_slab, jnp.float32)


# ----------------------------------------------------------------------------
# In-kernel building blocks (2-D (L, C) activations, one batch element)
# ----------------------------------------------------------------------------
def _elu(y):
    return jnp.where(y > 0.0, y, jnp.exp(jnp.minimum(y, 0.0)) - 1.0)


def _stride2(y, ds_ref):
    """Keep even rows of y (L, C) -> (ceil(L/2), C) via a strided VMEM read."""
    L, C = y.shape
    L_out = (L + 1) // 2
    ds_ref[0:L, 0:C] = y
    return ds_ref[pl.ds(0, L_out, stride=2), 0:C]


def _conv_bn(x, w, b, *, K, stride, pad, ds_ref):
    """BN-folded 1-D conv as ONE im2col matmul (bf16 inputs, f32 accumulate).

    x: (L_in, Cin) f32;  w: (K*Cin, Cout) bf16;  b: (1, Cout) f32.
    """
    L_in, Cin = x.shape
    L_full = L_in + 2 * pad - K + 1
    xb = x.astype(jnp.bfloat16)
    if pad > 0:
        zp = jnp.zeros((pad, Cin), jnp.bfloat16)
        xb = jnp.concatenate([zp, xb, zp], axis=0)
    if K == 1:
        im = xb                                              # (L_full, Cin)
    else:
        # in-kernel im2col: K shifted slices concatenated along the lane axis
        im = jnp.concatenate([xb[t:t + L_full, :] for t in range(K)], axis=1)
    acc = jnp.dot(im, w, preferred_element_type=jnp.float32)  # one MXU matmul
    if stride == 2:
        acc = _stride2(acc, ds_ref)
    return acc + b


def _maxpool3_s2_p1(y, ds_ref):
    """MaxPool1d(kernel_size=3, stride=2, padding=1) on (L, C)."""
    L, C = y.shape
    neg = jnp.full((1, C), jnp.finfo(jnp.float32).min, jnp.float32)
    yp = jnp.concatenate([neg, y, neg], axis=0)              # (L+2, C)
    z = jnp.maximum(jnp.maximum(yp[0:L, :], yp[1:L + 1, :]), yp[2:L + 2, :])
    return _stride2(z, ds_ref)


def _avgpool(y, k):
    """AvgPool1d(kernel_size=k, stride=1, padding=0) on (L, C)."""
    L_out = y.shape[0] - k + 1
    s = y[0:L_out, :]
    for j in range(1, k):
        s = s + y[j:j + L_out, :]
    return s * (1.0 / k)


def _basic_block(x, w1, b1, w2, b2, wd, bd, *, K, stride, ds_ref):
    """conv-BN-ELU, conv-BN, (+ downsampled/truncated residual), ELU."""
    h = _elu(_conv_bn(x, w1, b1, K=K, stride=stride, pad=1, ds_ref=ds_ref))
    h = _conv_bn(h, w2, b2, K=K, stride=1, pad=1, ds_ref=ds_ref)
    if wd is not None:
        r = _conv_bn(x, wd, bd, K=1, stride=stride, pad=0, ds_ref=ds_ref)
    else:
        r = x
    L2 = h.shape[0]
    # torch: residual[:, :, 0:-d] (first L2 positions); identity when d == 0
    return _elu(h + r[:L2, :])


def _backbone_kernel(x_ref, w_ref, b_ref, o_ref, s0, s1, s2, *, layout):
    scr = (s0, s1, s2)
    cnt = [0]

    def take():
        j = cnt[0]
        cnt[0] += 1
        off, rows, cout = layout[j]
        return w_ref[off:off + rows, 0:cout], b_ref[j:j + 1, 0:cout]

    # ---- stem: host did the im2col -> one dot + BN bias + ELU + maxpool ----
    x = x_ref[0]                                             # (L_stem, 7*Cin) bf16
    ws, bs = take()
    h = jnp.dot(x, ws, preferred_element_type=jnp.float32) + bs
    h = _maxpool3_s2_p1(_elu(h), s0)                         # (80, 32) for L=320

    # ---- three branches (unrolled in one body), 4 BasicBlocks + avg-pool ----
    row_off = 0
    for bi, br in enumerate(PLAN):
        ds_ref = scr[bi]
        y = h
        for blk in br["blocks"]:
            w1, b1 = take()
            w2, b2 = take()
            wd, bd = take() if blk["has_ds"] else (None, None)
            y = _basic_block(y, w1, b1, w2, b2, wd, bd,
                             K=blk["K"], stride=blk["stride"], ds_ref=ds_ref)
        y = _avgpool(y, br["pool_k"])
        n = y.shape[0]
        o_ref[0, row_off:row_off + n, :] = y.astype(o_ref.dtype)
        row_off += n


# ----------------------------------------------------------------------------
# Wrapper: host stem im2col, single fused pallas_call, torch flatten order
# ----------------------------------------------------------------------------
def backbone_forward(x_ncl, w_slab, b_slab):
    """x_ncl: (B, C_in, L) as in PyTorch.  Returns (B, 64 * L_total)."""
    B, Cin, L = x_ncl.shape
    layout, _ = _weight_layout(Cin)

    # --- host-side im2col of the stem conv (K=7, stride=2, pad=3) -----------
    L_stem = _conv_out_len(L, 7, 2, 3)
    xp = jnp.pad(x_ncl.astype(jnp.float32), ((0, 0), (0, 0), (3, 3)))
    taps = [xp[:, :, t:t + 2 * L_stem:2] for t in range(7)]     # each (B,Cin,L_stem)
    x_im = jnp.stack(taps, axis=-1)                             # (B,Cin,L_stem,7)
    x_im = jnp.transpose(x_im, (0, 2, 3, 1)).reshape(B, L_stem, 7 * Cin)
    x_im = x_im.astype(jnp.bfloat16)

    # --- static output-length arithmetic (must match in-kernel shape math) --
    L0 = _conv_out_len(L_stem, 3, 2, 1)
    out_lens = []
    for br in PLAN:
        K, Ll = br["K"], L0
        for blk in br["blocks"]:
            L1 = _conv_out_len(Ll, K, blk["stride"], 1)
            Ll = _conv_out_len(L1, K, 1, 1)
        out_lens.append(Ll - br["pool_k"] + 1)
    L_total = sum(out_lens)
    cout_final = LAYER_CFG[-1][0]

    kernel = functools.partial(_backbone_kernel, layout=layout)

    out = pl.pallas_call(
        kernel,
        grid=(B,),
        in_specs=[
            pl.BlockSpec((1, L_stem, 7 * Cin), lambda b: (b, 0, 0)),
            pl.BlockSpec(w_slab.shape, lambda b: (0, 0)),      # weight slab (bf16)
            pl.BlockSpec(b_slab.shape, lambda b: (0, 0)),      # bias slab (f32)
        ],
        out_specs=pl.BlockSpec((1, L_total, cout_final), lambda b: (b, 0, 0)),
        out_shape=jax.ShapeDtypeStruct((B, L_total, cout_final), jnp.float32),
        # one strided-downsample scratch per branch (+ stem reuses branch 0's)
        scratch_shapes=[pltpu.VMEM((2 * L0, SLAB_W), jnp.float32)] * 3,
        compiler_params=pltpu.CompilerParams(
            dimension_semantics=("parallel",)),
    )(x_im, w_slab, b_slab)

    # torch: cat([x1, x2, x3], dim=-1) on (B, 64, L_i) then reshape([b, -1])
    out = jnp.transpose(out, (0, 2, 1))                        # (B, 64, L_total)
    return out.reshape(B, -1)


# ----------------------------------------------------------------------------
# Deterministic synthetic parameters (raw conv weights + BN stats, torch layout)
# ----------------------------------------------------------------------------
def init_params(key, input_channel):
    keys = iter(jax.random.split(key, 256))

    def conv_w(cout, cin, k):
        std = 1.0 / np.sqrt(cin * k)
        return jax.random.normal(next(keys), (cout, cin, k), jnp.float32) * std

    def bn(c):
        gamma = 1.0 + 0.1 * jax.random.normal(next(keys), (c,), jnp.float32)
        beta = 0.1 * jax.random.normal(next(keys), (c,), jnp.float32)
        mean = 0.1 * jax.random.normal(next(keys), (c,), jnp.float32)
        var = 0.5 + jax.random.uniform(next(keys), (c,), jnp.float32)
        return (gamma, beta, mean, var)

    params = {"stem": {"w": conv_w(32, input_channel, 7), "bn": bn(32)}}
    for bi, br in enumerate(PLAN):
        blocks = []
        for blk in br["blocks"]:
            p = {"w1": conv_w(blk["cout"], blk["cin"], blk["K"]), "bn1": bn(blk["cout"]),
                 "w2": conv_w(blk["cout"], blk["cout"], blk["K"]), "bn2": bn(blk["cout"])}
            if blk["has_ds"]:
                p["wd"] = conv_w(blk["cout"], blk["cin"], 1)
                p["bnd"] = bn(blk["cout"])
            blocks.append(p)
        params[BRANCH_NAMES[bi]] = blocks
    return params


if __name__ == "__main__":
    # BackBone(input_size=320, input_channel=1, layers=[1, 1, 1, 1])
    B, C_IN, L = 2, 1, 320
    key = jax.random.PRNGKey(0)
    k_x, k_p = jax.random.split(key)
    x = jax.random.normal(k_x, (B, C_IN, L), jnp.float32)
    params = init_params(k_p, C_IN)

    # one-time host-side BN folding + slab packing (not part of the jitted fwd)
    w_slab, b_slab = pack_params(params, C_IN)

    fwd = jax.jit(backbone_forward)
    out = fwd(x, w_slab, b_slab)
    jax.block_until_ready(out)

    assert out.shape == (B, 64 * (5 + 4 + 2)), out.shape     # (2, 704)
    assert bool(jnp.all(jnp.isfinite(out)))
    print("KERNEL_OK")
</pallas_src>

<mosaic_0001>
module attributes {stable_mosaic.version = 11 : i64} {
  func.func @_backbone_kernel(%arg0: i32, %arg1: memref<1x160x7xbf16, #tpu.memory_space<vmem>>, %arg2: memref<5056x64xbf16, #tpu.memory_space<vmem>>, %arg3: memref<32x64xf32, #tpu.memory_space<vmem>>, %arg4: memref<1x11x64xf32, #tpu.memory_space<vmem>>, %arg5: memref<160x64xf32, #tpu.memory_space<vmem>>, %arg6: memref<160x64xf32, #tpu.memory_space<vmem>>, %arg7: memref<160x64xf32, #tpu.memory_space<vmem>>) attributes {dimension_semantics = [#tpu.dimension_semantics<parallel>], iteration_bounds = array<i64: 2>, scalar_prefetch = 0 : i64, scratch_operands = 3 : i64, tpu.core_type = #tpu.core_type<tc>, window_params = [{transform_indices = @transform_0, window_bounds = array<i64: 1, 160, 7>}, {pipeline_mode = #tpu.pipeline_mode<synchronous>, transform_indices = @transform_1, window_bounds = array<i64: 5056, 64>}, {pipeline_mode = #tpu.pipeline_mode<synchronous>, transform_indices = @transform_2, window_bounds = array<i64: 32, 64>}, {transform_indices = @transform_3, window_bounds = array<i64: 1, 11, 64>}]} {
    %c0 = arith.constant 0 : index
    %c0_0 = arith.constant 0 : index
    %c0_1 = arith.constant 0 : index
    %0 = vector.load %arg1[%c0, %c0_0, %c0_1] : memref<1x160x7xbf16, #tpu.memory_space<vmem>>, vector<1x160x7xbf16>
    %1 = vector.shape_cast %0 : vector<1x160x7xbf16> to vector<160x7xbf16>
    %c0_2 = arith.constant 0 : index
    %c0_3 = arith.constant 0 : index
    %2 = vector.load %arg2[%c0_2, %c0_3] : memref<5056x64xbf16, #tpu.memory_space<vmem>>, vector<7x32xbf16>
    %c0_4 = arith.constant 0 : index
    %c0_5 = arith.constant 0 : index
    %3 = vector.load %arg3[%c0_4, %c0_5] : memref<32x64xf32, #tpu.memory_space<vmem>>, vector<1x32xf32>
    %cst = arith.constant dense<0.000000e+00> : vector<160x32xf32>
    %4 = tpu.matmul %1, %2, %cst {dimension_numbers = #tpu.dot_dimension_numbers<[1], [0], [0], [1], [0, 0, 1, 1], [], []>} : vector<160x7xbf16>, vector<7x32xbf16>, vector<160x32xf32> -> vector<160x32xf32>
    %5 = vector.broadcast %3 : vector<1x32xf32> to vector<160x32xf32>
    %6 = arith.addf %4, %5 : vector<160x32xf32>
    %cst_6 = arith.constant 0.000000e+00 : f32
    %7 = vector.broadcast %cst_6 : f32 to vector<160x32xf32>
    %8 = arith.cmpf ogt, %6, %7 : vector<160x32xf32>
    %cst_7 = arith.constant 0.000000e+00 : f32
    %9 = vector.broadcast %cst_7 : f32 to vector<160x32xf32>
    %10 = arith.minimumf %6, %9 : vector<160x32xf32>
    %11 = math.exp %10 : vector<160x32xf32>
    %cst_8 = arith.constant 1.000000e+00 : f32
    %12 = vector.broadcast %cst_8 : f32 to vector<160x32xf32>
    %13 = arith.subf %11, %12 : vector<160x32xf32>
    %14 = arith.select %8, %6, %13 : vector<160x32xi1>, vector<160x32xf32>
    %cst_9 = arith.constant -3.40282347E+38 : f32
    %15 = vector.broadcast %cst_9 : f32 to vector<1x32xf32>
    %16 = tpu.concatenate %15, %14, %15 in 0 : vector<1x32xf32>, vector<160x32xf32>, vector<1x32xf32> -> vector<162x32xf32>
    %17 = vector.extract_strided_slice %16 {offsets = [0, 0], sizes = [160, 32], strides = [1, 1]} : vector<162x32xf32> to vector<160x32xf32>
    %18 = vector.extract_strided_slice %16 {offsets = [1, 0], sizes = [160, 32], strides = [1, 1]} : vector<162x32xf32> to vector<160x32xf32>
    %19 = arith.maximumf %17, %18 : vector<160x32xf32>
    %20 = vector.extract_strided_slice %16 {offsets = [2, 0], sizes = [160, 32], strides = [1, 1]} : vector<162x32xf32> to vector<160x32xf32>
    %21 = arith.maximumf %19, %20 : vector<160x32xf32>
    %c0_10 = arith.constant 0 : index
    %c0_11 = arith.constant 0 : index
    %22 = vector.load %arg5[%c0_10, %c0_11] : memref<160x64xf32, #tpu.memory_space<vmem>>, vector<160x32xf32>
    tpu.vector_store %arg5[%c0_10, %c0_11], %21 {strides = array<i32>} : memref<160x64xf32, #tpu.memory_space<vmem>>, vector<160x32xf32>,
    %c0_12 = arith.constant 0 : index
    %c0_13 = arith.constant 0 : index
    %23 = tpu.strided_load %arg5[%c0_12, %c0_13] {strides = array<i32: 2, 1>} : memref<160x64xf32, #tpu.memory_space<vmem>>, vector<80x32xf32>
    %c16 = arith.constant 16 : index
    %c0_14 = arith.constant 0 : index
    %24 = vector.load %arg2[%c16, %c0_14] : memref<5056x64xbf16, #tpu.memory_space<vmem>>, vector<96x32xbf16>
    %c1 = arith.constant 1 : index
    %c0_15 = arith.constant 0 : index
    %25 = vector.load %arg3[%c1, %c0_15] : memref<32x64xf32, #tpu.memory_space<vmem>>, vector<1x32xf32>
    %c112 = arith.constant 112 : index
    %c0_16 = arith.constant 0 : index
    %26 = vector.load %arg2[%c112, %c0_16] : memref<5056x64xbf16, #tpu.memory_space<vmem>>, vector<96x32xbf16>
    %c2 = arith.constant 2 : index
    %c0_17 = arith.constant 0 : index
    %27 = vector.load %arg3[%c2, %c0_17] : memref<32x64xf32, #tpu.memory_space<vmem>>, vector<1x32xf32>
    %28 = arith.truncf %23 : vector<80x32xf32> to vector<80x32xbf16>
    %cst_18 = arith.constant 0.000000e+00 : bf16
    %29 = vector.broadcast %cst_18 : bf16 to vector<1x32xbf16>
    %30 = tpu.concatenate %29, %28, %29 in 0 : vector<1x32xbf16>, vector<80x32xbf16>, vector<1x32xbf16> -> vector<82x32xbf16>
    %31 = vector.extract_strided_slice %30 {offsets = [0, 0], sizes = [80, 32], strides = [1, 1]} : vector<82x32xbf16> to vector<80x32xbf16>
    %32 = vector.extract_strided_slice %30 {offsets = [1, 0], sizes = [80, 32], strides = [1, 1]} : vector<82x32xbf16> to vector<80x32xbf16>
    %33 = vector.extract_strided_slice %30 {offsets = [2, 0], sizes = [80, 32], strides = [1, 1]} : vector<82x32xbf16> to vector<80x32xbf16>
    %34 = tpu.concatenate %31, %32, %33 in 1 : vector<80x32xbf16>, vector<80x32xbf16>, vector<80x32xbf16> -> vector<80x96xbf16>
    %cst_19 = arith.constant dense<0.000000e+00> : vector<80x32xf32>
    %35 = tpu.matmul %34, %24, %cst_19 {dimension_numbers = #tpu.dot_dimension_numbers<[1], [0], [0], [1], [0, 0, 1, 1], [], []>} : vector<80x96xbf16>, vector<96x32xbf16>, vector<80x32xf32> -> vector<80x32xf32>
    %36 = vector.broadcast %25 : vector<1x32xf32> to vector<80x32xf32>
    %37 = arith.addf %35, %36 : vector<80x32xf32>
    %cst_20 = arith.constant 0.000000e+00 : f32
    %38 = vector.broadcast %cst_20 : f32 to vector<80x32xf32>
    %39 = arith.cmpf ogt, %37, %38 : vector<80x32xf32>
    %cst_21 = arith.constant 0.000000e+00 : f32
    %40 = vector.broadcast %cst_21 : f32 to vector<80x32xf32>
    %41 = arith.minimumf %37, %40 : vector<80x32xf32>
    %42 = math.exp %41 : vector<80x32xf32>
    %cst_22 = arith.constant 1.000000e+00 : f32
    %43 = vector.broadcast %cst_22 : f32 to vector<80x32xf32>
    %44 = arith.subf %42, %43 : vector<80x32xf32>
    %45 = arith.select %39, %37, %44 : vector<80x32xi1>, vector<80x32xf32>
    %46 = arith.truncf %45 : vector<80x32xf32> to vector<80x32xbf16>
    %cst_23 = arith.constant 0.000000e+00 : bf16
    %47 = vector.broadcast %cst_23 : bf16 to vector<1x32xbf16>
    %48 = tpu.concatenate %47, %46, %47 in 0 : vector<1x32xbf16>, vector<80x32xbf16>, vector<1x32xbf16> -> vector<82x32xbf16>
    %49 = vector.extract_strided_slice %48 {offsets = [0, 0], sizes = [80, 32], strides = [1, 1]} : vector<82x32xbf16> to vector<80x32xbf16>
    %50 = vector.extract_strided_slice %48 {offsets = [1, 0], sizes = [80, 32], strides = [1, 1]} : vector<82x32xbf16> to vector<80x32xbf16>
    %51 = vector.extract_strided_slice %48 {offsets = [2, 0], sizes = [80, 32], strides = [1, 1]} : vector<82x32xbf16> to vector<80x32xbf16>
    %52 = tpu.concatenate %49, %50, %51 in 1 : vector<80x32xbf16>, vector<80x32xbf16>, vector<80x32xbf16> -> vector<80x96xbf16>
    %cst_24 = arith.constant dense<0.000000e+00> : vector<80x32xf32>
    %53 = tpu.matmul %52, %26, %cst_24 {dimension_numbers = #tpu.dot_dimension_numbers<[1], [0], [0], [1], [0, 0, 1, 1], [], []>} : vector<80x96xbf16>, vector<96x32xbf16>, vector<80x32xf32> -> vector<80x32xf32>
    %54 = vector.broadcast %27 : vector<1x32xf32> to vector<80x32xf32>
    %55 = arith.addf %53, %54 : vector<80x32xf32>
    %56 = arith.addf %55, %23 : vector<80x32xf32>
    %cst_25 = arith.constant 0.000000e+00 : f32
    %57 = vector.broadcast %cst_25 : f32 to vector<80x32xf32>
    %58 = arith.cmpf ogt, %56, %57 : vector<80x32xf32>
    %cst_26 = arith.constant 0.000000e+00 : f32
    %59 = vector.broadcast %cst_26 : f32 to vector<80x32xf32>
    %60 = arith.minimumf %56, %59 : vector<80x32xf32>
    %61 = math.exp %60 : vector<80x32xf32>
    %cst_27 = arith.constant 1.000000e+00 : f32
    %62 = vector.broadcast %cst_27 : f32 to vector<80x32xf32>
    %63 = arith.subf %61, %62 : vector<80x32xf32>
    %64 = arith.select %58, %56, %63 : vector<80x32xi1>, vector<80x32xf32>
    %c208 = arith.constant 208 : index
    %c0_28 = arith.constant 0 : index
    %65 = vector.load %arg2[%c208, %c0_28] : memref<5056x64xbf16, #tpu.memory_space<vmem>>, vector<96x32xbf16>
    %c3 = arith.constant 3 : index
    %c0_29 = arith.constant 0 : index
    %66 = vector.load %arg3[%c3, %c0_29] : memref<32x64xf32, #tpu.memory_space<vmem>>, vector<1x32xf32>
    %c304 = arith.constant 304 : index
    %c0_30 = arith.constant 0 : index
    %67 = vector.load %arg2[%c304, %c0_30] : memref<5056x64xbf16, #tpu.memory_space<vmem>>, vector<96x32xbf16>
    %c4 = arith.constant 4 : index
    %c0_31 = arith.constant 0 : index
    %68 = vector.load %arg3[%c4, %c0_31] : memref<32x64xf32, #tpu.memory_space<vmem>>, vector<1x32xf32>
    %69 = arith.truncf %64 : vector<80x32xf32> to vector<80x32xbf16>
    %cst_32 = arith.constant 0.000000e+00 : bf16
    %70 = vector.broadcast %cst_32 : bf16 to vector<1x32xbf16>
    %71 = tpu.concatenate %70, %69, %70 in 0 : vector<1x32xbf16>, vector<80x32xbf16>, vector<1x32xbf16> -> vector<82x32xbf16>
    %72 = vector.extract_strided_slice %71 {offsets = [0, 0], sizes = [80, 32], strides = [1, 1]} : vector<82x32xbf16> to vector<80x32xbf16>
    %73 = vector.extract_strided_slice %71 {offsets = [1, 0], sizes = [80, 32], strides = [1, 1]} : vector<82x32xbf16> to vector<80x32xbf16>
    %74 = vector.extract_strided_slice %71 {offsets = [2, 0], sizes = [80, 32], strides = [1, 1]} : vector<82x32xbf16> to vector<80x32xbf16>
    %75 = tpu.concatenate %72, %73, %74 in 1 : vector<80x32xbf16>, vector<80x32xbf16>, vector<80x32xbf16> -> vector<80x96xbf16>
    %cst_33 = arith.constant dense<0.000000e+00> : vector<80x32xf32>
    %76 = tpu.matmul %75, %65, %cst_33 {dimension_numbers = #tpu.dot_dimension_numbers<[1], [0], [0], [1], [0, 0, 1, 1], [], []>} : vector<80x96xbf16>, vector<96x32xbf16>, vector<80x32xf32> -> vector<80x32xf32>
    %77 = vector.broadcast %66 : vector<1x32xf32> to vector<80x32xf32>
    %78 = arith.addf %76, %77 : vector<80x32xf32>
    %cst_34 = arith.constant 0.000000e+00 : f32
    %79 = vector.broadcast %cst_34 : f32 to vector<80x32xf32>
    %80 = arith.cmpf ogt, %78, %79 : vector<80x32xf32>
    %cst_35 = arith.constant 0.000000e+00 : f32
    %81 = vector.broadcast %cst_35 : f32 to vector<80x32xf32>
    %82 = arith.minimumf %78, %81 : vector<80x32xf32>
    %83 = math.exp %82 : vector<80x32xf32>
    %cst_36 = arith.constant 1.000000e+00 : f32
    %84 = vector.broadcast %cst_36 : f32 to vector<80x32xf32>
    %85 = arith.subf %83, %84 : vector<80x32xf32>
    %86 = arith.select %80, %78, %85 : vector<80x32xi1>, vector<80x32xf32>
    %87 = arith.truncf %86 : vector<80x32xf32> to vector<80x32xbf16>
    %cst_37 = arith.constant 0.000000e+00 : bf16
    %88 = vector.broadcast %cst_37 : bf16 to vector<1x32xbf16>
    %89 = tpu.concatenate %88, %87, %88 in 0 : vector<1x32xbf16>, vector<80x32xbf16>, vector<1x32xbf16> -> vector<82x32xbf16>
    %90 = vector.extract_strided_slice %89 {offsets = [0, 0], sizes = [80, 32], strides = [1, 1]} : vector<82x32xbf16> to vector<80x32xbf16>
    %91 = vector.extract_strided_slice %89 {offsets = [1, 0], sizes = [80, 32], strides = [1, 1]} : vector<82x32xbf16> to vector<80x32xbf16>
    %92 = vector.extract_strided_slice %89 {offsets = [2, 0], sizes = [80, 32], strides = [1, 1]} : vector<82x32xbf16> to vector<80x32xbf16>
    %93 = tpu.concatenate %90, %91, %92 in 1 : vector<80x32xbf16>, vector<80x32xbf16>, vector<80x32xbf16> -> vector<80x96xbf16>
    %cst_38 = arith.constant dense<0.000000e+00> : vector<80x32xf32>
    %94 = tpu.matmul %93, %67, %cst_38 {dimension_numbers = #tpu.dot_dimension_numbers<[1], [0], [0], [1], [0, 0, 1, 1], [], []>} : vector<80x96xbf16>, vector<96x32xbf16>, vector<80x32xf32> -> vector<80x32xf32>
    %95 = vector.broadcast %68 : vector<1x32xf32> to vector<80x32xf32>
    %96 = arith.addf %94, %95 : vector<80x32xf32>
    %97 = arith.addf %96, %64 : vector<80x32xf32>
    %cst_39 = arith.constant 0.000000e+00 : f32
    %98 = vector.broadcast %cst_39 : f32 to vector<80x32xf32>
    %99 = arith.cmpf ogt, %97, %98 : vector<80x32xf32>
    %cst_40 = arith.constant 0.000000e+00 : f32
    %100 = vector.broadcast %cst_40 : f32 to vector<80x32xf32>
    %101 = arith.minimumf %97, %100 : vector<80x32xf32>
    %102 = math.exp %101 : vector<80x32xf32>
    %cst_41 = arith.constant 1.000000e+00 : f32
    %103 = vector.broadcast %cst_41 : f32 to vector<80x32xf32>
    %104 = arith.subf %102, %103 : vector<80x32xf32>
    %105 = arith.select %99, %97, %104 : vector<80x32xi1>, vector<80x32xf32>
    %c400 = arith.constant 400 : index
    %c0_42 = arith.constant 0 : index
    %106 = vector.load %arg2[%c400, %c0_42] : memref<5056x64xbf16, #tpu.memory_space<vmem>>, vector<96x48xbf16>
    %c5 = arith.constant 5 : index
    %c0_43 = arith.constant 0 : index
    %107 = vector.load %arg3[%c5, %c0_43] : memref<32x64xf32, #tpu.memory_space<vmem>>, vector<1x48xf32>
    %c496 = arith.constant 496 : index
    %c0_44 = arith.constant 0 : index
    %108 = vector.load %arg2[%c496, %c0_44] : memref<5056x64xbf16, #tpu.memory_space<vmem>>, vector<144x48xbf16>
    %c6 = arith.constant 6 : index
    %c0_45 = arith.constant 0 : index
    %109 = vector.load %arg3[%c6, %c0_45] : memref<32x64xf32, #tpu.memory_space<vmem>>, vector<1x48xf32>
    %c640 = arith.constant 640 : index
    %c0_46 = arith.constant 0 : index
    %110 = vector.load %arg2[%c640, %c0_46] : memref<5056x64xbf16, #tpu.memory_space<vmem>>, vector<32x48xbf16>
    %c7 = arith.constant 7 : index
    %c0_47 = arith.constant 0 : index
    %111 = vector.load %arg3[%c7, %c0_47] : memref<32x64xf32, #tpu.memory_space<vmem>>, vector<1x48xf32>
    %112 = arith.truncf %105 : vector<80x32xf32> to vector<80x32xbf16>
    %cst_48 = arith.constant 0.000000e+00 : bf16
    %113 = vector.broadcast %cst_48 : bf16 to vector<1x32xbf16>
    %114 = tpu.concatenate %113, %112, %113 in 0 : vector<1x32xbf16>, vector<80x32xbf16>, vector<1x32xbf16> -> vector<82x32xbf16>
    %115 = vector.extract_strided_slice %114 {offsets = [0, 0], sizes = [80, 32], strides = [1, 1]} : vector<82x32xbf16> to vector<80x32xbf16>
    %116 = vector.extract_strided_slice %114 {offsets = [1, 0], sizes = [80, 32], strides = [1, 1]} : vector<82x32xbf16> to vector<80x32xbf16>
    %117 = vector.extract_strided_slice %114 {offsets = [2, 0], sizes = [80, 32], strides = [1, 1]} : vector<82x32xbf16> to vector<80x32xbf16>
    %118 = tpu.concatenate %115, %116, %117 in 1 : vector<80x32xbf16>, vector<80x32xbf16>, vector<80x32xbf16> -> vector<80x96xbf16>
    %cst_49 = arith.constant dense<0.000000e+00> : vector<80x48xf32>
    %119 = tpu.matmul %118, %106, %cst_49 {dimension_numbers = #tpu.dot_dimension_numbers<[1], [0], [0], [1], [0, 0, 1, 1], [], []>} : vector<80x96xbf16>, vector<96x48xbf16>, vector<80x48xf32> -> vector<80x48xf32>
    %c0_50 = arith.constant 0 : index
    %c0_51 = arith.constant 0 : index
    %120 = vector.load %arg5[%c0_50, %c0_51] : memref<160x64xf32, #tpu.memory_space<vmem>>, vector<80x48xf32>
    tpu.vector_store %arg5[%c0_50, %c0_51], %119 {strides = array<i32>} : memref<160x64xf32, #tpu.memory_space<vmem>>, vector<80x48xf32>,
    %c0_52 = arith.constant 0 : index
    %c0_53 = arith.constant 0 : index
    %121 = tpu.strided_load %arg5[%c0_52, %c0_53] {strides = array<i32: 2, 1>} : memref<160x64xf32, #tpu.memory_space<vmem>>, vector<40x48xf32>
    %122 = vector.broadcast %107 : vector<1x48xf32> to vector<40x48xf32>
    %123 = arith.addf %121, %122 : vector<40x48xf32>
    %cst_54 = arith.constant 0.000000e+00 : f32
    %124 = vector.broadcast %cst_54 : f32 to vector<40x48xf32>
    %125 = arith.cmpf ogt, %123, %124 : vector<40x48xf32>
    %cst_55 = arith.constant 0.000000e+00 : f32
    %126 = vector.broadcast %cst_55 : f32 to vector<40x48xf32>
    %127 = arith.minimumf %123, %126 : vector<40x48xf32>
    %128 = math.exp %127 : vector<40x48xf32>
    %cst_56 = arith.constant 1.000000e+00 : f32
    %129 = vector.broadcast %cst_56 : f32 to vector<40x48xf32>
    %130 = arith.subf %128, %129 : vector<40x48xf32>
    %131 = arith.select %125, %123, %130 : vector<40x48xi1>, vector<40x48xf32>
    %132 = arith.truncf %131 : vector<40x48xf32> to vector<40x48xbf16>
    %cst_57 = arith.constant 0.000000e+00 : bf16
    %133 = vector.broadcast %cst_57 : bf16 to vector<1x48xbf16>
    %134 = tpu.concatenate %133, %132, %133 in 0 : vector<1x48xbf16>, vector<40x48xbf16>, vector<1x48xbf16> -> vector<42x48xbf16>
    %135 = vector.extract_strided_slice %134 {offsets = [0, 0], sizes = [40, 48], strides = [1, 1]} : vector<42x48xbf16> to vector<40x48xbf16>
    %136 = vector.extract_strided_slice %134 {offsets = [1, 0], sizes = [40, 48], strides = [1, 1]} : vector<42x48xbf16> to vector<40x48xbf16>
    %137 = vector.extract_strided_slice %134 {offsets = [2, 0], sizes = [40, 48], strides = [1, 1]} : vector<42x48xbf16> to vector<40x48xbf16>
    %138 = tpu.concatenate %135, %136, %137 in 1 : vector<40x48xbf16>, vector<40x48xbf16>, vector<40x48xbf16> -> vector<40x144xbf16>
    %cst_58 = arith.constant dense<0.000000e+00> : vector<40x48xf32>
    %139 = tpu.matmul %138, %108, %cst_58 {dimension_numbers = #tpu.dot_dimension_numbers<[1], [0], [0], [1], [0, 0, 1, 1], [], []>} : vector<40x144xbf16>, vector<144x48xbf16>, vector<40x48xf32> -> vector<40x48xf32>
    %140 = vector.broadcast %109 : vector<1x48xf32> to vector<40x48xf32>
    %141 = arith.addf %139, %140 : vector<40x48xf32>
    %142 = arith.truncf %105 : vector<80x32xf32> to vector<80x32xbf16>
    %cst_59 = arith.constant dense<0.000000e+00> : vector<80x48xf32>
    %143 = tpu.matmul %142, %110, %cst_59 {dimension_numbers = #tpu.dot_dimension_numbers<[1], [0], [0], [1], [0, 0, 1, 1], [], []>} : vector<80x32xbf16>, vector<32x48xbf16>, vector<80x48xf32> -> vector<80x48xf32>
    %c0_60 = arith.constant 0 : index
    %c0_61 = arith.constant 0 : index
    %144 = vector.load %arg5[%c0_60, %c0_61] : memref<160x64xf32, #tpu.memory_space<vmem>>, vector<80x48xf32>
    tpu.vector_store %arg5[%c0_60, %c0_61], %143 {strides = array<i32>} : memref<160x64xf32, #tpu.memory_space<vmem>>, vector<80x48xf32>,
    %c0_62 = arith.constant 0 : index
    %c0_63 = arith.constant 0 : index
    %145 = tpu.strided_load %arg5[%c0_62, %c0_63] {strides = array<i32: 2, 1>} : memref<160x64xf32, #tpu.memory_space<vmem>>, vector<40x48xf32>
    %146 = vector.broadcast %111 : vector<1x48xf32> to vector<40x48xf32>
    %147 = arith.addf %145, %146 : vector<40x48xf32>
    %148 = arith.addf %141, %147 : vector<40x48xf32>
    %cst_64 = arith.constant 0.000000e+00 : f32
    %149 = vector.broadcast %cst_64 : f32 to vector<40x48xf32>
    %150 = arith.cmpf ogt, %148, %149 : vector<40x48xf32>
    %cst_65 = arith.constant 0.000000e+00 : f32
    %151 = vector.broadcast %cst_65 : f32 to vector<40x48xf32>
    %152 = arith.minimumf %148, %151 : vector<40x48xf32>
    %153 = math.exp %152 : vector<40x48xf32>
    %cst_66 = arith.constant 1.000000e+00 : f32
    %154 = vector.broadcast %cst_66 : f32 to vector<40x48xf32>
    %155 = arith.subf %153, %154 : vector<40x48xf32>
    %156 = arith.select %150, %148, %155 : vector<40x48xi1>, vector<40x48xf32>
    %c672 = arith.constant 672 : index
    %c0_67 = arith.constant 0 : index
    %157 = vector.load %arg2[%c672, %c0_67] : memref<5056x64xbf16, #tpu.memory_space<vmem>>, vector<144x64xbf16>
    %c8 = arith.constant 8 : index
    %c0_68 = arith.constant 0 : index
    %158 = vector.load %arg3[%c8, %c0_68] : memref<32x64xf32, #tpu.memory_space<vmem>>, vector<1x64xf32>
    %c816 = arith.constant 816 : index
    %c0_69 = arith.constant 0 : index
    %159 = vector.load %arg2[%c816, %c0_69] : memref<5056x64xbf16, #tpu.memory_space<vmem>>, vector<192x64xbf16>
    %c9 = arith.constant 9 : index
    %c0_70 = arith.constant 0 : index
    %160 = vector.load %arg3[%c9, %c0_70] : memref<32x64xf32, #tpu.memory_space<vmem>>, vector<1x64xf32>
    %c1008 = arith.constant 1008 : index
    %c0_71 = arith.constant 0 : index
    %161 = vector.load %arg2[%c1008, %c0_71] : memref<5056x64xbf16, #tpu.memory_space<vmem>>, vector<48x64xbf16>
    %c10 = arith.constant 10 : index
    %c0_72 = arith.constant 0 : index
    %162 = vector.load %arg3[%c10, %c0_72] : memref<32x64xf32, #tpu.memory_space<vmem>>, vector<1x64xf32>
    %163 = arith.truncf %156 : vector<40x48xf32> to vector<40x48xbf16>
    %cst_73 = arith.constant 0.000000e+00 : bf16
    %164 = vector.broadcast %cst_73 : bf16 to vector<1x48xbf16>
    %165 = tpu.concatenate %164, %163, %164 in 0 : vector<1x48xbf16>, vector<40x48xbf16>, vector<1x48xbf16> -> vector<42x48xbf16>
    %166 = vector.extract_strided_slice %165 {offsets = [0, 0], sizes = [40, 48], strides = [1, 1]} : vector<42x48xbf16> to vector<40x48xbf16>
    %167 = vector.extract_strided_slice %165 {offsets = [1, 0], sizes = [40, 48], strides = [1, 1]} : vector<42x48xbf16> to vector<40x48xbf16>
    %168 = vector.extract_strided_slice %165 {offsets = [2, 0], sizes = [40, 48], strides = [1, 1]} : vector<42x48xbf16> to vector<40x48xbf16>
    %169 = tpu.concatenate %166, %167, %168 in 1 : vector<40x48xbf16>, vector<40x48xbf16>, vector<40x48xbf16> -> vector<40x144xbf16>
    %cst_74 = arith.constant dense<0.000000e+00> : vector<40x64xf32>
    %170 = tpu.matmul %169, %157, %cst_74 {dimension_numbers = #tpu.dot_dimension_numbers<[1], [0], [0], [1], [0, 0, 1, 1], [], []>} : vector<40x144xbf16>, vector<144x64xbf16>, vector<40x64xf32> -> vector<40x64xf32>
    %c0_75 = arith.constant 0 : index
    %c0_76 = arith.constant 0 : index
    %171 = vector.load %arg5[%c0_75, %c0_76] : memref<160x64xf32, #tpu.memory_space<vmem>>, vector<40x64xf32>
    tpu.vector_store %arg5[%c0_75, %c0_76], %170 {strides = array<i32>} : memref<160x64xf32, #tpu.memory_space<vmem>>, vector<40x64xf32>,
    %c0_77 = arith.constant 0 : index
    %c0_78 = arith.constant 0 : index
    %172 = tpu.strided_load %arg5[%c0_77, %c0_78] {strides = array<i32: 2, 1>} : memref<160x64xf32, #tpu.memory_space<vmem>>, vector<20x64xf32>
    %173 = vector.broadcast %158 : vector<1x64xf32> to vector<20x64xf32>
    %174 = arith.addf %172, %173 : vector<20x64xf32>
    %cst_79 = arith.constant 0.000000e+00 : f32
    %175 = vector.broadcast %cst_79 : f32 to vector<20x64xf32>
    %176 = arith.cmpf ogt, %174, %175 : vector<20x64xf32>
    %cst_80 = arith.constant 0.000000e+00 : f32
    %177 = vector.broadcast %cst_80 : f32 to vector<20x64xf32>
    %178 = arith.minimumf %174, %177 : vector<20x64xf32>
    %179 = math.exp %178 : vector<20x64xf32>
    %cst_81 = arith.constant 1.000000e+00 : f32
    %180 = vector.broadcast %cst_81 : f32 to vector<20x64xf32>
    %181 = arith.subf %179, %180 : vector<20x64xf32>
    %182 = arith.select %176, %174, %181 : vector<20x64xi1>, vector<20x64xf32>
    %183 = arith.truncf %182 : vector<20x64xf32> to vector<20x64xbf16>
    %cst_82 = arith.constant 0.000000e+00 : bf16
    %184 = vector.broadcast %cst_82 : bf16 to vector<1x64xbf16>
    %185 = tpu.concatenate %184, %183, %184 in 0 : vector<1x64xbf16>, vector<20x64xbf16>, vector<1x64xbf16> -> vector<22x64xbf16>
    %186 = vector.extract_strided_slice %185 {offsets = [0, 0], sizes = [20, 64], strides = [1, 1]} : vector<22x64xbf16> to vector<20x64xbf16>
    %187 = vector.extract_strided_slice %185 {offsets = [1, 0], sizes = [20, 64], strides = [1, 1]} : vector<22x64xbf16> to vector<20x64xbf16>
    %188 = vector.extract_strided_slice %185 {offsets = [2, 0], sizes = [20, 64], strides = [1, 1]} : vector<22x64xbf16> to vector<20x64xbf16>
    %189 = tpu.concatenate %186, %187, %188 in 1 : vector<20x64xbf16>, vector<20x64xbf16>, vector<20x64xbf16> -> vector<20x192xbf16>
    %cst_83 = arith.constant dense<0.000000e+00> : vector<20x64xf32>
    %190 = tpu.matmul %189, %159, %cst_83 {dimension_numbers = #tpu.dot_dimension_numbers<[1], [0], [0], [1], [0, 0, 1, 1], [], []>} : vector<20x192xbf16>, vector<192x64xbf16>, vector<20x64xf32> -> vector<20x64xf32>
    %191 = vector.broadcast %160 : vector<1x64xf32> to vector<20x64xf32>
    %192 = arith.addf %190, %191 : vector<20x64xf32>
    %193 = arith.truncf %156 : vector<40x48xf32> to vector<40x48xbf16>
    %cst_84 = arith.constant dense<0.000000e+00> : vector<40x64xf32>
    %194 = tpu.matmul %193, %161, %cst_84 {dimension_numbers = #tpu.dot_dimension_numbers<[1], [0], [0], [1], [0, 0, 1, 1], [], []>} : vector<40x48xbf16>, vector<48x64xbf16>, vector<40x64xf32> -> vector<40x64xf32>
    %c0_85 = arith.constant 0 : index
    %c0_86 = arith.constant 0 : index
    %195 = vector.load %arg5[%c0_85, %c0_86] : memref<160x64xf32, #tpu.memory_space<vmem>>, vector<40x64xf32>
    tpu.vector_store %arg5[%c0_85, %c0_86], %194 {strides = array<i32>} : memref<160x64xf32, #tpu.memory_space<vmem>>, vector<40x64xf32>,
    %c0_87 = arith.constant 0 : index
    %c0_88 = arith.constant 0 : index
    %196 = tpu.strided_load %arg5[%c0_87, %c0_88] {strides = array<i32: 2, 1>} : memref<160x64xf32, #tpu.memory_space<vmem>>, vector<20x64xf32>
    %197 = vector.broadcast %162 : vector<1x64xf32> to vector<20x64xf32>
    %198 = arith.addf %196, %197 : vector<20x64xf32>
    %199 = arith.addf %192, %198 : vector<20x64xf32>
    %cst_89 = arith.constant 0.000000e+00 : f32
    %200 = vector.broadcast %cst_89 : f32 to vector<20x64xf32>
    %201 = arith.cmpf ogt, %199, %200 : vector<20x64xf32>
    %cst_90 = arith.constant 0.000000e+00 : f32
    %202 = vector.broadcast %cst_90 : f32 to vector<20x64xf32>
    %203 = arith.minimumf %199, %202 : vector<20x64xf32>
    %204 = math.exp %203 : vector<20x64xf32>
    %cst_91 = arith.constant 1.000000e+00 : f32
    %205 = vector.broadcast %cst_91 : f32 to vector<20x64xf32>
    %206 = arith.subf %204, %205 : vector<20x64xf32>
    %207 = arith.select %201, %199, %206 : vector<20x64xi1>, vector<20x64xf32>
    %208 = vector.extract_strided_slice %207 {offsets = [0, 0], sizes = [5, 64], strides = [1, 1]} : vector<20x64xf32> to vector<5x64xf32>
    %209 = vector.extract_strided_slice %207 {offsets = [1, 0], sizes = [5, 64], strides = [1, 1]} : vector<20x64xf32> to vector<5x64xf32>
    %210 = arith.addf %208, %209 : vector<5x64xf32>
    %211 = vector.extract_strided_slice %207 {offsets = [2, 0], sizes = [5, 64], strides = [1, 1]} : vector<20x64xf32> to vector<5x64xf32>
    %212 = arith.addf %210, %211 : vector<5x64xf32>
    %213 = vector.extract_strided_slice %207 {offsets = [3, 0], sizes = [5, 64], strides = [1, 1]} : vector<20x64xf32> to vector<5x64xf32>
    %214 = arith.addf %212, %213 : vector<5x64xf32>
    %215 = vector.extract_strided_slice %207 {offsets = [4, 0], sizes = [5, 64], strides = [1, 1]} : vector<20x64xf32> to vector<5x64xf32>
    %216 = arith.addf %214, %215 : vector<5x64xf32>
    %217 = vector.extract_strided_slice %207 {offsets = [5, 0], sizes = [5, 64], strides = [1, 1]} : vector<20x64xf32> to vector<5x64xf32>
    %218 = arith.addf %216, %217 : vector<5x64xf32>
    %219 = vector.extract_strided_slice %207 {offsets = [6, 0], sizes = [5, 64], strides = [1, 1]} : vector<20x64xf32> to vector<5x64xf32>
    %220 = arith.addf %218, %219 : vector<5x64xf32>
    %221 = vector.extract_strided_slice %207 {offsets = [7, 0], sizes = [5, 64], strides = [1, 1]} : vector<20x64xf32> to vector<5x64xf32>
    %222 = arith.addf %220, %221 : vector<5x64xf32>
    %223 = vector.extract_strided_slice %207 {offsets = [8, 0], sizes = [5, 64], strides = [1, 1]} : vector<20x64xf32> to vector<5x64xf32>
    %224 = arith.addf %222, %223 : vector<5x64xf32>
    %225 = vector.extract_strided_slice %207 {offsets = [9, 0], sizes = [5, 64], strides = [1, 1]} : vector<20x64xf32> to vector<5x64xf32>
    %226 = arith.addf %224, %225 : vector<5x64xf32>
    %227 = vector.extract_strided_slice %207 {offsets = [10, 0], sizes = [5, 64], strides = [1, 1]} : vector<20x64xf32> to vector<5x64xf32>
    %228 = arith.addf %226, %227 : vector<5x64xf32>
    %229 = vector.extract_strided_slice %207 {offsets = [11, 0], sizes = [5, 64], strides = [1, 1]} : vector<20x64xf32> to vector<5x64xf32>
    %230 = arith.addf %228, %229 : vector<5x64xf32>
    %231 = vector.extract_strided_slice %207 {offsets = [12, 0], sizes = [5, 64], strides = [1, 1]} : vector<20x64xf32> to vector<5x64xf32>
    %232 = arith.addf %230, %231 : vector<5x64xf32>
    %233 = vector.extract_strided_slice %207 {offsets = [13, 0], sizes = [5, 64], strides = [1, 1]} : vector<20x64xf32> to vector<5x64xf32>
    %234 = arith.addf %232, %233 : vector<5x64xf32>
    %235 = vector.extract_strided_slice %207 {offsets = [14, 0], sizes = [5, 64], strides = [1, 1]} : vector<20x64xf32> to vector<5x64xf32>
    %236 = arith.addf %234, %235 : vector<5x64xf32>
    %237 = vector.extract_strided_slice %207 {offsets = [15, 0], sizes = [5, 64], strides = [1, 1]} : vector<20x64xf32> to vector<5x64xf32>
    %238 = arith.addf %236, %237 : vector<5x64xf32>
    %cst_92 = arith.constant 6.250000e-02 : f32
    %239 = vector.broadcast %cst_92 : f32 to vector<5x64xf32>
    %240 = arith.mulf %238, %239 : vector<5x64xf32>
    %c0_93 = arith.constant 0 : index
    %c0_94 = arith.constant 0 : index
    %c0_95 = arith.constant 0 : index
    %241 = vector.load %arg4[%c0_93, %c0_94, %c0_95] : memref<1x11x64xf32, #tpu.memory_space<vmem>>, vector<1x5x64xf32>
    %242 = vector.shape_cast %241 : vector<1x5x64xf32> to vector<5x64xf32>
    %243 = vector.shape_cast %240 : vector<5x64xf32> to vector<1x5x64xf32>
    tpu.vector_store %arg4[%c0_93, %c0_94, %c0_95], %243 {strides = array<i32>} : memref<1x11x64xf32, #tpu.memory_space<vmem>>, vector<1x5x64xf32>,
    %c1056 = arith.constant 1056 : index
    %c0_96 = arith.constant 0 : index
    %244 = vector.load %arg2[%c1056, %c0_96] : memref<5056x64xbf16, #tpu.memory_space<vmem>>, vector<160x32xbf16>
    %c11 = arith.constant 11 : index
    %c0_97 = arith.constant 0 : index
    %245 = vector.load %arg3[%c11, %c0_97] : memref<32x64xf32, #tpu.memory_space<vmem>>, vector<1x32xf32>
    %c1216 = arith.constant 1216 : index
    %c0_98 = arith.constant 0 : index
    %246 = vector.load %arg2[%c1216, %c0_98] : memref<5056x64xbf16, #tpu.memory_space<vmem>>, vector<160x32xbf16>
    %c12 = arith.constant 12 : index
    %c0_99 = arith.constant 0 : index
    %247 = vector.load %arg3[%c12, %c0_99] : memref<32x64xf32, #tpu.memory_space<vmem>>, vector<1x32xf32>
    %248 = arith.truncf %23 : vector<80x32xf32> to vector<80x32xbf16>
    %cst_100 = arith.constant 0.000000e+00 : bf16
    %249 = vector.broadcast %cst_100 : bf16 to vector<1x32xbf16>
    %250 = tpu.concatenate %249, %248, %249 in 0 : vector<1x32xbf16>, vector<80x32xbf16>, vector<1x32xbf16> -> vector<82x32xbf16>
    %251 = vector.extract_strided_slice %250 {offsets = [0, 0], sizes = [78, 32], strides = [1, 1]} : vector<82x32xbf16> to vector<78x32xbf16>
    %252 = vector.extract_strided_slice %250 {offsets = [1, 0], sizes = [78, 32], strides = [1, 1]} : vector<82x32xbf16> to vector<78x32xbf16>
    %253 = vector.extract_strided_slice %250 {offsets = [2, 0], sizes = [78, 32], strides = [1, 1]} : vector<82x32xbf16> to vector<78x32xbf16>
    %254 = vector.extract_strided_slice %250 {offsets = [3, 0], sizes = [78, 32], strides = [1, 1]} : vector<82x32xbf16> to vector<78x32xbf16>
    %255 = vector.extract_strided_slice %250 {offsets = [4, 0], sizes = [78, 32], strides = [1, 1]} : vector<82x32xbf16> to vector<78x32xbf16>
    %256 = tpu.concatenate %251, %252, %253, %254, %255 in 1 : vector<78x32xbf16>, vector<78x32xbf16>, vector<78x32xbf16>, vector<78x32xbf16>, vector<78x32xbf16> -> vector<78x160xbf16>
    %cst_101 = arith.constant dense<0.000000e+00> : vector<78x32xf32>
    %257 = tpu.matmul %256, %244, %cst_101 {dimension_numbers = #tpu.dot_dimension_numbers<[1], [0], [0], [1], [0, 0, 1, 1], [], []>} : vector<78x160xbf16>, vector<160x32xbf16>, vector<78x32xf32> -> vector<78x32xf32>
    %258 = vector.broadcast %245 : vector<1x32xf32> to vector<78x32xf32>
    %259 = arith.addf %257, %258 : vector<78x32xf32>
    %cst_102 = arith.constant 0.000000e+00 : f32
    %260 = vector.broadcast %cst_102 : f32 to vector<78x32xf32>
    %261 = arith.cmpf ogt, %259, %260 : vector<78x32xf32>
    %cst_103 = arith.constant 0.000000e+00 : f32
    %262 = vector.broadcast %cst_103 : f32 to vector<78x32xf32>
    %263 = arith.minimumf %259, %262 : vector<78x32xf32>
    %264 = math.exp %263 : vector<78x32xf32>
    %cst_104 = arith.constant 1.000000e+00 : f32
    %265 = vector.broadcast %cst_104 : f32 to vector<78x32xf32>
    %266 = arith.subf %264, %265 : vector<78x32xf32>
    %267 = arith.select %261, %259, %266 : vector<78x32xi1>, vector<78x32xf32>
    %268 = arith.truncf %267 : vector<78x32xf32> to vector<78x32xbf16>
    %cst_105 = arith.constant 0.000000e+00 : bf16
    %269 = vector.broadcast %cst_105 : bf16 to vector<1x32xbf16>
    %270 = tpu.concatenate %269, %268, %269 in 0 : vector<1x32xbf16>, vector<78x32xbf16>, vector<1x32xbf16> -> vector<80x32xbf16>
    %271 = vector.extract_strided_slice %270 {offsets = [0, 0], sizes = [76, 32], strides = [1, 1]} : vector<80x32xbf16> to vector<76x32xbf16>
    %272 = vector.extract_strided_slice %270 {offsets = [1, 0], sizes = [76, 32], strides = [1, 1]} : vector<80x32xbf16> to vector<76x32xbf16>
    %273 = vector.extract_strided_slice %270 {offsets = [2, 0], sizes = [76, 32], strides = [1, 1]} : vector<80x32xbf16> to vector<76x32xbf16>
    %274 = vector.extract_strided_slice %270 {offsets = [3, 0], sizes = [76, 32], strides = [1, 1]} : vector<80x32xbf16> to vector<76x32xbf16>
    %275 = vector.extract_strided_slice %270 {offsets = [4, 0], sizes = [76, 32], strides = [1, 1]} : vector<80x32xbf16> to vector<76x32xbf16>
    %276 = tpu.concatenate %271, %272, %273, %274, %275 in 1 : vector<76x32xbf16>, vector<76x32xbf16>, vector<76x32xbf16>, vector<76x32xbf16>, vector<76x32xbf16> -> vector<76x160xbf16>
    %cst_106 = arith.constant dense<0.000000e+00> : vector<76x32xf32>
    %277 = tpu.matmul %276, %246, %cst_106 {dimension_numbers = #tpu.dot_dimension_numbers<[1], [0], [0], [1], [0, 0, 1, 1], [], []>} : vector<76x160xbf16>, vector<160x32xbf16>, vector<76x32xf32> -> vector<76x32xf32>
    %278 = vector.broadcast %247 : vector<1x32xf32> to vector<76x32xf32>
    %279 = arith.addf %277, %278 : vector<76x32xf32>
    %280 = vector.extract_strided_slice %23 {offsets = [0, 0], sizes = [76, 32], strides = [1, 1]} : vector<80x32xf32> to vector<76x32xf32>
    %281 = arith.addf %279, %280 : vector<76x32xf32>
    %cst_107 = arith.constant 0.000000e+00 : f32
    %282 = vector.broadcast %cst_107 : f32 to vector<76x32xf32>
    %283 = arith.cmpf ogt, %281, %282 : vector<76x32xf32>
    %cst_108 = arith.constant 0.000000e+00 : f32
    %284 = vector.broadcast %cst_108 : f32 to vector<76x32xf32>
    %285 = arith.minimumf %281, %284 : vector<76x32xf32>
    %286 = math.exp %285 : vector<76x32xf32>
    %cst_109 = arith.constant 1.000000e+00 : f32
    %287 = vector.broadcast %cst_109 : f32 to vector<76x32xf32>
    %288 = arith.subf %286, %287 : vector<76x32xf32>
    %289 = arith.select %283, %281, %288 : vector<76x32xi1>, vector<76x32xf32>
    %c1376 = arith.constant 1376 : index
    %c0_110 = arith.constant 0 : index
    %290 = vector.load %arg2[%c1376, %c0_110] : memref<5056x64xbf16, #tpu.memory_space<vmem>>, vector<160x32xbf16>
    %c13 = arith.constant 13 : index
    %c0_111 = arith.constant 0 : index
    %291 = vector.load %arg3[%c13, %c0_111] : memref<32x64xf32, #tpu.memory_space<vmem>>, vector<1x32xf32>
    %c1536 = arith.constant 1536 : index
    %c0_112 = arith.constant 0 : index
    %292 = vector.load %arg2[%c1536, %c0_112] : memref<5056x64xbf16, #tpu.memory_space<vmem>>, vector<160x32xbf16>
    %c14 = arith.constant 14 : index
    %c0_113 = arith.constant 0 : index
    %293 = vector.load %arg3[%c14, %c0_113] : memref<32x64xf32, #tpu.memory_space<vmem>>, vector<1x32xf32>
    %294 = arith.truncf %289 : vector<76x32xf32> to vector<76x32xbf16>
    %cst_114 = arith.constant 0.000000e+00 : bf16
    %295 = vector.broadcast %cst_114 : bf16 to vector<1x32xbf16>
    %296 = tpu.concatenate %295, %294, %295 in 0 : vector<1x32xbf16>, vector<76x32xbf16>, vector<1x32xbf16> -> vector<78x32xbf16>
    %297 = vector.extract_strided_slice %296 {offsets = [0, 0], sizes = [74, 32], strides = [1, 1]} : vector<78x32xbf16> to vector<74x32xbf16>
    %298 = vector.extract_strided_slice %296 {offsets = [1, 0], sizes = [74, 32], strides = [1, 1]} : vector<78x32xbf16> to vector<74x32xbf16>
    %299 = vector.extract_strided_slice %296 {offsets = [2, 0], sizes = [74, 32], strides = [1, 1]} : vector<78x32xbf16> to vector<74x32xbf16>
    %300 = vector.extract_strided_slice %296 {offsets = [3, 0], sizes = [74, 32], strides = [1, 1]} : vector<78x32xbf16> to vector<74x32xbf16>
    %301 = vector.extract_strided_slice %296 {offsets = [4, 0], sizes = [74, 32], strides = [1, 1]} : vector<78x32xbf16> to vector<74x32xbf16>
    %302 = tpu.concatenate %297, %298, %299, %300, %301 in 1 : vector<74x32xbf16>, vector<74x32xbf16>, vector<74x32xbf16>, vector<74x32xbf16>, vector<74x32xbf16> -> vector<74x160xbf16>
    %cst_115 = arith.constant dense<0.000000e+00> : vector<74x32xf32>
    %303 = tpu.matmul %302, %290, %cst_115 {dimension_numbers = #tpu.dot_dimension_numbers<[1], [0], [0], [1], [0, 0, 1, 1], [], []>} : vector<74x160xbf16>, vector<160x32xbf16>, vector<74x32xf32> -> vector<74x32xf32>
    %304 = vector.broadcast %291 : vector<1x32xf32> to vector<74x32xf32>
    %305 = arith.addf %303, %304 : vector<74x32xf32>
    %cst_116 = arith.constant 0.000000e+00 : f32
    %306 = vector.broadcast %cst_116 : f32 to vector<74x32xf32>
    %307 = arith.cmpf ogt, %305, %306 : vector<74x32xf32>
    %cst_117 = arith.constant 0.000000e+00 : f32
    %308 = vector.broadcast %cst_117 : f32 to vector<74x32xf32>
    %309 = arith.minimumf %305, %308 : vector<74x32xf32>
    %310 = math.exp %309 : vector<74x32xf32>
    %cst_118 = arith.constant 1.000000e+00 : f32
    %311 = vector.broadcast %cst_118 : f32 to vector<74x32xf32>
    %312 = arith.subf %310, %311 : vector<74x32xf32>
    %313 = arith.select %307, %305, %312 : vector<74x32xi1>, vector<74x32xf32>
    %314 = arith.truncf %313 : vector<74x32xf32> to vector<74x32xbf16>
    %cst_119 = arith.constant 0.000000e+00 : bf16
    %315 = vector.broadcast %cst_119 : bf16 to vector<1x32xbf16>
    %316 = tpu.concatenate %315, %314, %315 in 0 : vector<1x32xbf16>, vector<74x32xbf16>, vector<1x32xbf16> -> vector<76x32xbf16>
    %317 = vector.extract_strided_slice %316 {offsets = [0, 0], sizes = [72, 32], strides = [1, 1]} : vector<76x32xbf16> to vector<72x32xbf16>
    %318 = vector.extract_strided_slice %316 {offsets = [1, 0], sizes = [72, 32], strides = [1, 1]} : vector<76x32xbf16> to vector<72x32xbf16>
    %319 = vector.extract_strided_slice %316 {offsets = [2, 0], sizes = [72, 32], strides = [1, 1]} : vector<76x32xbf16> to vector<72x32xbf16>
    %320 = vector.extract_strided_slice %316 {offsets = [3, 0], sizes = [72, 32], strides = [1, 1]} : vector<76x32xbf16> to vector<72x32xbf16>
    %321 = vector.extract_strided_slice %316 {offsets = [4, 0], sizes = [72, 32], strides = [1, 1]} : vector<76x32xbf16> to vector<72x32xbf16>
    %322 = tpu.concatenate %317, %318, %319, %320, %321 in 1 : vector<72x32xbf16>, vector<72x32xbf16>, vector<72x32xbf16>, vector<72x32xbf16>, vector<72x32xbf16> -> vector<72x160xbf16>
    %cst_120 = arith.constant dense<0.000000e+00> : vector<72x32xf32>
    %323 = tpu.matmul %322, %292, %cst_120 {dimension_numbers = #tpu.dot_dimension_numbers<[1], [0], [0], [1], [0, 0, 1, 1], [], []>} : vector<72x160xbf16>, vector<160x32xbf16>, vector<72x32xf32> -> vector<72x32xf32>
    %324 = vector.broadcast %293 : vector<1x32xf32> to vector<72x32xf32>
    %325 = arith.addf %323, %324 : vector<72x32xf32>
    %326 = vector.extract_strided_slice %289 {offsets = [0, 0], sizes = [72, 32], strides = [1, 1]} : vector<76x32xf32> to vector<72x32xf32>
    %327 = arith.addf %325, %326 : vector<72x32xf32>
    %cst_121 = arith.constant 0.000000e+00 : f32
    %328 = vector.broadcast %cst_121 : f32 to vector<72x32xf32>
    %329 = arith.cmpf ogt, %327, %328 : vector<72x32xf32>
    %cst_122 = arith.constant 0.000000e+00 : f32
    %330 = vector.broadcast %cst_122 : f32 to vector<72x32xf32>
    %331 = arith.minimumf %327, %330 : vector<72x32xf32>
    %332 = math.exp %331 : vector<72x32xf32>
    %cst_123 = arith.constant 1.000000e+00 : f32
    %333 = vector.broadcast %cst_123 : f32 to vector<72x32xf32>
    %334 = arith.subf %332, %333 : vector<72x32xf32>
    %335 = arith.select %329, %327, %334 : vector<72x32xi1>, vector<72x32xf32>
    %c1696 = arith.constant 1696 : index
    %c0_124 = arith.constant 0 : index
    %336 = vector.load %arg2[%c1696, %c0_124] : memref<5056x64xbf16, #tpu.memory_space<vmem>>, vector<160x48xbf16>
    %c15 = arith.constant 15 : index
    %c0_125 = arith.constant 0 : index
    %337 = vector.load %arg3[%c15, %c0_125] : memref<32x64xf32, #tpu.memory_space<vmem>>, vector<1x48xf32>
    %c1856 = arith.constant 1856 : index
    %c0_126 = arith.constant 0 : index
    %338 = vector.load %arg2[%c1856, %c0_126] : memref<5056x64xbf16, #tpu.memory_space<vmem>>, vector<240x48xbf16>
    %c16_127 = arith.constant 16 : index
    %c0_128 = arith.constant 0 : index
    %339 = vector.load %arg3[%c16_127, %c0_128] : memref<32x64xf32, #tpu.memory_space<vmem>>, vector<1x48xf32>
    %c2096 = arith.constant 2096 : index
    %c0_129 = arith.constant 0 : index
    %340 = vector.load %arg2[%c2096, %c0_129] : memref<5056x64xbf16, #tpu.memory_space<vmem>>, vector<32x48xbf16>
    %c17 = arith.constant 17 : index
    %c0_130 = arith.constant 0 : index
    %341 = vector.load %arg3[%c17, %c0_130] : memref<32x64xf32, #tpu.memory_space<vmem>>, vector<1x48xf32>
    %342 = arith.truncf %335 : vector<72x32xf32> to vector<72x32xbf16>
    %cst_131 = arith.constant 0.000000e+00 : bf16
    %343 = vector.broadcast %cst_131 : bf16 to vector<1x32xbf16>
    %344 = tpu.concatenate %343, %342, %343 in 0 : vector<1x32xbf16>, vector<72x32xbf16>, vector<1x32xbf16> -> vector<74x32xbf16>
    %345 = vector.extract_strided_slice %344 {offsets = [0, 0], sizes = [70, 32], strides = [1, 1]} : vector<74x32xbf16> to vector<70x32xbf16>
    %346 = vector.extract_strided_slice %344 {offsets = [1, 0], sizes = [70, 32], strides = [1, 1]} : vector<74x32xbf16> to vector<70x32xbf16>
    %347 = vector.extract_strided_slice %344 {offsets = [2, 0], sizes = [70, 32], strides = [1, 1]} : vector<74x32xbf16> to vector<70x32xbf16>
    %348 = vector.extract_strided_slice %344 {offsets = [3, 0], sizes = [70, 32], strides = [1, 1]} : vector<74x32xbf16> to vector<70x32xbf16>
    %349 = vector.extract_strided_slice %344 {offsets = [4, 0], sizes = [70, 32], strides = [1, 1]} : vector<74x32xbf16> to vector<70x32xbf16>
    %350 = tpu.concatenate %345, %346, %347, %348, %349 in 1 : vector<70x32xbf16>, vector<70x32xbf16>, vector<70x32xbf16>, vector<70x32xbf16>, vector<70x32xbf16> -> vector<70x160xbf16>
    %cst_132 = arith.constant dense<0.000000e+00> : vector<70x48xf32>
    %351 = tpu.matmul %350, %336, %cst_132 {dimension_numbers = #tpu.dot_dimension_numbers<[1], [0], [0], [1], [0, 0, 1, 1], [], []>} : vector<70x160xbf16>, vector<160x48xbf16>, vector<70x48xf32> -> vector<70x48xf32>
    %c0_133 = arith.constant 0 : index
    %c0_134 = arith.constant 0 : index
    %352 = vector.load %arg6[%c0_133, %c0_134] : memref<160x64xf32, #tpu.memory_space<vmem>>, vector<70x48xf32>
    tpu.vector_store %arg6[%c0_133, %c0_134], %351 {strides = array<i32>} : memref<160x64xf32, #tpu.memory_space<vmem>>, vector<70x48xf32>,
    %c0_135 = arith.constant 0 : index
    %c0_136 = arith.constant 0 : index
    %353 = tpu.strided_load %arg6[%c0_135, %c0_136] {strides = array<i32: 2, 1>} : memref<160x64xf32, #tpu.memory_space<vmem>>, vector<35x48xf32>
    %354 = vector.broadcast %337 : vector<1x48xf32> to vector<35x48xf32>
    %355 = arith.addf %353, %354 : vector<35x48xf32>
    %cst_137 = arith.constant 0.000000e+00 : f32
    %356 = vector.broadcast %cst_137 : f32 to vector<35x48xf32>
    %357 = arith.cmpf ogt, %355, %356 : vector<35x48xf32>
    %cst_138 = arith.constant 0.000000e+00 : f32
    %358 = vector.broadcast %cst_138 : f32 to vector<35x48xf32>
    %359 = arith.minimumf %355, %358 : vector<35x48xf32>
    %360 = math.exp %359 : vector<35x48xf32>
    %cst_139 = arith.constant 1.000000e+00 : f32
    %361 = vector.broadcast %cst_139 : f32 to vector<35x48xf32>
    %362 = arith.subf %360, %361 : vector<35x48xf32>
    %363 = arith.select %357, %355, %362 : vector<35x48xi1>, vector<35x48xf32>
    %364 = arith.truncf %363 : vector<35x48xf32> to vector<35x48xbf16>
    %cst_140 = arith.constant 0.000000e+00 : bf16
    %365 = vector.broadcast %cst_140 : bf16 to vector<1x48xbf16>
    %366 = tpu.concatenate %365, %364, %365 in 0 : vector<1x48xbf16>, vector<35x48xbf16>, vector<1x48xbf16> -> vector<37x48xbf16>
    %367 = vector.extract_strided_slice %366 {offsets = [0, 0], sizes = [33, 48], strides = [1, 1]} : vector<37x48xbf16> to vector<33x48xbf16>
    %368 = vector.extract_strided_slice %366 {offsets = [1, 0], sizes = [33, 48], strides = [1, 1]} : vector<37x48xbf16> to vector<33x48xbf16>
    %369 = vector.extract_strided_slice %366 {offsets = [2, 0], sizes = [33, 48], strides = [1, 1]} : vector<37x48xbf16> to vector<33x48xbf16>
    %370 = vector.extract_strided_slice %366 {offsets = [3, 0], sizes = [33, 48], strides = [1, 1]} : vector<37x48xbf16> to vector<33x48xbf16>
    %371 = vector.extract_strided_slice %366 {offsets = [4, 0], sizes = [33, 48], strides = [1, 1]} : vector<37x48xbf16> to vector<33x48xbf16>
    %372 = tpu.concatenate %367, %368, %369, %370, %371 in 1 : vector<33x48xbf16>, vector<33x48xbf16>, vector<33x48xbf16>, vector<33x48xbf16>, vector<33x48xbf16> -> vector<33x240xbf16>
    %cst_141 = arith.constant dense<0.000000e+00> : vector<33x48xf32>
    %373 = tpu.matmul %372, %338, %cst_141 {dimension_numbers = #tpu.dot_dimension_numbers<[1], [0], [0], [1], [0, 0, 1, 1], [], []>} : vector<33x240xbf16>, vector<240x48xbf16>, vector<33x48xf32> -> vector<33x48xf32>
    %374 = vector.broadcast %339 : vector<1x48xf32> to vector<33x48xf32>
    %375 = arith.addf %373, %374 : vector<33x48xf32>
    %376 = arith.truncf %335 : vector<72x32xf32> to vector<72x32xbf16>
    %cst_142 = arith.constant dense<0.000000e+00> : vector<72x48xf32>
    %377 = tpu.matmul %376, %340, %cst_142 {dimension_numbers = #tpu.dot_dimension_numbers<[1], [0], [0], [1], [0, 0, 1, 1], [], []>} : vector<72x32xbf16>, vector<32x48xbf16>, vector<72x48xf32> -> vector<72x48xf32>
    %c0_143 = arith.constant 0 : index
    %c0_144 = arith.constant 0 : index
    %378 = vector.load %arg6[%c0_143, %c0_144] : memref<160x64xf32, #tpu.memory_space<vmem>>, vector<72x48xf32>
    tpu.vector_store %arg6[%c0_143, %c0_144], %377 {strides = array<i32>} : memref<160x64xf32, #tpu.memory_space<vmem>>, vector<72x48xf32>,
    %c0_145 = arith.constant 0 : index
    %c0_146 = arith.constant 0 : index
    %379 = tpu.strided_load %arg6[%c0_145, %c0_146] {strides = array<i32: 2, 1>} : memref<160x64xf32, #tpu.memory_space<vmem>>, vector<36x48xf32>
    %380 = vector.broadcast %341 : vector<1x48xf32> to vector<36x48xf32>
    %381 = arith.addf %379, %380 : vector<36x48xf32>
    %382 = vector.extract_strided_slice %381 {offsets = [0, 0], sizes = [33, 48], strides = [1, 1]} : vector<36x48xf32> to vector<33x48xf32>
    %383 = arith.addf %375, %382 : vector<33x48xf32>
    %cst_147 = arith.constant 0.000000e+00 : f32
    %384 = vector.broadcast %cst_147 : f32 to vector<33x48xf32>
    %385 = arith.cmpf ogt, %383, %384 : vector<33x48xf32>
    %cst_148 = arith.constant 0.000000e+00 : f32
    %386 = vector.broadcast %cst_148 : f32 to vector<33x48xf32>
    %387 = arith.minimumf %383, %386 : vector<33x48xf32>
    %388 = math.exp %387 : vector<33x48xf32>
    %cst_149 = arith.constant 1.000000e+00 : f32
    %389 = vector.broadcast %cst_149 : f32 to vector<33x48xf32>
    %390 = arith.subf %388, %389 : vector<33x48xf32>
    %391 = arith.select %385, %383, %390 : vector<33x48xi1>, vector<33x48xf32>
    %c2128 = arith.constant 2128 : index
    %c0_150 = arith.constant 0 : index
    %392 = vector.load %arg2[%c2128, %c0_150] : memref<5056x64xbf16, #tpu.memory_space<vmem>>, vector<240x64xbf16>
    %c18 = arith.constant 18 : index
    %c0_151 = arith.constant 0 : index
    %393 = vector.load %arg3[%c18, %c0_151] : memref<32x64xf32, #tpu.memory_space<vmem>>, vector<1x64xf32>
    %c2368 = arith.constant 2368 : index
    %c0_152 = arith.constant 0 : index
    %394 = vector.load %arg2[%c2368, %c0_152] : memref<5056x64xbf16, #tpu.memory_space<vmem>>, vector<320x64xbf16>
    %c19 = arith.constant 19 : index
    %c0_153 = arith.constant 0 : index
    %395 = vector.load %arg3[%c19, %c0_153] : memref<32x64xf32, #tpu.memory_space<vmem>>, vector<1x64xf32>
    %c2688 = arith.constant 2688 : index
    %c0_154 = arith.constant 0 : index
    %396 = vector.load %arg2[%c2688, %c0_154] : memref<5056x64xbf16, #tpu.memory_space<vmem>>, vector<48x64xbf16>
    %c20 = arith.constant 20 : index
    %c0_155 = arith.constant 0 : index
    %397 = vector.load %arg3[%c20, %c0_155] : memref<32x64xf32, #tpu.memory_space<vmem>>, vector<1x64xf32>
    %398 = arith.truncf %391 : vector<33x48xf32> to vector<33x48xbf16>
    %cst_156 = arith.constant 0.000000e+00 : bf16
    %399 = vector.broadcast %cst_156 : bf16 to vector<1x48xbf16>
    %400 = tpu.concatenate %399, %398, %399 in 0 : vector<1x48xbf16>, vector<33x48xbf16>, vector<1x48xbf16> -> vector<35x48xbf16>
    %401 = vector.extract_strided_slice %400 {offsets = [0, 0], sizes = [31, 48], strides = [1, 1]} : vector<35x48xbf16> to vector<31x48xbf16>
    %402 = vector.extract_strided_slice %400 {offsets = [1, 0], sizes = [31, 48], strides = [1, 1]} : vector<35x48xbf16> to vector<31x48xbf16>
    %403 = vector.extract_strided_slice %400 {offsets = [2, 0], sizes = [31, 48], strides = [1, 1]} : vector<35x48xbf16> to vector<31x48xbf16>
    %404 = vector.extract_strided_slice %400 {offsets = [3, 0], sizes = [31, 48], strides = [1, 1]} : vector<35x48xbf16> to vector<31x48xbf16>
    %405 = vector.extract_strided_slice %400 {offsets = [4, 0], sizes = [31, 48], strides = [1, 1]} : vector<35x48xbf16> to vector<31x48xbf16>
    %406 = tpu.concatenate %401, %402, %403, %404, %405 in 1 : vector<31x48xbf16>, vector<31x48xbf16>, vector<31x48xbf16>, vector<31x48xbf16>, vector<31x48xbf16> -> vector<31x240xbf16>
    %cst_157 = arith.constant dense<0.000000e+00> : vector<31x64xf32>
    %407 = tpu.matmul %406, %392, %cst_157 {dimension_numbers = #tpu.dot_dimension_numbers<[1], [0], [0], [1], [0, 0, 1, 1], [], []>} : vector<31x240xbf16>, vector<240x64xbf16>, vector<31x64xf32> -> vector<31x64xf32>
    %c0_158 = arith.constant 0 : index
    %c0_159 = arith.constant 0 : index
    %408 = vector.load %arg6[%c0_158, %c0_159] : memref<160x64xf32, #tpu.memory_space<vmem>>, vector<31x64xf32>
    tpu.vector_store %arg6[%c0_158, %c0_159], %407 {strides = array<i32>} : memref<160x64xf32, #tpu.memory_space<vmem>>, vector<31x64xf32>,
    %c0_160 = arith.constant 0 : index
    %c0_161 = arith.constant 0 : index
    %409 = tpu.strided_load %arg6[%c0_160, %c0_161] {strides = array<i32: 2, 1>} : memref<160x64xf32, #tpu.memory_space<vmem>>, vector<16x64xf32>
    %410 = vector.broadcast %393 : vector<1x64xf32> to vector<16x64xf32>
    %411 = arith.addf %409, %410 : vector<16x64xf32>
    %cst_162 = arith.constant 0.000000e+00 : f32
    %412 = vector.broadcast %cst_162 : f32 to vector<16x64xf32>
    %413 = arith.cmpf ogt, %411, %412 : vector<16x64xf32>
    %cst_163 = arith.constant 0.000000e+00 : f32
    %414 = vector.broadcast %cst_163 : f32 to vector<16x64xf32>
    %415 = arith.minimumf %411, %414 : vector<16x64xf32>
    %416 = math.exp %415 : vector<16x64xf32>
    %cst_164 = arith.constant 1.000000e+00 : f32
    %417 = vector.broadcast %cst_164 : f32 to vector<16x64xf32>
    %418 = arith.subf %416, %417 : vector<16x64xf32>
    %419 = arith.select %413, %411, %418 : vector<16x64xi1>, vector<16x64xf32>
    %420 = arith.truncf %419 : vector<16x64xf32> to vector<16x64xbf16>
    %cst_165 = arith.constant 0.000000e+00 : bf16
    %421 = vector.broadcast %cst_165 : bf16 to vector<1x64xbf16>
    %422 = tpu.concatenate %421, %420, %421 in 0 : vector<1x64xbf16>, vector<16x64xbf16>, vector<1x64xbf16> -> vector<18x64xbf16>
    %423 = vector.extract_strided_slice %422 {offsets = [0, 0], sizes = [14, 64], strides = [1, 1]} : vector<18x64xbf16> to vector<14x64xbf16>
    %424 = vector.extract_strided_slice %422 {offsets = [1, 0], sizes = [14, 64], strides = [1, 1]} : vector<18x64xbf16> to vector<14x64xbf16>
    %425 = vector.extract_strided_slice %422 {offsets = [2, 0], sizes = [14, 64], strides = [1, 1]} : vector<18x64xbf16> to vector<14x64xbf16>
    %426 = vector.extract_strided_slice %422 {offsets = [3, 0], sizes = [14, 64], strides = [1, 1]} : vector<18x64xbf16> to vector<14x64xbf16>
    %427 = vector.extract_strided_slice %422 {offsets = [4, 0], sizes = [14, 64], strides = [1, 1]} : vector<18x64xbf16> to vector<14x64xbf16>
    %428 = tpu.concatenate %423, %424, %425, %426, %427 in 1 : vector<14x64xbf16>, vector<14x64xbf16>, vector<14x64xbf16>, vector<14x64xbf16>, vector<14x64xbf16> -> vector<14x320xbf16>
    %cst_166 = arith.constant dense<0.000000e+00> : vector<14x64xf32>
    %429 = tpu.matmul %428, %394, %cst_166 {dimension_numbers = #tpu.dot_dimension_numbers<[1], [0], [0], [1], [0, 0, 1, 1], [], []>} : vector<14x320xbf16>, vector<320x64xbf16>, vector<14x64xf32> -> vector<14x64xf32>
    %430 = vector.broadcast %395 : vector<1x64xf32> to vector<14x64xf32>
    %431 = arith.addf %429, %430 : vector<14x64xf32>
    %432 = arith.truncf %391 : vector<33x48xf32> to vector<33x48xbf16>
    %cst_167 = arith.constant dense<0.000000e+00> : vector<33x64xf32>
    %433 = tpu.matmul %432, %396, %cst_167 {dimension_numbers = #tpu.dot_dimension_numbers<[1], [0], [0], [1], [0, 0, 1, 1], [], []>} : vector<33x48xbf16>, vector<48x64xbf16>, vector<33x64xf32> -> vector<33x64xf32>
    %c0_168 = arith.constant 0 : index
    %c0_169 = arith.constant 0 : index
    %434 = vector.load %arg6[%c0_168, %c0_169] : memref<160x64xf32, #tpu.memory_space<vmem>>, vector<33x64xf32>
    tpu.vector_store %arg6[%c0_168, %c0_169], %433 {strides = array<i32>} : memref<160x64xf32, #tpu.memory_space<vmem>>, vector<33x64xf32>,
    %c0_170 = arith.constant 0 : index
    %c0_171 = arith.constant 0 : index
    %435 = tpu.strided_load %arg6[%c0_170, %c0_171] {strides = array<i32: 2, 1>} : memref<160x64xf32, #tpu.memory_space<vmem>>, vector<17x64xf32>
    %436 = vector.broadcast %397 : vector<1x64xf32> to vector<17x64xf32>
    %437 = arith.addf %435, %436 : vector<17x64xf32>
    %438 = vector.extract_strided_slice %437 {offsets = [0, 0], sizes = [14, 64], strides = [1, 1]} : vector<17x64xf32> to vector<14x64xf32>
    %439 = arith.addf %431, %438 : vector<14x64xf32>
    %cst_172 = arith.constant 0.000000e+00 : f32
    %440 = vector.broadcast %cst_172 : f32 to vector<14x64xf32>
    %441 = arith.cmpf ogt, %439, %440 : vector<14x64xf32>
    %cst_173 = arith.constant 0.000000e+00 : f32
    %442 = vector.broadcast %cst_173 : f32 to vector<14x64xf32>
    %443 = arith.minimumf %439, %442 : vector<14x64xf32>
    %444 = math.exp %443 : vector<14x64xf32>
    %cst_174 = arith.constant 1.000000e+00 : f32
    %445 = vector.broadcast %cst_174 : f32 to vector<14x64xf32>
    %446 = arith.subf %444, %445 : vector<14x64xf32>
    %447 = arith.select %441, %439, %446 : vector<14x64xi1>, vector<14x64xf32>
    %448 = vector.extract_strided_slice %447 {offsets = [0, 0], sizes = [4, 64], strides = [1, 1]} : vector<14x64xf32> to vector<4x64xf32>
    %449 = vector.extract_strided_slice %447 {offsets = [1, 0], sizes = [4, 64], strides = [1, 1]} : vector<14x64xf32> to vector<4x64xf32>
    %450 = arith.addf %448, %449 : vector<4x64xf32>
    %451 = vector.extract_strided_slice %447 {offsets = [2, 0], sizes = [4, 64], strides = [1, 1]} : vector<14x64xf32> to vector<4x64xf32>
    %452 = arith.addf %450, %451 : vector<4x64xf32>
    %453 = vector.extract_strided_slice %447 {offsets = [3, 0], sizes = [4, 64], strides = [1, 1]} : vector<14x64xf32> to vector<4x64xf32>
    %454 = arith.addf %452, %453 : vector<4x64xf32>
    %455 = vector.extract_strided_slice %447 {offsets = [4, 0], sizes = [4, 64], strides = [1, 1]} : vector<14x64xf32> to vector<4x64xf32>
    %456 = arith.addf %454, %455 : vector<4x64xf32>
    %457 = vector.extract_strided_slice %447 {offsets = [5, 0], sizes = [4, 64], strides = [1, 1]} : vector<14x64xf32> to vector<4x64xf32>
    %458 = arith.addf %456, %457 : vector<4x64xf32>
    %459 = vector.extract_strided_slice %447 {offsets = [6, 0], sizes = [4, 64], strides = [1, 1]} : vector<14x64xf32> to vector<4x64xf32>
    %460 = arith.addf %458, %459 : vector<4x64xf32>
    %461 = vector.extract_strided_slice %447 {offsets = [7, 0], sizes = [4, 64], strides = [1, 1]} : vector<14x64xf32> to vector<4x64xf32>
    %462 = arith.addf %460, %461 : vector<4x64xf32>
    %463 = vector.extract_strided_slice %447 {offsets = [8, 0], sizes = [4, 64], strides = [1, 1]} : vector<14x64xf32> to vector<4x64xf32>
    %464 = arith.addf %462, %463 : vector<4x64xf32>
    %465 = vector.extract_strided_slice %447 {offsets = [9, 0], sizes = [4, 64], strides = [1, 1]} : vector<14x64xf32> to vector<4x64xf32>
    %466 = arith.addf %464, %465 : vector<4x64xf32>
    %467 = vector.extract_strided_slice %447 {offsets = [10, 0], sizes = [4, 64], strides = [1, 1]} : vector<14x64xf32> to vector<4x64xf32>
    %468 = arith.addf %466, %467 : vector<4x64xf32>
    %cst_175 = arith.constant 0.0909090936 : f32
    %469 = vector.broadcast %cst_175 : f32 to vector<4x64xf32>
    %470 = arith.mulf %468, %469 : vector<4x64xf32>
    %c0_176 = arith.constant 0 : index
    %c5_177 = arith.constant 5 : index
    %c0_178 = arith.constant 0 : index
    %471 = vector.load %arg4[%c0_176, %c5_177, %c0_178] : memref<1x11x64xf32, #tpu.memory_space<vmem>>, vector<1x4x64xf32>
    %472 = vector.shape_cast %471 : vector<1x4x64xf32> to vector<4x64xf32>
    %473 = vector.shape_cast %470 : vector<4x64xf32> to vector<1x4x64xf32>
    tpu.vector_store %arg4[%c0_176, %c5_177, %c0_178], %473 {strides = array<i32>} : memref<1x11x64xf32, #tpu.memory_space<vmem>>, vector<1x4x64xf32>,
    %c2736 = arith.constant 2736 : index
    %c0_179 = arith.constant 0 : index
    %474 = vector.load %arg2[%c2736, %c0_179] : memref<5056x64xbf16, #tpu.memory_space<vmem>>, vector<224x32xbf16>
    %c21 = arith.constant 21 : index
    %c0_180 = arith.constant 0 : index
    %475 = vector.load %arg3[%c21, %c0_180] : memref<32x64xf32, #tpu.memory_space<vmem>>, vector<1x32xf32>
    %c2960 = arith.constant 2960 : index
    %c0_181 = arith.constant 0 : index
    %476 = vector.load %arg2[%c2960, %c0_181] : memref<5056x64xbf16, #tpu.memory_space<vmem>>, vector<224x32xbf16>
    %c22 = arith.constant 22 : index
    %c0_182 = arith.constant 0 : index
    %477 = vector.load %arg3[%c22, %c0_182] : memref<32x64xf32, #tpu.memory_space<vmem>>, vector<1x32xf32>
    %478 = arith.truncf %23 : vector<80x32xf32> to vector<80x32xbf16>
    %cst_183 = arith.constant 0.000000e+00 : bf16
    %479 = vector.broadcast %cst_183 : bf16 to vector<1x32xbf16>
    %480 = tpu.concatenate %479, %478, %479 in 0 : vector<1x32xbf16>, vector<80x32xbf16>, vector<1x32xbf16> -> vector<82x32xbf16>
    %481 = vector.extract_strided_slice %480 {offsets = [0, 0], sizes = [76, 32], strides = [1, 1]} : vector<82x32xbf16> to vector<76x32xbf16>
    %482 = vector.extract_strided_slice %480 {offsets = [1, 0], sizes = [76, 32], strides = [1, 1]} : vector<82x32xbf16> to vector<76x32xbf16>
    %483 = vector.extract_strided_slice %480 {offsets = [2, 0], sizes = [76, 32], strides = [1, 1]} : vector<82x32xbf16> to vector<76x32xbf16>
    %484 = vector.extract_strided_slice %480 {offsets = [3, 0], sizes = [76, 32], strides = [1, 1]} : vector<82x32xbf16> to vector<76x32xbf16>
    %485 = vector.extract_strided_slice %480 {offsets = [4, 0], sizes = [76, 32], strides = [1, 1]} : vector<82x32xbf16> to vector<76x32xbf16>
    %486 = vector.extract_strided_slice %480 {offsets = [5, 0], sizes = [76, 32], strides = [1, 1]} : vector<82x32xbf16> to vector<76x32xbf16>
    %487 = vector.extract_strided_slice %480 {offsets = [6, 0], sizes = [76, 32], strides = [1, 1]} : vector<82x32xbf16> to vector<76x32xbf16>
    %488 = tpu.concatenate %481, %482, %483, %484, %485, %486, %487 in 1 : vector<76x32xbf16>, vector<76x32xbf16>, vector<76x32xbf16>, vector<76x32xbf16>, vector<76x32xbf16>, vector<76x32xbf16>, vector<76x32xbf16> -> vector<76x224xbf16>
    %cst_184 = arith.constant dense<0.000000e+00> : vector<76x32xf32>
    %489 = tpu.matmul %488, %474, %cst_184 {dimension_numbers = #tpu.dot_dimension_numbers<[1], [0], [0], [1], [0, 0, 1, 1], [], []>} : vector<76x224xbf16>, vector<224x32xbf16>, vector<76x32xf32> -> vector<76x32xf32>
    %490 = vector.broadcast %475 : vector<1x32xf32> to vector<76x32xf32>
    %491 = arith.addf %489, %490 : vector<76x32xf32>
    %cst_185 = arith.constant 0.000000e+00 : f32
    %492 = vector.broadcast %cst_185 : f32 to vector<76x32xf32>
    %493 = arith.cmpf ogt, %491, %492 : vector<76x32xf32>
    %cst_186 = arith.constant 0.000000e+00 : f32
    %494 = vector.broadcast %cst_186 : f32 to vector<76x32xf32>
    %495 = arith.minimumf %491, %494 : vector<76x32xf32>
    %496 = math.exp %495 : vector<76x32xf32>
    %cst_187 = arith.constant 1.000000e+00 : f32
    %497 = vector.broadcast %cst_187 : f32 to vector<76x32xf32>
    %498 = arith.subf %496, %497 : vector<76x32xf32>
    %499 = arith.select %493, %491, %498 : vector<76x32xi1>, vector<76x32xf32>
    %500 = arith.truncf %499 : vector<76x32xf32> to vector<76x32xbf16>
    %cst_188 = arith.constant 0.000000e+00 : bf16
    %501 = vector.broadcast %cst_188 : bf16 to vector<1x32xbf16>
    %502 = tpu.concatenate %501, %500, %501 in 0 : vector<1x32xbf16>, vector<76x32xbf16>, vector<1x32xbf16> -> vector<78x32xbf16>
    %503 = vector.extract_strided_slice %502 {offsets = [0, 0], sizes = [72, 32], strides = [1, 1]} : vector<78x32xbf16> to vector<72x32xbf16>
    %504 = vector.extract_strided_slice %502 {offsets = [1, 0], sizes = [72, 32], strides = [1, 1]} : vector<78x32xbf16> to vector<72x32xbf16>
    %505 = vector.extract_strided_slice %502 {offsets = [2, 0], sizes = [72, 32], strides = [1, 1]} : vector<78x32xbf16> to vector<72x32xbf16>
    %506 = vector.extract_strided_slice %502 {offsets = [3, 0], sizes = [72, 32], strides = [1, 1]} : vector<78x32xbf16> to vector<72x32xbf16>
    %507 = vector.extract_strided_slice %502 {offsets = [4, 0], sizes = [72, 32], strides = [1, 1]} : vector<78x32xbf16> to vector<72x32xbf16>
    %508 = vector.extract_strided_slice %502 {offsets = [5, 0], sizes = [72, 32], strides = [1, 1]} : vector<78x32xbf16> to vector<72x32xbf16>
    %509 = vector.extract_strided_slice %502 {offsets = [6, 0], sizes = [72, 32], strides = [1, 1]} : vector<78x32xbf16> to vector<72x32xbf16>
    %510 = tpu.concatenate %503, %504, %505, %506, %507, %508, %509 in 1 : vector<72x32xbf16>, vector<72x32xbf16>, vector<72x32xbf16>, vector<72x32xbf16>, vector<72x32xbf16>, vector<72x32xbf16>, vector<72x32xbf16> -> vector<72x224xbf16>
    %cst_189 = arith.constant dense<0.000000e+00> : vector<72x32xf32>
    %511 = tpu.matmul %510, %476, %cst_189 {dimension_numbers = #tpu.dot_dimension_numbers<[1], [0], [0], [1], [0, 0, 1, 1], [], []>} : vector<72x224xbf16>, vector<224x32xbf16>, vector<72x32xf32> -> vector<72x32xf32>
    %512 = vector.broadcast %477 : vector<1x32xf32> to vector<72x32xf32>
    %513 = arith.addf %511, %512 : vector<72x32xf32>
    %514 = vector.extract_strided_slice %23 {offsets = [0, 0], sizes = [72, 32], strides = [1, 1]} : vector<80x32xf32> to vector<72x32xf32>
    %515 = arith.addf %513, %514 : vector<72x32xf32>
    %cst_190 = arith.constant 0.000000e+00 : f32
    %516 = vector.broadcast %cst_190 : f32 to vector<72x32xf32>
    %517 = arith.cmpf ogt, %515, %516 : vector<72x32xf32>
    %cst_191 = arith.constant 0.000000e+00 : f32
    %518 = vector.broadcast %cst_191 : f32 to vector<72x32xf32>
    %519 = arith.minimumf %515, %518 : vector<72x32xf32>
    %520 = math.exp %519 : vector<72x32xf32>
    %cst_192 = arith.constant 1.000000e+00 : f32
    %521 = vector.broadcast %cst_192 : f32 to vector<72x32xf32>
    %522 = arith.subf %520, %521 : vector<72x32xf32>
    %523 = arith.select %517, %515, %522 : vector<72x32xi1>, vector<72x32xf32>
    %c3184 = arith.constant 3184 : index
    %c0_193 = arith.constant 0 : index
    %524 = vector.load %arg2[%c3184, %c0_193] : memref<5056x64xbf16, #tpu.memory_space<vmem>>, vector<224x32xbf16>
    %c23 = arith.constant 23 : index
    %c0_194 = arith.constant 0 : index
    %525 = vector.load %arg3[%c23, %c0_194] : memref<32x64xf32, #tpu.memory_space<vmem>>, vector<1x32xf32>
    %c3408 = arith.constant 3408 : index
    %c0_195 = arith.constant 0 : index
    %526 = vector.load %arg2[%c3408, %c0_195] : memref<5056x64xbf16, #tpu.memory_space<vmem>>, vector<224x32xbf16>
    %c24 = arith.constant 24 : index
    %c0_196 = arith.constant 0 : index
    %527 = vector.load %arg3[%c24, %c0_196] : memref<32x64xf32, #tpu.memory_space<vmem>>, vector<1x32xf32>
    %528 = arith.truncf %523 : vector<72x32xf32> to vector<72x32xbf16>
    %cst_197 = arith.constant 0.000000e+00 : bf16
    %529 = vector.broadcast %cst_197 : bf16 to vector<1x32xbf16>
    %530 = tpu.concatenate %529, %528, %529 in 0 : vector<1x32xbf16>, vector<72x32xbf16>, vector<1x32xbf16> -> vector<74x32xbf16>
    %531 = vector.extract_strided_slice %530 {offsets = [0, 0], sizes = [68, 32], strides = [1, 1]} : vector<74x32xbf16> to vector<68x32xbf16>
    %532 = vector.extract_strided_slice %530 {offsets = [1, 0], sizes = [68, 32], strides = [1, 1]} : vector<74x32xbf16> to vector<68x32xbf16>
    %533 = vector.extract_strided_slice %530 {offsets = [2, 0], sizes = [68, 32], strides = [1, 1]} : vector<74x32xbf16> to vector<68x32xbf16>
    %534 = vector.extract_strided_slice %530 {offsets = [3, 0], sizes = [68, 32], strides = [1, 1]} : vector<74x32xbf16> to vector<68x32xbf16>
    %535 = vector.extract_strided_slice %530 {offsets = [4, 0], sizes = [68, 32], strides = [1, 1]} : vector<74x32xbf16> to vector<68x32xbf16>
    %536 = vector.extract_strided_slice %530 {offsets = [5, 0], sizes = [68, 32], strides = [1, 1]} : vector<74x32xbf16> to vector<68x32xbf16>
    %537 = vector.extract_strided_slice %530 {offsets = [6, 0], sizes = [68, 32], strides = [1, 1]} : vector<74x32xbf16> to vector<68x32xbf16>
    %538 = tpu.concatenate %531, %532, %533, %534, %535, %536, %537 in 1 : vector<68x32xbf16>, vector<68x32xbf16>, vector<68x32xbf16>, vector<68x32xbf16>, vector<68x32xbf16>, vector<68x32xbf16>, vector<68x32xbf16> -> vector<68x224xbf16>
    %cst_198 = arith.constant dense<0.000000e+00> : vector<68x32xf32>
    %539 = tpu.matmul %538, %524, %cst_198 {dimension_numbers = #tpu.dot_dimension_numbers<[1], [0], [0], [1], [0, 0, 1, 1], [], []>} : vector<68x224xbf16>, vector<224x32xbf16>, vector<68x32xf32> -> vector<68x32xf32>
    %540 = vector.broadcast %525 : vector<1x32xf32> to vector<68x32xf32>
    %541 = arith.addf %539, %540 : vector<68x32xf32>
    %cst_199 = arith.constant 0.000000e+00 : f32
    %542 = vector.broadcast %cst_199 : f32 to vector<68x32xf32>
    %543 = arith.cmpf ogt, %541, %542 : vector<68x32xf32>
    %cst_200 = arith.constant 0.000000e+00 : f32
    %544 = vector.broadcast %cst_200 : f32 to vector<68x32xf32>
    %545 = arith.minimumf %541, %544 : vector<68x32xf32>
    %546 = math.exp %545 : vector<68x32xf32>
    %cst_201 = arith.constant 1.000000e+00 : f32
    %547 = vector.broadcast %cst_201 : f32 to vector<68x32xf32>
    %548 = arith.subf %546, %547 : vector<68x32xf32>
    %549 = arith.select %543, %541, %548 : vector<68x32xi1>, vector<68x32xf32>
    %550 = arith.truncf %549 : vector<68x32xf32> to vector<68x32xbf16>
    %cst_202 = arith.constant 0.000000e+00 : bf16
    %551 = vector.broadcast %cst_202 : bf16 to vector<1x32xbf16>
    %552 = tpu.concatenate %551, %550, %551 in 0 : vector<1x32xbf16>, vector<68x32xbf16>, vector<1x32xbf16> -> vector<70x32xbf16>
    %553 = vector.extract_strided_slice %552 {offsets = [0, 0], sizes = [64, 32], strides = [1, 1]} : vector<70x32xbf16> to vector<64x32xbf16>
    %554 = vector.extract_strided_slice %552 {offsets = [1, 0], sizes = [64, 32], strides = [1, 1]} : vector<70x32xbf16> to vector<64x32xbf16>
    %555 = vector.extract_strided_slice %552 {offsets = [2, 0], sizes = [64, 32], strides = [1, 1]} : vector<70x32xbf16> to vector<64x32xbf16>
    %556 = vector.extract_strided_slice %552 {offsets = [3, 0], sizes = [64, 32], strides = [1, 1]} : vector<70x32xbf16> to vector<64x32xbf16>
    %557 = vector.extract_strided_slice %552 {offsets = [4, 0], sizes = [64, 32], strides = [1, 1]} : vector<70x32xbf16> to vector<64x32xbf16>
    %558 = vector.extract_strided_slice %552 {offsets = [5, 0], sizes = [64, 32], strides = [1, 1]} : vector<70x32xbf16> to vector<64x32xbf16>
    %559 = vector.extract_strided_slice %552 {offsets = [6, 0], sizes = [64, 32], strides = [1, 1]} : vector<70x32xbf16> to vector<64x32xbf16>
    %560 = tpu.concatenate %553, %554, %555, %556, %557, %558, %559 in 1 : vector<64x32xbf16>, vector<64x32xbf16>, vector<64x32xbf16>, vector<64x32xbf16>, vector<64x32xbf16>, vector<64x32xbf16>, vector<64x32xbf16> -> vector<64x224xbf16>
    %cst_203 = arith.constant dense<0.000000e+00> : vector<64x32xf32>
    %561 = tpu.matmul %560, %526, %cst_203 {dimension_numbers = #tpu.dot_dimension_numbers<[1], [0], [0], [1], [0, 0, 1, 1], [], []>} : vector<64x224xbf16>, vector<224x32xbf16>, vector<64x32xf32> -> vector<64x32xf32>
    %562 = vector.broadcast %527 : vector<1x32xf32> to vector<64x32xf32>
    %563 = arith.addf %561, %562 : vector<64x32xf32>
    %564 = vector.extract_strided_slice %523 {offsets = [0, 0], sizes = [64, 32], strides = [1, 1]} : vector<72x32xf32> to vector<64x32xf32>
    %565 = arith.addf %563, %564 : vector<64x32xf32>
    %cst_204 = arith.constant 0.000000e+00 : f32
    %566 = vector.broadcast %cst_204 : f32 to vector<64x32xf32>
    %567 = arith.cmpf ogt, %565, %566 : vector<64x32xf32>
    %cst_205 = arith.constant 0.000000e+00 : f32
    %568 = vector.broadcast %cst_205 : f32 to vector<64x32xf32>
    %569 = arith.minimumf %565, %568 : vector<64x32xf32>
    %570 = math.exp %569 : vector<64x32xf32>
    %cst_206 = arith.constant 1.000000e+00 : f32
    %571 = vector.broadcast %cst_206 : f32 to vector<64x32xf32>
    %572 = arith.subf %570, %571 : vector<64x32xf32>
    %573 = arith.select %567, %565, %572 : vector<64x32xi1>, vector<64x32xf32>
    %c3632 = arith.constant 3632 : index
    %c0_207 = arith.constant 0 : index
    %574 = vector.load %arg2[%c3632, %c0_207] : memref<5056x64xbf16, #tpu.memory_space<vmem>>, vector<224x48xbf16>
    %c25 = arith.constant 25 : index
    %c0_208 = arith.constant 0 : index
    %575 = vector.load %arg3[%c25, %c0_208] : memref<32x64xf32, #tpu.memory_space<vmem>>, vector<1x48xf32>
    %c3856 = arith.constant 3856 : index
    %c0_209 = arith.constant 0 : index
    %576 = vector.load %arg2[%c3856, %c0_209] : memref<5056x64xbf16, #tpu.memory_space<vmem>>, vector<336x48xbf16>
    %c26 = arith.constant 26 : index
    %c0_210 = arith.constant 0 : index
    %577 = vector.load %arg3[%c26, %c0_210] : memref<32x64xf32, #tpu.memory_space<vmem>>, vector<1x48xf32>
    %c4192 = arith.constant 4192 : index
    %c0_211 = arith.constant 0 : index
    %578 = vector.load %arg2[%c4192, %c0_211] : memref<5056x64xbf16, #tpu.memory_space<vmem>>, vector<32x48xbf16>
    %c27 = arith.constant 27 : index
    %c0_212 = arith.constant 0 : index
    %579 = vector.load %arg3[%c27, %c0_212] : memref<32x64xf32, #tpu.memory_space<vmem>>, vector<1x48xf32>
    %580 = arith.truncf %573 : vector<64x32xf32> to vector<64x32xbf16>
    %cst_213 = arith.constant 0.000000e+00 : bf16
    %581 = vector.broadcast %cst_213 : bf16 to vector<1x32xbf16>
    %582 = tpu.concatenate %581, %580, %581 in 0 : vector<1x32xbf16>, vector<64x32xbf16>, vector<1x32xbf16> -> vector<66x32xbf16>
    %583 = vector.extract_strided_slice %582 {offsets = [0, 0], sizes = [60, 32], strides = [1, 1]} : vector<66x32xbf16> to vector<60x32xbf16>
    %584 = vector.extract_strided_slice %582 {offsets = [1, 0], sizes = [60, 32], strides = [1, 1]} : vector<66x32xbf16> to vector<60x32xbf16>
    %585 = vector.extract_strided_slice %582 {offsets = [2, 0], sizes = [60, 32], strides = [1, 1]} : vector<66x32xbf16> to vector<60x32xbf16>
    %586 = vector.extract_strided_slice %582 {offsets = [3, 0], sizes = [60, 32], strides = [1, 1]} : vector<66x32xbf16> to vector<60x32xbf16>
    %587 = vector.extract_strided_slice %582 {offsets = [4, 0], sizes = [60, 32], strides = [1, 1]} : vector<66x32xbf16> to vector<60x32xbf16>
    %588 = vector.extract_strided_slice %582 {offsets = [5, 0], sizes = [60, 32], strides = [1, 1]} : vector<66x32xbf16> to vector<60x32xbf16>
    %589 = vector.extract_strided_slice %582 {offsets = [6, 0], sizes = [60, 32], strides = [1, 1]} : vector<66x32xbf16> to vector<60x32xbf16>
    %590 = tpu.concatenate %583, %584, %585, %586, %587, %588, %589 in 1 : vector<60x32xbf16>, vector<60x32xbf16>, vector<60x32xbf16>, vector<60x32xbf16>, vector<60x32xbf16>, vector<60x32xbf16>, vector<60x32xbf16> -> vector<60x224xbf16>
    %cst_214 = arith.constant dense<0.000000e+00> : vector<60x48xf32>
    %591 = tpu.matmul %590, %574, %cst_214 {dimension_numbers = #tpu.dot_dimension_numbers<[1], [0], [0], [1], [0, 0, 1, 1], [], []>} : vector<60x224xbf16>, vector<224x48xbf16>, vector<60x48xf32> -> vector<60x48xf32>
    %c0_215 = arith.constant 0 : index
    %c0_216 = arith.constant 0 : index
    %592 = vector.load %arg7[%c0_215, %c0_216] : memref<160x64xf32, #tpu.memory_space<vmem>>, vector<60x48xf32>
    tpu.vector_store %arg7[%c0_215, %c0_216], %591 {strides = array<i32>} : memref<160x64xf32, #tpu.memory_space<vmem>>, vector<60x48xf32>,
    %c0_217 = arith.constant 0 : index
    %c0_218 = arith.constant 0 : index
    %593 = tpu.strided_load %arg7[%c0_217, %c0_218] {strides = array<i32: 2, 1>} : memref<160x64xf32, #tpu.memory_space<vmem>>, vector<30x48xf32>
    %594 = vector.broadcast %575 : vector<1x48xf32> to vector<30x48xf32>
    %595 = arith.addf %593, %594 : vector<30x48xf32>
    %cst_219 = arith.constant 0.000000e+00 : f32
    %596 = vector.broadcast %cst_219 : f32 to vector<30x48xf32>
    %597 = arith.cmpf ogt, %595, %596 : vector<30x48xf32>
    %cst_220 = arith.constant 0.000000e+00 : f32
    %598 = vector.broadcast %cst_220 : f32 to vector<30x48xf32>
    %599 = arith.minimumf %595, %598 : vector<30x48xf32>
    %600 = math.exp %599 : vector<30x48xf32>
    %cst_221 = arith.constant 1.000000e+00 : f32
    %601 = vector.broadcast %cst_221 : f32 to vector<30x48xf32>
    %602 = arith.subf %600, %601 : vector<30x48xf32>
    %603 = arith.select %597, %595, %602 : vector<30x48xi1>, vector<30x48xf32>
    %604 = arith.truncf %603 : vector<30x48xf32> to vector<30x48xbf16>
    %cst_222 = arith.constant 0.000000e+00 : bf16
    %605 = vector.broadcast %cst_222 : bf16 to vector<1x48xbf16>
    %606 = tpu.concatenate %605, %604, %605 in 0 : vector<1x48xbf16>, vector<30x48xbf16>, vector<1x48xbf16> -> vector<32x48xbf16>
    %607 = vector.extract_strided_slice %606 {offsets = [0, 0], sizes = [26, 48], strides = [1, 1]} : vector<32x48xbf16> to vector<26x48xbf16>
    %608 = vector.extract_strided_slice %606 {offsets = [1, 0], sizes = [26, 48], strides = [1, 1]} : vector<32x48xbf16> to vector<26x48xbf16>
    %609 = vector.extract_strided_slice %606 {offsets = [2, 0], sizes = [26, 48], strides = [1, 1]} : vector<32x48xbf16> to vector<26x48xbf16>
    %610 = vector.extract_strided_slice %606 {offsets = [3, 0], sizes = [26, 48], strides = [1, 1]} : vector<32x48xbf16> to vector<26x48xbf16>
    %611 = vector.extract_strided_slice %606 {offsets = [4, 0], sizes = [26, 48], strides = [1, 1]} : vector<32x48xbf16> to vector<26x48xbf16>
    %612 = vector.extract_strided_slice %606 {offsets = [5, 0], sizes = [26, 48], strides = [1, 1]} : vector<32x48xbf16> to vector<26x48xbf16>
    %613 = vector.extract_strided_slice %606 {offsets = [6, 0], sizes = [26, 48], strides = [1, 1]} : vector<32x48xbf16> to vector<26x48xbf16>
    %614 = tpu.concatenate %607, %608, %609, %610, %611, %612, %613 in 1 : vector<26x48xbf16>, vector<26x48xbf16>, vector<26x48xbf16>, vector<26x48xbf16>, vector<26x48xbf16>, vector<26x48xbf16>, vector<26x48xbf16> -> vector<26x336xbf16>
    %cst_223 = arith.constant dense<0.000000e+00> : vector<26x48xf32>
    %615 = tpu.matmul %614, %576, %cst_223 {dimension_numbers = #tpu.dot_dimension_numbers<[1], [0], [0], [1], [0, 0, 1, 1], [], []>} : vector<26x336xbf16>, vector<336x48xbf16>, vector<26x48xf32> -> vector<26x48xf32>
    %616 = vector.broadcast %577 : vector<1x48xf32> to vector<26x48xf32>
    %617 = arith.addf %615, %616 : vector<26x48xf32>
    %618 = arith.truncf %573 : vector<64x32xf32> to vector<64x32xbf16>
    %cst_224 = arith.constant dense<0.000000e+00> : vector<64x48xf32>
    %619 = tpu.matmul %618, %578, %cst_224 {dimension_numbers = #tpu.dot_dimension_numbers<[1], [0], [0], [1], [0, 0, 1, 1], [], []>} : vector<64x32xbf16>, vector<32x48xbf16>, vector<64x48xf32> -> vector<64x48xf32>
    %c0_225 = arith.constant 0 : index
    %c0_226 = arith.constant 0 : index
    %620 = vector.load %arg7[%c0_225, %c0_226] : memref<160x64xf32, #tpu.memory_space<vmem>>, vector<64x48xf32>
    tpu.vector_store %arg7[%c0_225, %c0_226], %619 {strides = array<i32>} : memref<160x64xf32, #tpu.memory_space<vmem>>, vector<64x48xf32>,
    %c0_227 = arith.constant 0 : index
    %c0_228 = arith.constant 0 : index
    %621 = tpu.strided_load %arg7[%c0_227, %c0_228] {strides = array<i32: 2, 1>} : memref<160x64xf32, #tpu.memory_space<vmem>>, vector<32x48xf32>
    %622 = vector.broadcast %579 : vector<1x48xf32> to vector<32x48xf32>
    %623 = arith.addf %621, %622 : vector<32x48xf32>
    %624 = vector.extract_strided_slice %623 {offsets = [0, 0], sizes = [26, 48], strides = [1, 1]} : vector<32x48xf32> to vector<26x48xf32>
    %625 = arith.addf %617, %624 : vector<26x48xf32>
    %cst_229 = arith.constant 0.000000e+00 : f32
    %626 = vector.broadcast %cst_229 : f32 to vector<26x48xf32>
    %627 = arith.cmpf ogt, %625, %626 : vector<26x48xf32>
    %cst_230 = arith.constant 0.000000e+00 : f32
    %628 = vector.broadcast %cst_230 : f32 to vector<26x48xf32>
    %629 = arith.minimumf %625, %628 : vector<26x48xf32>
    %630 = math.exp %629 : vector<26x48xf32>
    %cst_231 = arith.constant 1.000000e+00 : f32
    %631 = vector.broadcast %cst_231 : f32 to vector<26x48xf32>
    %632 = arith.subf %630, %631 : vector<26x48xf32>
    %633 = arith.select %627, %625, %632 : vector<26x48xi1>, vector<26x48xf32>
    %c4224 = arith.constant 4224 : index
    %c0_232 = arith.constant 0 : index
    %634 = vector.load %arg2[%c4224, %c0_232] : memref<5056x64xbf16, #tpu.memory_space<vmem>>, vector<336x64xbf16>
    %c28 = arith.constant 28 : index
    %c0_233 = arith.constant 0 : index
    %635 = vector.load %arg3[%c28, %c0_233] : memref<32x64xf32, #tpu.memory_space<vmem>>, vector<1x64xf32>
    %c4560 = arith.constant 4560 : index
    %c0_234 = arith.constant 0 : index
    %636 = vector.load %arg2[%c4560, %c0_234] : memref<5056x64xbf16, #tpu.memory_space<vmem>>, vector<448x64xbf16>
    %c29 = arith.constant 29 : index
    %c0_235 = arith.constant 0 : index
    %637 = vector.load %arg3[%c29, %c0_235] : memref<32x64xf32, #tpu.memory_space<vmem>>, vector<1x64xf32>
    %c5008 = arith.constant 5008 : index
    %c0_236 = arith.constant 0 : index
    %638 = vector.load %arg2[%c5008, %c0_236] : memref<5056x64xbf16, #tpu.memory_space<vmem>>, vector<48x64xbf16>
    %c30 = arith.constant 30 : index
    %c0_237 = arith.constant 0 : index
    %639 = vector.load %arg3[%c30, %c0_237] : memref<32x64xf32, #tpu.memory_space<vmem>>, vector<1x64xf32>
    %640 = arith.truncf %633 : vector<26x48xf32> to vector<26x48xbf16>
    %cst_238 = arith.constant 0.000000e+00 : bf16
    %641 = vector.broadcast %cst_238 : bf16 to vector<1x48xbf16>
    %642 = tpu.concatenate %641, %640, %641 in 0 : vector<1x48xbf16>, vector<26x48xbf16>, vector<1x48xbf16> -> vector<28x48xbf16>
    %643 = vector.extract_strided_slice %642 {offsets = [0, 0], sizes = [22, 48], strides = [1, 1]} : vector<28x48xbf16> to vector<22x48xbf16>
    %644 = vector.extract_strided_slice %642 {offsets = [1, 0], sizes = [22, 48], strides = [1, 1]} : vector<28x48xbf16> to vector<22x48xbf16>
    %645 = vector.extract_strided_slice %642 {offsets = [2, 0], sizes = [22, 48], strides = [1, 1]} : vector<28x48xbf16> to vector<22x48xbf16>
    %646 = vector.extract_strided_slice %642 {offsets = [3, 0], sizes = [22, 48], strides = [1, 1]} : vector<28x48xbf16> to vector<22x48xbf16>
    %647 = vector.extract_strided_slice %642 {offsets = [4, 0], sizes = [22, 48], strides = [1, 1]} : vector<28x48xbf16> to vector<22x48xbf16>
    %648 = vector.extract_strided_slice %642 {offsets = [5, 0], sizes = [22, 48], strides = [1, 1]} : vector<28x48xbf16> to vector<22x48xbf16>
    %649 = vector.extract_strided_slice %642 {offsets = [6, 0], sizes = [22, 48], strides = [1, 1]} : vector<28x48xbf16> to vector<22x48xbf16>
    %650 = tpu.concatenate %643, %644, %645, %646, %647, %648, %649 in 1 : vector<22x48xbf16>, vector<22x48xbf16>, vector<22x48xbf16>, vector<22x48xbf16>, vector<22x48xbf16>, vector<22x48xbf16>, vector<22x48xbf16> -> vector<22x336xbf16>
    %cst_239 = arith.constant dense<0.000000e+00> : vector<22x64xf32>
    %651 = tpu.matmul %650, %634, %cst_239 {dimension_numbers = #tpu.dot_dimension_numbers<[1], [0], [0], [1], [0, 0, 1, 1], [], []>} : vector<22x336xbf16>, vector<336x64xbf16>, vector<22x64xf32> -> vector<22x64xf32>
    %c0_240 = arith.constant 0 : index
    %c0_241 = arith.constant 0 : index
    %652 = vector.load %arg7[%c0_240, %c0_241] : memref<160x64xf32, #tpu.memory_space<vmem>>, vector<22x64xf32>
    tpu.vector_store %arg7[%c0_240, %c0_241], %651 {strides = array<i32>} : memref<160x64xf32, #tpu.memory_space<vmem>>, vector<22x64xf32>,
    %c0_242 = arith.constant 0 : index
    %c0_243 = arith.constant 0 : index
    %653 = tpu.strided_load %arg7[%c0_242, %c0_243] {strides = array<i32: 2, 1>} : memref<160x64xf32, #tpu.memory_space<vmem>>, vector<11x64xf32>
    %654 = vector.broadcast %635 : vector<1x64xf32> to vector<11x64xf32>
    %655 = arith.addf %653, %654 : vector<11x64xf32>
    %cst_244 = arith.constant 0.000000e+00 : f32
    %656 = vector.broadcast %cst_244 : f32 to vector<11x64xf32>
    %657 = arith.cmpf ogt, %655, %656 : vector<11x64xf32>
    %cst_245 = arith.constant 0.000000e+00 : f32
    %658 = vector.broadcast %cst_245 : f32 to vector<11x64xf32>
    %659 = arith.minimumf %655, %658 : vector<11x64xf32>
    %660 = math.exp %659 : vector<11x64xf32>
    %cst_246 = arith.constant 1.000000e+00 : f32
    %661 = vector.broadcast %cst_246 : f32 to vector<11x64xf32>
    %662 = arith.subf %660, %661 : vector<11x64xf32>
    %663 = arith.select %657, %655, %662 : vector<11x64xi1>, vector<11x64xf32>
    %664 = arith.truncf %663 : vector<11x64xf32> to vector<11x64xbf16>
    %cst_247 = arith.constant 0.000000e+00 : bf16
    %665 = vector.broadcast %cst_247 : bf16 to vector<1x64xbf16>
    %666 = tpu.concatenate %665, %664, %665 in 0 : vector<1x64xbf16>, vector<11x64xbf16>, vector<1x64xbf16> -> vector<13x64xbf16>
    %667 = vector.extract_strided_slice %666 {offsets = [0, 0], sizes = [7, 64], strides = [1, 1]} : vector<13x64xbf16> to vector<7x64xbf16>
    %668 = vector.extract_strided_slice %666 {offsets = [1, 0], sizes = [7, 64], strides = [1, 1]} : vector<13x64xbf16> to vector<7x64xbf16>
    %669 = vector.extract_strided_slice %666 {offsets = [2, 0], sizes = [7, 64], strides = [1, 1]} : vector<13x64xbf16> to vector<7x64xbf16>
    %670 = vector.extract_strided_slice %666 {offsets = [3, 0], sizes = [7, 64], strides = [1, 1]} : vector<13x64xbf16> to vector<7x64xbf16>
    %671 = vector.extract_strided_slice %666 {offsets = [4, 0], sizes = [7, 64], strides = [1, 1]} : vector<13x64xbf16> to vector<7x64xbf16>
    %672 = vector.extract_strided_slice %666 {offsets = [5, 0], sizes = [7, 64], strides = [1, 1]} : vector<13x64xbf16> to vector<7x64xbf16>
    %673 = vector.extract_strided_slice %666 {offsets = [6, 0], sizes = [7, 64], strides = [1, 1]} : vector<13x64xbf16> to vector<7x64xbf16>
    %674 = tpu.concatenate %667, %668, %669, %670, %671, %672, %673 in 1 : vector<7x64xbf16>, vector<7x64xbf16>, vector<7x64xbf16>, vector<7x64xbf16>, vector<7x64xbf16>, vector<7x64xbf16>, vector<7x64xbf16> -> vector<7x448xbf16>
    %cst_248 = arith.constant dense<0.000000e+00> : vector<7x64xf32>
    %675 = tpu.matmul %674, %636, %cst_248 {dimension_numbers = #tpu.dot_dimension_numbers<[1], [0], [0], [1], [0, 0, 1, 1], [], []>} : vector<7x448xbf16>, vector<448x64xbf16>, vector<7x64xf32> -> vector<7x64xf32>
    %676 = vector.broadcast %637 : vector<1x64xf32> to vector<7x64xf32>
    %677 = arith.addf %675, %676 : vector<7x64xf32>
    %678 = arith.truncf %633 : vector<26x48xf32> to vector<26x48xbf16>
    %cst_249 = arith.constant dense<0.000000e+00> : vector<26x64xf32>
    %679 = tpu.matmul %678, %638, %cst_249 {dimension_numbers = #tpu.dot_dimension_numbers<[1], [0], [0], [1], [0, 0, 1, 1], [], []>} : vector<26x48xbf16>, vector<48x64xbf16>, vector<26x64xf32> -> vector<26x64xf32>
    %c0_250 = arith.constant 0 : index
    %c0_251 = arith.constant 0 : index
    %680 = vector.load %arg7[%c0_250, %c0_251] : memref<160x64xf32, #tpu.memory_space<vmem>>, vector<26x64xf32>
    tpu.vector_store %arg7[%c0_250, %c0_251], %679 {strides = array<i32>} : memref<160x64xf32, #tpu.memory_space<vmem>>, vector<26x64xf32>,
    %c0_252 = arith.constant 0 : index
    %c0_253 = arith.constant 0 : index
    %681 = tpu.strided_load %arg7[%c0_252, %c0_253] {strides = array<i32: 2, 1>} : memref<160x64xf32, #tpu.memory_space<vmem>>, vector<13x64xf32>
    %682 = vector.broadcast %639 : vector<1x64xf32> to vector<13x64xf32>
    %683 = arith.addf %681, %682 : vector<13x64xf32>
    %684 = vector.extract_strided_slice %683 {offsets = [0, 0], sizes = [7, 64], strides = [1, 1]} : vector<13x64xf32> to vector<7x64xf32>
    %685 = arith.addf %677, %684 : vector<7x64xf32>
    %cst_254 = arith.constant 0.000000e+00 : f32
    %686 = vector.broadcast %cst_254 : f32 to vector<7x64xf32>
    %687 = arith.cmpf ogt, %685, %686 : vector<7x64xf32>
    %cst_255 = arith.constant 0.000000e+00 : f32
    %688 = vector.broadcast %cst_255 : f32 to vector<7x64xf32>
    %689 = arith.minimumf %685, %688 : vector<7x64xf32>
    %690 = math.exp %689 : vector<7x64xf32>
    %cst_256 = arith.constant 1.000000e+00 : f32
    %691 = vector.broadcast %cst_256 : f32 to vector<7x64xf32>
    %692 = arith.subf %690, %691 : vector<7x64xf32>
    %693 = arith.select %687, %685, %692 : vector<7x64xi1>, vector<7x64xf32>
    %694 = vector.extract_strided_slice %693 {offsets = [0, 0], sizes = [2, 64], strides = [1, 1]} : vector<7x64xf32> to vector<2x64xf32>
    %695 = vector.extract_strided_slice %693 {offsets = [1, 0], sizes = [2, 64], strides = [1, 1]} : vector<7x64xf32> to vector<2x64xf32>
    %696 = arith.addf %694, %695 : vector<2x64xf32>
    %697 = vector.extract_strided_slice %693 {offsets = [2, 0], sizes = [2, 64], strides = [1, 1]} : vector<7x64xf32> to vector<2x64xf32>
    %698 = arith.addf %696, %697 : vector<2x64xf32>
    %699 = vector.extract_strided_slice %693 {offsets = [3, 0], sizes = [2, 64], strides = [1, 1]} : vector<7x64xf32> to vector<2x64xf32>
    %700 = arith.addf %698, %699 : vector<2x64xf32>
    %701 = vector.extract_strided_slice %693 {offsets = [4, 0], sizes = [2, 64], strides = [1, 1]} : vector<7x64xf32> to vector<2x64xf32>
    %702 = arith.addf %700, %701 : vector<2x64xf32>
    %703 = vector.extract_strided_slice %693 {offsets = [5, 0], sizes = [2, 64], strides = [1, 1]} : vector<7x64xf32> to vector<2x64xf32>
    %704 = arith.addf %702, %703 : vector<2x64xf32>
    %cst_257 = arith.constant 0.166666672 : f32
    %705 = vector.broadcast %cst_257 : f32 to vector<2x64xf32>
    %706 = arith.mulf %704, %705 : vector<2x64xf32>
    %c0_258 = arith.constant 0 : index
    %c9_259 = arith.constant 9 : index
    %c0_260 = arith.constant 0 : index
    %707 = vector.load %arg4[%c0_258, %c9_259, %c0_260] : memref<1x11x64xf32, #tpu.memory_space<vmem>>, vector<1x2x64xf32>
    %708 = vector.shape_cast %707 : vector<1x2x64xf32> to vector<2x64xf32>
    %709 = vector.shape_cast %706 : vector<2x64xf32> to vector<1x2x64xf32>
    tpu.vector_store %arg4[%c0_258, %c9_259, %c0_260], %709 {strides = array<i32>} : memref<1x11x64xf32, #tpu.memory_space<vmem>>, vector<1x2x64xf32>,
    return
  }
  func.func @transform_0(%arg0: i32) -> (i32, i32, i32) {
    %c0_i32 = arith.constant 0 : i32
    %c0_i32_0 = arith.constant 0 : i32
    %c0_i32_1 = arith.constant 0 : i32
    return %arg0, %c0_i32, %c0_i32_0 : i32, i32, i32
  }
  func.func @transform_1(%arg0: i32) -> (i32, i32) {
    %c0_i32 = arith.constant 0 : i32
    %c0_i32_0 = arith.constant 0 : i32
    %c0_i32_1 = arith.constant 0 : i32
    return %c0_i32, %c0_i32_0 : i32, i32
  }
  func.func @transform_2(%arg0: i32) -> (i32, i32) {
    %c0_i32 = arith.constant 0 : i32
    %c0_i32_0 = arith.constant 0 : i32
    %c0_i32_1 = arith.constant 0 : i32
    return %c0_i32, %c0_i32_0 : i32, i32
  }
  func.func @transform_3(%arg0: i32) -> (i32, i32, i32) {
    %c0_i32 = arith.constant 0 : i32
    %c0_i32_0 = arith.constant 0 : i32
    %c0_i32_1 = arith.constant 0 : i32
    return %arg0, %c0_i32, %c0_i32_0 : i32, i32, i32
  }
}

</mosaic_0001>

<llo_original>
// kernel: backbone_forward.1
$region0: #{backbone_forward.1}
  #allocation0 [shape = 'u32[]', space=smem, size = 0x4, offset = 0x4, fixed_abs, tag = 'smem constant byte address 0x4 - core index']
  #allocation1 [shape = 'u32[144,128]{1,0:T(1,128)}', space=vmem, size = 0x12000, scoped, tag = 'internal scratch']
  #allocation2 [shape = 'f32[160,64]{1,0:T(8,128)}', space=vmem, size = 0x14000, scoped, tag = 'scratch operand']
  #allocation3 [shape = 'f32[160,64]{1,0:T(8,128)}', space=vmem, size = 0x14000, scoped, tag = 'scratch operand']
  #allocation4 [shape = 'f32[160,64]{1,0:T(8,128)}', space=vmem, size = 0x14000, scoped, tag = 'scratch operand']
  %s0 = inlined_call_operand.vmem [shape: bf16[2,160,7], index: 0, kind: input, shape index: {}]
  %s1 = inlined_call_operand.vmem [shape: bf16[5056,64], index: 1, kind: input, shape index: {}]
  %s2 = inlined_call_operand.vmem [shape: f32[32,64], index: 2, kind: input, shape index: {}]
  %s3 = inlined_call_operand.vmem [shape: f32[2,11,64], index: 3, kind: output, shape index: {}]
  %s4 = sld [smem:[#allocation0]]
  $region45: #{backbone_forward.1} parent=0
    _
  %s6 = ssub.s32 1, %s4
  %s7 = scalar_select 0, %s6, %s4
  loop: start=0, step=1, limit=4
  $region2: #{backbone_forward.1} parent=0 // loop_pre_header
    _
  $region3: #{backbone_forward.1} parent=0 // loop_header
    %s9 = sphi 0, %s13
    %p10 = scmp.ge.s32.totalorder %s9, 4
    %s19 = sphi 0, %s21
    %s22 = sphi 0, %s19
    %s23 = sphi 0, %s22
    %s39 = sphi 0, %s23
    %s43 = sphi 0, %s43
    %s45 = sphi 0, %s43
    %s46 = sphi 0, %s45
    %s60 = sphi 0, %s46
    %s64 = sphi 0, %s64
    %s66 = sphi 0, %s64
    %s67 = sphi 0, %s66
    %s81 = sphi 0, %s67
    %s87 = sphi 0, %s89
    %s90 = sphi 0, %s87
    %s91 = sphi 0, %s90
    %s107 = sphi 0, %s91
  $region4: #{backbone_forward.1} parent=0 // loop_header_branch
    %12 = sbr.rel (%p10) target = $region8
  $region5: #{backbone_forward.1} parent=0 // loop_body
    %s14 = ssub.s32 %s9, 1
    %s15 = ssub.s32 %s9, 2
    %s16 = sadd.s32 %s9, 1
    %s17 = ssub.s32 %s9, %s16
    %p18 = scmp.eq.s32.totalorder %s17, 0
    %s20 = sadd.s32 %s19, 1
    %s21 = scalar_select %p18, %s19, %s20
    %p24 = pneg %p18
    %p25 = scmp.eq.s32.totalorder %s9, 1
    %p26 = por %p24, %p25
    %p27 = scmp.ne.s32.totalorder %s19, %s22
    %p28 = scmp.eq.s32.totalorder %s9, 0
    %p29 = por %p27, %p28
    %p30 = scmp.ne.s32.totalorder %s19, %s22
    %p31 = scmp.eq.s32.totalorder %s14, 1
    %p32 = por %p30, %p31
    %p33 = scmp.ne.s32.totalorder %s22, %s23
    %p34 = scmp.eq.s32.totalorder %s14, 0
    %p35 = por %p33, %p34
    %p36 = scmp.ne.s32.totalorder %s22, %s23
    %p37 = scmp.eq.s32.totalorder %s15, 1
    %p38 = por %p36, %p37
    %p40 = scmp.ne.s32.totalorder %s23, %s39
    %p41 = scmp.eq.s32.totalorder %s15, 0
    %p42 = por %p40, %p41
    %s44 = sadd.s32 %s43, 1
    %p47 = scmp.eq.s32.totalorder %s9, 1
    %p48 = scmp.ne.s32.totalorder %s43, %s45
    %p49 = scmp.eq.s32.totalorder %s9, 0
    %p50 = por %p48, %p49
    %p51 = scmp.ne.s32.totalorder %s43, %s45
    %p52 = scmp.eq.s32.totalorder %s14, 1
    %p53 = por %p51, %p52
    %p54 = scmp.ne.s32.totalorder %s45, %s46
    %p55 = scmp.eq.s32.totalorder %s14, 0
    %p56 = por %p54, %p55
    %p57 = scmp.ne.s32.totalorder %s45, %s46
    %p58 = scmp.eq.s32.totalorder %s15, 1
    %p59 = por %p57, %p58
    %p61 = scmp.ne.s32.totalorder %s46, %s60
    %p62 = scmp.eq.s32.totalorder %s15, 0
    %p63 = por %p61, %p62
    %s65 = sadd.s32 %s64, 1
    %p68 = scmp.eq.s32.totalorder %s9, 1
    %p69 = scmp.ne.s32.totalorder %s64, %s66
    %p70 = scmp.eq.s32.totalorder %s9, 0
    %p71 = por %p69, %p70
    %p72 = scmp.ne.s32.totalorder %s64, %s66
    %p73 = scmp.eq.s32.totalorder %s14, 1
    %p74 = por %p72, %p73
    %p75 = scmp.ne.s32.totalorder %s66, %s67
    %p76 = scmp.eq.s32.totalorder %s14, 0
    %p77 = por %p75, %p76
    %p78 = scmp.ne.s32.totalorder %s66, %s67
    %p79 = scmp.eq.s32.totalorder %s15, 1
    %p80 = por %p78, %p79
    %p82 = scmp.ne.s32.totalorder %s67, %s81
    %p83 = scmp.eq.s32.totalorder %s15, 0
    %p84 = por %p82, %p83
    %s85 = ssub.s32 %s9, %s16
    %p86 = scmp.eq.s32.totalorder %s85, 0
    %s88 = sadd.s32 %s87, 1
    %s89 = scalar_select %p86, %s87, %s88
    %p92 = pneg %p86
    %p93 = scmp.eq.s32.totalorder %s9, 1
    %p94 = por %p92, %p93
    %p95 = scmp.ne.s32.totalorder %s87, %s90
    %p96 = scmp.eq.s32.totalorder %s9, 0
    %p97 = por %p95, %p96
    %p98 = scmp.ne.s32.totalorder %s87, %s90
    %p99 = scmp.eq.s32.totalorder %s14, 1
    %p100 = por %p98, %p99
    %p101 = scmp.ne.s32.totalorder %s90, %s91
    %p102 = scmp.eq.s32.totalorder %s14, 0
    %p103 = por %p101, %p102
    %p104 = scmp.ne.s32.totalorder %s90, %s91
    %p105 = scmp.eq.s32.totalorder %s15, 1
    %p106 = por %p104, %p105
    %p108 = scmp.ne.s32.totalorder %s91, %s107
    %p109 = scmp.eq.s32.totalorder %s15, 0
    %p110 = por %p108, %p109
    %p111 = scmp.le.s32.totalorder 1, %s9
    %p112 = scmp.lt.s32.totalorder %s9, 3
    %p113 = pnand %p111, %p112
    %p114 = pneg %p113
    // Predicated region
    $region9: #{backbone_forward.1} parent=5 // pred_check
      _
    $region10: #{backbone_forward.1} parent=5 // pred_check_branch
      %116 = sbr.rel (%p113) target = $region12
    $region11: #{backbone_forward.1} parent=5 // pred_region
      %s117 = ssub.s32 %s9, 1
      // Predicated region
      $region13: #{backbone_forward.1} parent=11 // pred_check
        %p118 = pneg %p56
      $region14: #{backbone_forward.1} parent=11 // pred_check_branch
        %120 = sbr.rel (%p118) target = $region16
      $region15: #{backbone_forward.1} parent=11 // pred_region
        _
      $region16: #{backbone_forward.1} parent=11 // pred_fallthru
        _
      // Predicated region
      $region17: #{backbone_forward.1} parent=11 // pred_check
        %p121 = pneg %p77
      $region18: #{backbone_forward.1} parent=11 // pred_check_branch
        %123 = sbr.rel (%p121) target = $region20
      $region19: #{backbone_forward.1} parent=11 // pred_region
        _
      $region20: #{backbone_forward.1} parent=11 // pred_fallthru
        _
    $region12: #{backbone_forward.1} parent=5 // pred_fallthru
      _
    %p124 = scmp.lt.s32.totalorder %s9, 2
    // Predicated region
    $region21: #{backbone_forward.1} parent=5 // pred_check
      %p125 = pneg %p124
    $region22: #{backbone_forward.1} parent=5 // pred_check_branch
      %127 = sbr.rel (%p125) target = $region24
    $region23: #{backbone_forward.1} parent=5 // pred_region
      // Predicated region
      $region25: #{backbone_forward.1} parent=23 // pred_check
        %p128 = pneg %p29
      $region26: #{backbone_forward.1} parent=23 // pred_check_branch
        %130 = sbr.rel (%p128) target = $region28
      $region27: #{backbone_forward.1} parent=23 // pred_region
        %p131 = scmp.lt.s32.totalorder %s9, 1
        %s132 = scalar_select %p131, %s9, 1
        %s133 = smul.addr %s132, 20
        %s134 = smul.addr %s133, 4
        %s135 = scalar_lea.vmem %s0, %s134
      $region28: #{backbone_forward.1} parent=23 // pred_fallthru
        _
    $region24: #{backbone_forward.1} parent=5 // pred_fallthru
      _
    %p136 = scmp.le.s32.totalorder 1, %s9
    %p137 = scmp.lt.s32.totalorder %s9, 3
    %p138 = pnand %p136, %p137
    %p139 = pneg %p138
    // Predicated region
    $region29: #{backbone_forward.1} parent=5 // pred_check
      _
    $region30: #{backbone_forward.1} parent=5 // pred_check_branch
      %141 = sbr.rel (%p138) target = $region32
    $region31: #{backbone_forward.1} parent=5 // pred_region
      %s142 = ssub.s32 %s9, 1
      %p143 = scmp.lt.s32.totalorder %s14, 1
      %s144 = scalar_select %p143, %s14, 1
      %s145 = smul.addr %s144, 20
      %s146 = smul.addr %s145, 4
      %s147 = scalar_lea.vmem %s0, %s146
      %p148 = pneg %p35
      %p149 = pneg %p32
      %p150 = pneg %p56
      %p151 = pneg %p53
      %p152 = pneg %p77
      %p153 = pneg %p74
      %p154 = pneg %p103
      %p155 = pneg %p100
      %p156 = scmp.lt.s32.totalorder %s14, 1
      %s157 = scalar_select %p156, %s14, 1
      %s158 = smul.addr %s157, 2
      %s159 = smul.addr %s158, 8
      %s160 = scalar_lea.vmem %s3, %s159
      %p161 = scmp.lt.s32.totalorder %s14, 1
      %s162 = scalar_select %p161, %s14, 1
      %s163 = smul.addr %s162, 20
      %s164 = smul.addr %s163, 4
      %s165 = scalar_lea.vmem %s0, %s164
      %p166 = scmp.lt.s32.totalorder %s14, 1
      %s167 = scalar_select %p166, %s14, 1
      %s168 = smul.addr %s167, 2
      %s169 = smul.addr %s168, 8
      %s170 = scalar_lea.vmem %s3, %s169
      %v172 = vld [vmem:[%s165] sm:$0xf]
      %v173 = vld [vmem:[%s165 + $0x4] sm:$0xf]
      %v174 = vld [vmem:[%s165 + $0x8] sm:$0xf]
      %v175 = vld [vmem:[%s165 + $0xc] sm:$0xf]
      %v176 = vld [vmem:[%s165 + $0x10] sm:$0xf]
      %v177 = vld [vmem:[%s165 + $0x14] sm:$0xf]
      %v178 = vld [vmem:[%s165 + $0x18] sm:$0xf]
      %v179 = vld [vmem:[%s165 + $0x1c] sm:$0xf]
      %v180 = vld [vmem:[%s165 + $0x20] sm:$0xf]
      %v181 = vld [vmem:[%s165 + $0x24] sm:$0xf]
      %v182 = vld [vmem:[%s165 + $0x28] sm:$0xf]
      %v183 = vld [vmem:[%s165 + $0x2c] sm:$0xf]
      %v184 = vld [vmem:[%s165 + $0x30] sm:$0xf]
      %v185 = vld [vmem:[%s165 + $0x34] sm:$0xf]
      %v186 = vld [vmem:[%s165 + $0x38] sm:$0xf]
      %v187 = vld [vmem:[%s165 + $0x3c] sm:$0xf]
      %v188 = vld [vmem:[%s165 + $0x40] sm:$0xf]
      %v189 = vld [vmem:[%s165 + $0x44] sm:$0xf]
      %v190 = vld [vmem:[%s165 + $0x48] sm:$0xf]
      %v191 = vld [vmem:[%s165 + $0x4c] sm:$0xf]
      %v192 = vld [vmem:[%s1] sm:$0xf]
      %v193 = vld [vmem:[%s2] sm:$0x1]
      %v194 = vlaneseq
      %v195 = vshrl.u32 %v194, 7
      %v196 = vsub.s32 0, %v195
      %v197 = vrot.slane %v193, %v196
      %v218 = vunpack.c.l.b16 %v172
      %v219 = vunpack.c.l.b16 %v173
      %v220 = vunpack.c.l.b16 %v174
      %v221 = vunpack.c.l.b16 %v175
      %v222 = vunpack.c.l.b16 %v176
      %v223 = vunpack.c.l.b16 %v177
      %v224 = vunpack.c.l.b16 %v178
      %v225 = vunpack.c.l.b16 %v179
      %v226 = vunpack.c.l.b16 %v180
      %v227 = vunpack.c.l.b16 %v181
      %v228 = vunpack.c.l.b16 %v182
      %v229 = vunpack.c.l.b16 %v183
      %v230 = vunpack.c.l.b16 %v184
      %v231 = vunpack.c.l.b16 %v185
      %v232 = vunpack.c.l.b16 %v186
      %v233 = vunpack.c.l.b16 %v187
      %v234 = vunpack.c.l.b16 %v188
      %v235 = vunpack.c.l.b16 %v189
      %v236 = vunpack.c.l.b16 %v190
      %v237 = vunpack.c.l.b16 %v191
      %v238 = vpack.c.b16 %v219, %v218
      %v239 = vpack.c.b16 %v221, %v220
      %v240 = vpack.c.b16 %v223, %v222
      %v241 = vpack.c.b16 %v225, %v224
      %v242 = vpack.c.b16 %v227, %v226
      %v243 = vpack.c.b16 %v229, %v228
      %v244 = vpack.c.b16 %v231, %v230
      %v245 = vpack.c.b16 %v233, %v232
      %v246 = vpack.c.b16 %v235, %v234
      %v247 = vpack.c.b16 %v237, %v236
      %vm248 = vcmask 56320
      %v250 = vsel %vm248, %v238, 0
      %v253 = vsel %vm248, %v239, 0
      %v256 = vsel %vm248, %v240, 0
      %v259 = vsel %vm248, %v241, 0
      %v262 = vsel %vm248, %v242, 0
      %v265 = vsel %vm248, %v243, 0
      %v268 = vsel %vm248, %v244, 0
      %v271 = vsel %vm248, %v245, 0
      %v274 = vsel %vm248, %v246, 0
      %v277 = vsel %vm248, %v247, 0
      %vm279 = vcmask 1042432
      %vm280 = vcmask 1043456
      %v281 = vsel %vm279, 4294967295, 65535
      %v282 = vsel %vm280, %v281, 0
      %v284 = vand.u32 %v192, %v282
      %286 = vmatprep.subr.bf16.mxu0 0
      %287 = vmatpush1.bf16.msra.mxu0 %v284
      %288 = vmatprep.subr.bf16.mxu0 0
      %289 = vmatpush1.bf16.msra.mxu0 0
      %290 = vmatprep.subr.bf16.mxu0 0
      %291 = vmatpush1.bf16.msra.mxu0 0
      %292 = vmatprep.subr.bf16.mxu0 0
      %293 = vmatpush1.bf16.msra.mxu0 0
      %294 = vmatprep.subr.bf16.mxu0 0
      %295 = vmatpush1.bf16.msra.mxu0 0
      %296 = vmatprep.subr.bf16.mxu0 0
      %297 = vmatpush1.bf16.msra.mxu0 0
      %298 = vmatprep.subr.bf16.mxu0 0
      %299 = vmatpush1.bf16.msra.mxu0 0
      %300 = vmatprep.subr.bf16.mxu0 0
      %301 = vmatpush1.bf16.msra.mxu0 0
      %302 = vmatprep.subr.bf16.mxu0 0
      %303 = vmatpush1.bf16.msra.mxu0 0
      %304 = vmatprep.subr.bf16.mxu0 0
      %305 = vmatpush1.bf16.msra.mxu0 0
      %306 = vmatprep.subr.bf16.mxu0 0
      %307 = vmatpush1.bf16.msra.mxu0 0
      %308 = vmatprep.subr.bf16.mxu0 0
      %309 = vmatpush1.bf16.msra.mxu0 0
      %310 = vmatprep.subr.bf16.mxu0 0
      %311 = vmatpush1.bf16.msra.mxu0 0
      %312 = vmatprep.subr.bf16.mxu0 0
      %313 = vmatpush1.bf16.msra.mxu0 0
      %314 = vmatprep.subr.bf16.mxu0 0
      %315 = vmatpush1.bf16.msra.mxu0 0
      %316 = vmatprep.subr.bf16.mxu0 0
      %317 = vmatpush1.bf16.msra.mxu0 0
      %318 = vmatprep.mubr.bf16.mxu0 0
      %319 = vmatmul.mubr.bf16.gmra.mrb[0].mxu0 %v250
      %v320 = vpop.f32.mrb[0].mxu0
      %v321 = vadd.f32 %v197, %v320
      %v322 = vpop.f32.mrb[0].mxu0
      %v323 = vpop.f32.mrb[0].mxu0
      %v324 = vadd.f32 %v197, %v323
      %v325 = vpop.f32.mrb[0].mxu0
      %326 = vmatprep.mubr.bf16.mxu0 0
      %327 = vmatmul.mubr.bf16.gmra.mrb[0].mxu0 %v253
      %v328 = vpop.f32.mrb[0].mxu0
      %v329 = vadd.f32 %v197, %v328
      %v330 = vpop.f32.mrb[0].mxu0
      %v331 = vpop.f32.mrb[0].mxu0
      %v332 = vadd.f32 %v197, %v331
      %v333 = vpop.f32.mrb[0].mxu0
      %334 = vmatprep.mubr.bf16.mxu0 0
      %335 = vmatmul.mubr.bf16.gmra.mrb[0].mxu0 %v256
      %v336 = vpop.f32.mrb[0].mxu0
      %v337 = vadd.f32 %v197, %v336
      %v338 = vpop.f32.mrb[0].mxu0
      %v339 = vpop.f32.mrb[0].mxu0
      %v340 = vadd.f32 %v197, %v339
      %v341 = vpop.f32.mrb[0].mxu0
      %342 = vmatprep.mubr.bf16.mxu0 0
      %343 = vmatmul.mubr.bf16.gmra.mrb[0].mxu0 %v259
      %v344 = vpop.f32.mrb[0].mxu0
      %v345 = vadd.f32 %v197, %v344
      %v346 = vpop.f32.mrb[0].mxu0
      %v347 = vpop.f32.mrb[0].mxu0
      %v348 = vadd.f32 %v197, %v347
      %v349 = vpop.f32.mrb[0].mxu0
      %350 = vmatprep.mubr.bf16.mxu0 0
      %351 = vmatmul.mubr.bf16.gmra.mrb[0].mxu0 %v262
      %v352 = vpop.f32.mrb[0].mxu0
      %v353 = vadd.f32 %v197, %v352
      %v354 = vpop.f32.mrb[0].mxu0
      %v355 = vpop.f32.mrb[0].mxu0
      %v356 = vadd.f32 %v197, %v355
      %v357 = vpop.f32.mrb[0].mxu0
      %358 = vmatprep.mubr.bf16.mxu0 0
      %359 = vmatmul.mubr.bf16.gmra.mrb[0].mxu0 %v265
      %v360 = vpop.f32.mrb[0].mxu0
      %v361 = vadd.f32 %v197, %v360
      %v362 = vpop.f32.mrb[0].mxu0
      %v363 = vpop.f32.mrb[0].mxu0
      %v364 = vadd.f32 %v197, %v363
      %v365 = vpop.f32.mrb[0].mxu0
      %366 = vmatprep.mubr.bf16.mxu0 0
      %367 = vmatmul.mubr.bf16.gmra.mrb[0].mxu0 %v268
      %v368 = vpop.f32.mrb[0].mxu0
      %v369 = vadd.f32 %v197, %v368
      %v370 = vpop.f32.mrb[0].mxu0
      %v371 = vpop.f32.mrb[0].mxu0
      %v372 = vadd.f32 %v197, %v371
      %v373 = vpop.f32.mrb[0].mxu0
      %374 = vmatprep.mubr.bf16.mxu0 0
      %375 = vmatmul.mubr.bf16.gmra.mrb[0].mxu0 %v271
      %v376 = vpop.f32.mrb[0].mxu0
      %v377 = vadd.f32 %v197, %v376
      %v378 = vpop.f32.mrb[0].mxu0
      %v379 = vpop.f32.mrb[0].mxu0
      %v380 = vadd.f32 %v197, %v379
      %v381 = vpop.f32.mrb[0].mxu0
      %382 = vmatprep.mubr.bf16.mxu0 0
      %383 = vmatmul.mubr.bf16.gmra.mrb[0].mxu0 %v274
      %v384 = vpop.f32.mrb[0].mxu0
      %v385 = vadd.f32 %v197, %v384
      %v386 = vpop.f32.mrb[0].mxu0
      %v387 = vpop.f32.mrb[0].mxu0
      %v388 = vadd.f32 %v197, %v387
      %v389 = vpop.f32.mrb[0].mxu0
      %390 = vmatprep.mubr.bf16.mxu0 0
      %391 = vmatmul.mubr.bf16.gmra.mrb[0].mxu0 %v277
      %v392 = vpop.f32.mrb[0].mxu0
      %v393 = vadd.f32 %v197, %v392
      %v394 = vpop.f32.mrb[0].mxu0
      %v395 = vpop.f32.mrb[0].mxu0
      %v396 = vadd.f32 %v197, %v395
      %v397 = vpop.f32.mrb[0].mxu0
      %398 = vdwg.mxu0
      %vm399 = vcmp.gt.f32.partialorder %v321, 0.0
      %vm400 = vcmp.gt.f32.partialorder %v324, 0.0
      %vm401 = vcmp.gt.f32.partialorder %v329, 0.0
      %vm402 = vcmp.gt.f32.partialorder %v332, 0.0
      %vm403 = vcmp.gt.f32.partialorder %v337, 0.0
      %vm404 = vcmp.gt.f32.partialorder %v340, 0.0
      %vm405 = vcmp.gt.f32.partialorder %v345, 0.0
      %vm406 = vcmp.gt.f32.partialorder %v348, 0.0
      %vm407 = vcmp.gt.f32.partialorder %v353, 0.0
      %vm408 = vcmp.gt.f32.partialorder %v356, 0.0
      %vm409 = vcmp.gt.f32.partialorder %v361, 0.0
      %vm410 = vcmp.gt.f32.partialorder %v364, 0.0
      %vm411 = vcmp.gt.f32.partialorder %v369, 0.0
      %vm412 = vcmp.gt.f32.partialorder %v372, 0.0
      %vm413 = vcmp.gt.f32.partialorder %v377, 0.0
      %vm414 = vcmp.gt.f32.partialorder %v380, 0.0
      %vm415 = vcmp.gt.f32.partialorder %v385, 0.0
      %vm416 = vcmp.gt.f32.partialorder %v388, 0.0
      %vm417 = vcmp.gt.f32.partialorder %v393, 0.0
      %vm418 = vcmp.gt.f32.partialorder %v396, 0.0
      %v419 = vmin.f32 %v321, 0.0
      %v420 = vmin.f32 %v324, 0.0
      %v421 = vmin.f32 %v329, 0.0
      %v422 = vmin.f32 %v332, 0.0
      %v423 = vmin.f32 %v337, 0.0
      %v424 = vmin.f32 %v340, 0.0
      %v425 = vmin.f32 %v345, 0.0
      %v426 = vmin.f32 %v348, 0.0
      %v427 = vmin.f32 %v353, 0.0
      %v428 = vmin.f32 %v356, 0.0
      %v429 = vmin.f32 %v361, 0.0
      %v430 = vmin.f32 %v364, 0.0
      %v431 = vmin.f32 %v369, 0.0
      %v432 = vmin.f32 %v372, 0.0
      %v433 = vmin.f32 %v377, 0.0
      %v434 = vmin.f32 %v380, 0.0
      %v435 = vmin.f32 %v385, 0.0
      %v436 = vmin.f32 %v388, 0.0
      %v437 = vmin.f32 %v393, 0.0
      %v438 = vmin.f32 %v396, 0.0
      %v439 = vmul.f32 %v419, 1.442695
      %v440 = vpow.pop %v439
      %v441 = vmul.f32 %v420, 1.442695
      %v442 = vpow.pop %v441
      %v443 = vmul.f32 %v421, 1.442695
      %v444 = vpow.pop %v443
      %v445 = vmul.f32 %v422, 1.442695
      %v446 = vpow.pop %v445
      %v447 = vmul.f32 %v423, 1.442695
      %v448 = vpow.pop %v447
      %v449 = vmul.f32 %v424, 1.442695
      %v450 = vpow.pop %v449
      %v451 = vmul.f32 %v425, 1.442695
      %v452 = vpow.pop %v451
      %v453 = vmul.f32 %v426, 1.442695
      %v454 = vpow.pop %v453
      %v455 = vmul.f32 %v427, 1.442695
      %v456 = vpow.pop %v455
      %v457 = vmul.f32 %v428, 1.442695
      %v458 = vpow.pop %v457
      %v459 = vmul.f32 %v429, 1.442695
      %v460 = vpow.pop %v459
      %v461 = vmul.f32 %v430, 1.442695
      %v462 = vpow.pop %v461
      %v463 = vmul.f32 %v431, 1.442695
      %v464 = vpow.pop %v463
      %v465 = vmul.f32 %v432, 1.442695
      %v466 = vpow.pop %v465
      %v467 = vmul.f32 %v433, 1.442695
      %v468 = vpow.pop %v467
      %v469 = vmul.f32 %v434, 1.442695
      %v470 = vpow.pop %v469
      %v471 = vmul.f32 %v435, 1.442695
      %v472 = vpow.pop %v471
      %v473 = vmul.f32 %v436, 1.442695
      %v474 = vpow.pop %v473
      %v475 = vmul.f32 %v437, 1.442695
      %v476 = vpow.pop %v475
      %v477 = vmul.f32 %v438, 1.442695
      %v478 = vpow.pop %v477
      %v479 = vsub.f32 %v440, 1.0
      %v480 = vsub.f32 %v442, 1.0
      %v481 = vsub.f32 %v444, 1.0
      %v482 = vsub.f32 %v446, 1.0
      %v483 = vsub.f32 %v448, 1.0
      %v484 = vsub.f32 %v450, 1.0
      %v485 = vsub.f32 %v452, 1.0
      %v486 = vsub.f32 %v454, 1.0
      %v487 = vsub.f32 %v456, 1.0
      %v488 = vsub.f32 %v458, 1.0
      %v489 = vsub.f32 %v460, 1.0
      %v490 = vsub.f32 %v462, 1.0
      %v491 = vsub.f32 %v464, 1.0
      %v492 = vsub.f32 %v466, 1.0
      %v493 = vsub.f32 %v468, 1.0
      %v494 = vsub.f32 %v470, 1.0
      %v495 = vsub.f32 %v472, 1.0
      %v496 = vsub.f32 %v474, 1.0
      %v497 = vsub.f32 %v476, 1.0
      %v498 = vsub.f32 %v478, 1.0
      %v499 = vsel %vm399, %v321, %v479
      %v500 = vsel %vm400, %v324, %v480
      %v501 = vsel %vm401, %v329, %v481
      %v502 = vsel %vm402, %v332, %v482
      %v503 = vsel %vm403, %v337, %v483
      %v504 = vsel %vm404, %v340, %v484
      %v505 = vsel %vm405, %v345, %v485
      %v506 = vsel %vm406, %v348, %v486
      %v507 = vsel %vm407, %v353, %v487
      %v508 = vsel %vm408, %v356, %v488
      %v509 = vsel %vm409, %v361, %v489
      %v510 = vsel %vm410, %v364, %v490
      %v511 = vsel %vm411, %v369, %v491
      %v512 = vsel %vm412, %v372, %v492
      %v513 = vsel %vm413, %v377, %v493
      %v514 = vsel %vm414, %v380, %v494
      %v515 = vsel %vm415, %v385, %v495
      %v516 = vsel %vm416, %v388, %v496
      %v517 = vsel %vm417, %v393, %v497
      %v518 = vsel %vm418, %v396, %v498
      %vm539 = vcmask 1040384
      %v540 = vrot.slane %v499, 7
      %v541 = vrot.slane %v500, 7
      %v542 = vsel %vm539, %v540, %v541
      %v543 = vrot.slane %v501, 7
      %v544 = vsel %vm539, %v541, %v543
      %v545 = vrot.slane %v502, 7
      %v546 = vsel %vm539, %v543, %v545
      %v547 = vrot.slane %v503, 7
      %v548 = vsel %vm539, %v545, %v547
      %v549 = vrot.slane %v504, 7
      %v550 = vsel %vm539, %v547, %v549
      %v551 = vrot.slane %v505, 7
      %v552 = vsel %vm539, %v549, %v551
      %v553 = vrot.slane %v506, 7
      %v554 = vsel %vm539, %v551, %v553
      %v555 = vrot.slane %v507, 7
      %v556 = vsel %vm539, %v553, %v555
      %v557 = vrot.slane %v508, 7
      %v558 = vsel %vm539, %v555, %v557
      %v559 = vrot.slane %v509, 7
      %v560 = vsel %vm539, %v557, %v559
      %v561 = vrot.slane %v510, 7
      %v562 = vsel %vm539, %v559, %v561
      %v563 = vrot.slane %v511, 7
      %v564 = vsel %vm539, %v561, %v563
      %v565 = vrot.slane %v512, 7
      %v566 = vsel %vm539, %v563, %v565
      %v567 = vrot.slane %v513, 7
      %v568 = vsel %vm539, %v565, %v567
      %v569 = vrot.slane %v514, 7
      %v570 = vsel %vm539, %v567, %v569
      %v571 = vrot.slane %v515, 7
      %v572 = vsel %vm539, %v569, %v571
      %v573 = vrot.slane %v516, 7
      %v574 = vsel %vm539, %v571, %v573
      %v575 = vrot.slane %v517, 7
      %v576 = vsel %vm539, %v573, %v575
      %v577 = vrot.slane %v518, 7
      %v578 = vsel %vm539, %v575, %v577
      %v600 = vsel %vm539, -3.4028235e+38, %v540
      %v601 = vsel %vm539, %v577, -3.4028235e+38
      %vm604 = vcmask 1046528
      %v605 = vrot.slane %v600, 1
      %v606 = vrot.slane %v542, 1
      %v607 = vsel %vm604, %v605, %v606
      %v608 = vrot.slane %v544, 1
      %v609 = vsel %vm604, %v606, %v608
      %v610 = vrot.slane %v546, 1
      %v611 = vsel %vm604, %v608, %v610
      %v612 = vrot.slane %v548, 1
      %v613 = vsel %vm604, %v610, %v612
      %v614 = vrot.slane %v550, 1
      %v615 = vsel %vm604, %v612, %v614
      %v616 = vrot.slane %v552, 1
      %v617 = vsel %vm604, %v614, %v616
      %v618 = vrot.slane %v554, 1
      %v619 = vsel %vm604, %v616, %v618
      %v620 = vrot.slane %v556, 1
      %v621 = vsel %vm604, %v618, %v620
      %v622 = vrot.slane %v558, 1
      %v623 = vsel %vm604, %v620, %v622
      %v624 = vrot.slane %v560, 1
      %v625 = vsel %vm604, %v622, %v624
      %v626 = vrot.slane %v562, 1
      %v627 = vsel %vm604, %v624, %v626
      %v628 = vrot.slane %v564, 1
      %v629 = vsel %vm604, %v626, %v628
      %v630 = vrot.slane %v566, 1
      %v631 = vsel %vm604, %v628, %v630
      %v632 = vrot.slane %v568, 1
      %v633 = vsel %vm604, %v630, %v632
      %v634 = vrot.slane %v570, 1
      %v635 = vsel %vm604, %v632, %v634
      %v636 = vrot.slane %v572, 1
      %v637 = vsel %vm604, %v634, %v636
      %v638 = vrot.slane %v574, 1
      %v639 = vsel %vm604, %v636, %v638
      %v640 = vrot.slane %v576, 1
      %v641 = vsel %vm604, %v638, %v640
      %v642 = vrot.slane %v578, 1
      %v643 = vsel %vm604, %v640, %v642
      %v644 = vrot.slane %v601, 1
      %v645 = vsel %vm604, %v642, %v644
      %v666 = vmax.f32 %v600, %v607
      %v667 = vmax.f32 %v542, %v609
      %v668 = vmax.f32 %v544, %v611
      %v669 = vmax.f32 %v546, %v613
      %v670 = vmax.f32 %v548, %v615
      %v671 = vmax.f32 %v550, %v617
      %v672 = vmax.f32 %v552, %v619
      %v673 = vmax.f32 %v554, %v621
      %v674 = vmax.f32 %v556, %v623
      %v675 = vmax.f32 %v558, %v625
      %v676 = vmax.f32 %v560, %v627
      %v677 = vmax.f32 %v562, %v629
      %v678 = vmax.f32 %v564, %v631
      %v679 = vmax.f32 %v566, %v633
      %v680 = vmax.f32 %v568, %v635
      %v681 = vmax.f32 %v570, %v637
      %v682 = vmax.f32 %v572, %v639
      %v683 = vmax.f32 %v574, %v641
      %v684 = vmax.f32 %v576, %v643
      %v685 = vmax.f32 %v578, %v645
      %vm686 = vcmask 1045504
      %v687 = vrot.slane %v600, 2
      %v688 = vrot.slane %v542, 2
      %v689 = vsel %vm686, %v687, %v688
      %v690 = vrot.slane %v544, 2
      %v691 = vsel %vm686, %v688, %v690
      %v692 = vrot.slane %v546, 2
      %v693 = vsel %vm686, %v690, %v692
      %v694 = vrot.slane %v548, 2
      %v695 = vsel %vm686, %v692, %v694
      %v696 = vrot.slane %v550, 2
      %v697 = vsel %vm686, %v694, %v696
      %v698 = vrot.slane %v552, 2
      %v699 = vsel %vm686, %v696, %v698
      %v700 = vrot.slane %v554, 2
      %v701 = vsel %vm686, %v698, %v700
      %v702 = vrot.slane %v556, 2
      %v703 = vsel %vm686, %v700, %v702
      %v704 = vrot.slane %v558, 2
      %v705 = vsel %vm686, %v702, %v704
      %v706 = vrot.slane %v560, 2
      %v707 = vsel %vm686, %v704, %v706
      %v708 = vrot.slane %v562, 2
      %v709 = vsel %vm686, %v706, %v708
      %v710 = vrot.slane %v564, 2
      %v711 = vsel %vm686, %v708, %v710
      %v712 = vrot.slane %v566, 2
      %v713 = vsel %vm686, %v710, %v712
      %v714 = vrot.slane %v568, 2
      %v715 = vsel %vm686, %v712, %v714
      %v716 = vrot.slane %v570, 2
      %v717 = vsel %vm686, %v714, %v716
      %v718 = vrot.slane %v572, 2
      %v719 = vsel %vm686, %v716, %v718
      %v720 = vrot.slane %v574, 2
      %v721 = vsel %vm686, %v718, %v720
      %v722 = vrot.slane %v576, 2
      %v723 = vsel %vm686, %v720, %v722
      %v724 = vrot.slane %v578, 2
      %v725 = vsel %vm686, %v722, %v724
      %v726 = vrot.slane %v601, 2
      %v727 = vsel %vm686, %v724, %v726
      %v748 = vmax.f32 %v666, %v689
      %v749 = vmax.f32 %v667, %v691
      %v750 = vmax.f32 %v668, %v693
      %v751 = vmax.f32 %v669, %v695
      %v752 = vmax.f32 %v670, %v697
      %v753 = vmax.f32 %v671, %v699
      %v754 = vmax.f32 %v672, %v701
      %v755 = vmax.f32 %v673, %v703
      %v756 = vmax.f32 %v674, %v705
      %v757 = vmax.f32 %v675, %v707
      %v758 = vmax.f32 %v676, %v709
      %v759 = vmax.f32 %v677, %v711
      %v760 = vmax.f32 %v678, %v713
      %v761 = vmax.f32 %v679, %v715
      %v762 = vmax.f32 %v680, %v717
      %v763 = vmax.f32 %v681, %v719
      %v764 = vmax.f32 %v682, %v721
      %v765 = vmax.f32 %v683, %v723
      %v766 = vmax.f32 %v684, %v725
      %v767 = vmax.f32 %v685, %v727
      %vm768 = vcmask 261120
      %769 = vst.msk [vmem:[#allocation2] sm:$0xff] %vm768, %v748
      %770 = vst.msk [vmem:[#allocation2 + $0x8] sm:$0xff] %vm768, %v749
      %771 = vst.msk [vmem:[#allocation2 + $0x10] sm:$0xff] %vm768, %v750
      %772 = vst.msk [vmem:[#allocation2 + $0x18] sm:$0xff] %vm768, %v751
      %773 = vst.msk [vmem:[#allocation2 + $0x20] sm:$0xff] %vm768, %v752
      %774 = vst.msk [vmem:[#allocation2 + $0x28] sm:$0xff] %vm768, %v753
      %775 = vst.msk [vmem:[#allocation2 + $0x30] sm:$0xff] %vm768, %v754
      %776 = vst.msk [vmem:[#allocation2 + $0x38] sm:$0xff] %vm768, %v755
      %777 = vst.msk [vmem:[#allocation2 + $0x40] sm:$0xff] %vm768, %v756
      %778 = vst.msk [vmem:[#allocation2 + $0x48] sm:$0xff] %vm768, %v757
      %779 = vst.msk [vmem:[#allocation2 + $0x50] sm:$0xff] %vm768, %v758
      %780 = vst.msk [vmem:[#allocation2 + $0x58] sm:$0xff] %vm768, %v759
      %781 = vst.msk [vmem:[#allocation2 + $0x60] sm:$0xff] %vm768, %v760
      %782 = vst.msk [vmem:[#allocation2 + $0x68] sm:$0xff] %vm768, %v761
      %783 = vst.msk [vmem:[#allocation2 + $0x70] sm:$0xff] %vm768, %v762
      %784 = vst.msk [vmem:[#allocation2 + $0x78] sm:$0xff] %vm768, %v763
      %785 = vst.msk [vmem:[#allocation2 + $0x80] sm:$0xff] %vm768, %v764
      %786 = vst.msk [vmem:[#allocation2 + $0x88] sm:$0xff] %vm768, %v765
      %787 = vst.msk [vmem:[#allocation2 + $0x90] sm:$0xff] %vm768, %v766
      %788 = vst.msk [vmem:[#allocation2 + $0x98] sm:$0xff] %vm768, %v767
      %v789 = vld [vmem:[#allocation2] ss:$2 sm:$0xff]
      %s790 = scalar_lea.vmem [#allocation2], 16
      %v791 = vld [vmem:[%s790] ss:$2 sm:$0xff]
      %s792 = scalar_lea.vmem [#allocation2], 32
      %v793 = vld [vmem:[%s792] ss:$2 sm:$0xff]
      %s794 = scalar_lea.vmem [#allocation2], 48
      %v795 = vld [vmem:[%s794] ss:$2 sm:$0xff]
      %s796 = scalar_lea.vmem [#allocation2], 64
      %v797 = vld [vmem:[%s796] ss:$2 sm:$0xff]
      %s798 = scalar_lea.vmem [#allocation2], 80
      %v799 = vld [vmem:[%s798] ss:$2 sm:$0xff]
      %s800 = scalar_lea.vmem [#allocation2], 96
      %v801 = vld [vmem:[%s800] ss:$2 sm:$0xff]
      %s802 = scalar_lea.vmem [#allocation2], 112
      %v803 = vld [vmem:[%s802] ss:$2 sm:$0xff]
      %s804 = scalar_lea.vmem [#allocation2], 128
      %v805 = vld [vmem:[%s804] ss:$2 sm:$0xff]
      %s806 = scalar_lea.vmem [#allocation2], 144
      %v807 = vld [vmem:[%s806] ss:$2 sm:$0xff]
      %v808 = vld [vmem:[%s1 + $0x8] sm:$0xf]
      %v809 = vld [vmem:[%s1 + $0xc] sm:$0xf]
      %v810 = vld [vmem:[%s1 + $0x10] sm:$0xf]
      %v811 = vld [vmem:[%s1 + $0x14] sm:$0xf]
      %v812 = vld [vmem:[%s1 + $0x18] sm:$0xf]
      %v813 = vld [vmem:[%s1 + $0x1c] sm:$0xf]
      %v814 = vld [vmem:[%s1 + $0x20] sm:$0xf]
      %v815 = vld [vmem:[%s1 + $0x24] sm:$0xf]
      %v816 = vld [vmem:[%s1 + $0x28] sm:$0xf]
      %v817 = vld [vmem:[%s1 + $0x2c] sm:$0xf]
      %v818 = vld [vmem:[%s1 + $0x30] sm:$0xf]
      %v819 = vld [vmem:[%s1 + $0x34] sm:$0xf]
      %v820 = vld [vmem:[%s2 + $0x1] sm:$0x1]
      %v821 = vld [vmem:[%s1 + $0x38] sm:$0xf]
      %v822 = vld [vmem:[%s1 + $0x3c] sm:$0xf]
      %v823 = vld [vmem:[%s1 + $0x40] sm:$0xf]
      %v824 = vld [vmem:[%s1 + $0x44] sm:$0xf]
      %v825 = vld [vmem:[%s1 + $0x48] sm:$0xf]
      %v826 = vld [vmem:[%s1 + $0x4c] sm:$0xf]
      %v827 = vld [vmem:[%s1 + $0x50] sm:$0xf]
      %v828 = vld [vmem:[%s1 + $0x54] sm:$0xf]
      %v829 = vld [vmem:[%s1 + $0x58] sm:$0xf]
      %v830 = vld [vmem:[%s1 + $0x5c] sm:$0xf]
      %v831 = vld [vmem:[%s1 + $0x60] sm:$0xf]
      %v832 = vld [vmem:[%s1 + $0x64] sm:$0xf]
      %v833 = vld [vmem:[%s2 + $0x2] sm:$0x1]
      %v834 = vpack.c.bf16 %v791, %v789
      %v835 = vpack.c.bf16 %v795, %v793
      %v836 = vpack.c.bf16 %v799, %v797
      %v837 = vpack.c.bf16 %v803, %v801
      %v838 = vpack.c.bf16 %v807, %v805
      %vm839 = vsmask.f32 256
      %v841 = vshrl.u32 %v834, 16
      %v843 = vrot.slane %v841, 7
      %v844 = vshll.u32 %v834, 16
      %v846 = vor.u32 %v843, %v844
      %v848 = vshrl.u32 %v835, 16
      %v850 = vrot.slane %v848, 7
      %v851 = vshll.u32 %v835, 16
      %v853 = vor.u32 %v850, %v851
      %v854 = vsel %vm839, %v843, %v853
      %v856 = vshrl.u32 %v836, 16
      %v858 = vrot.slane %v856, 7
      %v859 = vshll.u32 %v836, 16
      %v861 = vor.u32 %v858, %v859
      %v862 = vsel %vm839, %v850, %v861
      %v864 = vshrl.u32 %v837, 16
      %v866 = vrot.slane %v864, 7
      %v867 = vshll.u32 %v837, 16
      %v869 = vor.u32 %v866, %v867
      %v870 = vsel %vm839, %v858, %v869
      %v872 = vshrl.u32 %v838, 16
      %v874 = vrot.slane %v872, 7
      %v875 = vshll.u32 %v838, 16
      %v877 = vor.u32 %v874, %v875
      %v878 = vsel %vm839, %v866, %v877
      %vm881 = vcmask 1040384
      %vm882 = vmand %vm881, %vm839
      %v883 = vsel %vm882, 0, %v846
      %v884 = vsel %vm882, %v874, 0
      %vm885 = vsmask.f32 7424
      %v887 = vshrl.u32 %v883, 16
      %v889 = vshll.u32 %v883, 16
      %v891 = vrot.slane %v889, 1
      %v892 = vor.u32 %v887, %v891
      %v894 = vshll.u32 %v854, 16
      %v896 = vrot.slane %v894, 1
      %v897 = vsel %vm885, %v892, %v896
      %v898 = vshrl.u32 %v854, 16
      %v900 = vor.u32 %v898, %v896
      %v902 = vshll.u32 %v862, 16
      %v904 = vrot.slane %v902, 1
      %v905 = vsel %vm885, %v900, %v904
      %v906 = vshrl.u32 %v862, 16
      %v908 = vor.u32 %v906, %v904
      %v910 = vshll.u32 %v870, 16
      %v912 = vrot.slane %v910, 1
      %v913 = vsel %vm885, %v908, %v912
      %v914 = vshrl.u32 %v870, 16
      %v916 = vor.u32 %v914, %v912
      %v918 = vshll.u32 %v878, 16
      %v920 = vrot.slane %v918, 1
      %v921 = vsel %vm885, %v916, %v920
      %v922 = vshrl.u32 %v878, 16
      %v924 = vor.u32 %v922, %v920
      %v926 = vshll.u32 %v884, 16
      %v928 = vrot.slane %v926, 1
      %v929 = vsel %vm885, %v924, %v928
      %930 = vrot.lane.b32.xlu0 %v897, 32
      %v931 = vpop.permute.xlu0 %930
      %932 = vrot.lane.b32.xlu0 %v905, 32
      %v933 = vpop.permute.xlu0 %932
      %934 = vrot.lane.b32.xlu0 %v913, 32
      %v935 = vpop.permute.xlu0 %934
      %936 = vrot.lane.b32.xlu0 %v921, 32
      %v937 = vpop.permute.xlu0 %936
      %938 = vrot.lane.b32.xlu0 %v929, 32
      %v939 = vpop.permute.xlu0 %938
      %vm942 = vcmask 1046528
      %v943 = vrot.slane %v883, 1
      %v944 = vrot.slane %v854, 1
      %v945 = vsel %vm942, %v943, %v944
      %v946 = vrot.slane %v862, 1
      %v947 = vsel %vm942, %v944, %v946
      %v948 = vrot.slane %v870, 1
      %v949 = vsel %vm942, %v946, %v948
      %v950 = vrot.slane %v878, 1
      %v951 = vsel %vm942, %v948, %v950
      %v952 = vrot.slane %v884, 1
      %v953 = vsel %vm942, %v950, %v952
      %954 = vrot.lane.b32.xlu0 %v945, 64
      %v955 = vpop.permute.xlu0 %954
      %956 = vrot.lane.b32.xlu0 %v947, 64
      %v957 = vpop.permute.xlu0 %956
      %958 = vrot.lane.b32.xlu0 %v949, 64
      %v959 = vpop.permute.xlu0 %958
      %960 = vrot.lane.b32.xlu0 %v951, 64
      %v961 = vpop.permute.xlu0 %960
      %962 = vrot.lane.b32.xlu0 %v953, 64
      %v963 = vpop.permute.xlu0 %962
      %v965 = vsel %vm768, %v883, %v931
      %v967 = vsel %vm768, %v854, %v933
      %v969 = vsel %vm768, %v862, %v935
      %v971 = vsel %vm768, %v870, %v937
      %v973 = vsel %vm768, %v878, %v939
      %vm974 = vcmask 523264
      %v976 = vsel %vm974, %v965, %v955
      %v978 = vsel %vm974, %v967, %v957
      %v980 = vsel %vm974, %v969, %v959
      %v982 = vsel %vm974, %v971, %v961
      %v984 = vsel %vm974, %v973, %v963
      %v985 = vlaneseq
      %v986 = vshrl.u32 %v985, 7
      %v987 = vsub.s32 0, %v986
      %v988 = vrot.slane %v820, %v987
      %v1001 = vunpack.c.l.b16 %v808
      %v1002 = vunpack.c.l.b16 %v809
      %v1003 = vunpack.c.l.b16 %v810
      %v1004 = vunpack.c.l.b16 %v811
      %v1005 = vunpack.c.l.b16 %v812
      %v1006 = vunpack.c.l.b16 %v813
      %v1007 = vunpack.c.l.b16 %v814
      %v1008 = vunpack.c.l.b16 %v815
      %v1009 = vunpack.c.l.b16 %v816
      %v1010 = vunpack.c.l.b16 %v817
      %v1011 = vunpack.c.l.b16 %v818
      %v1012 = vunpack.c.l.b16 %v819
      %v1013 = vpack.c.b16 %v1002, %v1001
      %v1014 = vpack.c.b16 %v1004, %v1003
      %v1015 = vpack.c.b16 %v1006, %v1005
      %v1016 = vpack.c.b16 %v1008, %v1007
      %v1017 = vpack.c.b16 %v1010, %v1009
      %v1018 = vpack.c.b16 %v1012, %v1011
      %vm1025 = vcmask 785408
      %v1026 = vsel %vm1025, %v976, 0
      %v1028 = vsel %vm1025, %v978, 0
      %v1030 = vsel %vm1025, %v980, 0
      %v1032 = vsel %vm1025, %v982, 0
      %v1034 = vsel %vm1025, %v984, 0
      %1036 = vmatprep.subr.bf16.mxu0 0
      %1037 = vmatpush1.bf16.msra.mxu0 %v1013
      %1038 = vmatprep.subr.bf16.mxu0 0
      %1039 = vmatpush1.bf16.msra.mxu0 %v1014
      %1040 = vmatprep.subr.bf16.mxu0 0
      %1041 = vmatpush1.bf16.msra.mxu0 %v1015
      %1042 = vmatprep.subr.bf16.mxu0 0
      %1043 = vmatpush1.bf16.msra.mxu0 %v1016
      %1044 = vmatprep.subr.bf16.mxu0 0
      %1045 = vmatpush1.bf16.msra.mxu0 %v1017
      %1046 = vmatprep.subr.bf16.mxu0 0
      %1047 = vmatpush1.bf16.msra.mxu0 %v1018
      %1048 = vmatprep.subr.bf16.mxu0 0
      %1049 = vmatpush1.bf16.msra.mxu0 0
      %1050 = vmatprep.subr.bf16.mxu0 0
      %1051 = vmatpush1.bf16.msra.mxu0 0
      %1052 = vmatprep.subr.bf16.mxu0 0
      %1053 = vmatpush1.bf16.msra.mxu0 0
      %1054 = vmatprep.subr.bf16.mxu0 0
      %1055 = vmatpush1.bf16.msra.mxu0 0
      %1056 = vmatprep.subr.bf16.mxu0 0
      %1057 = vmatpush1.bf16.msra.mxu0 0
      %1058 = vmatprep.subr.bf16.mxu0 0
      %1059 = vmatpush1.bf16.msra.mxu0 0
      %1060 = vmatprep.subr.bf16.mxu0 0
      %1061 = vmatpush1.bf16.msra.mxu0 0
      %1062 = vmatprep.subr.bf16.mxu0 0
      %1063 = vmatpush1.bf16.msra.mxu0 0
      %1064 = vmatprep.subr.bf16.mxu0 0
      %1065 = vmatpush1.bf16.msra.mxu0 0
      %1066 = vmatprep.subr.bf16.mxu0 0
      %1067 = vmatpush1.bf16.msra.mxu0 0
      %1068 = vmatprep.mubr.bf16.mxu0 0
      %1069 = vmatmul.mubr.bf16.gmra.mrb[0].mxu0 %v1026
      %v1070 = vpop.f32.mrb[0].mxu0
      %v1071 = vadd.f32 %v988, %v1070
      %v1072 = vpop.f32.mrb[0].mxu0
      %v1073 = vpop.f32.mrb[0].mxu0
      %v1074 = vadd.f32 %v988, %v1073
      %v1075 = vpop.f32.mrb[0].mxu0
      %1076 = vmatprep.mubr.bf16.mxu0 0
      %1077 = vmatmul.mubr.bf16.gmra.mrb[0].mxu0 %v1028
      %v1078 = vpop.f32.mrb[0].mxu0
      %v1079 = vadd.f32 %v988, %v1078
      %v1080 = vpop.f32.mrb[0].mxu0
      %v1081 = vpop.f32.mrb[0].mxu0
      %v1082 = vadd.f32 %v988, %v1081
      %v1083 = vpop.f32.mrb[0].mxu0
      %1084 = vmatprep.mubr.bf16.mxu0 0
      %1085 = vmatmul.mubr.bf16.gmra.mrb[0].mxu0 %v1030
      %v1086 = vpop.f32.mrb[0].mxu0
      %v1087 = vadd.f32 %v988, %v1086
      %v1088 = vpop.f32.mrb[0].mxu0
      %v1089 = vpop.f32.mrb[0].mxu0
      %v1090 = vadd.f32 %v988, %v1089
      %v1091 = vpop.f32.mrb[0].mxu0
      %1092 = vmatprep.mubr.bf16.mxu0 0
      %1093 = vmatmul.mubr.bf16.gmra.mrb[0].mxu0 %v1032
      %v1094 = vpop.f32.mrb[0].mxu0
      %v1095 = vadd.f32 %v988, %v1094
      %v1096 = vpop.f32.mrb[0].mxu0
      %v1097 = vpop.f32.mrb[0].mxu0
      %v1098 = vadd.f32 %v988, %v1097
      %v1099 = vpop.f32.mrb[0].mxu0
      %1100 = vmatprep.mubr.bf16.mxu0 0
      %1101 = vmatmul.mubr.bf16.gmra.mrb[0].mxu0 %v1034
      %v1102 = vpop.f32.mrb[0].mxu0
      %v1103 = vadd.f32 %v988, %v1102
      %v1104 = vpop.f32.mrb[0].mxu0
      %v1105 = vpop.f32.mrb[0].mxu0
      %v1106 = vadd.f32 %v988, %v1105
      %v1107 = vpop.f32.mrb[0].mxu0
      %1108 = vdwg.mxu0
      %vm1109 = vcmp.gt.f32.partialorder %v1071, 0.0
      %vm1110 = vcmp.gt.f32.partialorder %v1074, 0.0
      %vm1111 = vcmp.gt.f32.partialorder %v1079, 0.0
      %vm1112 = vcmp.gt.f32.partialorder %v1082, 0.0
      %vm1113 = vcmp.gt.f32.partialorder %v1087, 0.0
      %vm1114 = vcmp.gt.f32.partialorder %v1090, 0.0
      %vm1115 = vcmp.gt.f32.partialorder %v1095, 0.0
      %vm1116 = vcmp.gt.f32.partialorder %v1098, 0.0
      %vm1117 = vcmp.gt.f32.partialorder %v1103, 0.0
      %vm1118 = vcmp.gt.f32.partialorder %v1106, 0.0
      %v1119 = vmin.f32 %v1071, 0.0
      %v1120 = vmin.f32 %v1074, 0.0
      %v1121 = vmin.f32 %v1079, 0.0
      %v1122 = vmin.f32 %v1082, 0.0
      %v1123 = vmin.f32 %v1087, 0.0
      %v1124 = vmin.f32 %v1090, 0.0
      %v1125 = vmin.f32 %v1095, 0.0
      %v1126 = vmin.f32 %v1098, 0.0
      %v1127 = vmin.f32 %v1103, 0.0
      %v1128 = vmin.f32 %v1106, 0.0
      %v1129 = vmul.f32 %v1119, 1.442695
      %v1130 = vpow.pop %v1129
      %v1131 = vmul.f32 %v1120, 1.442695
      %v1132 = vpow.pop %v1131
      %v1133 = vmul.f32 %v1121, 1.442695
      %v1134 = vpow.pop %v1133
      %v1135 = vmul.f32 %v1122, 1.442695
      %v1136 = vpow.pop %v1135
      %v1137 = vmul.f32 %v1123, 1.442695
      %v1138 = vpow.pop %v1137
      %v1139 = vmul.f32 %v1124, 1.442695
      %v1140 = vpow.pop %v1139
      %v1141 = vmul.f32 %v1125, 1.442695
      %v1142 = vpow.pop %v1141
      %v1143 = vmul.f32 %v1126, 1.442695
      %v1144 = vpow.pop %v1143
      %v1145 = vmul.f32 %v1127, 1.442695
      %v1146 = vpow.pop %v1145
      %v1147 = vmul.f32 %v1128, 1.442695
      %v1148 = vpow.pop %v1147
      %v1149 = vsub.f32 %v1130, 1.0
      %v1150 = vsub.f32 %v1132, 1.0
      %v1151 = vsub.f32 %v1134, 1.0
      %v1152 = vsub.f32 %v1136, 1.0
      %v1153 = vsub.f32 %v1138, 1.0
      %v1154 = vsub.f32 %v1140, 1.0
      %v1155 = vsub.f32 %v1142, 1.0
      %v1156 = vsub.f32 %v1144, 1.0
      %v1157 = vsub.f32 %v1146, 1.0
      %v1158 = vsub.f32 %v1148, 1.0
      %v1159 = vsel %vm1109, %v1071, %v1149
      %v1160 = vsel %vm1110, %v1074, %v1150
      %v1161 = vsel %vm1111, %v1079, %v1151
      %v1162 = vsel %vm1112, %v1082, %v1152
      %v1163 = vsel %vm1113, %v1087, %v1153
      %v1164 = vsel %vm1114, %v1090, %v1154
      %v1165 = vsel %vm1115, %v1095, %v1155
      %v1166 = vsel %vm1116, %v1098, %v1156
      %v1167 = vsel %vm1117, %v1103, %v1157
      %v1168 = vsel %vm1118, %v1106, %v1158
      %v1169 = vpack.c.bf16 %v1160, %v1159
      %v1170 = vpack.c.bf16 %v1162, %v1161
      %v1171 = vpack.c.bf16 %v1164, %v1163
      %v1172 = vpack.c.bf16 %v1166, %v1165
      %v1173 = vpack.c.bf16 %v1168, %v1167
      %v1175 = vshrl.u32 %v1169, 16
      %v1177 = vrot.slane %v1175, 7
      %v1178 = vshll.u32 %v1169, 16
      %v1180 = vor.u32 %v1177, %v1178
      %v1182 = vshrl.u32 %v1170, 16
      %v1184 = vrot.slane %v1182, 7
      %v1185 = vshll.u32 %v1170, 16
      %v1187 = vor.u32 %v1184, %v1185
      %v1188 = vsel %vm839, %v1177, %v1187
      %v1190 = vshrl.u32 %v1171, 16
      %v1192 = vrot.slane %v1190, 7
      %v1193 = vshll.u32 %v1171, 16
      %v1195 = vor.u32 %v1192, %v1193
      %v1196 = vsel %vm839, %v1184, %v1195
      %v1198 = vshrl.u32 %v1172, 16
      %v1200 = vrot.slane %v1198, 7
      %v1201 = vshll.u32 %v1172, 16
      %v1203 = vor.u32 %v1200, %v1201
      %v1204 = vsel %vm839, %v1192, %v1203
      %v1206 = vshrl.u32 %v1173, 16
      %v1208 = vrot.slane %v1206, 7
      %v1209 = vshll.u32 %v1173, 16
      %v1211 = vor.u32 %v1208, %v1209
      %v1212 = vsel %vm839, %v1200, %v1211
      %v1215 = vsel %vm882, 0, %v1180
      %v1216 = vsel %vm882, %v1208, 0
      %v1218 = vshrl.u32 %v1215, 16
      %v1220 = vshll.u32 %v1215, 16
      %v1222 = vrot.slane %v1220, 1
      %v1223 = vor.u32 %v1218, %v1222
      %v1225 = vshll.u32 %v1188, 16
      %v1227 = vrot.slane %v1225, 1
      %v1228 = vsel %vm885, %v1223, %v1227
      %v1229 = vshrl.u32 %v1188, 16
      %v1231 = vor.u32 %v1229, %v1227
      %v1233 = vshll.u32 %v1196, 16
      %v1235 = vrot.slane %v1233, 1
      %v1236 = vsel %vm885, %v1231, %v1235
      %v1237 = vshrl.u32 %v1196, 16
      %v1239 = vor.u32 %v1237, %v1235
      %v1241 = vshll.u32 %v1204, 16
      %v1243 = vrot.slane %v1241, 1
      %v1244 = vsel %vm885, %v1239, %v1243
      %v1245 = vshrl.u32 %v1204, 16
      %v1247 = vor.u32 %v1245, %v1243
      %v1249 = vshll.u32 %v1212, 16
      %v1251 = vrot.slane %v1249, 1
      %v1252 = vsel %vm885, %v1247, %v1251
      %v1253 = vshrl.u32 %v1212, 16
      %v1255 = vor.u32 %v1253, %v1251
      %v1257 = vshll.u32 %v1216, 16
      %v1259 = vrot.slane %v1257, 1
      %v1260 = vsel %vm885, %v1255, %v1259
      %1261 = vrot.lane.b32.xlu0 %v1228, 32
      %v1262 = vpop.permute.xlu0 %1261
      %1263 = vrot.lane.b32.xlu0 %v1236, 32
      %v1264 = vpop.permute.xlu0 %1263
      %1265 = vrot.lane.b32.xlu0 %v1244, 32
      %v1266 = vpop.permute.xlu0 %1265
      %1267 = vrot.lane.b32.xlu0 %v1252, 32
      %v1268 = vpop.permute.xlu0 %1267
      %1269 = vrot.lane.b32.xlu0 %v1260, 32
      %v1270 = vpop.permute.xlu0 %1269
      %v1273 = vrot.slane %v1215, 1
      %v1274 = vrot.slane %v1188, 1
      %v1275 = vsel %vm942, %v1273, %v1274
      %v1276 = vrot.slane %v1196, 1
      %v1277 = vsel %vm942, %v1274, %v1276
      %v1278 = vrot.slane %v1204, 1
      %v1279 = vsel %vm942, %v1276, %v1278
      %v1280 = vrot.slane %v1212, 1
      %v1281 = vsel %vm942, %v1278, %v1280
      %v1282 = vrot.slane %v1216, 1
      %v1283 = vsel %vm942, %v1280, %v1282
      %1284 = vrot.lane.b32.xlu0 %v1275, 64
      %v1285 = vpop.permute.xlu0 %1284
      %1286 = vrot.lane.b32.xlu0 %v1277, 64
      %v1287 = vpop.permute.xlu0 %1286
      %1288 = vrot.lane.b32.xlu0 %v1279, 64
      %v1289 = vpop.permute.xlu0 %1288
      %1290 = vrot.lane.b32.xlu0 %v1281, 64
      %v1291 = vpop.permute.xlu0 %1290
      %1292 = vrot.lane.b32.xlu0 %v1283, 64
      %v1293 = vpop.permute.xlu0 %1292
      %v1295 = vsel %vm768, %v1215, %v1262
      %v1297 = vsel %vm768, %v1188, %v1264
      %v1299 = vsel %vm768, %v1196, %v1266
      %v1301 = vsel %vm768, %v1204, %v1268
      %v1303 = vsel %vm768, %v1212, %v1270
      %v1305 = vsel %vm974, %v1295, %v1285
      %v1307 = vsel %vm974, %v1297, %v1287
      %v1309 = vsel %vm974, %v1299, %v1289
      %v1311 = vsel %vm974, %v1301, %v1291
      %v1313 = vsel %vm974, %v1303, %v1293
      %v1314 = vlaneseq
      %v1315 = vshrl.u32 %v1314, 7
      %v1316 = vsub.s32 0, %v1315
      %v1317 = vrot.slane %v833, %v1316
      %v1330 = vunpack.c.l.b16 %v821
      %v1331 = vunpack.c.l.b16 %v822
      %v1332 = vunpack.c.l.b16 %v823
      %v1333 = vunpack.c.l.b16 %v824
      %v1334 = vunpack.c.l.b16 %v825
      %v1335 = vunpack.c.l.b16 %v826
      %v1336 = vunpack.c.l.b16 %v827
      %v1337 = vunpack.c.l.b16 %v828
      %v1338 = vunpack.c.l.b16 %v829
      %v1339 = vunpack.c.l.b16 %v830
      %v1340 = vunpack.c.l.b16 %v831
      %v1341 = vunpack.c.l.b16 %v832
      %v1342 = vpack.c.b16 %v1331, %v1330
      %v1343 = vpack.c.b16 %v1333, %v1332
      %v1344 = vpack.c.b16 %v1335, %v1334
      %v1345 = vpack.c.b16 %v1337, %v1336
      %v1346 = vpack.c.b16 %v1339, %v1338
      %v1347 = vpack.c.b16 %v1341, %v1340
      %v1354 = vsel %vm1025, %v1305, 0
      %v1356 = vsel %vm1025, %v1307, 0
      %v1358 = vsel %vm1025, %v1309, 0
      %v1360 = vsel %vm1025, %v1311, 0
      %v1362 = vsel %vm1025, %v1313, 0
      %1364 = vmatprep.subr.bf16.mxu0 0
      %1365 = vmatpush1.bf16.msra.mxu0 %v1342
      %1366 = vmatprep.subr.bf16.mxu0 0
      %1367 = vmatpush1.bf16.msra.mxu0 %v1343
      %1368 = vmatprep.subr.bf16.mxu0 0
      %1369 = vmatpush1.bf16.msra.mxu0 %v1344
      %1370 = vmatprep.subr.bf16.mxu0 0
      %1371 = vmatpush1.bf16.msra.mxu0 %v1345
      %1372 = vmatprep.subr.bf16.mxu0 0
      %1373 = vmatpush1.bf16.msra.mxu0 %v1346
      %1374 = vmatprep.subr.bf16.mxu0 0
      %1375 = vmatpush1.bf16.msra.mxu0 %v1347
      %1376 = vmatprep.subr.bf16.mxu0 0
      %1377 = vmatpush1.bf16.msra.mxu0 0
      %1378 = vmatprep.subr.bf16.mxu0 0
      %1379 = vmatpush1.bf16.msra.mxu0 0
      %1380 = vmatprep.subr.bf16.mxu0 0
      %1381 = vmatpush1.bf16.msra.mxu0 0
      %1382 = vmatprep.subr.bf16.mxu0 0
      %1383 = vmatpush1.bf16.msra.mxu0 0
      %1384 = vmatprep.subr.bf16.mxu0 0
      %1385 = vmatpush1.bf16.msra.mxu0 0
      %1386 = vmatprep.subr.bf16.mxu0 0
      %1387 = vmatpush1.bf16.msra.mxu0 0
      %1388 = vmatprep.subr.bf16.mxu0 0
      %1389 = vmatpush1.bf16.msra.mxu0 0
      %1390 = vmatprep.subr.bf16.mxu0 0
      %1391 = vmatpush1.bf16.msra.mxu0 0
      %1392 = vmatprep.subr.bf16.mxu0 0
      %1393 = vmatpush1.bf16.msra.mxu0 0
      %1394 = vmatprep.subr.bf16.mxu0 0
      %1395 = vmatpush1.bf16.msra.mxu0 0
      %1396 = vmatprep.mubr.bf16.mxu0 0
      %1397 = vmatmul.mubr.bf16.gmra.mrb[0].mxu0 %v1354
      %v1398 = vpop.f32.mrb[0].mxu0
      %v1399 = vadd.f32 %v1317, %v1398
      %v1400 = vpop.f32.mrb[0].mxu0
      %v1401 = vpop.f32.mrb[0].mxu0
      %v1402 = vadd.f32 %v1317, %v1401
      %v1403 = vpop.f32.mrb[0].mxu0
      %1404 = vmatprep.mubr.bf16.mxu0 0
      %1405 = vmatmul.mubr.bf16.gmra.mrb[0].mxu0 %v1356
      %v1406 = vpop.f32.mrb[0].mxu0
      %v1407 = vadd.f32 %v1317, %v1406
      %v1408 = vpop.f32.mrb[0].mxu0
      %v1409 = vpop.f32.mrb[0].mxu0
      %v1410 = vadd.f32 %v1317, %v1409
      %v1411 = vpop.f32.mrb[0].mxu0
      %1412 = vmatprep.mubr.bf16.mxu0 0
      %1413 = vmatmul.mubr.bf16.gmra.mrb[0].mxu0 %v1358
      %v1414 = vpop.f32.mrb[0].mxu0
      %v1415 = vadd.f32 %v1317, %v1414
      %v1416 = vpop.f32.mrb[0].mxu0
      %v1417 = vpop.f32.mrb[0].mxu0
      %v1418 = vadd.f32 %v1317, %v1417
      %v1419 = vpop.f32.mrb[0].mxu0
      %1420 = vmatprep.mubr.bf16.mxu0 0
      %1421 = vmatmul.mubr.bf16.gmra.mrb[0].mxu0 %v1360
      %v1422 = vpop.f32.mrb[0].mxu0
      %v1423 = vadd.f32 %v1317, %v1422
      %v1424 = vpop.f32.mrb[0].mxu0
      %v1425 = vpop.f32.mrb[0].mxu0
      %v1426 = vadd.f32 %v1317, %v1425
      %v1427 = vpop.f32.mrb[0].mxu0
      %1428 = vmatprep.mubr.bf16.mxu0 0
      %1429 = vmatmul.mubr.bf16.gmra.mrb[0].mxu0 %v1362
      %v1430 = vpop.f32.mrb[0].mxu0
      %v1431 = vadd.f32 %v1317, %v1430
      %v1432 = vpop.f32.mrb[0].mxu0
      %v1433 = vpop.f32.mrb[0].mxu0
      %v1434 = vadd.f32 %v1317, %v1433
      %v1435 = vpop.f32.mrb[0].mxu0
      %1436 = vdwg.mxu0
      %v1437 = vadd.f32 %v1399, %v789
      %v1438 = vadd.f32 %v1402, %v791
      %v1439 = vadd.f32 %v1407, %v793
      %v1440 = vadd.f32 %v1410, %v795
      %v1441 = vadd.f32 %v1415, %v797
      %v1442 = vadd.f32 %v1418, %v799
      %v1443 = vadd.f32 %v1423, %v801
      %v1444 = vadd.f32 %v1426, %v803
      %v1445 = vadd.f32 %v1431, %v805
      %v1446 = vadd.f32 %v1434, %v807
      %vm1447 = vcmp.gt.f32.partialorder %v1437, 0.0
      %vm1448 = vcmp.gt.f32.partialorder %v1438, 0.0
      %vm1449 = vcmp.gt.f32.partialorder %v1439, 0.0
      %vm1450 = vcmp.gt.f32.partialorder %v1440, 0.0
      %vm1451 = vcmp.gt.f32.partialorder %v1441, 0.0
      %vm1452 = vcmp.gt.f32.partialorder %v1442, 0.0
      %vm1453 = vcmp.gt.f32.partialorder %v1443, 0.0
      %vm1454 = vcmp.gt.f32.partialorder %v1444, 0.0
      %vm1455 = vcmp.gt.f32.partialorder %v1445, 0.0
      %vm1456 = vcmp.gt.f32.partialorder %v1446, 0.0
      %v1457 = vmin.f32 %v1437, 0.0
      %v1458 = vmin.f32 %v1438, 0.0
      %v1459 = vmin.f32 %v1439, 0.0
      %v1460 = vmin.f32 %v1440, 0.0
      %v1461 = vmin.f32 %v1441, 0.0
      %v1462 = vmin.f32 %v1442, 0.0
      %v1463 = vmin.f32 %v1443, 0.0
      %v1464 = vmin.f32 %v1444, 0.0
      %v1465 = vmin.f32 %v1445, 0.0
      %v1466 = vmin.f32 %v1446, 0.0
      %v1467 = vmul.f32 %v1457, 1.442695
      %v1468 = vpow.pop %v1467
      %v1469 = vmul.f32 %v1458, 1.442695
      %v1470 = vpow.pop %v1469
      %v1471 = vmul.f32 %v1459, 1.442695
      %v1472 = vpow.pop %v1471
      %v1473 = vmul.f32 %v1460, 1.442695
      %v1474 = vpow.pop %v1473
      %v1475 = vmul.f32 %v1461, 1.442695
      %v1476 = vpow.pop %v1475
      %v1477 = vmul.f32 %v1462, 1.442695
      %v1478 = vpow.pop %v1477
      %v1479 = vmul.f32 %v1463, 1.442695
      %v1480 = vpow.pop %v1479
      %v1481 = vmul.f32 %v1464, 1.442695
      %v1482 = vpow.pop %v1481
      %v1483 = vmul.f32 %v1465, 1.442695
      %v1484 = vpow.pop %v1483
      %v1485 = vmul.f32 %v1466, 1.442695
      %v1486 = vpow.pop %v1485
      %v1487 = vsub.f32 %v1468, 1.0
      %v1488 = vsub.f32 %v1470, 1.0
      %v1489 = vsub.f32 %v1472, 1.0
      %v1490 = vsub.f32 %v1474, 1.0
      %v1491 = vsub.f32 %v1476, 1.0
      %v1492 = vsub.f32 %v1478, 1.0
      %v1493 = vsub.f32 %v1480, 1.0
      %v1494 = vsub.f32 %v1482, 1.0
      %v1495 = vsub.f32 %v1484, 1.0
      %v1496 = vsub.f32 %v1486, 1.0
      %v1497 = vsel %vm1447, %v1437, %v1487
      %v1498 = vsel %vm1448, %v1438, %v1488
      %v1499 = vsel %vm1449, %v1439, %v1489
      %v1500 = vsel %vm1450, %v1440, %v1490
      %v1501 = vsel %vm1451, %v1441, %v1491
      %v1502 = vsel %vm1452, %v1442, %v1492
      %v1503 = vsel %vm1453, %v1443, %v1493
      %v1504 = vsel %vm1454, %v1444, %v1494
      %v1505 = vsel %vm1455, %v1445, %v1495
      %v1506 = vsel %vm1456, %v1446, %v1496
      %v1507 = vld [vmem:[%s1 + $0x68] sm:$0xf]
      %v1508 = vld [vmem:[%s1 + $0x6c] sm:$0xf]
      %v1509 = vld [vmem:[%s1 + $0x70] sm:$0xf]
      %v1510 = vld [vmem:[%s1 + $0x74] sm:$0xf]
      %v1511 = vld [vmem:[%s1 + $0x78] sm:$0xf]
      %v1512 = vld [vmem:[%s1 + $0x7c] sm:$0xf]
      %v1513 = vld [vmem:[%s1 + $0x80] sm:$0xf]
      %v1514 = vld [vmem:[%s1 + $0x84] sm:$0xf]
      %v1515 = vld [vmem:[%s1 + $0x88] sm:$0xf]
      %v1516 = vld [vmem:[%s1 + $0x8c] sm:$0xf]
      %v1517 = vld [vmem:[%s1 + $0x90] sm:$0xf]
      %v1518 = vld [vmem:[%s1 + $0x94] sm:$0xf]
      %v1519 = vld [vmem:[%s2 + $0x3] sm:$0x1]
      %v1520 = vld [vmem:[%s1 + $0x98] sm:$0xf]
      %v1521 = vld [vmem:[%s1 + $0x9c] sm:$0xf]
      %v1522 = vld [vmem:[%s1 + $0xa0] sm:$0xf]
      %v1523 = vld [vmem:[%s1 + $0xa4] sm:$0xf]
      %v1524 = vld [vmem:[%s1 + $0xa8] sm:$0xf]
      %v1525 = vld [vmem:[%s1 + $0xac] sm:$0xf]
      %v1526 = vld [vmem:[%s1 + $0xb0] sm:$0xf]
      %v1527 = vld [vmem:[%s1 + $0xb4] sm:$0xf]
      %v1528 = vld [vmem:[%s1 + $0xb8] sm:$0xf]
      %v1529 = vld [vmem:[%s1 + $0xbc] sm:$0xf]
      %v1530 = vld [vmem:[%s1 + $0xc0] sm:$0xf]
      %v1531 = vld [vmem:[%s1 + $0xc4] sm:$0xf]
      %v1532 = vld [vmem:[%s2 + $0x4] sm:$0x1]
      %v1533 = vpack.c.bf16 %v1498, %v1497
      %v1534 = vpack.c.bf16 %v1500, %v1499
      %v1535 = vpack.c.bf16 %v1502, %v1501
      %v1536 = vpack.c.bf16 %v1504, %v1503
      %v1537 = vpack.c.bf16 %v1506, %v1505
      %v1539 = vshrl.u32 %v1533, 16
      %v1541 = vrot.slane %v1539, 7
      %v1542 = vshll.u32 %v1533, 16
      %v1544 = vor.u32 %v1541, %v1542
      %v1546 = vshrl.u32 %v1534, 16
      %v1548 = vrot.slane %v1546, 7
      %v1549 = vshll.u32 %v1534, 16
      %v1551 = vor.u32 %v1548, %v1549
      %v1552 = vsel %vm839, %v1541, %v1551
      %v1554 = vshrl.u32 %v1535, 16
      %v1556 = vrot.slane %v1554, 7
      %v1557 = vshll.u32 %v1535, 16
      %v1559 = vor.u32 %v1556, %v1557
      %v1560 = vsel %vm839, %v1548, %v1559
      %v1562 = vshrl.u32 %v1536, 16
      %v1564 = vrot.slane %v1562, 7
      %v1565 = vshll.u32 %v1536, 16
      %v1567 = vor.u32 %v1564, %v1565
      %v1568 = vsel %vm839, %v1556, %v1567
      %v1570 = vshrl.u32 %v1537, 16
      %v1572 = vrot.slane %v1570, 7
      %v1573 = vshll.u32 %v1537, 16
      %v1575 = vor.u32 %v1572, %v1573
      %v1576 = vsel %vm839, %v1564, %v1575
      %v1579 = vsel %vm882, 0, %v1544
      %v1580 = vsel %vm882, %v1572, 0
      %v1582 = vshrl.u32 %v1579, 16
      %v1584 = vshll.u32 %v1579, 16
      %v1586 = vrot.slane %v1584, 1
      %v1587 = vor.u32 %v1582, %v1586
      %v1589 = vshll.u32 %v1552, 16
      %v1591 = vrot.slane %v1589, 1
      %v1592 = vsel %vm885, %v1587, %v1591
      %v1593 = vshrl.u32 %v1552, 16
      %v1595 = vor.u32 %v1593, %v1591
      %v1597 = vshll.u32 %v1560, 16
      %v1599 = vrot.slane %v1597, 1
      %v1600 = vsel %vm885, %v1595, %v1599
      %v1601 = vshrl.u32 %v1560, 16
      %v1603 = vor.u32 %v1601, %v1599
      %v1605 = vshll.u32 %v1568, 16
      %v1607 = vrot.slane %v1605, 1
      %v1608 = vsel %vm885, %v1603, %v1607
      %v1609 = vshrl.u32 %v1568, 16
      %v1611 = vor.u32 %v1609, %v1607
      %v1613 = vshll.u32 %v1576, 16
      %v1615 = vrot.slane %v1613, 1
      %v1616 = vsel %vm885, %v1611, %v1615
      %v1617 = vshrl.u32 %v1576, 16
      %v1619 = vor.u32 %v1617, %v1615
      %v1621 = vshll.u32 %v1580, 16
      %v1623 = vrot.slane %v1621, 1
      %v1624 = vsel %vm885, %v1619, %v1623
      %1625 = vrot.lane.b32.xlu0 %v1592, 32
      %v1626 = vpop.permute.xlu0 %1625
      %1627 = vrot.lane.b32.xlu0 %v1600, 32
      %v1628 = vpop.permute.xlu0 %1627
      %1629 = vrot.lane.b32.xlu0 %v1608, 32
      %v1630 = vpop.permute.xlu0 %1629
      %1631 = vrot.lane.b32.xlu0 %v1616, 32
      %v1632 = vpop.permute.xlu0 %1631
      %1633 = vrot.lane.b32.xlu0 %v1624, 32
      %v1634 = vpop.permute.xlu0 %1633
      %v1637 = vrot.slane %v1579, 1
      %v1638 = vrot.slane %v1552, 1
      %v1639 = vsel %vm942, %v1637, %v1638
      %v1640 = vrot.slane %v1560, 1
      %v1641 = vsel %vm942, %v1638, %v1640
      %v1642 = vrot.slane %v1568, 1
      %v1643 = vsel %vm942, %v1640, %v1642
      %v1644 = vrot.slane %v1576, 1
      %v1645 = vsel %vm942, %v1642, %v1644
      %v1646 = vrot.slane %v1580, 1
      %v1647 = vsel %vm942, %v1644, %v1646
      %1648 = vrot.lane.b32.xlu0 %v1639, 64
      %v1649 = vpop.permute.xlu0 %1648
      %1650 = vrot.lane.b32.xlu0 %v1641, 64
      %v1651 = vpop.permute.xlu0 %1650
      %1652 = vrot.lane.b32.xlu0 %v1643, 64
      %v1653 = vpop.permute.xlu0 %1652
      %1654 = vrot.lane.b32.xlu0 %v1645, 64
      %v1655 = vpop.permute.xlu0 %1654
      %1656 = vrot.lane.b32.xlu0 %v1647, 64
      %v1657 = vpop.permute.xlu0 %1656
      %v1659 = vsel %vm768, %v1579, %v1626
      %v1661 = vsel %vm768, %v1552, %v1628
      %v1663 = vsel %vm768, %v1560, %v1630
      %v1665 = vsel %vm768, %v1568, %v1632
      %v1667 = vsel %vm768, %v1576, %v1634
      %v1669 = vsel %vm974, %v1659, %v1649
      %v1671 = vsel %vm974, %v1661, %v1651
      %v1673 = vsel %vm974, %v1663, %v1653
      %v1675 = vsel %vm974, %v1665, %v1655
      %v1677 = vsel %vm974, %v1667, %v1657
      %v1678 = vlaneseq
      %v1679 = vshrl.u32 %v1678, 7
      %v1680 = vsub.s32 0, %v1679
      %v1681 = vrot.slane %v1519, %v1680
      %v1694 = vunpack.c.l.b16 %v1507
      %v1695 = vunpack.c.l.b16 %v1508
      %v1696 = vunpack.c.l.b16 %v1509
      %v1697 = vunpack.c.l.b16 %v1510
      %v1698 = vunpack.c.l.b16 %v1511
      %v1699 = vunpack.c.l.b16 %v1512
      %v1700 = vunpack.c.l.b16 %v1513
      %v1701 = vunpack.c.l.b16 %v1514
      %v1702 = vunpack.c.l.b16 %v1515
      %v1703 = vunpack.c.l.b16 %v1516
      %v1704 = vunpack.c.l.b16 %v1517
      %v1705 = vunpack.c.l.b16 %v1518
      %v1706 = vpack.c.b16 %v1695, %v1694
      %v1707 = vpack.c.b16 %v1697, %v1696
      %v1708 = vpack.c.b16 %v1699, %v1698
      %v1709 = vpack.c.b16 %v1701, %v1700
      %v1710 = vpack.c.b16 %v1703, %v1702
      %v1711 = vpack.c.b16 %v1705, %v1704
      %v1718 = vsel %vm1025, %v1669, 0
      %v1720 = vsel %vm1025, %v1671, 0
      %v1722 = vsel %vm1025, %v1673, 0
      %v1724 = vsel %vm1025, %v1675, 0
      %v1726 = vsel %vm1025, %v1677, 0
      %1728 = vmatprep.subr.bf16.mxu0 0
      %1729 = vmatpush1.bf16.msra.mxu0 %v1706
      %1730 = vmatprep.subr.bf16.mxu0 0
      %1731 = vmatpush1.bf16.msra.mxu0 %v1707
      %1732 = vmatprep.subr.bf16.mxu0 0
      %1733 = vmatpush1.bf16.msra.mxu0 %v1708
      %1734 = vmatprep.subr.bf16.mxu0 0
      %1735 = vmatpush1.bf16.msra.mxu0 %v1709
      %1736 = vmatprep.subr.bf16.mxu0 0
      %1737 = vmatpush1.bf16.msra.mxu0 %v1710
      %1738 = vmatprep.subr.bf16.mxu0 0
      %1739 = vmatpush1.bf16.msra.mxu0 %v1711
      %1740 = vmatprep.subr.bf16.mxu0 0
      %1741 = vmatpush1.bf16.msra.mxu0 0
      %1742 = vmatprep.subr.bf16.mxu0 0
      %1743 = vmatpush1.bf16.msra.mxu0 0
      %1744 = vmatprep.subr.bf16.mxu0 0
      %1745 = vmatpush1.bf16.msra.mxu0 0
      %1746 = vmatprep.subr.bf16.mxu0 0
      %1747 = vmatpush1.bf16.msra.mxu0 0
      %1748 = vmatprep.subr.bf16.mxu0 0
      %1749 = vmatpush1.bf16.msra.mxu0 0
      %1750 = vmatprep.subr.bf16.mxu0 0
      %1751 = vmatpush1.bf16.msra.mxu0 0
      %1752 = vmatprep.subr.bf16.mxu0 0
      %1753 = vmatpush1.bf16.msra.mxu0 0
      %1754 = vmatprep.subr.bf16.mxu0 0
      %1755 = vmatpush1.bf16.msra.mxu0 0
      %1756 = vmatprep.subr.bf16.mxu0 0
      %1757 = vmatpush1.bf16.msra.mxu0 0
      %1758 = vmatprep.subr.bf16.mxu0 0
      %1759 = vmatpush1.bf16.msra.mxu0 0
      %1760 = vmatprep.mubr.bf16.mxu0 0
      %1761 = vmatmul.mubr.bf16.gmra.mrb[0].mxu0 %v1718
      %v1762 = vpop.f32.mrb[0].mxu0
      %v1763 = vadd.f32 %v1681, %v1762
      %v1764 = vpop.f32.mrb[0].mxu0
      %v1765 = vpop.f32.mrb[0].mxu0
      %v1766 = vadd.f32 %v1681, %v1765
      %v1767 = vpop.f32.mrb[0].mxu0
      %1768 = vmatprep.mubr.bf16.mxu0 0
      %1769 = vmatmul.mubr.bf16.gmra.mrb[0].mxu0 %v1720
      %v1770 = vpop.f32.mrb[0].mxu0
      %v1771 = vadd.f32 %v1681, %v1770
      %v1772 = vpop.f32.mrb[0].mxu0
      %v1773 = vpop.f32.mrb[0].mxu0
      %v1774 = vadd.f32 %v1681, %v1773
      %v1775 = vpop.f32.mrb[0].mxu0
      %1776 = vmatprep.mubr.bf16.mxu0 0
      %1777 = vmatmul.mubr.bf16.gmra.mrb[0].mxu0 %v1722
      %v1778 = vpop.f32.mrb[0].mxu0
      %v1779 = vadd.f32 %v1681, %v1778
      %v1780 = vpop.f32.mrb[0].mxu0
      %v1781 = vpop.f32.mrb[0].mxu0
      %v1782 = vadd.f32 %v1681, %v1781
      %v1783 = vpop.f32.mrb[0].mxu0
      %1784 = vmatprep.mubr.bf16.mxu0 0
      %1785 = vmatmul.mubr.bf16.gmra.mrb[0].mxu0 %v1724
      %v1786 = vpop.f32.mrb[0].mxu0
      %v1787 = vadd.f32 %v1681, %v1786
      %v1788 = vpop.f32.mrb[0].mxu0
      %v1789 = vpop.f32.mrb[0].mxu0
      %v1790 = vadd.f32 %v1681, %v1789
      %v1791 = vpop.f32.mrb[0].mxu0
      %1792 = vmatprep.mubr.bf16.mxu0 0
      %1793 = vmatmul.mubr.bf16.gmra.mrb[0].mxu0 %v1726
      %v1794 = vpop.f32.mrb[0].mxu0
      %v1795 = vadd.f32 %v1681, %v1794
      %v1796 = vpop.f32.mrb[0].mxu0
      %v1797 = vpop.f32.mrb[0].mxu0
      %v1798 = vadd.f32 %v1681, %v1797
      %v1799 = vpop.f32.mrb[0].mxu0
      %1800 = vdwg.mxu0
      %vm1801 = vcmp.gt.f32.partialorder %v1763, 0.0
      %vm1802 = vcmp.gt.f32.partialorder %v1766, 0.0
      %vm1803 = vcmp.gt.f32.partialorder %v1771, 0.0
      %vm1804 = vcmp.gt.f32.partialorder %v1774, 0.0
      %vm1805 = vcmp.gt.f32.partialorder %v1779, 0.0
      %vm1806 = vcmp.gt.f32.partialorder %v1782, 0.0
      %vm1807 = vcmp.gt.f32.partialorder %v1787, 0.0
      %vm1808 = vcmp.gt.f32.partialorder %v1790, 0.0
      %vm1809 = vcmp.gt.f32.partialorder %v1795, 0.0
      %vm1810 = vcmp.gt.f32.partialorder %v1798, 0.0
      %v1811 = vmin.f32 %v1763, 0.0
      %v1812 = vmin.f32 %v1766, 0.0
      %v1813 = vmin.f32 %v1771, 0.0
      %v1814 = vmin.f32 %v1774, 0.0
      %v1815 = vmin.f32 %v1779, 0.0
      %v1816 = vmin.f32 %v1782, 0.0
      %v1817 = vmin.f32 %v1787, 0.0
      %v1818 = vmin.f32 %v1790, 0.0
      %v1819 = vmin.f32 %v1795, 0.0
      %v1820 = vmin.f32 %v1798, 0.0
      %v1821 = vmul.f32 %v1811, 1.442695
      %v1822 = vpow.pop %v1821
      %v1823 = vmul.f32 %v1812, 1.442695
      %v1824 = vpow.pop %v1823
      %v1825 = vmul.f32 %v1813, 1.442695
      %v1826 = vpow.pop %v1825
      %v1827 = vmul.f32 %v1814, 1.442695
      %v1828 = vpow.pop %v1827
      %v1829 = vmul.f32 %v1815, 1.442695
      %v1830 = vpow.pop %v1829
      %v1831 = vmul.f32 %v1816, 1.442695
      %v1832 = vpow.pop %v1831
      %v1833 = vmul.f32 %v1817, 1.442695
      %v1834 = vpow.pop %v1833
      %v1835 = vmul.f32 %v1818, 1.442695
      %v1836 = vpow.pop %v1835
      %v1837 = vmul.f32 %v1819, 1.442695
      %v1838 = vpow.pop %v1837
      %v1839 = vmul.f32 %v1820, 1.442695
      %v1840 = vpow.pop %v1839
      %v1841 = vsub.f32 %v1822, 1.0
      %v1842 = vsub.f32 %v1824, 1.0
      %v1843 = vsub.f32 %v1826, 1.0
      %v1844 = vsub.f32 %v1828, 1.0
      %v1845 = vsub.f32 %v1830, 1.0
      %v1846 = vsub.f32 %v1832, 1.0
      %v1847 = vsub.f32 %v1834, 1.0
      %v1848 = vsub.f32 %v1836, 1.0
      %v1849 = vsub.f32 %v1838, 1.0
      %v1850 = vsub.f32 %v1840, 1.0
      %v1851 = vsel %vm1801, %v1763, %v1841
      %v1852 = vsel %vm1802, %v1766, %v1842
      %v1853 = vsel %vm1803, %v1771, %v1843
      %v1854 = vsel %vm1804, %v1774, %v1844
      %v1855 = vsel %vm1805, %v1779, %v1845
      %v1856 = vsel %vm1806, %v1782, %v1846
      %v1857 = vsel %vm1807, %v1787, %v1847
      %v1858 = vsel %vm1808, %v1790, %v1848
      %v1859 = vsel %vm1809, %v1795, %v1849
      %v1860 = vsel %vm1810, %v1798, %v1850
      %v1861 = vpack.c.bf16 %v1852, %v1851
      %v1862 = vpack.c.bf16 %v1854, %v1853
      %v1863 = vpack.c.bf16 %v1856, %v1855
      %v1864 = vpack.c.bf16 %v1858, %v1857
      %v1865 = vpack.c.bf16 %v1860, %v1859
      %v1867 = vshrl.u32 %v1861, 16
      %v1869 = vrot.slane %v1867, 7
      %v1870 = vshll.u32 %v1861, 16
      %v1872 = vor.u32 %v1869, %v1870
      %v1874 = vshrl.u32 %v1862, 16
      %v1876 = vrot.slane %v1874, 7
      %v1877 = vshll.u32 %v1862, 16
      %v1879 = vor.u32 %v1876, %v1877
      %v1880 = vsel %vm839, %v1869, %v1879
      %v1882 = vshrl.u32 %v1863, 16
      %v1884 = vrot.slane %v1882, 7
      %v1885 = vshll.u32 %v1863, 16
      %v1887 = vor.u32 %v1884, %v1885
      %v1888 = vsel %vm839, %v1876, %v1887
      %v1890 = vshrl.u32 %v1864, 16
      %v1892 = vrot.slane %v1890, 7
      %v1893 = vshll.u32 %v1864, 16
      %v1895 = vor.u32 %v1892, %v1893
      %v1896 = vsel %vm839, %v1884, %v1895
      %v1898 = vshrl.u32 %v1865, 16
      %v1900 = vrot.slane %v1898, 7
      %v1901 = vshll.u32 %v1865, 16
      %v1903 = vor.u32 %v1900, %v1901
      %v1904 = vsel %vm839, %v1892, %v1903
      %v1907 = vsel %vm882, 0, %v1872
      %v1908 = vsel %vm882, %v1900, 0
      %v1910 = vshrl.u32 %v1907, 16
      %v1912 = vshll.u32 %v1907, 16
      %v1914 = vrot.slane %v1912, 1
      %v1915 = vor.u32 %v1910, %v1914
      %v1917 = vshll.u32 %v1880, 16
      %v1919 = vrot.slane %v1917, 1
      %v1920 = vsel %vm885, %v1915, %v1919
      %v1921 = vshrl.u32 %v1880, 16
      %v1923 = vor.u32 %v1921, %v1919
      %v1925 = vshll.u32 %v1888, 16
      %v1927 = vrot.slane %v1925, 1
      %v1928 = vsel %vm885, %v1923, %v1927
      %v1929 = vshrl.u32 %v1888, 16
      %v1931 = vor.u32 %v1929, %v1927
      %v1933 = vshll.u32 %v1896, 16
      %v1935 = vrot.slane %v1933, 1
      %v1936 = vsel %vm885, %v1931, %v1935
      %v1937 = vshrl.u32 %v1896, 16
      %v1939 = vor.u32 %v1937, %v1935
      %v1941 = vshll.u32 %v1904, 16
      %v1943 = vrot.slane %v1941, 1
      %v1944 = vsel %vm885, %v1939, %v1943
      %v1945 = vshrl.u32 %v1904, 16
      %v1947 = vor.u32 %v1945, %v1943
      %v1949 = vshll.u32 %v1908, 16
      %v1951 = vrot.slane %v1949, 1
      %v1952 = vsel %vm885, %v1947, %v1951
      %1953 = vrot.lane.b32.xlu0 %v1920, 32
      %v1954 = vpop.permute.xlu0 %1953
      %1955 = vrot.lane.b32.xlu0 %v1928, 32
      %v1956 = vpop.permute.xlu0 %1955
      %1957 = vrot.lane.b32.xlu0 %v1936, 32
      %v1958 = vpop.permute.xlu0 %1957
      %1959 = vrot.lane.b32.xlu0 %v1944, 32
      %v1960 = vpop.permute.xlu0 %1959
      %1961 = vrot.lane.b32.xlu0 %v1952, 32
      %v1962 = vpop.permute.xlu0 %1961
      %v1965 = vrot.slane %v1907, 1
      %v1966 = vrot.slane %v1880, 1
      %v1967 = vsel %vm942, %v1965, %v1966
      %v1968 = vrot.slane %v1888, 1
      %v1969 = vsel %vm942, %v1966, %v1968
      %v1970 = vrot.slane %v1896, 1
      %v1971 = vsel %vm942, %v1968, %v1970
      %v1972 = vrot.slane %v1904, 1
      %v1973 = vsel %vm942, %v1970, %v1972
      %v1974 = vrot.slane %v1908, 1
      %v1975 = vsel %vm942, %v1972, %v1974
      %1976 = vrot.lane.b32.xlu0 %v1967, 64
      %v1977 = vpop.permute.xlu0 %1976
      %1978 = vrot.lane.b32.xlu0 %v1969, 64
      %v1979 = vpop.permute.xlu0 %1978
      %1980 = vrot.lane.b32.xlu0 %v1971, 64
      %v1981 = vpop.permute.xlu0 %1980
      %1982 = vrot.lane.b32.xlu0 %v1973, 64
      %v1983 = vpop.permute.xlu0 %1982
      %1984 = vrot.lane.b32.xlu0 %v1975, 64
      %v1985 = vpop.permute.xlu0 %1984
      %v1987 = vsel %vm768, %v1907, %v1954
      %v1989 = vsel %vm768, %v1880, %v1956
      %v1991 = vsel %vm768, %v1888, %v1958
      %v1993 = vsel %vm768, %v1896, %v1960
      %v1995 = vsel %vm768, %v1904, %v1962
      %v1997 = vsel %vm974, %v1987, %v1977
      %v1999 = vsel %vm974, %v1989, %v1979
      %v2001 = vsel %vm974, %v1991, %v1981
      %v2003 = vsel %vm974, %v1993, %v1983
      %v2005 = vsel %vm974, %v1995, %v1985
      %v2006 = vlaneseq
      %v2007 = vshrl.u32 %v2006, 7
      %v2008 = vsub.s32 0, %v2007
      %v2009 = vrot.slane %v1532, %v2008
      %v2022 = vunpack.c.l.b16 %v1520
      %v2023 = vunpack.c.l.b16 %v1521
      %v2024 = vunpack.c.l.b16 %v1522
      %v2025 = vunpack.c.l.b16 %v1523
      %v2026 = vunpack.c.l.b16 %v1524
      %v2027 = vunpack.c.l.b16 %v1525
      %v2028 = vunpack.c.l.b16 %v1526
      %v2029 = vunpack.c.l.b16 %v1527
      %v2030 = vunpack.c.l.b16 %v1528
      %v2031 = vunpack.c.l.b16 %v1529
      %v2032 = vunpack.c.l.b16 %v1530
      %v2033 = vunpack.c.l.b16 %v1531
      %v2034 = vpack.c.b16 %v2023, %v2022
      %v2035 = vpack.c.b16 %v2025, %v2024
      %v2036 = vpack.c.b16 %v2027, %v2026
      %v2037 = vpack.c.b16 %v2029, %v2028
      %v2038 = vpack.c.b16 %v2031, %v2030
      %v2039 = vpack.c.b16 %v2033, %v2032
      %v2046 = vsel %vm1025, %v1997, 0
      %v2048 = vsel %vm1025, %v1999, 0
      %v2050 = vsel %vm1025, %v2001, 0
      %v2052 = vsel %vm1025, %v2003, 0
      %v2054 = vsel %vm1025, %v2005, 0
      %2056 = vmatprep.subr.bf16.mxu0 0
      %2057 = vmatpush1.bf16.msra.mxu0 %v2034
      %2058 = vmatprep.subr.bf16.mxu0 0
      %2059 = vmatpush1.bf16.msra.mxu0 %v2035
      %2060 = vmatprep.subr.bf16.mxu0 0
      %2061 = vmatpush1.bf16.msra.mxu0 %v2036
      %2062 = vmatprep.subr.bf16.mxu0 0
      %2063 = vmatpush1.bf16.msra.mxu0 %v2037
      %2064 = vmatprep.subr.bf16.mxu0 0
      %2065 = vmatpush1.bf16.msra.mxu0 %v2038
      %2066 = vmatprep.subr.bf16.mxu0 0
      %2067 = vmatpush1.bf16.msra.mxu0 %v2039
      %2068 = vmatprep.subr.bf16.mxu0 0
      %2069 = vmatpush1.bf16.msra.mxu0 0
      %2070 = vmatprep.subr.bf16.mxu0 0
      %2071 = vmatpush1.bf16.msra.mxu0 0
      %2072 = vmatprep.subr.bf16.mxu0 0
      %2073 = vmatpush1.bf16.msra.mxu0 0
      %2074 = vmatprep.subr.bf16.mxu0 0
      %2075 = vmatpush1.bf16.msra.mxu0 0
      %2076 = vmatprep.subr.bf16.mxu0 0
      %2077 = vmatpush1.bf16.msra.mxu0 0
      %2078 = vmatprep.subr.bf16.mxu0 0
      %2079 = vmatpush1.bf16.msra.mxu0 0
      %2080 = vmatprep.subr.bf16.mxu0 0
      %2081 = vmatpush1.bf16.msra.mxu0 0
      %2082 = vmatprep.subr.bf16.mxu0 0
      %2083 = vmatpush1.bf16.msra.mxu0 0
      %2084 = vmatprep.subr.bf16.mxu0 0
      %2085 = vmatpush1.bf16.msra.mxu0 0
      %2086 = vmatprep.subr.bf16.mxu0 0
      %2087 = vmatpush1.bf16.msra.mxu0 0
      %2088 = vmatprep.mubr.bf16.mxu0 0
      %2089 = vmatmul.mubr.bf16.gmra.mrb[0].mxu0 %v2046
      %v2090 = vpop.f32.mrb[0].mxu0
      %v2091 = vadd.f32 %v2009, %v2090
      %v2092 = vpop.f32.mrb[0].mxu0
      %v2093 = vpop.f32.mrb[0].mxu0
      %v2094 = vadd.f32 %v2009, %v2093
      %v2095 = vpop.f32.mrb[0].mxu0
      %2096 = vmatprep.mubr.bf16.mxu0 0
      %2097 = vmatmul.mubr.bf16.gmra.mrb[0].mxu0 %v2048
      %v2098 = vpop.f32.mrb[0].mxu0
      %v2099 = vadd.f32 %v2009, %v2098
      %v2100 = vpop.f32.mrb[0].mxu0
      %v2101 = vpop.f32.mrb[0].mxu0
      %v2102 = vadd.f32 %v2009, %v2101
      %v2103 = vpop.f32.mrb[0].mxu0
      %2104 = vmatprep.mubr.bf16.mxu0 0
      %2105 = vmatmul.mubr.bf16.gmra.mrb[0].mxu0 %v2050
      %v2106 = vpop.f32.mrb[0].mxu0
      %v2107 = vadd.f32 %v2009, %v2106
      %v2108 = vpop.f32.mrb[0].mxu0
      %v2109 = vpop.f32.mrb[0].mxu0
      %v2110 = vadd.f32 %v2009, %v2109
      %v2111 = vpop.f32.mrb[0].mxu0
      %2112 = vmatprep.mubr.bf16.mxu0 0
      %2113 = vmatmul.mubr.bf16.gmra.mrb[0].mxu0 %v2052
      %v2114 = vpop.f32.mrb[0].mxu0
      %v2115 = vadd.f32 %v2009, %v2114
      %v2116 = vpop.f32.mrb[0].mxu0
      %v2117 = vpop.f32.mrb[0].mxu0
      %v2118 = vadd.f32 %v2009, %v2117
      %v2119 = vpop.f32.mrb[0].mxu0
      %2120 = vmatprep.mubr.bf16.mxu0 0
      %2121 = vmatmul.mubr.bf16.gmra.mrb[0].mxu0 %v2054
      %v2122 = vpop.f32.mrb[0].mxu0
      %v2123 = vadd.f32 %v2009, %v2122
      %v2124 = vpop.f32.mrb[0].mxu0
      %v2125 = vpop.f32.mrb[0].mxu0
      %v2126 = vadd.f32 %v2009, %v2125
      %v2127 = vpop.f32.mrb[0].mxu0
      %2128 = vdwg.mxu0
      %v2129 = vadd.f32 %v2091, %v1497
      %v2130 = vadd.f32 %v2094, %v1498
      %v2131 = vadd.f32 %v2099, %v1499
      %v2132 = vadd.f32 %v2102, %v1500
      %v2133 = vadd.f32 %v2107, %v1501
      %v2134 = vadd.f32 %v2110, %v1502
      %v2135 = vadd.f32 %v2115, %v1503
      %v2136 = vadd.f32 %v2118, %v1504
      %v2137 = vadd.f32 %v2123, %v1505
      %v2138 = vadd.f32 %v2126, %v1506
      %vm2139 = vcmp.gt.f32.partialorder %v2129, 0.0
      %vm2140 = vcmp.gt.f32.partialorder %v2130, 0.0
      %vm2141 = vcmp.gt.f32.partialorder %v2131, 0.0
      %vm2142 = vcmp.gt.f32.partialorder %v2132, 0.0
      %vm2143 = vcmp.gt.f32.partialorder %v2133, 0.0
      %vm2144 = vcmp.gt.f32.partialorder %v2134, 0.0
      %vm2145 = vcmp.gt.f32.partialorder %v2135, 0.0
      %vm2146 = vcmp.gt.f32.partialorder %v2136, 0.0
      %vm2147 = vcmp.gt.f32.partialorder %v2137, 0.0
      %vm2148 = vcmp.gt.f32.partialorder %v2138, 0.0
      %v2149 = vmin.f32 %v2129, 0.0
      %v2150 = vmin.f32 %v2130, 0.0
      %v2151 = vmin.f32 %v2131, 0.0
      %v2152 = vmin.f32 %v2132, 0.0
      %v2153 = vmin.f32 %v2133, 0.0
      %v2154 = vmin.f32 %v2134, 0.0
      %v2155 = vmin.f32 %v2135, 0.0
      %v2156 = vmin.f32 %v2136, 0.0
      %v2157 = vmin.f32 %v2137, 0.0
      %v2158 = vmin.f32 %v2138, 0.0
      %v2159 = vmul.f32 %v2149, 1.442695
      %v2160 = vpow.pop %v2159
      %v2161 = vmul.f32 %v2150, 1.442695
      %v2162 = vpow.pop %v2161
      %v2163 = vmul.f32 %v2151, 1.442695
      %v2164 = vpow.pop %v2163
      %v2165 = vmul.f32 %v2152, 1.442695
      %v2166 = vpow.pop %v2165
      %v2167 = vmul.f32 %v2153, 1.442695
      %v2168 = vpow.pop %v2167
      %v2169 = vmul.f32 %v2154, 1.442695
      %v2170 = vpow.pop %v2169
      %v2171 = vmul.f32 %v2155, 1.442695
      %v2172 = vpow.pop %v2171
      %v2173 = vmul.f32 %v2156, 1.442695
      %v2174 = vpow.pop %v2173
      %v2175 = vmul.f32 %v2157, 1.442695
      %v2176 = vpow.pop %v2175
      %v2177 = vmul.f32 %v2158, 1.442695
      %v2178 = vpow.pop %v2177
      %v2179 = vsub.f32 %v2160, 1.0
      %v2180 = vsub.f32 %v2162, 1.0
      %v2181 = vsub.f32 %v2164, 1.0
      %v2182 = vsub.f32 %v2166, 1.0
      %v2183 = vsub.f32 %v2168, 1.0
      %v2184 = vsub.f32 %v2170, 1.0
      %v2185 = vsub.f32 %v2172, 1.0
      %v2186 = vsub.f32 %v2174, 1.0
      %v2187 = vsub.f32 %v2176, 1.0
      %v2188 = vsub.f32 %v2178, 1.0
      %v2189 = vsel %vm2139, %v2129, %v2179
      %v2190 = vsel %vm2140, %v2130, %v2180
      %v2191 = vsel %vm2141, %v2131, %v2181
      %v2192 = vsel %vm2142, %v2132, %v2182
      %v2193 = vsel %vm2143, %v2133, %v2183
      %v2194 = vsel %vm2144, %v2134, %v2184
      %v2195 = vsel %vm2145, %v2135, %v2185
      %v2196 = vsel %vm2146, %v2136, %v2186
      %v2197 = vsel %vm2147, %v2137, %v2187
      %v2198 = vsel %vm2148, %v2138, %v2188
      %v2199 = vld [vmem:[%s1 + $0xc8] sm:$0xf]
      %v2200 = vld [vmem:[%s1 + $0xcc] sm:$0xf]
      %v2201 = vld [vmem:[%s1 + $0xd0] sm:$0xf]
      %v2202 = vld [vmem:[%s1 + $0xd4] sm:$0xf]
      %v2203 = vld [vmem:[%s1 + $0xd8] sm:$0xf]
      %v2204 = vld [vmem:[%s1 + $0xdc] sm:$0xf]
      %v2205 = vld [vmem:[%s1 + $0xe0] sm:$0xf]
      %v2206 = vld [vmem:[%s1 + $0xe4] sm:$0xf]
      %v2207 = vld [vmem:[%s1 + $0xe8] sm:$0xf]
      %v2208 = vld [vmem:[%s1 + $0xec] sm:$0xf]
      %v2209 = vld [vmem:[%s1 + $0xf0] sm:$0xf]
      %v2210 = vld [vmem:[%s1 + $0xf4] sm:$0xf]
      %v2211 = vld [vmem:[%s2 + $0x5] sm:$0x1]
      %v2212 = vld [vmem:[%s1 + $0xf8] sm:$0xf]
      %v2213 = vld [vmem:[%s1 + $0xfc] sm:$0xf]
      %v2214 = vld [vmem:[%s1 + $0x100] sm:$0xf]
      %v2215 = vld [vmem:[%s1 + $0x104] sm:$0xf]
      %v2216 = vld [vmem:[%s1 + $0x108] sm:$0xf]
      %v2217 = vld [vmem:[%s1 + $0x10c] sm:$0xf]
      %v2218 = vld [vmem:[%s1 + $0x110] sm:$0xf]
      %v2219 = vld [vmem:[%s1 + $0x114] sm:$0xf]
      %v2220 = vld [vmem:[%s1 + $0x118] sm:$0xf]
      %v2221 = vld [vmem:[%s1 + $0x11c] sm:$0xf]
      %v2222 = vld [vmem:[%s1 + $0x120] sm:$0xf]
      %v2223 = vld [vmem:[%s1 + $0x124] sm:$0xf]
      %v2224 = vld [vmem:[%s1 + $0x128] sm:$0xf]
      %v2225 = vld [vmem:[%s1 + $0x12c] sm:$0xf]
      %v2226 = vld [vmem:[%s1 + $0x130] sm:$0xf]
      %v2227 = vld [vmem:[%s1 + $0x134] sm:$0xf]
      %v2228 = vld [vmem:[%s1 + $0x138] sm:$0xf]
      %v2229 = vld [vmem:[%s1 + $0x13c] sm:$0xf]
      %v2230 = vld [vmem:[%s2 + $0x6] sm:$0x1]
      %v2231 = vld [vmem:[%s1 + $0x140] sm:$0xf]
      %v2232 = vld [vmem:[%s1 + $0x144] sm:$0xf]
      %v2233 = vld [vmem:[%s1 + $0x148] sm:$0xf]
      %v2234 = vld [vmem:[%s1 + $0x14c] sm:$0xf]
      %v2235 = vld [vmem:[%s2 + $0x7] sm:$0x1]
      %v2236 = vpack.c.bf16 %v2190, %v2189
      %v2237 = vpack.c.bf16 %v2192, %v2191
      %v2238 = vpack.c.bf16 %v2194, %v2193
      %v2239 = vpack.c.bf16 %v2196, %v2195
      %v2240 = vpack.c.bf16 %v2198, %v2197
      %v2242 = vshrl.u32 %v2236, 16
      %v2244 = vrot.slane %v2242, 7
      %v2245 = vshll.u32 %v2236, 16
      %v2247 = vor.u32 %v2244, %v2245
      %v2249 = vshrl.u32 %v2237, 16
      %v2251 = vrot.slane %v2249, 7
      %v2252 = vshll.u32 %v2237, 16
      %v2254 = vor.u32 %v2251, %v2252
      %v2255 = vsel %vm839, %v2244, %v2254
      %v2257 = vshrl.u32 %v2238, 16
      %v2259 = vrot.slane %v2257, 7
      %v2260 = vshll.u32 %v2238, 16
      %v2262 = vor.u32 %v2259, %v2260
      %v2263 = vsel %vm839, %v2251, %v2262
      %v2265 = vshrl.u32 %v2239, 16
      %v2267 = vrot.slane %v2265, 7
      %v2268 = vshll.u32 %v2239, 16
      %v2270 = vor.u32 %v2267, %v2268
      %v2271 = vsel %vm839, %v2259, %v2270
      %v2273 = vshrl.u32 %v2240, 16
      %v2275 = vrot.slane %v2273, 7
      %v2276 = vshll.u32 %v2240, 16
      %v2278 = vor.u32 %v2275, %v2276
      %v2279 = vsel %vm839, %v2267, %v2278
      %v2282 = vsel %vm882, 0, %v2247
      %v2283 = vsel %vm882, %v2275, 0
      %v2285 = vshrl.u32 %v2282, 16
      %v2287 = vshll.u32 %v2282, 16
      %v2289 = vrot.slane %v2287, 1
      %v2290 = vor.u32 %v2285, %v2289
      %v2292 = vshll.u32 %v2255, 16
      %v2294 = vrot.slane %v2292, 1
      %v2295 = vsel %vm885, %v2290, %v2294
      %v2296 = vshrl.u32 %v2255, 16
      %v2298 = vor.u32 %v2296, %v2294
      %v2300 = vshll.u32 %v2263, 16
      %v2302 = vrot.slane %v2300, 1
      %v2303 = vsel %vm885, %v2298, %v2302
      %v2304 = vshrl.u32 %v2263, 16
      %v2306 = vor.u32 %v2304, %v2302
      %v2308 = vshll.u32 %v2271, 16
      %v2310 = vrot.slane %v2308, 1
      %v2311 = vsel %vm885, %v2306, %v2310
      %v2312 = vshrl.u32 %v2271, 16
      %v2314 = vor.u32 %v2312, %v2310
      %v2316 = vshll.u32 %v2279, 16
      %v2318 = vrot.slane %v2316, 1
      %v2319 = vsel %vm885, %v2314, %v2318
      %v2320 = vshrl.u32 %v2279, 16
      %v2322 = vor.u32 %v2320, %v2318
      %v2324 = vshll.u32 %v2283, 16
      %v2326 = vrot.slane %v2324, 1
      %v2327 = vsel %vm885, %v2322, %v2326
      %2328 = vrot.lane.b32.xlu0 %v2295, 32
      %v2329 = vpop.permute.xlu0 %2328
      %2330 = vrot.lane.b32.xlu0 %v2303, 32
      %v2331 = vpop.permute.xlu0 %2330
      %2332 = vrot.lane.b32.xlu0 %v2311, 32
      %v2333 = vpop.permute.xlu0 %2332
      %2334 = vrot.lane.b32.xlu0 %v2319, 32
      %v2335 = vpop.permute.xlu0 %2334
      %2336 = vrot.lane.b32.xlu0 %v2327, 32
      %v2337 = vpop.permute.xlu0 %2336
      %v2340 = vrot.slane %v2282, 1
      %v2341 = vrot.slane %v2255, 1
      %v2342 = vsel %vm942, %v2340, %v2341
      %v2343 = vrot.slane %v2263, 1
      %v2344 = vsel %vm942, %v2341, %v2343
      %v2345 = vrot.slane %v2271, 1
      %v2346 = vsel %vm942, %v2343, %v2345
      %v2347 = vrot.slane %v2279, 1
      %v2348 = vsel %vm942, %v2345, %v2347
      %v2349 = vrot.slane %v2283, 1
      %v2350 = vsel %vm942, %v2347, %v2349
      %2351 = vrot.lane.b32.xlu0 %v2342, 64
      %v2352 = vpop.permute.xlu0 %2351
      %2353 = vrot.lane.b32.xlu0 %v2344, 64
      %v2354 = vpop.permute.xlu0 %2353
      %2355 = vrot.lane.b32.xlu0 %v2346, 64
      %v2356 = vpop.permute.xlu0 %2355
      %2357 = vrot.lane.b32.xlu0 %v2348, 64
      %v2358 = vpop.permute.xlu0 %2357
      %2359 = vrot.lane.b32.xlu0 %v2350, 64
      %v2360 = vpop.permute.xlu0 %2359
      %v2362 = vsel %vm768, %v2282, %v2329
      %v2364 = vsel %vm768, %v2255, %v2331
      %v2366 = vsel %vm768, %v2263, %v2333
      %v2368 = vsel %vm768, %v2271, %v2335
      %v2370 = vsel %vm768, %v2279, %v2337
      %v2372 = vsel %vm974, %v2362, %v2352
      %v2374 = vsel %vm974, %v2364, %v2354
      %v2376 = vsel %vm974, %v2366, %v2356
      %v2378 = vsel %vm974, %v2368, %v2358
      %v2380 = vsel %vm974, %v2370, %v2360
      %v2393 = vunpack.c.l.b16 %v2199
      %v2394 = vunpack.c.l.b16 %v2200
      %v2395 = vunpack.c.l.b16 %v2201
      %v2396 = vunpack.c.l.b16 %v2202
      %v2397 = vunpack.c.l.b16 %v2203
      %v2398 = vunpack.c.l.b16 %v2204
      %v2399 = vunpack.c.l.b16 %v2205
      %v2400 = vunpack.c.l.b16 %v2206
      %v2401 = vunpack.c.l.b16 %v2207
      %v2402 = vunpack.c.l.b16 %v2208
      %v2403 = vunpack.c.l.b16 %v2209
      %v2404 = vunpack.c.l.b16 %v2210
      %v2405 = vpack.c.b16 %v2394, %v2393
      %v2406 = vpack.c.b16 %v2396, %v2395
      %v2407 = vpack.c.b16 %v2398, %v2397
      %v2408 = vpack.c.b16 %v2400, %v2399
      %v2409 = vpack.c.b16 %v2402, %v2401
      %v2410 = vpack.c.b16 %v2404, %v2403
      %v2417 = vsel %vm1025, %v2372, 0
      %v2419 = vsel %vm1025, %v2374, 0
      %v2421 = vsel %vm1025, %v2376, 0
      %v2423 = vsel %vm1025, %v2378, 0
      %v2425 = vsel %vm1025, %v2380, 0
      %2427 = vmatprep.subr.bf16.mxu0 0
      %2428 = vmatpush1.bf16.msra.mxu0 %v2405
      %2429 = vmatprep.subr.bf16.mxu0 0
      %2430 = vmatpush1.bf16.msra.mxu0 %v2406
      %2431 = vmatprep.subr.bf16.mxu0 0
      %2432 = vmatpush1.bf16.msra.mxu0 %v2407
      %2433 = vmatprep.subr.bf16.mxu0 0
      %2434 = vmatpush1.bf16.msra.mxu0 %v2408
      %2435 = vmatprep.subr.bf16.mxu0 0
      %2436 = vmatpush1.bf16.msra.mxu0 %v2409
      %2437 = vmatprep.subr.bf16.mxu0 0
      %2438 = vmatpush1.bf16.msra.mxu0 %v2410
      %2439 = vmatprep.subr.bf16.mxu0 0
      %2440 = vmatpush1.bf16.msra.mxu0 0
      %2441 = vmatprep.subr.bf16.mxu0 0
      %2442 = vmatpush1.bf16.msra.mxu0 0
      %2443 = vmatprep.subr.bf16.mxu0 0
      %2444 = vmatpush1.bf16.msra.mxu0 0
      %2445 = vmatprep.subr.bf16.mxu0 0
      %2446 = vmatpush1.bf16.msra.mxu0 0
      %2447 = vmatprep.subr.bf16.mxu0 0
      %2448 = vmatpush1.bf16.msra.mxu0 0
      %2449 = vmatprep.subr.bf16.mxu0 0
      %2450 = vmatpush1.bf16.msra.mxu0 0
      %2451 = vmatprep.subr.bf16.mxu0 0
      %2452 = vmatpush1.bf16.msra.mxu0 0
      %2453 = vmatprep.subr.bf16.mxu0 0
      %2454 = vmatpush1.bf16.msra.mxu0 0
      %2455 = vmatprep.subr.bf16.mxu0 0
      %2456 = vmatpush1.bf16.msra.mxu0 0
      %2457 = vmatprep.subr.bf16.mxu0 0
      %2458 = vmatpush1.bf16.msra.mxu0 0
      %2459 = vmatprep.mubr.bf16.mxu0 0
      %2460 = vmatmul.mubr.bf16.gmra.mrb[0].mxu0 %v2417
      %v2461 = vpop.f32.mrb[0].mxu0
      %v2462 = vadd.f32 0.0, %v2461
      %v2463 = vpop.f32.mrb[0].mxu0
      %v2464 = vpop.f32.mrb[0].mxu0
      %v2465 = vadd.f32 0.0, %v2464
      %v2466 = vpop.f32.mrb[0].mxu0
      %2467 = vmatprep.mubr.bf16.mxu0 0
      %2468 = vmatmul.mubr.bf16.gmra.mrb[0].mxu0 %v2419
      %v2469 = vpop.f32.mrb[0].mxu0
      %v2470 = vadd.f32 0.0, %v2469
      %v2471 = vpop.f32.mrb[0].mxu0
      %v2472 = vpop.f32.mrb[0].mxu0
      %v2473 = vadd.f32 0.0, %v2472
      %v2474 = vpop.f32.mrb[0].mxu0
      %2475 = vmatprep.mubr.bf16.mxu0 0
      %2476 = vmatmul.mubr.bf16.gmra.mrb[0].mxu0 %v2421
      %v2477 = vpop.f32.mrb[0].mxu0
      %v2478 = vadd.f32 0.0, %v2477
      %v2479 = vpop.f32.mrb[0].mxu0
      %v2480 = vpop.f32.mrb[0].mxu0
      %v2481 = vadd.f32 0.0, %v2480
      %v2482 = vpop.f32.mrb[0].mxu0
      %2483 = vmatprep.mubr.bf16.mxu0 0
      %2484 = vmatmul.mubr.bf16.gmra.mrb[0].mxu0 %v2423
      %v2485 = vpop.f32.mrb[0].mxu0
      %v2486 = vadd.f32 0.0, %v2485
      %v2487 = vpop.f32.mrb[0].mxu0
      %v2488 = vpop.f32.mrb[0].mxu0
      %v2489 = vadd.f32 0.0, %v2488
      %v2490 = vpop.f32.mrb[0].mxu0
      %2491 = vmatprep.mubr.bf16.mxu0 0
      %2492 = vmatmul.mubr.bf16.gmra.mrb[0].mxu0 %v2425
      %v2493 = vpop.f32.mrb[0].mxu0
      %v2494 = vadd.f32 0.0, %v2493
      %v2495 = vpop.f32.mrb[0].mxu0
      %v2496 = vpop.f32.mrb[0].mxu0
      %v2497 = vadd.f32 0.0, %v2496
      %v2498 = vpop.f32.mrb[0].mxu0
      %2499 = vdwg.mxu0
      %vm2500 = vcmask 392192
      %2501 = vst.msk [vmem:[#allocation2] sm:$0xff] %vm2500, %v2462
      %2502 = vst.msk [vmem:[#allocation2 + $0x8] sm:$0xff] %vm2500, %v2465
      %2503 = vst.msk [vmem:[#allocation2 + $0x10] sm:$0xff] %vm2500, %v2470
      %2504 = vst.msk [vmem:[#allocation2 + $0x18] sm:$0xff] %vm2500, %v2473
      %2505 = vst.msk [vmem:[#allocation2 + $0x20] sm:$0xff] %vm2500, %v2478
      %2506 = vst.msk [vmem:[#allocation2 + $0x28] sm:$0xff] %vm2500, %v2481
      %2507 = vst.msk [vmem:[#allocation2 + $0x30] sm:$0xff] %vm2500, %v2486
      %2508 = vst.msk [vmem:[#allocation2 + $0x38] sm:$0xff] %vm2500, %v2489
      %2509 = vst.msk [vmem:[#allocation2 + $0x40] sm:$0xff] %vm2500, %v2494
      %2510 = vst.msk [vmem:[#allocation2 + $0x48] sm:$0xff] %vm2500, %v2497
      %v2511 = vld [vmem:[#allocation2] ss:$2 sm:$0xff]
      %v2512 = vld [vmem:[%s790] ss:$2 sm:$0xff]
      %v2513 = vld [vmem:[%s792] ss:$2 sm:$0xff]
      %v2514 = vld [vmem:[%s794] ss:$2 sm:$0xff]
      %v2515 = vld [vmem:[%s796] ss:$2 sm:$0xff]
      %v2516 = vlaneseq
      %v2517 = vshrl.u32 %v2516, 7
      %v2518 = vsub.s32 0, %v2517
      %v2519 = vrot.slane %v2211, %v2518
      %v2520 = vadd.f32 %v2511, %v2519
      %v2521 = vadd.f32 %v2512, %v2519
      %v2522 = vadd.f32 %v2513, %v2519
      %v2523 = vadd.f32 %v2514, %v2519
      %v2524 = vadd.f32 %v2515, %v2519
      %vm2525 = vcmp.gt.f32.partialorder %v2520, 0.0
      %vm2526 = vcmp.gt.f32.partialorder %v2521, 0.0
      %vm2527 = vcmp.gt.f32.partialorder %v2522, 0.0
      %vm2528 = vcmp.gt.f32.partialorder %v2523, 0.0
      %vm2529 = vcmp.gt.f32.partialorder %v2524, 0.0
      %v2530 = vmin.f32 %v2520, 0.0
      %v2531 = vmin.f32 %v2521, 0.0
      %v2532 = vmin.f32 %v2522, 0.0
      %v2533 = vmin.f32 %v2523, 0.0
      %v2534 = vmin.f32 %v2524, 0.0
      %v2535 = vmul.f32 %v2530, 1.442695
      %v2536 = vpow.pop %v2535
      %v2537 = vmul.f32 %v2531, 1.442695
      %v2538 = vpow.pop %v2537
      %v2539 = vmul.f32 %v2532, 1.442695
      %v2540 = vpow.pop %v2539
      %v2541 = vmul.f32 %v2533, 1.442695
      %v2542 = vpow.pop %v2541
      %v2543 = vmul.f32 %v2534, 1.442695
      %v2544 = vpow.pop %v2543
      %v2545 = vsub.f32 %v2536, 1.0
      %v2546 = vsub.f32 %v2538, 1.0
      %v2547 = vsub.f32 %v2540, 1.0
      %v2548 = vsub.f32 %v2542, 1.0
      %v2549 = vsub.f32 %v2544, 1.0
      %v2550 = vsel %vm2525, %v2520, %v2545
      %v2551 = vsel %vm2526, %v2521, %v2546
      %v2552 = vsel %vm2527, %v2522, %v2547
      %v2553 = vsel %vm2528, %v2523, %v2548
      %v2554 = vsel %vm2529, %v2524, %v2549
      %v2555 = vpack.c.bf16 %v2551, %v2550
      %v2556 = vpack.c.bf16 %v2553, %v2552
      %v2557 = vpack.c.bf16 %v2554, %v2554
      %v2559 = vshrl.u32 %v2555, 16
      %v2561 = vrot.slane %v2559, 7
      %v2562 = vshll.u32 %v2555, 16
      %v2564 = vor.u32 %v2561, %v2562
      %v2566 = vshrl.u32 %v2556, 16
      %v2568 = vrot.slane %v2566, 7
      %v2569 = vshll.u32 %v2556, 16
      %v2571 = vor.u32 %v2568, %v2569
      %v2572 = vsel %vm839, %v2561, %v2571
      %v2574 = vshrl.u32 %v2557, 16
      %v2576 = vrot.slane %v2574, 7
      %v2577 = vshll.u32 %v2557, 16
      %v2579 = vor.u32 %v2576, %v2577
      %v2580 = vsel %vm839, %v2568, %v2579
      %v2583 = vsel %vm882, 0, %v2564
      %vm2584 = vcmask 1044480
      %vm2585 = vsmask.f32 4352
      %vm2586 = vmand %vm2584, %vm2585
      %v2587 = vsel %vm2586, %v2580, 0
      %v2589 = vshrl.u32 %v2583, 16
      %v2591 = vshll.u32 %v2583, 16
      %v2593 = vrot.slane %v2591, 1
      %v2594 = vor.u32 %v2589, %v2593
      %v2596 = vshll.u32 %v2572, 16
      %v2598 = vrot.slane %v2596, 1
      %v2599 = vsel %vm885, %v2594, %v2598
      %v2600 = vshrl.u32 %v2572, 16
      %v2602 = vor.u32 %v2600, %v2598
      %v2604 = vshll.u32 %v2587, 16
      %v2606 = vrot.slane %v2604, 1
      %v2607 = vsel %vm885, %v2602, %v2606
      %v2608 = vshrl.u32 %v2587, 16
      %v2610 = vor.u32 %v2608, %v2606
      %2611 = vrot.lane.b32.xlu0 %v2599, 48
      %v2612 = vpop.permute.xlu0 %2611
      %2613 = vrot.lane.b32.xlu0 %v2607, 48
      %v2614 = vpop.permute.xlu0 %2613
      %2615 = vrot.lane.b32.xlu0 %v2610, 48
      %v2616 = vpop.permute.xlu0 %2615
      %v2619 = vrot.slane %v2583, 1
      %v2620 = vrot.slane %v2572, 1
      %v2621 = vsel %vm942, %v2619, %v2620
      %v2622 = vrot.slane %v2587, 1
      %v2623 = vsel %vm942, %v2620, %v2622
      %2624 = vrot.lane.b32.xlu0 %v2621, 96
      %v2625 = vpop.permute.xlu0 %2624
      %2626 = vrot.lane.b32.xlu0 %v2623, 96
      %v2627 = vpop.permute.xlu0 %2626
      %2628 = vrot.lane.b32.xlu0 %v2622, 96
      %v2629 = vpop.permute.xlu0 %2628
      %v2631 = vsel %vm2500, %v2583, %v2612
      %v2633 = vsel %vm2500, %v2572, %v2614
      %v2635 = vsel %vm2500, %v2587, %v2616
      %v2637 = vsel %vm1025, %v2631, %v2625
      %v2640 = vsel %vm1025, %v2633, %v2627
      %v2643 = vsel %vm1025, %v2635, %v2629
      %v2645 = vlaneseq
      %v2646 = vshrl.u32 %v2645, 7
      %v2647 = vsub.s32 0, %v2646
      %v2648 = vrot.slane %v2230, %v2647
      %v2667 = vunpack.c.l.b16 %v2212
      %v2668 = vunpack.c.l.b16 %v2213
      %v2669 = vunpack.c.l.b16 %v2214
      %v2670 = vunpack.c.l.b16 %v2215
      %v2671 = vunpack.c.l.b16 %v2216
      %v2672 = vunpack.c.l.b16 %v2217
      %v2673 = vunpack.c.l.b16 %v2218
      %v2674 = vunpack.c.l.b16 %v2219
      %v2675 = vunpack.c.l.b16 %v2220
      %v2676 = vunpack.c.l.b16 %v2221
      %v2677 = vunpack.c.l.b16 %v2222
      %v2678 = vunpack.c.l.b16 %v2223
      %v2679 = vunpack.c.l.b16 %v2224
      %v2680 = vunpack.c.l.b16 %v2225
      %v2681 = vunpack.c.l.b16 %v2226
      %v2682 = vunpack.c.l.b16 %v2227
      %v2683 = vunpack.c.l.b16 %v2228
      %v2684 = vunpack.c.l.b16 %v2229
      %v2685 = vpack.c.b16 %v2668, %v2667
      %v2686 = vpack.c.b16 %v2670, %v2669
      %v2687 = vpack.c.b16 %v2672, %v2671
      %v2688 = vpack.c.b16 %v2674, %v2673
      %v2689 = vpack.c.b16 %v2676, %v2675
      %v2690 = vpack.c.b16 %v2678, %v2677
      %v2691 = vpack.c.b16 %v2680, %v2679
      %v2692 = vpack.c.b16 %v2682, %v2681
      %v2693 = vpack.c.b16 %v2684, %v2683
      %vm2703 = vcmask 130048
      %v2704 = vsel %vm2703, %v2625, 0
      %v2706 = vsel %vm2703, %v2627, 0
      %v2708 = vsel %vm2703, %v2629, 0
      %2710 = vmatprep.subr.bf16.mxu0 0
      %2711 = vmatpush1.bf16.msra.mxu0 %v2685
      %2712 = vmatprep.subr.bf16.mxu0 0
      %2713 = vmatpush1.bf16.msra.mxu0 %v2686
      %2714 = vmatprep.subr.bf16.mxu0 0
      %2715 = vmatpush1.bf16.msra.mxu0 %v2687
      %2716 = vmatprep.subr.bf16.mxu0 0
      %2717 = vmatpush1.bf16.msra.mxu0 %v2688
      %2718 = vmatprep.subr.bf16.mxu0 0
      %2719 = vmatpush1.bf16.msra.mxu0 %v2689
      %2720 = vmatprep.subr.bf16.mxu0 0
      %2721 = vmatpush1.bf16.msra.mxu0 %v2690
      %2722 = vmatprep.subr.bf16.mxu0 0
      %2723 = vmatpush1.bf16.msra.mxu0 %v2691
      %2724 = vmatprep.subr.bf16.mxu0 0
      %2725 = vmatpush1.bf16.msra.mxu0 %v2692
      %2726 = vmatprep.subr.bf16.mxu0 0
      %2727 = vmatpush1.bf16.msra.mxu0 %v2693
      %2728 = vmatprep.subr.bf16.mxu0 0
      %2729 = vmatpush1.bf16.msra.mxu0 0
      %2730 = vmatprep.subr.bf16.mxu0 0
      %2731 = vmatpush1.bf16.msra.mxu0 0
      %2732 = vmatprep.subr.bf16.mxu0 0
      %2733 = vmatpush1.bf16.msra.mxu0 0
      %2734 = vmatprep.subr.bf16.mxu0 0
      %2735 = vmatpush1.bf16.msra.mxu0 0
      %2736 = vmatprep.subr.bf16.mxu0 0
      %2737 = vmatpush1.bf16.msra.mxu0 0
      %2738 = vmatprep.subr.bf16.mxu0 0
      %2739 = vmatpush1.bf16.msra.mxu0 0
      %2740 = vmatprep.subr.bf16.mxu0 0
      %2741 = vmatpush1.bf16.msra.mxu0 0
      %2742 = vmatprep.mubr.bf16.mxu0 %v2704
      %2743 = vmatmul.mubr.bf16.gmra.mrb[0].mxu0 %v2637
      %v2744 = vpop.f32.mrb[0].mxu0
      %v2745 = vadd.f32 %v2648, %v2744
      %v2746 = vpop.f32.mrb[0].mxu0
      %v2747 = vpop.f32.mrb[0].mxu0
      %v2748 = vadd.f32 %v2648, %v2747
      %v2749 = vpop.f32.mrb[0].mxu0
      %2750 = vmatprep.mubr.bf16.mxu0 %v2706
      %2751 = vmatmul.mubr.bf16.gmra.mrb[0].mxu0 %v2640
      %v2752 = vpop.f32.mrb[0].mxu0
      %v2753 = vadd.f32 %v2648, %v2752
      %v2754 = vpop.f32.mrb[0].mxu0
      %v2755 = vpop.f32.mrb[0].mxu0
      %v2756 = vadd.f32 %v2648, %v2755
      %v2757 = vpop.f32.mrb[0].mxu0
      %2758 = vmatprep.mubr.bf16.mxu0 %v2708
      %2759 = vmatmul.mubr.bf16.gmra.mrb[0].mxu0 %v2643
      %v2760 = vpop.f32.mrb[0].mxu0
      %v2761 = vadd.f32 %v2648, %v2760
      %v2762 = vpop.f32.mrb[0].mxu0
      %v2763 = vpop.f32.mrb[0].mxu0
      %v2764 = vpop.f32.mrb[0].mxu0
      %2765 = vdwg.mxu0
      %v2770 = vunpack.c.l.b16 %v2231
      %v2771 = vunpack.c.l.b16 %v2232
      %v2772 = vunpack.c.l.b16 %v2233
      %v2773 = vunpack.c.l.b16 %v2234
      %v2774 = vpack.c.b16 %v2771, %v2770
      %v2775 = vpack.c.b16 %v2773, %v2772
      %v2778 = vsel %vm768, %v2236, 0
      %v2780 = vsel %vm768, %v2237, 0
      %v2782 = vsel %vm768, %v2238, 0
      %v2784 = vsel %vm768, %v2239, 0
      %v2786 = vsel %vm768, %v2240, 0
      %2788 = vmatprep.subr.bf16.mxu0 0
      %2789 = vmatpush1.bf16.msra.mxu0 %v2774
      %2790 = vmatprep.subr.bf16.mxu0 0
      %2791 = vmatpush1.bf16.msra.mxu0 %v2775
      %2792 = vmatprep.subr.bf16.mxu0 0
      %2793 = vmatpush1.bf16.msra.mxu0 0
      %2794 = vmatprep.subr.bf16.mxu0 0
      %2795 = vmatpush1.bf16.msra.mxu0 0
      %2796 = vmatprep.subr.bf16.mxu0 0
      %2797 = vmatpush1.bf16.msra.mxu0 0
      %2798 = vmatprep.subr.bf16.mxu0 0
      %2799 = vmatpush1.bf16.msra.mxu0 0
      %2800 = vmatprep.subr.bf16.mxu0 0
      %2801 = vmatpush1.bf16.msra.mxu0 0
      %2802 = vmatprep.subr.bf16.mxu0 0
      %2803 = vmatpush1.bf16.msra.mxu0 0
      %2804 = vmatprep.subr.bf16.mxu0 0
      %2805 = vmatpush1.bf16.msra.mxu0 0
      %2806 = vmatprep.subr.bf16.mxu0 0
      %2807 = vmatpush1.bf16.msra.mxu0 0
      %2808 = vmatprep.subr.bf16.mxu0 0
      %2809 = vmatpush1.bf16.msra.mxu0 0
      %2810 = vmatprep.subr.bf16.mxu0 0
      %2811 = vmatpush1.bf16.msra.mxu0 0
      %2812 = vmatprep.subr.bf16.mxu0 0
      %2813 = vmatpush1.bf16.msra.mxu0 0
      %2814 = vmatprep.subr.bf16.mxu0 0
      %2815 = vmatpush1.bf16.msra.mxu0 0
      %2816 = vmatprep.subr.bf16.mxu0 0
      %2817 = vmatpush1.bf16.msra.mxu0 0
      %2818 = vmatprep.subr.bf16.mxu0 0
      %2819 = vmatpush1.bf16.msra.mxu0 0
      %2820 = vmatprep.mubr.bf16.mxu0 0
      %2821 = vmatmul.mubr.bf16.gmra.mrb[0].mxu0 %v2778
      %v2822 = vpop.f32.mrb[0].mxu0
      %v2823 = vadd.f32 0.0, %v2822
      %v2824 = vpop.f32.mrb[0].mxu0
      %v2825 = vpop.f32.mrb[0].mxu0
      %v2826 = vadd.f32 0.0, %v2825
      %v2827 = vpop.f32.mrb[0].mxu0
      %2828 = vmatprep.mubr.bf16.mxu0 0
      %2829 = vmatmul.mubr.bf16.gmra.mrb[0].mxu0 %v2780
      %v2830 = vpop.f32.mrb[0].mxu0
      %v2831 = vadd.f32 0.0, %v2830
      %v2832 = vpop.f32.mrb[0].mxu0
      %v2833 = vpop.f32.mrb[0].mxu0
      %v2834 = vadd.f32 0.0, %v2833
      %v2835 = vpop.f32.mrb[0].mxu0
      %2836 = vmatprep.mubr.bf16.mxu0 0
      %2837 = vmatmul.mubr.bf16.gmra.mrb[0].mxu0 %v2782
      %v2838 = vpop.f32.mrb[0].mxu0
      %v2839 = vadd.f32 0.0, %v2838
      %v2840 = vpop.f32.mrb[0].mxu0
      %v2841 = vpop.f32.mrb[0].mxu0
      %v2842 = vadd.f32 0.0, %v2841
      %v2843 = vpop.f32.mrb[0].mxu0
      %2844 = vmatprep.mubr.bf16.mxu0 0
      %2845 = vmatmul.mubr.bf16.gmra.mrb[0].mxu0 %v2784
      %v2846 = vpop.f32.mrb[0].mxu0
      %v2847 = vadd.f32 0.0, %v2846
      %v2848 = vpop.f32.mrb[0].mxu0
      %v2849 = vpop.f32.mrb[0].mxu0
      %v2850 = vadd.f32 0.0, %v2849
      %v2851 = vpop.f32.mrb[0].mxu0
      %2852 = vmatprep.mubr.bf16.mxu0 0
      %2853 = vmatmul.mubr.bf16.gmra.mrb[0].mxu0 %v2786
      %v2854 = vpop.f32.mrb[0].mxu0
      %v2855 = vadd.f32 0.0, %v2854
      %v2856 = vpop.f32.mrb[0].mxu0
      %v2857 = vpop.f32.mrb[0].mxu0
      %v2858 = vadd.f32 0.0, %v2857
      %v2859 = vpop.f32.mrb[0].mxu0
      %2860 = vdwg.mxu0
      %2861 = vst.msk [vmem:[#allocation2] sm:$0xff] %vm2500, %v2823
      %2862 = vst.msk [vmem:[#allocation2 + $0x8] sm:$0xff] %vm2500, %v2826
      %2863 = vst.msk [vmem:[#allocation2 + $0x10] sm:$0xff] %vm2500, %v2831
      %2864 = vst.msk [vmem:[#allocation2 + $0x18] sm:$0xff] %vm2500, %v2834
      %2865 = vst.msk [vmem:[#allocation2 + $0x20] sm:$0xff] %vm2500, %v2839
      %2866 = vst.msk [vmem:[#allocation2 + $0x28] sm:$0xff] %vm2500, %v2842
      %2867 = vst.msk [vmem:[#allocation2 + $0x30] sm:$0xff] %vm2500, %v2847
      %2868 = vst.msk [vmem:[#allocation2 + $0x38] sm:$0xff] %vm2500, %v2850
      %2869 = vst.msk [vmem:[#allocation2 + $0x40] sm:$0xff] %vm2500, %v2855
      %2870 = vst.msk [vmem:[#allocation2 + $0x48] sm:$0xff] %vm2500, %v2858
      %v2871 = vld [vmem:[#allocation2] ss:$2 sm:$0xff]
      %v2872 = vld [vmem:[%s790] ss:$2 sm:$0xff]
      %v2873 = vld [vmem:[%s792] ss:$2 sm:$0xff]
      %v2874 = vld [vmem:[%s794] ss:$2 sm:$0xff]
      %v2875 = vld [vmem:[%s796] ss:$2 sm:$0xff]
      %v2876 = vlaneseq
      %v2877 = vshrl.u32 %v2876, 7
      %v2878 = vsub.s32 0, %v2877
      %v2879 = vrot.slane %v2235, %v2878
      %v2880 = vadd.f32 %v2871, %v2879
      %v2881 = vadd.f32 %v2872, %v2879
      %v2882 = vadd.f32 %v2873, %v2879
      %v2883 = vadd.f32 %v2874, %v2879
      %v2884 = vadd.f32 %v2875, %v2879
      %v2885 = vadd.f32 %v2745, %v2880
      %v2886 = vadd.f32 %v2748, %v2881
      %v2887 = vadd.f32 %v2753, %v2882
      %v2888 = vadd.f32 %v2756, %v2883
      %v2889 = vadd.f32 %v2761, %v2884
      %vm2890 = vcmp.gt.f32.partialorder %v2885, 0.0
      %vm2891 = vcmp.gt.f32.partialorder %v2886, 0.0
      %vm2892 = vcmp.gt.f32.partialorder %v2887, 0.0
      %vm2893 = vcmp.gt.f32.partialorder %v2888, 0.0
      %vm2894 = vcmp.gt.f32.partialorder %v2889, 0.0
      %v2895 = vmin.f32 %v2885, 0.0
      %v2896 = vmin.f32 %v2886, 0.0
      %v2897 = vmin.f32 %v2887, 0.0
      %v2898 = vmin.f32 %v2888, 0.0
      %v2899 = vmin.f32 %v2889, 0.0
      %v2900 = vmul.f32 %v2895, 1.442695
      %v2901 = vpow.pop %v2900
      %v2902 = vmul.f32 %v2896, 1.442695
      %v2903 = vpow.pop %v2902
      %v2904 = vmul.f32 %v2897, 1.442695
      %v2905 = vpow.pop %v2904
      %v2906 = vmul.f32 %v2898, 1.442695
      %v2907 = vpow.pop %v2906
      %v2908 = vmul.f32 %v2899, 1.442695
      %v2909 = vpow.pop %v2908
      %v2910 = vsub.f32 %v2901, 1.0
      %v2911 = vsub.f32 %v2903, 1.0
      %v2912 = vsub.f32 %v2905, 1.0
      %v2913 = vsub.f32 %v2907, 1.0
      %v2914 = vsub.f32 %v2909, 1.0
      %v2915 = vsel %vm2890, %v2885, %v2910
      %v2916 = vsel %vm2891, %v2886, %v2911
      %v2917 = vsel %vm2892, %v2887, %v2912
      %v2918 = vsel %vm2893, %v2888, %v2913
      %v2919 = vsel %vm2894, %v2889, %v2914
      %v2920 = vld [vmem:[%s1 + $0x150] sm:$0xf]
      %v2921 = vld [vmem:[%s1 + $0x154] sm:$0xf]
      %v2922 = vld [vmem:[%s1 + $0x158] sm:$0xf]
      %v2923 = vld [vmem:[%s1 + $0x15c] sm:$0xf]
      %v2924 = vld [vmem:[%s1 + $0x160] sm:$0xf]
      %v2925 = vld [vmem:[%s1 + $0x164] sm:$0xf]
      %v2926 = vld [vmem:[%s1 + $0x168] sm:$0xf]
      %v2927 = vld [vmem:[%s1 + $0x16c] sm:$0xf]
      %v2928 = vld [vmem:[%s1 + $0x170] sm:$0xf]
      %v2929 = vld [vmem:[%s1 + $0x174] sm:$0xf]
      %v2930 = vld [vmem:[%s1 + $0x178] sm:$0xf]
      %v2931 = vld [vmem:[%s1 + $0x17c] sm:$0xf]
      %v2932 = vld [vmem:[%s1 + $0x180] sm:$0xf]
      %v2933 = vld [vmem:[%s1 + $0x184] sm:$0xf]
      %v2934 = vld [vmem:[%s1 + $0x188] sm:$0xf]
      %v2935 = vld [vmem:[%s1 + $0x18c] sm:$0xf]
      %v2936 = vld [vmem:[%s1 + $0x190] sm:$0xf]
      %v2937 = vld [vmem:[%s1 + $0x194] sm:$0xf]
      %v2938 = vld [vmem:[%s2 + $0x8] sm:$0x1]
      %v2939 = vld [vmem:[%s1 + $0x198] sm:$0xf]
      %v2940 = vld [vmem:[%s1 + $0x19c] sm:$0xf]
      %v2941 = vld [vmem:[%s1 + $0x1a0] sm:$0xf]
      %v2942 = vld [vmem:[%s1 + $0x1a4] sm:$0xf]
      %v2943 = vld [vmem:[%s1 + $0x1a8] sm:$0xf]
      %v2944 = vld [vmem:[%s1 + $0x1ac] sm:$0xf]
      %v2945 = vld [vmem:[%s1 + $0x1b0] sm:$0xf]
      %v2946 = vld [vmem:[%s1 + $0x1b4] sm:$0xf]
      %v2947 = vld [vmem:[%s1 + $0x1b8] sm:$0xf]
      %v2948 = vld [vmem:[%s1 + $0x1bc] sm:$0xf]
      %v2949 = vld [vmem:[%s1 + $0x1c0] sm:$0xf]
      %v2950 = vld [vmem:[%s1 + $0x1c4] sm:$0xf]
      %v2951 = vld [vmem:[%s1 + $0x1c8] sm:$0xf]
      %v2952 = vld [vmem:[%s1 + $0x1cc] sm:$0xf]
      %v2953 = vld [vmem:[%s1 + $0x1d0] sm:$0xf]
      %v2954 = vld [vmem:[%s1 + $0x1d4] sm:$0xf]
      %v2955 = vld [vmem:[%s1 + $0x1d8] sm:$0xf]
      %v2956 = vld [vmem:[%s1 + $0x1dc] sm:$0xf]
      %v2957 = vld [vmem:[%s1 + $0x1e0] sm:$0xf]
      %v2958 = vld [vmem:[%s1 + $0x1e4] sm:$0xf]
      %v2959 = vld [vmem:[%s1 + $0x1e8] sm:$0xf]
      %v2960 = vld [vmem:[%s1 + $0x1ec] sm:$0xf]
      %v2961 = vld [vmem:[%s1 + $0x1f0] sm:$0xf]
      %v2962 = vld [vmem:[%s1 + $0x1f4] sm:$0xf]
      %v2963 = vld [vmem:[%s2 + $0x9] sm:$0x1]
      %v2964 = vld [vmem:[%s1 + $0x1f8] sm:$0xf]
      %v2965 = vld [vmem:[%s1 + $0x1fc] sm:$0xf]
      %v2966 = vld [vmem:[%s1 + $0x200] sm:$0xf]
      %v2967 = vld [vmem:[%s1 + $0x204] sm:$0xf]
      %v2968 = vld [vmem:[%s1 + $0x208] sm:$0xf]
      %v2969 = vld [vmem:[%s1 + $0x20c] sm:$0xf]
      %v2970 = vld [vmem:[%s2 + $0xa] sm:$0x1]
      %v2971 = vpack.c.bf16 %v2916, %v2915
      %v2972 = vpack.c.bf16 %v2918, %v2917
      %v2973 = vpack.c.bf16 %v2919, %v2919
      %v2975 = vshrl.u32 %v2971, 16
      %v2977 = vrot.slane %v2975, 7
      %v2978 = vshll.u32 %v2971, 16
      %v2980 = vor.u32 %v2977, %v2978
      %v2982 = vshrl.u32 %v2972, 16
      %v2984 = vrot.slane %v2982, 7
      %v2985 = vshll.u32 %v2972, 16
      %v2987 = vor.u32 %v2984, %v2985
      %v2988 = vsel %vm839, %v2977, %v2987
      %v2990 = vshrl.u32 %v2973, 16
      %v2992 = vrot.slane %v2990, 7
      %v2993 = vshll.u32 %v2973, 16
      %v2995 = vor.u32 %v2992, %v2993
      %v2996 = vsel %vm839, %v2984, %v2995
      %v2999 = vsel %vm882, 0, %v2980
      %v3000 = vsel %vm2586, %v2996, 0
      %v3002 = vshrl.u32 %v2999, 16
      %v3004 = vshll.u32 %v2999, 16
      %v3006 = vrot.slane %v3004, 1
      %v3007 = vor.u32 %v3002, %v3006
      %v3009 = vshll.u32 %v2988, 16
      %v3011 = vrot.slane %v3009, 1
      %v3012 = vsel %vm885, %v3007, %v3011
      %v3013 = vshrl.u32 %v2988, 16
      %v3015 = vor.u32 %v3013, %v3011
      %v3017 = vshll.u32 %v3000, 16
      %v3019 = vrot.slane %v3017, 1
      %v3020 = vsel %vm885, %v3015, %v3019
      %v3021 = vshrl.u32 %v3000, 16
      %v3023 = vor.u32 %v3021, %v3019
      %3024 = vrot.lane.b32.xlu0 %v3012, 48
      %v3025 = vpop.permute.xlu0 %3024
      %3026 = vrot.lane.b32.xlu0 %v3020, 48
      %v3027 = vpop.permute.xlu0 %3026
      %3028 = vrot.lane.b32.xlu0 %v3023, 48
      %v3029 = vpop.permute.xlu0 %3028
      %v3032 = vrot.slane %v2999, 1
      %v3033 = vrot.slane %v2988, 1
      %v3034 = vsel %vm942, %v3032, %v3033
      %v3035 = vrot.slane %v3000, 1
      %v3036 = vsel %vm942, %v3033, %v3035
      %3037 = vrot.lane.b32.xlu0 %v3034, 96
      %v3038 = vpop.permute.xlu0 %3037
      %3039 = vrot.lane.b32.xlu0 %v3036, 96
      %v3040 = vpop.permute.xlu0 %3039
      %3041 = vrot.lane.b32.xlu0 %v3035, 96
      %v3042 = vpop.permute.xlu0 %3041
      %v3044 = vsel %vm2500, %v2999, %v3025
      %v3046 = vsel %vm2500, %v2988, %v3027
      %v3048 = vsel %vm2500, %v3000, %v3029
      %v3050 = vsel %vm1025, %v3044, %v3038
      %v3053 = vsel %vm1025, %v3046, %v3040
      %v3056 = vsel %vm1025, %v3048, %v3042
      %v3076 = vunpack.c.l.b16 %v2920
      %v3077 = vunpack.c.l.b16 %v2921
      %v3078 = vunpack.c.l.b16 %v2922
      %v3079 = vunpack.c.l.b16 %v2923
      %v3080 = vunpack.c.l.b16 %v2924
      %v3081 = vunpack.c.l.b16 %v2925
      %v3082 = vunpack.c.l.b16 %v2926
      %v3083 = vunpack.c.l.b16 %v2927
      %v3084 = vunpack.c.l.b16 %v2928
      %v3085 = vunpack.c.l.b16 %v2929
      %v3086 = vunpack.c.l.b16 %v2930
      %v3087 = vunpack.c.l.b16 %v2931
      %v3088 = vunpack.c.l.b16 %v2932
      %v3089 = vunpack.c.l.b16 %v2933
      %v3090 = vunpack.c.l.b16 %v2934
      %v3091 = vunpack.c.l.b16 %v2935
      %v3092 = vunpack.c.l.b16 %v2936
      %v3093 = vunpack.c.l.b16 %v2937
      %v3094 = vpack.c.b16 %v3077, %v3076
      %v3095 = vpack.c.b16 %v3079, %v3078
      %v3096 = vpack.c.b16 %v3081, %v3080
      %v3097 = vpack.c.b16 %v3083, %v3082
      %v3098 = vpack.c.b16 %v3085, %v3084
      %v3099 = vpack.c.b16 %v3087, %v3086
      %v3100 = vpack.c.b16 %v3089, %v3088
      %v3101 = vpack.c.b16 %v3091, %v3090
      %v3102 = vpack.c.b16 %v3093, %v3092
      %v3112 = vsel %vm2703, %v3038, 0
      %v3114 = vsel %vm2703, %v3040, 0
      %v3116 = vsel %vm2703, %v3042, 0
      %3118 = vmatprep.subr.bf16.mxu0 0
      %3119 = vmatpush1.bf16.msra.mxu0 %v3094
      %3120 = vmatprep.subr.bf16.mxu0 0
      %3121 = vmatpush1.bf16.msra.mxu0 %v3095
      %3122 = vmatprep.subr.bf16.mxu0 0
      %3123 = vmatpush1.bf16.msra.mxu0 %v3096
      %3124 = vmatprep.subr.bf16.mxu0 0
      %3125 = vmatpush1.bf16.msra.mxu0 %v3097
      %3126 = vmatprep.subr.bf16.mxu0 0
      %3127 = vmatpush1.bf16.msra.mxu0 %v3098
      %3128 = vmatprep.subr.bf16.mxu0 0
      %3129 = vmatpush1.bf16.msra.mxu0 %v3099
      %3130 = vmatprep.subr.bf16.mxu0 0
      %3131 = vmatpush1.bf16.msra.mxu0 %v3100
      %3132 = vmatprep.subr.bf16.mxu0 0
      %3133 = vmatpush1.bf16.msra.mxu0 %v3101
      %3134 = vmatprep.subr.bf16.mxu0 0
      %3135 = vmatpush1.bf16.msra.mxu0 %v3102
      %3136 = vmatprep.subr.bf16.mxu0 0
      %3137 = vmatpush1.bf16.msra.mxu0 0
      %3138 = vmatprep.subr.bf16.mxu0 0
      %3139 = vmatpush1.bf16.msra.mxu0 0
      %3140 = vmatprep.subr.bf16.mxu0 0
      %3141 = vmatpush1.bf16.msra.mxu0 0
      %3142 = vmatprep.subr.bf16.mxu0 0
      %3143 = vmatpush1.bf16.msra.mxu0 0
      %3144 = vmatprep.subr.bf16.mxu0 0
      %3145 = vmatpush1.bf16.msra.mxu0 0
      %3146 = vmatprep.subr.bf16.mxu0 0
      %3147 = vmatpush1.bf16.msra.mxu0 0
      %3148 = vmatprep.subr.bf16.mxu0 0
      %3149 = vmatpush1.bf16.msra.mxu0 0
      %3150 = vmatprep.mubr.bf16.mxu0 %v3112
      %3151 = vmatmul.mubr.bf16.gmra.mrb[0].mxu0 %v3050
      %v3152 = vpop.f32.mrb[0].mxu0
      %v3153 = vadd.f32 0.0, %v3152
      %v3154 = vpop.f32.mrb[0].mxu0
      %v3155 = vpop.f32.mrb[0].mxu0
      %v3156 = vadd.f32 0.0, %v3155
      %v3157 = vpop.f32.mrb[0].mxu0
      %3158 = vmatprep.mubr.bf16.mxu0 %v3114
      %3159 = vmatmul.mubr.bf16.gmra.mrb[0].mxu0 %v3053
      %v3160 = vpop.f32.mrb[0].mxu0
      %v3161 = vadd.f32 0.0, %v3160
      %v3162 = vpop.f32.mrb[0].mxu0
      %v3163 = vpop.f32.mrb[0].mxu0
      %v3164 = vadd.f32 0.0, %v3163
      %v3165 = vpop.f32.mrb[0].mxu0
      %3166 = vmatprep.mubr.bf16.mxu0 %v3116
      %3167 = vmatmul.mubr.bf16.gmra.mrb[0].mxu0 %v3056
      %v3168 = vpop.f32.mrb[0].mxu0
      %v3169 = vadd.f32 0.0, %v3168
      %v3170 = vpop.f32.mrb[0].mxu0
      %v3171 = vpop.f32.mrb[0].mxu0
      %v3172 = vpop.f32.mrb[0].mxu0
      %3173 = vdwg.mxu0
      %3174 = vst.msk [vmem:[#allocation2] sm:$0xff] %vm974, %v3153
      %3175 = vst.msk [vmem:[#allocation2 + $0x8] sm:$0xff] %vm974, %v3156
      %3176 = vst.msk [vmem:[#allocation2 + $0x10] sm:$0xff] %vm974, %v3161
      %3177 = vst.msk [vmem:[#allocation2 + $0x18] sm:$0xff] %vm974, %v3164
      %3178 = vst.msk [vmem:[#allocation2 + $0x20] sm:$0xff] %vm974, %v3169
      %v3179 = vld [vmem:[#allocation2] ss:$2 sm:$0xff]
      %v3180 = vld [vmem:[%s790] ss:$2 sm:$0xff]
      %v3181 = vld [vmem:[%s792] ss:$2 sm:$0xf]
      %v3182 = vlaneseq
      %v3183 = vshrl.u32 %v3182, 7
      %v3184 = vsub.s32 0, %v3183
      %v3185 = vrot.slane %v2938, %v3184
      %v3186 = vadd.f32 %v3179, %v3185
      %v3187 = vadd.f32 %v3180, %v3185
      %v3188 = vadd.f32 %v3181, %v3185
      %vm3189 = vcmp.gt.f32.partialorder %v3186, 0.0
      %vm3190 = vcmp.gt.f32.partialorder %v3187, 0.0
      %vm3191 = vcmp.gt.f32.partialorder %v3188, 0.0
      %v3192 = vmin.f32 %v3186, 0.0
      %v3193 = vmin.f32 %v3187, 0.0
      %v3194 = vmin.f32 %v3188, 0.0
      %v3195 = vmul.f32 %v3192, 1.442695
      %v3196 = vpow.pop %v3195
      %v3197 = vmul.f32 %v3193, 1.442695
      %v3198 = vpow.pop %v3197
      %v3199 = vmul.f32 %v3194, 1.442695
      %v3200 = vpow.pop %v3199
      %v3201 = vsub.f32 %v3196, 1.0
      %v3202 = vsub.f32 %v3198, 1.0
      %v3203 = vsub.f32 %v3200, 1.0
      %v3204 = vsel %vm3189, %v3186, %v3201
      %v3205 = vsel %vm3190, %v3187, %v3202
      %v3206 = vsel %vm3191, %v3188, %v3203
      %v3207 = vpack.c.bf16 %v3205, %v3204
      %v3208 = vpack.c.bf16 %v3206, %v3206
      %v3210 = vshrl.u32 %v3207, 16
      %v3212 = vrot.slane %v3210, 7
      %v3213 = vshll.u32 %v3207, 16
      %v3215 = vor.u32 %v3212, %v3213
      %v3217 = vshrl.u32 %v3208, 16
      %v3219 = vrot.slane %v3217, 7
      %v3220 = vshll.u32 %v3208, 16
      %v3222 = vor.u32 %v3219, %v3220
      %v3223 = vsel %vm839, %v3212, %v3222
      %v3226 = vsel %vm882, 0, %v3215
      %vm3227 = vcmask 1042432
      %vm3228 = vsmask.f32 2304
      %vm3229 = vmand %vm3227, %vm3228
      %v3230 = vsel %vm3229, %v3223, 0
      %v3232 = vshrl.u32 %v3226, 16
      %v3234 = vshll.u32 %v3226, 16
      %v3236 = vrot.slane %v3234, 1
      %v3237 = vor.u32 %v3232, %v3236
      %v3239 = vshll.u32 %v3230, 16
      %v3241 = vrot.slane %v3239, 1
      %v3242 = vsel %vm885, %v3237, %v3241
      %v3243 = vshrl.u32 %v3230, 16
      %v3245 = vor.u32 %v3243, %v3241
      %3246 = vrot.lane.b32.xlu0 %v3242, 64
      %v3247 = vpop.permute.xlu0 %3246
      %3248 = vrot.lane.b32.xlu0 %v3245, 64
      %v3249 = vpop.permute.xlu0 %3248
      %v3252 = vrot.slane %v3226, 1
      %v3253 = vrot.slane %v3230, 1
      %v3254 = vsel %vm942, %v3252, %v3253
      %v3256 = vsel %vm974, %v3226, %v3247
      %v3259 = vsel %vm974, %v3230, %v3249
      %v3261 = vlaneseq
      %v3262 = vshrl.u32 %v3261, 7
      %v3263 = vsub.s32 0, %v3262
      %v3264 = vrot.slane %v2963, %v3263
      %v3289 = vunpack.c.l.b16 %v2939
      %v3290 = vunpack.c.l.b16 %v2940
      %v3291 = vunpack.c.l.b16 %v2941
      %v3292 = vunpack.c.l.b16 %v2942
      %v3293 = vunpack.c.l.b16 %v2943
      %v3294 = vunpack.c.l.b16 %v2944
      %v3295 = vunpack.c.l.b16 %v2945
      %v3296 = vunpack.c.l.b16 %v2946
      %v3297 = vunpack.c.l.b16 %v2947
      %v3298 = vunpack.c.l.b16 %v2948
      %v3299 = vunpack.c.l.b16 %v2949
      %v3300 = vunpack.c.l.b16 %v2950
      %v3301 = vunpack.c.l.b16 %v2951
      %v3302 = vunpack.c.l.b16 %v2952
      %v3303 = vunpack.c.l.b16 %v2953
      %v3304 = vunpack.c.l.b16 %v2954
      %v3305 = vunpack.c.l.b16 %v2955
      %v3306 = vunpack.c.l.b16 %v2956
      %v3307 = vunpack.c.l.b16 %v2957
      %v3308 = vunpack.c.l.b16 %v2958
      %v3309 = vunpack.c.l.b16 %v2959
      %v3310 = vunpack.c.l.b16 %v2960
      %v3311 = vunpack.c.l.b16 %v2961
      %v3312 = vunpack.c.l.b16 %v2962
      %v3313 = vpack.c.b16 %v3290, %v3289
      %v3314 = vpack.c.b16 %v3292, %v3291
      %v3315 = vpack.c.b16 %v3294, %v3293
      %v3316 = vpack.c.b16 %v3296, %v3295
      %v3317 = vpack.c.b16 %v3298, %v3297
      %v3318 = vpack.c.b16 %v3300, %v3299
      %v3319 = vpack.c.b16 %v3302, %v3301
      %v3320 = vpack.c.b16 %v3304, %v3303
      %v3321 = vpack.c.b16 %v3306, %v3305
      %v3322 = vpack.c.b16 %v3308, %v3307
      %v3323 = vpack.c.b16 %v3310, %v3309
      %v3324 = vpack.c.b16 %v3312, %v3311
      %v3338 = vsel %vm974, %v3254, 0
      %v3341 = vsel %vm974, %v3253, 0
      %3343 = vmatprep.subr.bf16.mxu0 0
      %3344 = vmatpush1.bf16.msra.mxu0 %v3313
      %3345 = vmatprep.subr.bf16.mxu0 0
      %3346 = vmatpush1.bf16.msra.mxu0 %v3314
      %3347 = vmatprep.subr.bf16.mxu0 0
      %3348 = vmatpush1.bf16.msra.mxu0 %v3315
      %3349 = vmatprep.subr.bf16.mxu0 0
      %3350 = vmatpush1.bf16.msra.mxu0 %v3316
      %3351 = vmatprep.subr.bf16.mxu0 0
      %3352 = vmatpush1.bf16.msra.mxu0 %v3317
      %3353 = vmatprep.subr.bf16.mxu0 0
      %3354 = vmatpush1.bf16.msra.mxu0 %v3318
      %3355 = vmatprep.subr.bf16.mxu0 0
      %3356 = vmatpush1.bf16.msra.mxu0 %v3319
      %3357 = vmatprep.subr.bf16.mxu0 0
      %3358 = vmatpush1.bf16.msra.mxu0 %v3320
      %3359 = vmatprep.subr.bf16.mxu0 0
      %3360 = vmatpush1.bf16.msra.mxu0 %v3321
      %3361 = vmatprep.subr.bf16.mxu0 0
      %3362 = vmatpush1.bf16.msra.mxu0 %v3322
      %3363 = vmatprep.subr.bf16.mxu0 0
      %3364 = vmatpush1.bf16.msra.mxu0 %v3323
      %3365 = vmatprep.subr.bf16.mxu0 0
      %3366 = vmatpush1.bf16.msra.mxu0 %v3324
      %3367 = vmatprep.subr.bf16.mxu0 0
      %3368 = vmatpush1.bf16.msra.mxu0 0
      %3369 = vmatprep.subr.bf16.mxu0 0
      %3370 = vmatpush1.bf16.msra.mxu0 0
      %3371 = vmatprep.subr.bf16.mxu0 0
      %3372 = vmatpush1.bf16.msra.mxu0 0
      %3373 = vmatprep.subr.bf16.mxu0 0
      %3374 = vmatpush1.bf16.msra.mxu0 0
      %3375 = vmatprep.mubr.bf16.mxu0 %v3338
      %3376 = vmatmul.mubr.bf16.gmra.mrb[0].mxu0 %v3256
      %v3377 = vpop.f32.mrb[0].mxu0
      %v3378 = vadd.f32 %v3264, %v3377
      %v3379 = vpop.f32.mrb[0].mxu0
      %v3380 = vpop.f32.mrb[0].mxu0
      %v3381 = vadd.f32 %v3264, %v3380
      %v3382 = vpop.f32.mrb[0].mxu0
      %3383 = vmatprep.mubr.bf16.mxu0 %v3341
      %3384 = vmatmul.mubr.bf16.gmra.mrb[0].mxu0 %v3259
      %v3385 = vpop.f32.mrb[0].mxu0
      %v3386 = vadd.f32 %v3264, %v3385
      %v3387 = vpop.f32.mrb[0].mxu0
      %v3388 = vpop.f32.mrb[0].mxu0
      %v3389 = vpop.f32.mrb[0].mxu0
      %3390 = vdwg.mxu0
      %v3397 = vunpack.c.l.b16 %v2964
      %v3398 = vunpack.c.l.b16 %v2965
      %v3399 = vunpack.c.l.b16 %v2966
      %v3400 = vunpack.c.l.b16 %v2967
      %v3401 = vunpack.c.l.b16 %v2968
      %v3402 = vunpack.c.l.b16 %v2969
      %v3403 = vpack.c.b16 %v3398, %v3397
      %v3404 = vpack.c.b16 %v3400, %v3399
      %v3405 = vpack.c.b16 %v3402, %v3401
      %v3409 = vsel %vm2500, %v2971, 0
      %v3411 = vsel %vm2500, %v2972, 0
      %v3413 = vsel %vm2500, %v2973, 0
      %3415 = vmatprep.subr.bf16.mxu0 0
      %3416 = vmatpush1.bf16.msra.mxu0 %v3403
      %3417 = vmatprep.subr.bf16.mxu0 0
      %3418 = vmatpush1.bf16.msra.mxu0 %v3404
      %3419 = vmatprep.subr.bf16.mxu0 0
      %3420 = vmatpush1.bf16.msra.mxu0 %v3405
      %3421 = vmatprep.subr.bf16.mxu0 0
      %3422 = vmatpush1.bf16.msra.mxu0 0
      %3423 = vmatprep.subr.bf16.mxu0 0
      %3424 = vmatpush1.bf16.msra.mxu0 0
      %3425 = vmatprep.subr.bf16.mxu0 0
      %3426 = vmatpush1.bf16.msra.mxu0 0
      %3427 = vmatprep.subr.bf16.mxu0 0
      %3428 = vmatpush1.bf16.msra.mxu0 0
      %3429 = vmatprep.subr.bf16.mxu0 0
      %3430 = vmatpush1.bf16.msra.mxu0 0
      %3431 = vmatprep.subr.bf16.mxu0 0
      %3432 = vmatpush1.bf16.msra.mxu0 0
      %3433 = vmatprep.subr.bf16.mxu0 0
      %3434 = vmatpush1.bf16.msra.mxu0 0
      %3435 = vmatprep.subr.bf16.mxu0 0
      %3436 = vmatpush1.bf16.msra.mxu0 0
      %3437 = vmatprep.subr.bf16.mxu0 0
      %3438 = vmatpush1.bf16.msra.mxu0 0
      %3439 = vmatprep.subr.bf16.mxu0 0
      %3440 = vmatpush1.bf16.msra.mxu0 0
      %3441 = vmatprep.subr.bf16.mxu0 0
      %3442 = vmatpush1.bf16.msra.mxu0 0
      %3443 = vmatprep.subr.bf16.mxu0 0
      %3444 = vmatpush1.bf16.msra.mxu0 0
      %3445 = vmatprep.subr.bf16.mxu0 0
      %3446 = vmatpush1.bf16.msra.mxu0 0
      %3447 = vmatprep.mubr.bf16.mxu0 0
      %3448 = vmatmul.mubr.bf16.gmra.mrb[0].mxu0 %v3409
      %v3449 = vpop.f32.mrb[0].mxu0
      %v3450 = vadd.f32 0.0, %v3449
      %v3451 = vpop.f32.mrb[0].mxu0
      %v3452 = vpop.f32.mrb[0].mxu0
      %v3453 = vadd.f32 0.0, %v3452
      %v3454 = vpop.f32.mrb[0].mxu0
      %3455 = vmatprep.mubr.bf16.mxu0 0
      %3456 = vmatmul.mubr.bf16.gmra.mrb[0].mxu0 %v3411
      %v3457 = vpop.f32.mrb[0].mxu0
      %v3458 = vadd.f32 0.0, %v3457
      %v3459 = vpop.f32.mrb[0].mxu0
      %v3460 = vpop.f32.mrb[0].mxu0
      %v3461 = vadd.f32 0.0, %v3460
      %v3462 = vpop.f32.mrb[0].mxu0
      %3463 = vmatprep.mubr.bf16.mxu0 0
      %3464 = vmatmul.mubr.bf16.gmra.mrb[0].mxu0 %v3413
      %v3465 = vpop.f32.mrb[0].mxu0
      %v3466 = vadd.f32 0.0, %v3465
      %v3467 = vpop.f32.mrb[0].mxu0
      %v3468 = vpop.f32.mrb[0].mxu0
      %v3469 = vpop.f32.mrb[0].mxu0
      %3470 = vdwg.mxu0
      %3471 = vst.msk [vmem:[#allocation2] sm:$0xff] %vm974, %v3450
      %3472 = vst.msk [vmem:[#allocation2 + $0x8] sm:$0xff] %vm974, %v3453
      %3473 = vst.msk [vmem:[#allocation2 + $0x10] sm:$0xff] %vm974, %v3458
      %3474 = vst.msk [vmem:[#allocation2 + $0x18] sm:$0xff] %vm974, %v3461
      %3475 = vst.msk [vmem:[#allocation2 + $0x20] sm:$0xff] %vm974, %v3466
      %v3476 = vld [vmem:[#allocation2] ss:$2 sm:$0xff]
      %v3477 = vld [vmem:[%s790] ss:$2 sm:$0xff]
      %v3478 = vld [vmem:[%s792] ss:$2 sm:$0xf]
      %v3479 = vlaneseq
      %v3480 = vshrl.u32 %v3479, 7
      %v3481 = vsub.s32 0, %v3480
      %v3482 = vrot.slane %v2970, %v3481
      %v3483 = vadd.f32 %v3476, %v3482
      %v3484 = vadd.f32 %v3477, %v3482
      %v3485 = vadd.f32 %v3478, %v3482
      %v3486 = vadd.f32 %v3378, %v3483
      %v3487 = vadd.f32 %v3381, %v3484
      %v3488 = vadd.f32 %v3386, %v3485
      %vm3489 = vcmp.gt.f32.partialorder %v3486, 0.0
      %vm3490 = vcmp.gt.f32.partialorder %v3487, 0.0
      %vm3491 = vcmp.gt.f32.partialorder %v3488, 0.0
      %v3492 = vmin.f32 %v3486, 0.0
      %v3493 = vmin.f32 %v3487, 0.0
      %v3494 = vmin.f32 %v3488, 0.0
      %v3495 = vmul.f32 %v3492, 1.442695
      %v3496 = vpow.pop %v3495
      %v3497 = vmul.f32 %v3493, 1.442695
      %v3498 = vpow.pop %v3497
      %v3499 = vmul.f32 %v3494, 1.442695
      %v3500 = vpow.pop %v3499
      %v3501 = vsub.f32 %v3496, 1.0
      %v3502 = vsub.f32 %v3498, 1.0
      %v3503 = vsub.f32 %v3500, 1.0
      %v3504 = vsel %vm3489, %v3486, %v3501
      %v3505 = vsel %vm3490, %v3487, %v3502
      %v3506 = vsel %vm3491, %v3488, %v3503
      %v3508 = vrot.slane %v3504, 1
      %v3510 = vadd.f32 %v3504, %v3508
      %v3511 = vrot.slane %v3504, 2
      %v3513 = vadd.f32 %v3510, %v3511
      %v3514 = vrot.slane %v3504, 3
      %v3516 = vadd.f32 %v3513, %v3514
      %v3518 = vrot.slane %v3504, 4
      %v3519 = vrot.slane %v3505, 4
      %v3520 = vsel %vm280, %v3518, %v3519
      %v3522 = vadd.f32 %v3516, %v3520
      %v3523 = vrot.slane %v3504, 5
      %v3524 = vrot.slane %v3505, 5
      %v3525 = vsel %vm279, %v3523, %v3524
      %v3527 = vadd.f32 %v3522, %v3525
      %vm3528 = vcmask 1041408
      %v3529 = vrot.slane %v3504, 6
      %v3530 = vrot.slane %v3505, 6
      %v3531 = vsel %vm3528, %v3529, %v3530
      %v3533 = vadd.f32 %v3527, %v3531
      %v3534 = vrot.slane %v3504, 7
      %v3535 = vrot.slane %v3505, 7
      %v3536 = vsel %vm539, %v3534, %v3535
      %v3538 = vadd.f32 %v3533, %v3536
      %v3539 = vadd.f32 %v3538, %v3505
      %v3540 = vrot.slane %v3505, 1
      %v3542 = vadd.f32 %v3539, %v3540
      %v3543 = vrot.slane %v3505, 2
      %v3545 = vadd.f32 %v3542, %v3543
      %v3546 = vrot.slane %v3505, 3
      %v3548 = vadd.f32 %v3545, %v3546
      %v3550 = vrot.slane %v3506, 4
      %v3551 = vsel %vm280, %v3519, %v3550
      %v3553 = vadd.f32 %v3548, %v3551
      %v3554 = vrot.slane %v3506, 5
      %v3555 = vsel %vm279, %v3524, %v3554
      %v3557 = vadd.f32 %v3553, %v3555
      %v3558 = vrot.slane %v3506, 6
      %v3559 = vsel %vm3528, %v3530, %v3558
      %v3561 = vadd.f32 %v3557, %v3559
      %v3562 = vrot.slane %v3506, 7
      %v3563 = vsel %vm539, %v3535, %v3562
      %v3565 = vadd.f32 %v3561, %v3563
      %v3566 = vmul.f32 %v3565, 0.0625
      %vm3567 = vcmask 520192
      %3568 = vst.msk [vmem:[%s170] sm:$0x1f] %vm3567, %v3566
      %v3569 = vld [vmem:[%s1 + $0x210] sm:$0xf]
      %v3570 = vld [vmem:[%s1 + $0x214] sm:$0xf]
      %v3571 = vld [vmem:[%s1 + $0x218] sm:$0xf]
      %v3572 = vld [vmem:[%s1 + $0x21c] sm:$0xf]
      %v3573 = vld [vmem:[%s1 + $0x220] sm:$0xf]
      %v3574 = vld [vmem:[%s1 + $0x224] sm:$0xf]
      %v3575 = vld [vmem:[%s1 + $0x228] sm:$0xf]
      %v3576 = vld [vmem:[%s1 + $0x22c] sm:$0xf]
      %v3577 = vld [vmem:[%s1 + $0x230] sm:$0xf]
      %v3578 = vld [vmem:[%s1 + $0x234] sm:$0xf]
      %v3579 = vld [vmem:[%s1 + $0x238] sm:$0xf]
      %v3580 = vld [vmem:[%s1 + $0x23c] sm:$0xf]
      %v3581 = vld [vmem:[%s1 + $0x240] sm:$0xf]
      %v3582 = vld [vmem:[%s1 + $0x244] sm:$0xf]
      %v3583 = vld [vmem:[%s1 + $0x248] sm:$0xf]
      %v3584 = vld [vmem:[%s1 + $0x24c] sm:$0xf]
      %v3585 = vld [vmem:[%s1 + $0x250] sm:$0xf]
      %v3586 = vld [vmem:[%s1 + $0x254] sm:$0xf]
      %v3587 = vld [vmem:[%s1 + $0x258] sm:$0xf]
      %v3588 = vld [vmem:[%s1 + $0x25c] sm:$0xf]
      %v3589 = vld [vmem:[%s2 + $0xb] sm:$0x1]
      %v3590 = vld [vmem:[%s1 + $0x260] sm:$0xf]
      %v3591 = vld [vmem:[%s1 + $0x264] sm:$0xf]
      %v3592 = vld [vmem:[%s1 + $0x268] sm:$0xf]
      %v3593 = vld [vmem:[%s1 + $0x26c] sm:$0xf]
      %v3594 = vld [vmem:[%s1 + $0x270] sm:$0xf]
      %v3595 = vld [vmem:[%s1 + $0x274] sm:$0xf]
      %v3596 = vld [vmem:[%s1 + $0x278] sm:$0xf]
      %v3597 = vld [vmem:[%s1 + $0x27c] sm:$0xf]
      %v3598 = vld [vmem:[%s1 + $0x280] sm:$0xf]
      %v3599 = vld [vmem:[%s1 + $0x284] sm:$0xf]
      %v3600 = vld [vmem:[%s1 + $0x288] sm:$0xf]
      %v3601 = vld [vmem:[%s1 + $0x28c] sm:$0xf]
      %v3602 = vld [vmem:[%s1 + $0x290] sm:$0xf]
      %v3603 = vld [vmem:[%s1 + $0x294] sm:$0xf]
      %v3604 = vld [vmem:[%s1 + $0x298] sm:$0xf]
      %v3605 = vld [vmem:[%s1 + $0x29c] sm:$0xf]
      %v3606 = vld [vmem:[%s1 + $0x2a0] sm:$0xf]
      %v3607 = vld [vmem:[%s1 + $0x2a4] sm:$0xf]
      %v3608 = vld [vmem:[%s1 + $0x2a8] sm:$0xf]
      %v3609 = vld [vmem:[%s1 + $0x2ac] sm:$0xf]
      %v3610 = vld [vmem:[%s2 + $0xc] sm:$0x1]
      %3611 = vrot.lane.b32.xlu0 %v924, 32
      %v3612 = vpop.permute.xlu0 %3611
      %3613 = vrot.lane.b32.xlu0 %v950, 64
      %v3614 = vpop.permute.xlu0 %3613
      %vm3615 = vsmask.f32 6400
      %v3616 = vrot.slane %v887, 1
      %v3617 = vrot.slane %v889, 2
      %v3618 = vor.u32 %v3616, %v3617
      %v3619 = vrot.slane %v898, 1
      %v3620 = vrot.slane %v894, 2
      %v3621 = vor.u32 %v3619, %v3620
      %v3622 = vsel %vm3615, %v3618, %v3621
      %v3623 = vrot.slane %v906, 1
      %v3624 = vrot.slane %v902, 2
      %v3625 = vor.u32 %v3623, %v3624
      %v3626 = vsel %vm3615, %v3621, %v3625
      %v3627 = vrot.slane %v914, 1
      %v3628 = vrot.slane %v910, 2
      %v3629 = vor.u32 %v3627, %v3628
      %v3630 = vsel %vm3615, %v3625, %v3629
      %v3631 = vrot.slane %v922, 1
      %v3632 = vrot.slane %v918, 2
      %v3633 = vor.u32 %v3631, %v3632
      %v3634 = vsel %vm3615, %v3629, %v3633
      %v3635 = vrot.slane %v926, 2
      %v3636 = vsel %vm3615, %v3633, %v3635
      %3637 = vrot.lane.b32.xlu0 %v3622, 96
      %v3638 = vpop.permute.xlu0 %3637
      %3639 = vrot.lane.b32.xlu0 %v3626, 96
      %v3640 = vpop.permute.xlu0 %3639
      %3641 = vrot.lane.b32.xlu0 %v3630, 96
      %v3642 = vpop.permute.xlu0 %3641
      %3643 = vrot.lane.b32.xlu0 %v3634, 96
      %v3644 = vpop.permute.xlu0 %3643
      %3645 = vrot.lane.b32.xlu0 %v3636, 96
      %v3646 = vpop.permute.xlu0 %3645
      %vm3647 = vcmask 1045504
      %v3648 = vrot.slane %v883, 2
      %v3649 = vrot.slane %v854, 2
      %v3650 = vsel %vm3647, %v3648, %v3649
      %v3651 = vrot.slane %v862, 2
      %v3652 = vsel %vm3647, %v3649, %v3651
      %v3653 = vrot.slane %v870, 2
      %v3654 = vsel %vm3647, %v3651, %v3653
      %v3655 = vrot.slane %v878, 2
      %v3656 = vsel %vm3647, %v3653, %v3655
      %v3657 = vrot.slane %v884, 2
      %v3658 = vsel %vm3647, %v3655, %v3657
      %v3660 = vsel %vm768, %v878, %v3612
      %v3662 = vsel %vm974, %v3660, %v3614
      %v3664 = vsel %vm1025, %v976, %v3638
      %v3667 = vsel %vm1025, %v978, %v3640
      %v3670 = vsel %vm1025, %v980, %v3642
      %v3673 = vsel %vm1025, %v982, %v3644
      %v3676 = vsel %vm1025, %v3662, %v3646
      %v3678 = vlaneseq
      %v3679 = vshrl.u32 %v3678, 7
      %v3680 = vsub.s32 0, %v3679
      %v3681 = vrot.slane %v3589, %v3680
      %v3702 = vunpack.c.l.b16 %v3569
      %v3703 = vunpack.c.l.b16 %v3570
      %v3704 = vunpack.c.l.b16 %v3571
      %v3705 = vunpack.c.l.b16 %v3572
      %v3706 = vunpack.c.l.b16 %v3573
      %v3707 = vunpack.c.l.b16 %v3574
      %v3708 = vunpack.c.l.b16 %v3575
      %v3709 = vunpack.c.l.b16 %v3576
      %v3710 = vunpack.c.l.b16 %v3577
      %v3711 = vunpack.c.l.b16 %v3578
      %v3712 = vunpack.c.l.b16 %v3579
      %v3713 = vunpack.c.l.b16 %v3580
      %v3714 = vunpack.c.l.b16 %v3581
      %v3715 = vunpack.c.l.b16 %v3582
      %v3716 = vunpack.c.l.b16 %v3583
      %v3717 = vunpack.c.l.b16 %v3584
      %v3718 = vunpack.c.l.b16 %v3585
      %v3719 = vunpack.c.l.b16 %v3586
      %v3720 = vunpack.c.l.b16 %v3587
      %v3721 = vunpack.c.l.b16 %v3588
      %v3722 = vpack.c.b16 %v3703, %v3702
      %v3723 = vpack.c.b16 %v3705, %v3704
      %v3724 = vpack.c.b16 %v3707, %v3706
      %v3725 = vpack.c.b16 %v3709, %v3708
      %v3726 = vpack.c.b16 %v3711, %v3710
      %v3727 = vpack.c.b16 %v3713, %v3712
      %v3728 = vpack.c.b16 %v3715, %v3714
      %v3729 = vpack.c.b16 %v3717, %v3716
      %v3730 = vpack.c.b16 %v3719, %v3718
      %v3731 = vpack.c.b16 %v3721, %v3720
      %v3743 = vsel %vm768, %v3650, 0
      %v3746 = vsel %vm768, %v3652, 0
      %v3749 = vsel %vm768, %v3654, 0
      %v3752 = vsel %vm768, %v3656, 0
      %v3755 = vsel %vm768, %v3658, 0
      %3757 = vmatprep.subr.bf16.mxu0 0
      %3758 = vmatpush1.bf16.msra.mxu0 %v3722
      %3759 = vmatprep.subr.bf16.mxu0 0
      %3760 = vmatpush1.bf16.msra.mxu0 %v3723
      %3761 = vmatprep.subr.bf16.mxu0 0
      %3762 = vmatpush1.bf16.msra.mxu0 %v3724
      %3763 = vmatprep.subr.bf16.mxu0 0
      %3764 = vmatpush1.bf16.msra.mxu0 %v3725
      %3765 = vmatprep.subr.bf16.mxu0 0
      %3766 = vmatpush1.bf16.msra.mxu0 %v3726
      %3767 = vmatprep.subr.bf16.mxu0 0
      %3768 = vmatpush1.bf16.msra.mxu0 %v3727
      %3769 = vmatprep.subr.bf16.mxu0 0
      %3770 = vmatpush1.bf16.msra.mxu0 %v3728
      %3771 = vmatprep.subr.bf16.mxu0 0
      %3772 = vmatpush1.bf16.msra.mxu0 %v3729
      %3773 = vmatprep.subr.bf16.mxu0 0
      %3774 = vmatpush1.bf16.msra.mxu0 %v3730
      %3775 = vmatprep.subr.bf16.mxu0 0
      %3776 = vmatpush1.bf16.msra.mxu0 %v3731
      %3777 = vmatprep.subr.bf16.mxu0 0
      %3778 = vmatpush1.bf16.msra.mxu0 0
      %3779 = vmatprep.subr.bf16.mxu0 0
      %3780 = vmatpush1.bf16.msra.mxu0 0
      %3781 = vmatprep.subr.bf16.mxu0 0
      %3782 = vmatpush1.bf16.msra.mxu0 0
      %3783 = vmatprep.subr.bf16.mxu0 0
      %3784 = vmatpush1.bf16.msra.mxu0 0
      %3785 = vmatprep.subr.bf16.mxu0 0
      %3786 = vmatpush1.bf16.msra.mxu0 0
      %3787 = vmatprep.subr.bf16.mxu0 0
      %3788 = vmatpush1.bf16.msra.mxu0 0
      %3789 = vmatprep.mubr.bf16.mxu0 %v3743
      %3790 = vmatmul.mubr.bf16.gmra.mrb[0].mxu0 %v3664
      %v3791 = vpop.f32.mrb[0].mxu0
      %v3792 = vadd.f32 %v3681, %v3791
      %v3793 = vpop.f32.mrb[0].mxu0
      %v3794 = vpop.f32.mrb[0].mxu0
      %v3795 = vadd.f32 %v3681, %v3794
      %v3796 = vpop.f32.mrb[0].mxu0
      %3797 = vmatprep.mubr.bf16.mxu0 %v3746
      %3798 = vmatmul.mubr.bf16.gmra.mrb[0].mxu0 %v3667
      %v3799 = vpop.f32.mrb[0].mxu0
      %v3800 = vadd.f32 %v3681, %v3799
      %v3801 = vpop.f32.mrb[0].mxu0
      %v3802 = vpop.f32.mrb[0].mxu0
      %v3803 = vadd.f32 %v3681, %v3802
      %v3804 = vpop.f32.mrb[0].mxu0
      %3805 = vmatprep.mubr.bf16.mxu0 %v3749
      %3806 = vmatmul.mubr.bf16.gmra.mrb[0].mxu0 %v3670
      %v3807 = vpop.f32.mrb[0].mxu0
      %v3808 = vadd.f32 %v3681, %v3807
      %v3809 = vpop.f32.mrb[0].mxu0
      %v3810 = vpop.f32.mrb[0].mxu0
      %v3811 = vadd.f32 %v3681, %v3810
      %v3812 = vpop.f32.mrb[0].mxu0
      %3813 = vmatprep.mubr.bf16.mxu0 %v3752
      %3814 = vmatmul.mubr.bf16.gmra.mrb[0].mxu0 %v3673
      %v3815 = vpop.f32.mrb[0].mxu0
      %v3816 = vadd.f32 %v3681, %v3815
      %v3817 = vpop.f32.mrb[0].mxu0
      %v3818 = vpop.f32.mrb[0].mxu0
      %v3819 = vadd.f32 %v3681, %v3818
      %v3820 = vpop.f32.mrb[0].mxu0
      %3821 = vmatprep.mubr.bf16.mxu0 %v3755
      %3822 = vmatmul.mubr.bf16.gmra.mrb[0].mxu0 %v3676
      %v3823 = vpop.f32.mrb[0].mxu0
      %v3824 = vadd.f32 %v3681, %v3823
      %v3825 = vpop.f32.mrb[0].mxu0
      %v3826 = vpop.f32.mrb[0].mxu0
      %v3827 = vadd.f32 %v3681, %v3826
      %v3828 = vpop.f32.mrb[0].mxu0
      %3829 = vdwg.mxu0
      %vm3830 = vcmp.gt.f32.partialorder %v3792, 0.0
      %vm3831 = vcmp.gt.f32.partialorder %v3795, 0.0
      %vm3832 = vcmp.gt.f32.partialorder %v3800, 0.0
      %vm3833 = vcmp.gt.f32.partialorder %v3803, 0.0
      %vm3834 = vcmp.gt.f32.partialorder %v3808, 0.0
      %vm3835 = vcmp.gt.f32.partialorder %v3811, 0.0
      %vm3836 = vcmp.gt.f32.partialorder %v3816, 0.0
      %vm3837 = vcmp.gt.f32.partialorder %v3819, 0.0
      %vm3838 = vcmp.gt.f32.partialorder %v3824, 0.0
      %vm3839 = vcmp.gt.f32.partialorder %v3827, 0.0
      %v3840 = vmin.f32 %v3792, 0.0
      %v3841 = vmin.f32 %v3795, 0.0
      %v3842 = vmin.f32 %v3800, 0.0
      %v3843 = vmin.f32 %v3803, 0.0
      %v3844 = vmin.f32 %v3808, 0.0
      %v3845 = vmin.f32 %v3811, 0.0
      %v3846 = vmin.f32 %v3816, 0.0
      %v3847 = vmin.f32 %v3819, 0.0
      %v3848 = vmin.f32 %v3824, 0.0
      %v3849 = vmin.f32 %v3827, 0.0
      %v3850 = vmul.f32 %v3840, 1.442695
      %v3851 = vpow.pop %v3850
      %v3852 = vmul.f32 %v3841, 1.442695
      %v3853 = vpow.pop %v3852
      %v3854 = vmul.f32 %v3842, 1.442695
      %v3855 = vpow.pop %v3854
      %v3856 = vmul.f32 %v3843, 1.442695
      %v3857 = vpow.pop %v3856
      %v3858 = vmul.f32 %v3844, 1.442695
      %v3859 = vpow.pop %v3858
      %v3860 = vmul.f32 %v3845, 1.442695
      %v3861 = vpow.pop %v3860
      %v3862 = vmul.f32 %v3846, 1.442695
      %v3863 = vpow.pop %v3862
      %v3864 = vmul.f32 %v3847, 1.442695
      %v3865 = vpow.pop %v3864
      %v3866 = vmul.f32 %v3848, 1.442695
      %v3867 = vpow.pop %v3866
      %v3868 = vmul.f32 %v3849, 1.442695
      %v3869 = vpow.pop %v3868
      %v3870 = vsub.f32 %v3851, 1.0
      %v3871 = vsub.f32 %v3853, 1.0
      %v3872 = vsub.f32 %v3855, 1.0
      %v3873 = vsub.f32 %v3857, 1.0
      %v3874 = vsub.f32 %v3859, 1.0
      %v3875 = vsub.f32 %v3861, 1.0
      %v3876 = vsub.f32 %v3863, 1.0
      %v3877 = vsub.f32 %v3865, 1.0
      %v3878 = vsub.f32 %v3867, 1.0
      %v3879 = vsub.f32 %v3869, 1.0
      %v3880 = vsel %vm3830, %v3792, %v3870
      %v3881 = vsel %vm3831, %v3795, %v3871
      %v3882 = vsel %vm3832, %v3800, %v3872
      %v3883 = vsel %vm3833, %v3803, %v3873
      %v3884 = vsel %vm3834, %v3808, %v3874
      %v3885 = vsel %vm3835, %v3811, %v3875
      %v3886 = vsel %vm3836, %v3816, %v3876
      %v3887 = vsel %vm3837, %v3819, %v3877
      %v3888 = vsel %vm3838, %v3824, %v3878
      %v3889 = vsel %vm3839, %v3827, %v3879
      %v3890 = vpack.c.bf16 %v3881, %v3880
      %v3891 = vpack.c.bf16 %v3883, %v3882
      %v3892 = vpack.c.bf16 %v3885, %v3884
      %v3893 = vpack.c.bf16 %v3887, %v3886
      %v3894 = vpack.c.bf16 %v3889, %v3888
      %v3896 = vshrl.u32 %v3890, 16
      %v3898 = vrot.slane %v3896, 7
      %v3899 = vshll.u32 %v3890, 16
      %v3901 = vor.u32 %v3898, %v3899
      %v3903 = vshrl.u32 %v3891, 16
      %v3905 = vrot.slane %v3903, 7
      %v3906 = vshll.u32 %v3891, 16
      %v3908 = vor.u32 %v3905, %v3906
      %v3909 = vsel %vm839, %v3898, %v3908
      %v3911 = vshrl.u32 %v3892, 16
      %v3913 = vrot.slane %v3911, 7
      %v3914 = vshll.u32 %v3892, 16
      %v3916 = vor.u32 %v3913, %v3914
      %v3917 = vsel %vm839, %v3905, %v3916
      %v3919 = vshrl.u32 %v3893, 16
      %v3921 = vrot.slane %v3919, 7
      %v3922 = vshll.u32 %v3893, 16
      %v3924 = vor.u32 %v3921, %v3922
      %v3925 = vsel %vm839, %v3913, %v3924
      %v3927 = vshrl.u32 %v3894, 16
      %v3929 = vrot.slane %v3927, 7
      %v3930 = vshll.u32 %v3894, 16
      %v3932 = vor.u32 %v3929, %v3930
      %v3933 = vsel %vm839, %v3921, %v3932
      %v3936 = vsel %vm882, 0, %v3901
      %vm3937 = vcmask 1047552
      %vm3938 = vmand %vm3937, %vm885
      %v3939 = vsel %vm3938, %v3933, 0
      %v3941 = vshrl.u32 %v3936, 16
      %v3943 = vshll.u32 %v3936, 16
      %v3945 = vrot.slane %v3943, 1
      %v3946 = vor.u32 %v3941, %v3945
      %v3948 = vshll.u32 %v3909, 16
      %v3950 = vrot.slane %v3948, 1
      %v3951 = vsel %vm885, %v3946, %v3950
      %v3952 = vshrl.u32 %v3909, 16
      %v3954 = vor.u32 %v3952, %v3950
      %v3956 = vshll.u32 %v3917, 16
      %v3958 = vrot.slane %v3956, 1
      %v3959 = vsel %vm885, %v3954, %v3958
      %v3960 = vshrl.u32 %v3917, 16
      %v3962 = vor.u32 %v3960, %v3958
      %v3964 = vshll.u32 %v3925, 16
      %v3966 = vrot.slane %v3964, 1
      %v3967 = vsel %vm885, %v3962, %v3966
      %v3968 = vshrl.u32 %v3925, 16
      %v3970 = vor.u32 %v3968, %v3966
      %v3972 = vshll.u32 %v3939, 16
      %v3974 = vrot.slane %v3972, 1
      %v3975 = vsel %vm885, %v3970, %v3974
      %v3976 = vshrl.u32 %v3939, 16
      %v3978 = vor.u32 %v3976, %v3974
      %3979 = vrot.lane.b32.xlu0 %v3951, 32
      %v3980 = vpop.permute.xlu0 %3979
      %3981 = vrot.lane.b32.xlu0 %v3959, 32
      %v3982 = vpop.permute.xlu0 %3981
      %3983 = vrot.lane.b32.xlu0 %v3967, 32
      %v3984 = vpop.permute.xlu0 %3983
      %3985 = vrot.lane.b32.xlu0 %v3975, 32
      %v3986 = vpop.permute.xlu0 %3985
      %3987 = vrot.lane.b32.xlu0 %v3978, 32
      %v3988 = vpop.permute.xlu0 %3987
      %v3991 = vrot.slane %v3936, 1
      %v3992 = vrot.slane %v3909, 1
      %v3993 = vsel %vm942, %v3991, %v3992
      %v3994 = vrot.slane %v3917, 1
      %v3995 = vsel %vm942, %v3992, %v3994
      %v3996 = vrot.slane %v3925, 1
      %v3997 = vsel %vm942, %v3994, %v3996
      %v3998 = vrot.slane %v3939, 1
      %v3999 = vsel %vm942, %v3996, %v3998
      %4000 = vrot.lane.b32.xlu0 %v3993, 64
      %v4001 = vpop.permute.xlu0 %4000
      %4002 = vrot.lane.b32.xlu0 %v3995, 64
      %v4003 = vpop.permute.xlu0 %4002
      %4004 = vrot.lane.b32.xlu0 %v3997, 64
      %v4005 = vpop.permute.xlu0 %4004
      %4006 = vrot.lane.b32.xlu0 %v3999, 64
      %v4007 = vpop.permute.xlu0 %4006
      %4008 = vrot.lane.b32.xlu0 %v3998, 64
      %v4009 = vpop.permute.xlu0 %4008
      %v4010 = vrot.slane %v3941, 1
      %v4011 = vrot.slane %v3943, 2
      %v4012 = vor.u32 %v4010, %v4011
      %v4013 = vrot.slane %v3952, 1
      %v4014 = vrot.slane %v3948, 2
      %v4015 = vor.u32 %v4013, %v4014
      %v4016 = vsel %vm3615, %v4012, %v4015
      %v4017 = vrot.slane %v3960, 1
      %v4018 = vrot.slane %v3956, 2
      %v4019 = vor.u32 %v4017, %v4018
      %v4020 = vsel %vm3615, %v4015, %v4019
      %v4021 = vrot.slane %v3968, 1
      %v4022 = vrot.slane %v3964, 2
      %v4023 = vor.u32 %v4021, %v4022
      %v4024 = vsel %vm3615, %v4019, %v4023
      %v4025 = vrot.slane %v3976, 1
      %v4026 = vrot.slane %v3972, 2
      %v4027 = vor.u32 %v4025, %v4026
      %v4028 = vsel %vm3615, %v4023, %v4027
      %4029 = vrot.lane.b32.xlu0 %v4016, 96
      %v4030 = vpop.permute.xlu0 %4029
      %4031 = vrot.lane.b32.xlu0 %v4020, 96
      %v4032 = vpop.permute.xlu0 %4031
      %4033 = vrot.lane.b32.xlu0 %v4024, 96
      %v4034 = vpop.permute.xlu0 %4033
      %4035 = vrot.lane.b32.xlu0 %v4028, 96
      %v4036 = vpop.permute.xlu0 %4035
      %4037 = vrot.lane.b32.xlu0 %v4027, 96
      %v4038 = vpop.permute.xlu0 %4037
      %v4039 = vrot.slane %v3936, 2
      %v4040 = vrot.slane %v3909, 2
      %v4041 = vsel %vm3647, %v4039, %v4040
      %v4042 = vrot.slane %v3917, 2
      %v4043 = vsel %vm3647, %v4040, %v4042
      %v4044 = vrot.slane %v3925, 2
      %v4045 = vsel %vm3647, %v4042, %v4044
      %v4046 = vrot.slane %v3939, 2
      %v4047 = vsel %vm3647, %v4044, %v4046
      %v4049 = vsel %vm768, %v3936, %v3980
      %v4051 = vsel %vm768, %v3909, %v3982
      %v4053 = vsel %vm768, %v3917, %v3984
      %v4055 = vsel %vm768, %v3925, %v3986
      %v4057 = vsel %vm768, %v3939, %v3988
      %v4059 = vsel %vm974, %v4049, %v4001
      %v4061 = vsel %vm974, %v4051, %v4003
      %v4063 = vsel %vm974, %v4053, %v4005
      %v4065 = vsel %vm974, %v4055, %v4007
      %v4067 = vsel %vm974, %v4057, %v4009
      %v4069 = vsel %vm1025, %v4059, %v4030
      %v4072 = vsel %vm1025, %v4061, %v4032
      %v4075 = vsel %vm1025, %v4063, %v4034
      %v4078 = vsel %vm1025, %v4065, %v4036
      %v4081 = vsel %vm1025, %v4067, %v4038
      %v4083 = vlaneseq
      %v4084 = vshrl.u32 %v4083, 7
      %v4085 = vsub.s32 0, %v4084
      %v4086 = vrot.slane %v3610, %v4085
      %v4107 = vunpack.c.l.b16 %v3590
      %v4108 = vunpack.c.l.b16 %v3591
      %v4109 = vunpack.c.l.b16 %v3592
      %v4110 = vunpack.c.l.b16 %v3593
      %v4111 = vunpack.c.l.b16 %v3594
      %v4112 = vunpack.c.l.b16 %v3595
      %v4113 = vunpack.c.l.b16 %v3596
      %v4114 = vunpack.c.l.b16 %v3597
      %v4115 = vunpack.c.l.b16 %v3598
      %v4116 = vunpack.c.l.b16 %v3599
      %v4117 = vunpack.c.l.b16 %v3600
      %v4118 = vunpack.c.l.b16 %v3601
      %v4119 = vunpack.c.l.b16 %v3602
      %v4120 = vunpack.c.l.b16 %v3603
      %v4121 = vunpack.c.l.b16 %v3604
      %v4122 = vunpack.c.l.b16 %v3605
      %v4123 = vunpack.c.l.b16 %v3606
      %v4124 = vunpack.c.l.b16 %v3607
      %v4125 = vunpack.c.l.b16 %v3608
      %v4126 = vunpack.c.l.b16 %v3609
      %v4127 = vpack.c.b16 %v4108, %v4107
      %v4128 = vpack.c.b16 %v4110, %v4109
      %v4129 = vpack.c.b16 %v4112, %v4111
      %v4130 = vpack.c.b16 %v4114, %v4113
      %v4131 = vpack.c.b16 %v4116, %v4115
      %v4132 = vpack.c.b16 %v4118, %v4117
      %v4133 = vpack.c.b16 %v4120, %v4119
      %v4134 = vpack.c.b16 %v4122, %v4121
      %v4135 = vpack.c.b16 %v4124, %v4123
      %v4136 = vpack.c.b16 %v4126, %v4125
      %v4148 = vsel %vm768, %v4041, 0
      %v4151 = vsel %vm768, %v4043, 0
      %v4154 = vsel %vm768, %v4045, 0
      %v4157 = vsel %vm768, %v4047, 0
      %v4160 = vsel %vm768, %v4046, 0
      %4162 = vmatprep.subr.bf16.mxu0 0
      %4163 = vmatpush1.bf16.msra.mxu0 %v4127
      %4164 = vmatprep.subr.bf16.mxu0 0
      %4165 = vmatpush1.bf16.msra.mxu0 %v4128
      %4166 = vmatprep.subr.bf16.mxu0 0
      %4167 = vmatpush1.bf16.msra.mxu0 %v4129
      %4168 = vmatprep.subr.bf16.mxu0 0
      %4169 = vmatpush1.bf16.msra.mxu0 %v4130
      %4170 = vmatprep.subr.bf16.mxu0 0
      %4171 = vmatpush1.bf16.msra.mxu0 %v4131
      %4172 = vmatprep.subr.bf16.mxu0 0
      %4173 = vmatpush1.bf16.msra.mxu0 %v4132
      %4174 = vmatprep.subr.bf16.mxu0 0
      %4175 = vmatpush1.bf16.msra.mxu0 %v4133
      %4176 = vmatprep.subr.bf16.mxu0 0
      %4177 = vmatpush1.bf16.msra.mxu0 %v4134
      %4178 = vmatprep.subr.bf16.mxu0 0
      %4179 = vmatpush1.bf16.msra.mxu0 %v4135
      %4180 = vmatprep.subr.bf16.mxu0 0
      %4181 = vmatpush1.bf16.msra.mxu0 %v4136
      %4182 = vmatprep.subr.bf16.mxu0 0
      %4183 = vmatpush1.bf16.msra.mxu0 0
      %4184 = vmatprep.subr.bf16.mxu0 0
      %4185 = vmatpush1.bf16.msra.mxu0 0
      %4186 = vmatprep.subr.bf16.mxu0 0
      %4187 = vmatpush1.bf16.msra.mxu0 0
      %4188 = vmatprep.subr.bf16.mxu0 0
      %4189 = vmatpush1.bf16.msra.mxu0 0
      %4190 = vmatprep.subr.bf16.mxu0 0
      %4191 = vmatpush1.bf16.msra.mxu0 0
      %4192 = vmatprep.subr.bf16.mxu0 0
      %4193 = vmatpush1.bf16.msra.mxu0 0
      %4194 = vmatprep.mubr.bf16.mxu0 %v4148
      %4195 = vmatmul.mubr.bf16.gmra.mrb[0].mxu0 %v4069
      %v4196 = vpop.f32.mrb[0].mxu0
      %v4197 = vadd.f32 %v4086, %v4196
      %v4198 = vpop.f32.mrb[0].mxu0
      %v4199 = vpop.f32.mrb[0].mxu0
      %v4200 = vadd.f32 %v4086, %v4199
      %v4201 = vpop.f32.mrb[0].mxu0
      %4202 = vmatprep.mubr.bf16.mxu0 %v4151
      %4203 = vmatmul.mubr.bf16.gmra.mrb[0].mxu0 %v4072
      %v4204 = vpop.f32.mrb[0].mxu0
      %v4205 = vadd.f32 %v4086, %v4204
      %v4206 = vpop.f32.mrb[0].mxu0
      %v4207 = vpop.f32.mrb[0].mxu0
      %v4208 = vadd.f32 %v4086, %v4207
      %v4209 = vpop.f32.mrb[0].mxu0
      %4210 = vmatprep.mubr.bf16.mxu0 %v4154
      %4211 = vmatmul.mubr.bf16.gmra.mrb[0].mxu0 %v4075
      %v4212 = vpop.f32.mrb[0].mxu0
      %v4213 = vadd.f32 %v4086, %v4212
      %v4214 = vpop.f32.mrb[0].mxu0
      %v4215 = vpop.f32.mrb[0].mxu0
      %v4216 = vadd.f32 %v4086, %v4215
      %v4217 = vpop.f32.mrb[0].mxu0
      %4218 = vmatprep.mubr.bf16.mxu0 %v4157
      %4219 = vmatmul.mubr.bf16.gmra.mrb[0].mxu0 %v4078
      %v4220 = vpop.f32.mrb[0].mxu0
      %v4221 = vadd.f32 %v4086, %v4220
      %v4222 = vpop.f32.mrb[0].mxu0
      %v4223 = vpop.f32.mrb[0].mxu0
      %v4224 = vadd.f32 %v4086, %v4223
      %v4225 = vpop.f32.mrb[0].mxu0
      %4226 = vmatprep.mubr.bf16.mxu0 %v4160
      %4227 = vmatmul.mubr.bf16.gmra.mrb[0].mxu0 %v4081
      %v4228 = vpop.f32.mrb[0].mxu0
      %v4229 = vadd.f32 %v4086, %v4228
      %v4230 = vpop.f32.mrb[0].mxu0
      %v4231 = vpop.f32.mrb[0].mxu0
      %v4232 = vadd.f32 %v4086, %v4231
      %v4233 = vpop.f32.mrb[0].mxu0
      %4234 = vdwg.mxu0
      %v4235 = vadd.f32 %v4197, %v789
      %v4236 = vadd.f32 %v4200, %v791
      %v4237 = vadd.f32 %v4205, %v793
      %v4238 = vadd.f32 %v4208, %v795
      %v4239 = vadd.f32 %v4213, %v797
      %v4240 = vadd.f32 %v4216, %v799
      %v4241 = vadd.f32 %v4221, %v801
      %v4242 = vadd.f32 %v4224, %v803
      %v4243 = vadd.f32 %v4229, %v805
      %v4244 = vadd.f32 %v4232, %v807
      %vm4245 = vcmp.gt.f32.partialorder %v4235, 0.0
      %vm4246 = vcmp.gt.f32.partialorder %v4236, 0.0
      %vm4247 = vcmp.gt.f32.partialorder %v4237, 0.0
      %vm4248 = vcmp.gt.f32.partialorder %v4238, 0.0
      %vm4249 = vcmp.gt.f32.partialorder %v4239, 0.0
      %vm4250 = vcmp.gt.f32.partialorder %v4240, 0.0
      %vm4251 = vcmp.gt.f32.partialorder %v4241, 0.0
      %vm4252 = vcmp.gt.f32.partialorder %v4242, 0.0
      %vm4253 = vcmp.gt.f32.partialorder %v4243, 0.0
      %vm4254 = vcmp.gt.f32.partialorder %v4244, 0.0
      %v4255 = vmin.f32 %v4235, 0.0
      %v4256 = vmin.f32 %v4236, 0.0
      %v4257 = vmin.f32 %v4237, 0.0
      %v4258 = vmin.f32 %v4238, 0.0
      %v4259 = vmin.f32 %v4239, 0.0
      %v4260 = vmin.f32 %v4240, 0.0
      %v4261 = vmin.f32 %v4241, 0.0
      %v4262 = vmin.f32 %v4242, 0.0
      %v4263 = vmin.f32 %v4243, 0.0
      %v4264 = vmin.f32 %v4244, 0.0
      %v4265 = vmul.f32 %v4255, 1.442695
      %v4266 = vpow.pop %v4265
      %v4267 = vmul.f32 %v4256, 1.442695
      %v4268 = vpow.pop %v4267
      %v4269 = vmul.f32 %v4257, 1.442695
      %v4270 = vpow.pop %v4269
      %v4271 = vmul.f32 %v4258, 1.442695
      %v4272 = vpow.pop %v4271
      %v4273 = vmul.f32 %v4259, 1.442695
      %v4274 = vpow.pop %v4273
      %v4275 = vmul.f32 %v4260, 1.442695
      %v4276 = vpow.pop %v4275
      %v4277 = vmul.f32 %v4261, 1.442695
      %v4278 = vpow.pop %v4277
      %v4279 = vmul.f32 %v4262, 1.442695
      %v4280 = vpow.pop %v4279
      %v4281 = vmul.f32 %v4263, 1.442695
      %v4282 = vpow.pop %v4281
      %v4283 = vmul.f32 %v4264, 1.442695
      %v4284 = vpow.pop %v4283
      %v4285 = vsub.f32 %v4266, 1.0
      %v4286 = vsub.f32 %v4268, 1.0
      %v4287 = vsub.f32 %v4270, 1.0
      %v4288 = vsub.f32 %v4272, 1.0
      %v4289 = vsub.f32 %v4274, 1.0
      %v4290 = vsub.f32 %v4276, 1.0
      %v4291 = vsub.f32 %v4278, 1.0
      %v4292 = vsub.f32 %v4280, 1.0
      %v4293 = vsub.f32 %v4282, 1.0
      %v4294 = vsub.f32 %v4284, 1.0
      %v4295 = vsel %vm4245, %v4235, %v4285
      %v4296 = vsel %vm4246, %v4236, %v4286
      %v4297 = vsel %vm4247, %v4237, %v4287
      %v4298 = vsel %vm4248, %v4238, %v4288
      %v4299 = vsel %vm4249, %v4239, %v4289
      %v4300 = vsel %vm4250, %v4240, %v4290
      %v4301 = vsel %vm4251, %v4241, %v4291
      %v4302 = vsel %vm4252, %v4242, %v4292
      %v4303 = vsel %vm4253, %v4243, %v4293
      %v4304 = vsel %vm4254, %v4244, %v4294
      %v4305 = vld [vmem:[%s1 + $0x2b0] sm:$0xf]
      %v4306 = vld [vmem:[%s1 + $0x2b4] sm:$0xf]
      %v4307 = vld [vmem:[%s1 + $0x2b8] sm:$0xf]
      %v4308 = vld [vmem:[%s1 + $0x2bc] sm:$0xf]
      %v4309 = vld [vmem:[%s1 + $0x2c0] sm:$0xf]
      %v4310 = vld [vmem:[%s1 + $0x2c4] sm:$0xf]
      %v4311 = vld [vmem:[%s1 + $0x2c8] sm:$0xf]
      %v4312 = vld [vmem:[%s1 + $0x2cc] sm:$0xf]
      %v4313 = vld [vmem:[%s1 + $0x2d0] sm:$0xf]
      %v4314 = vld [vmem:[%s1 + $0x2d4] sm:$0xf]
      %v4315 = vld [vmem:[%s1 + $0x2d8] sm:$0xf]
      %v4316 = vld [vmem:[%s1 + $0x2dc] sm:$0xf]
      %v4317 = vld [vmem:[%s1 + $0x2e0] sm:$0xf]
      %v4318 = vld [vmem:[%s1 + $0x2e4] sm:$0xf]
      %v4319 = vld [vmem:[%s1 + $0x2e8] sm:$0xf]
      %v4320 = vld [vmem:[%s1 + $0x2ec] sm:$0xf]
      %v4321 = vld [vmem:[%s1 + $0x2f0] sm:$0xf]
      %v4322 = vld [vmem:[%s1 + $0x2f4] sm:$0xf]
      %v4323 = vld [vmem:[%s1 + $0x2f8] sm:$0xf]
      %v4324 = vld [vmem:[%s1 + $0x2fc] sm:$0xf]
      %v4325 = vld [vmem:[%s2 + $0xd] sm:$0x1]
      %v4326 = vld [vmem:[%s1 + $0x300] sm:$0xf]
      %v4327 = vld [vmem:[%s1 + $0x304] sm:$0xf]
      %v4328 = vld [vmem:[%s1 + $0x308] sm:$0xf]
      %v4329 = vld [vmem:[%s1 + $0x30c] sm:$0xf]
      %v4330 = vld [vmem:[%s1 + $0x310] sm:$0xf]
      %v4331 = vld [vmem:[%s1 + $0x314] sm:$0xf]
      %v4332 = vld [vmem:[%s1 + $0x318] sm:$0xf]
      %v4333 = vld [vmem:[%s1 + $0x31c] sm:$0xf]
      %v4334 = vld [vmem:[%s1 + $0x320] sm:$0xf]
      %v4335 = vld [vmem:[%s1 + $0x324] sm:$0xf]
      %v4336 = vld [vmem:[%s1 + $0x328] sm:$0xf]
      %v4337 = vld [vmem:[%s1 + $0x32c] sm:$0xf]
      %v4338 = vld [vmem:[%s1 + $0x330] sm:$0xf]
      %v4339 = vld [vmem:[%s1 + $0x334] sm:$0xf]
      %v4340 = vld [vmem:[%s1 + $0x338] sm:$0xf]
      %v4341 = vld [vmem:[%s1 + $0x33c] sm:$0xf]
      %v4342 = vld [vmem:[%s1 + $0x340] sm:$0xf]
      %v4343 = vld [vmem:[%s1 + $0x344] sm:$0xf]
      %v4344 = vld [vmem:[%s1 + $0x348] sm:$0xf]
      %v4345 = vld [vmem:[%s1 + $0x34c] sm:$0xf]
      %v4346 = vld [vmem:[%s2 + $0xe] sm:$0x1]
      %v4347 = vpack.c.bf16 %v4296, %v4295
      %v4348 = vpack.c.bf16 %v4298, %v4297
      %v4349 = vpack.c.bf16 %v4300, %v4299
      %v4350 = vpack.c.bf16 %v4302, %v4301
      %v4351 = vpack.c.bf16 %v4304, %v4303
      %v4353 = vshrl.u32 %v4347, 16
      %v4355 = vrot.slane %v4353, 7
      %v4356 = vshll.u32 %v4347, 16
      %v4358 = vor.u32 %v4355, %v4356
      %v4360 = vshrl.u32 %v4348, 16
      %v4362 = vrot.slane %v4360, 7
      %v4363 = vshll.u32 %v4348, 16
      %v4365 = vor.u32 %v4362, %v4363
      %v4366 = vsel %vm839, %v4355, %v4365
      %v4368 = vshrl.u32 %v4349, 16
      %v4370 = vrot.slane %v4368, 7
      %v4371 = vshll.u32 %v4349, 16
      %v4373 = vor.u32 %v4370, %v4371
      %v4374 = vsel %vm839, %v4362, %v4373
      %v4376 = vshrl.u32 %v4350, 16
      %v4378 = vrot.slane %v4376, 7
      %v4379 = vshll.u32 %v4350, 16
      %v4381 = vor.u32 %v4378, %v4379
      %v4382 = vsel %vm839, %v4370, %v4381
      %v4384 = vshrl.u32 %v4351, 16
      %v4386 = vrot.slane %v4384, 7
      %v4387 = vshll.u32 %v4351, 16
      %v4389 = vor.u32 %v4386, %v4387
      %v4390 = vsel %vm839, %v4378, %v4389
      %v4393 = vsel %vm882, 0, %v4358
      %vm4394 = vmand %vm942, %vm3615
      %v4395 = vsel %vm4394, %v4390, 0
      %v4397 = vshrl.u32 %v4393, 16
      %v4399 = vshll.u32 %v4393, 16
      %v4401 = vrot.slane %v4399, 1
      %v4402 = vor.u32 %v4397, %v4401
      %v4404 = vshll.u32 %v4366, 16
      %v4406 = vrot.slane %v4404, 1
      %v4407 = vsel %vm885, %v4402, %v4406
      %v4408 = vshrl.u32 %v4366, 16
      %v4410 = vor.u32 %v4408, %v4406
      %v4412 = vshll.u32 %v4374, 16
      %v4414 = vrot.slane %v4412, 1
      %v4415 = vsel %vm885, %v4410, %v4414
      %v4416 = vshrl.u32 %v4374, 16
      %v4418 = vor.u32 %v4416, %v4414
      %v4420 = vshll.u32 %v4382, 16
      %v4422 = vrot.slane %v4420, 1
      %v4423 = vsel %vm885, %v4418, %v4422
      %v4424 = vshrl.u32 %v4382, 16
      %v4426 = vor.u32 %v4424, %v4422
      %v4428 = vshll.u32 %v4395, 16
      %v4430 = vrot.slane %v4428, 1
      %v4431 = vsel %vm885, %v4426, %v4430
      %v4432 = vshrl.u32 %v4395, 16
      %v4434 = vor.u32 %v4432, %v4430
      %4435 = vrot.lane.b32.xlu0 %v4407, 32
      %v4436 = vpop.permute.xlu0 %4435
      %4437 = vrot.lane.b32.xlu0 %v4415, 32
      %v4438 = vpop.permute.xlu0 %4437
      %4439 = vrot.lane.b32.xlu0 %v4423, 32
      %v4440 = vpop.permute.xlu0 %4439
      %4441 = vrot.lane.b32.xlu0 %v4431, 32
      %v4442 = vpop.permute.xlu0 %4441
      %4443 = vrot.lane.b32.xlu0 %v4434, 32
      %v4444 = vpop.permute.xlu0 %4443
      %v4447 = vrot.slane %v4393, 1
      %v4448 = vrot.slane %v4366, 1
      %v4449 = vsel %vm942, %v4447, %v4448
      %v4450 = vrot.slane %v4374, 1
      %v4451 = vsel %vm942, %v4448, %v4450
      %v4452 = vrot.slane %v4382, 1
      %v4453 = vsel %vm942, %v4450, %v4452
      %v4454 = vrot.slane %v4395, 1
      %v4455 = vsel %vm942, %v4452, %v4454
      %4456 = vrot.lane.b32.xlu0 %v4449, 64
      %v4457 = vpop.permute.xlu0 %4456
      %4458 = vrot.lane.b32.xlu0 %v4451, 64
      %v4459 = vpop.permute.xlu0 %4458
      %4460 = vrot.lane.b32.xlu0 %v4453, 64
      %v4461 = vpop.permute.xlu0 %4460
      %4462 = vrot.lane.b32.xlu0 %v4455, 64
      %v4463 = vpop.permute.xlu0 %4462
      %4464 = vrot.lane.b32.xlu0 %v4454, 64
      %v4465 = vpop.permute.xlu0 %4464
      %v4466 = vrot.slane %v4397, 1
      %v4467 = vrot.slane %v4399, 2
      %v4468 = vor.u32 %v4466, %v4467
      %v4469 = vrot.slane %v4408, 1
      %v4470 = vrot.slane %v4404, 2
      %v4471 = vor.u32 %v4469, %v4470
      %v4472 = vsel %vm3615, %v4468, %v4471
      %v4473 = vrot.slane %v4416, 1
      %v4474 = vrot.slane %v4412, 2
      %v4475 = vor.u32 %v4473, %v4474
      %v4476 = vsel %vm3615, %v4471, %v4475
      %v4477 = vrot.slane %v4424, 1
      %v4478 = vrot.slane %v4420, 2
      %v4479 = vor.u32 %v4477, %v4478
      %v4480 = vsel %vm3615, %v4475, %v4479
      %v4481 = vrot.slane %v4432, 1
      %v4482 = vrot.slane %v4428, 2
      %v4483 = vor.u32 %v4481, %v4482
      %v4484 = vsel %vm3615, %v4479, %v4483
      %4485 = vrot.lane.b32.xlu0 %v4472, 96
      %v4486 = vpop.permute.xlu0 %4485
      %4487 = vrot.lane.b32.xlu0 %v4476, 96
      %v4488 = vpop.permute.xlu0 %4487
      %4489 = vrot.lane.b32.xlu0 %v4480, 96
      %v4490 = vpop.permute.xlu0 %4489
      %4491 = vrot.lane.b32.xlu0 %v4484, 96
      %v4492 = vpop.permute.xlu0 %4491
      %4493 = vrot.lane.b32.xlu0 %v4483, 96
      %v4494 = vpop.permute.xlu0 %4493
      %v4495 = vrot.slane %v4393, 2
      %v4496 = vrot.slane %v4366, 2
      %v4497 = vsel %vm3647, %v4495, %v4496
      %v4498 = vrot.slane %v4374, 2
      %v4499 = vsel %vm3647, %v4496, %v4498
      %v4500 = vrot.slane %v4382, 2
      %v4501 = vsel %vm3647, %v4498, %v4500
      %v4502 = vrot.slane %v4395, 2
      %v4503 = vsel %vm3647, %v4500, %v4502
      %v4505 = vsel %vm768, %v4393, %v4436
      %v4507 = vsel %vm768, %v4366, %v4438
      %v4509 = vsel %vm768, %v4374, %v4440
      %v4511 = vsel %vm768, %v4382, %v4442
      %v4513 = vsel %vm768, %v4395, %v4444
      %v4515 = vsel %vm974, %v4505, %v4457
      %v4517 = vsel %vm974, %v4507, %v4459
      %v4519 = vsel %vm974, %v4509, %v4461
      %v4521 = vsel %vm974, %v4511, %v4463
      %v4523 = vsel %vm974, %v4513, %v4465
      %v4525 = vsel %vm1025, %v4515, %v4486
      %v4528 = vsel %vm1025, %v4517, %v4488
      %v4531 = vsel %vm1025, %v4519, %v4490
      %v4534 = vsel %vm1025, %v4521, %v4492
      %v4537 = vsel %vm1025, %v4523, %v4494
      %v4539 = vlaneseq
      %v4540 = vshrl.u32 %v4539, 7
      %v4541 = vsub.s32 0, %v4540
      %v4542 = vrot.slane %v4325, %v4541
      %v4563 = vunpack.c.l.b16 %v4305
      %v4564 = vunpack.c.l.b16 %v4306
      %v4565 = vunpack.c.l.b16 %v4307
      %v4566 = vunpack.c.l.b16 %v4308
      %v4567 = vunpack.c.l.b16 %v4309
      %v4568 = vunpack.c.l.b16 %v4310
      %v4569 = vunpack.c.l.b16 %v4311
      %v4570 = vunpack.c.l.b16 %v4312
      %v4571 = vunpack.c.l.b16 %v4313
      %v4572 = vunpack.c.l.b16 %v4314
      %v4573 = vunpack.c.l.b16 %v4315
      %v4574 = vunpack.c.l.b16 %v4316
      %v4575 = vunpack.c.l.b16 %v4317
      %v4576 = vunpack.c.l.b16 %v4318
      %v4577 = vunpack.c.l.b16 %v4319
      %v4578 = vunpack.c.l.b16 %v4320
      %v4579 = vunpack.c.l.b16 %v4321
      %v4580 = vunpack.c.l.b16 %v4322
      %v4581 = vunpack.c.l.b16 %v4323
      %v4582 = vunpack.c.l.b16 %v4324
      %v4583 = vpack.c.b16 %v4564, %v4563
      %v4584 = vpack.c.b16 %v4566, %v4565
      %v4585 = vpack.c.b16 %v4568, %v4567
      %v4586 = vpack.c.b16 %v4570, %v4569
      %v4587 = vpack.c.b16 %v4572, %v4571
      %v4588 = vpack.c.b16 %v4574, %v4573
      %v4589 = vpack.c.b16 %v4576, %v4575
      %v4590 = vpack.c.b16 %v4578, %v4577
      %v4591 = vpack.c.b16 %v4580, %v4579
      %v4592 = vpack.c.b16 %v4582, %v4581
      %v4604 = vsel %vm768, %v4497, 0
      %v4607 = vsel %vm768, %v4499, 0
      %v4610 = vsel %vm768, %v4501, 0
      %v4613 = vsel %vm768, %v4503, 0
      %v4616 = vsel %vm768, %v4502, 0
      %4618 = vmatprep.subr.bf16.mxu0 0
      %4619 = vmatpush1.bf16.msra.mxu0 %v4583
      %4620 = vmatprep.subr.bf16.mxu0 0
      %4621 = vmatpush1.bf16.msra.mxu0 %v4584
      %4622 = vmatprep.subr.bf16.mxu0 0
      %4623 = vmatpush1.bf16.msra.mxu0 %v4585
      %4624 = vmatprep.subr.bf16.mxu0 0
      %4625 = vmatpush1.bf16.msra.mxu0 %v4586
      %4626 = vmatprep.subr.bf16.mxu0 0
      %4627 = vmatpush1.bf16.msra.mxu0 %v4587
      %4628 = vmatprep.subr.bf16.mxu0 0
      %4629 = vmatpush1.bf16.msra.mxu0 %v4588
      %4630 = vmatprep.subr.bf16.mxu0 0
      %4631 = vmatpush1.bf16.msra.mxu0 %v4589
      %4632 = vmatprep.subr.bf16.mxu0 0
      %4633 = vmatpush1.bf16.msra.mxu0 %v4590
      %4634 = vmatprep.subr.bf16.mxu0 0
      %4635 = vmatpush1.bf16.msra.mxu0 %v4591
      %4636 = vmatprep.subr.bf16.mxu0 0
      %4637 = vmatpush1.bf16.msra.mxu0 %v4592
      %4638 = vmatprep.subr.bf16.mxu0 0
      %4639 = vmatpush1.bf16.msra.mxu0 0
      %4640 = vmatprep.subr.bf16.mxu0 0
      %4641 = vmatpush1.bf16.msra.mxu0 0
      %4642 = vmatprep.subr.bf16.mxu0 0
      %4643 = vmatpush1.bf16.msra.mxu0 0
      %4644 = vmatprep.subr.bf16.mxu0 0
      %4645 = vmatpush1.bf16.msra.mxu0 0
      %4646 = vmatprep.subr.bf16.mxu0 0
      %4647 = vmatpush1.bf16.msra.mxu0 0
      %4648 = vmatprep.subr.bf16.mxu0 0
      %4649 = vmatpush1.bf16.msra.mxu0 0
      %4650 = vmatprep.mubr.bf16.mxu0 %v4604
      %4651 = vmatmul.mubr.bf16.gmra.mrb[0].mxu0 %v4525
      %v4652 = vpop.f32.mrb[0].mxu0
      %v4653 = vadd.f32 %v4542, %v4652
      %v4654 = vpop.f32.mrb[0].mxu0
      %v4655 = vpop.f32.mrb[0].mxu0
      %v4656 = vadd.f32 %v4542, %v4655
      %v4657 = vpop.f32.mrb[0].mxu0
      %4658 = vmatprep.mubr.bf16.mxu0 %v4607
      %4659 = vmatmul.mubr.bf16.gmra.mrb[0].mxu0 %v4528
      %v4660 = vpop.f32.mrb[0].mxu0
      %v4661 = vadd.f32 %v4542, %v4660
      %v4662 = vpop.f32.mrb[0].mxu0
      %v4663 = vpop.f32.mrb[0].mxu0
      %v4664 = vadd.f32 %v4542, %v4663
      %v4665 = vpop.f32.mrb[0].mxu0
      %4666 = vmatprep.mubr.bf16.mxu0 %v4610
      %4667 = vmatmul.mubr.bf16.gmra.mrb[0].mxu0 %v4531
      %v4668 = vpop.f32.mrb[0].mxu0
      %v4669 = vadd.f32 %v4542, %v4668
      %v4670 = vpop.f32.mrb[0].mxu0
      %v4671 = vpop.f32.mrb[0].mxu0
      %v4672 = vadd.f32 %v4542, %v4671
      %v4673 = vpop.f32.mrb[0].mxu0
      %4674 = vmatprep.mubr.bf16.mxu0 %v4613
      %4675 = vmatmul.mubr.bf16.gmra.mrb[0].mxu0 %v4534
      %v4676 = vpop.f32.mrb[0].mxu0
      %v4677 = vadd.f32 %v4542, %v4676
      %v4678 = vpop.f32.mrb[0].mxu0
      %v4679 = vpop.f32.mrb[0].mxu0
      %v4680 = vadd.f32 %v4542, %v4679
      %v4681 = vpop.f32.mrb[0].mxu0
      %4682 = vmatprep.mubr.bf16.mxu0 %v4616
      %4683 = vmatmul.mubr.bf16.gmra.mrb[0].mxu0 %v4537
      %v4684 = vpop.f32.mrb[0].mxu0
      %v4685 = vadd.f32 %v4542, %v4684
      %v4686 = vpop.f32.mrb[0].mxu0
      %v4687 = vpop.f32.mrb[0].mxu0
      %v4688 = vadd.f32 %v4542, %v4687
      %v4689 = vpop.f32.mrb[0].mxu0
      %4690 = vdwg.mxu0
      %vm4691 = vcmp.gt.f32.partialorder %v4653, 0.0
      %vm4692 = vcmp.gt.f32.partialorder %v4656, 0.0
      %vm4693 = vcmp.gt.f32.partialorder %v4661, 0.0
      %vm4694 = vcmp.gt.f32.partialorder %v4664, 0.0
      %vm4695 = vcmp.gt.f32.partialorder %v4669, 0.0
      %vm4696 = vcmp.gt.f32.partialorder %v4672, 0.0
      %vm4697 = vcmp.gt.f32.partialorder %v4677, 0.0
      %vm4698 = vcmp.gt.f32.partialorder %v4680, 0.0
      %vm4699 = vcmp.gt.f32.partialorder %v4685, 0.0
      %vm4700 = vcmp.gt.f32.partialorder %v4688, 0.0
      %v4701 = vmin.f32 %v4653, 0.0
      %v4702 = vmin.f32 %v4656, 0.0
      %v4703 = vmin.f32 %v4661, 0.0
      %v4704 = vmin.f32 %v4664, 0.0
      %v4705 = vmin.f32 %v4669, 0.0
      %v4706 = vmin.f32 %v4672, 0.0
      %v4707 = vmin.f32 %v4677, 0.0
      %v4708 = vmin.f32 %v4680, 0.0
      %v4709 = vmin.f32 %v4685, 0.0
      %v4710 = vmin.f32 %v4688, 0.0
      %v4711 = vmul.f32 %v4701, 1.442695
      %v4712 = vpow.pop %v4711
      %v4713 = vmul.f32 %v4702, 1.442695
      %v4714 = vpow.pop %v4713
      %v4715 = vmul.f32 %v4703, 1.442695
      %v4716 = vpow.pop %v4715
      %v4717 = vmul.f32 %v4704, 1.442695
      %v4718 = vpow.pop %v4717
      %v4719 = vmul.f32 %v4705, 1.442695
      %v4720 = vpow.pop %v4719
      %v4721 = vmul.f32 %v4706, 1.442695
      %v4722 = vpow.pop %v4721
      %v4723 = vmul.f32 %v4707, 1.442695
      %v4724 = vpow.pop %v4723
      %v4725 = vmul.f32 %v4708, 1.442695
      %v4726 = vpow.pop %v4725
      %v4727 = vmul.f32 %v4709, 1.442695
      %v4728 = vpow.pop %v4727
      %v4729 = vmul.f32 %v4710, 1.442695
      %v4730 = vpow.pop %v4729
      %v4731 = vsub.f32 %v4712, 1.0
      %v4732 = vsub.f32 %v4714, 1.0
      %v4733 = vsub.f32 %v4716, 1.0
      %v4734 = vsub.f32 %v4718, 1.0
      %v4735 = vsub.f32 %v4720, 1.0
      %v4736 = vsub.f32 %v4722, 1.0
      %v4737 = vsub.f32 %v4724, 1.0
      %v4738 = vsub.f32 %v4726, 1.0
      %v4739 = vsub.f32 %v4728, 1.0
      %v4740 = vsub.f32 %v4730, 1.0
      %v4741 = vsel %vm4691, %v4653, %v4731
      %v4742 = vsel %vm4692, %v4656, %v4732
      %v4743 = vsel %vm4693, %v4661, %v4733
      %v4744 = vsel %vm4694, %v4664, %v4734
      %v4745 = vsel %vm4695, %v4669, %v4735
      %v4746 = vsel %vm4696, %v4672, %v4736
      %v4747 = vsel %vm4697, %v4677, %v4737
      %v4748 = vsel %vm4698, %v4680, %v4738
      %v4749 = vsel %vm4699, %v4685, %v4739
      %v4750 = vsel %vm4700, %v4688, %v4740
      %v4751 = vpack.c.bf16 %v4742, %v4741
      %v4752 = vpack.c.bf16 %v4744, %v4743
      %v4753 = vpack.c.bf16 %v4746, %v4745
      %v4754 = vpack.c.bf16 %v4748, %v4747
      %v4755 = vpack.c.bf16 %v4750, %v4749
      %v4757 = vshrl.u32 %v4751, 16
      %v4759 = vrot.slane %v4757, 7
      %v4760 = vshll.u32 %v4751, 16
      %v4762 = vor.u32 %v4759, %v4760
      %v4764 = vshrl.u32 %v4752, 16
      %v4766 = vrot.slane %v4764, 7
      %v4767 = vshll.u32 %v4752, 16
      %v4769 = vor.u32 %v4766, %v4767
      %v4770 = vsel %vm839, %v4759, %v4769
      %v4772 = vshrl.u32 %v4753, 16
      %v4774 = vrot.slane %v4772, 7
      %v4775 = vshll.u32 %v4753, 16
      %v4777 = vor.u32 %v4774, %v4775
      %v4778 = vsel %vm839, %v4766, %v4777
      %v4780 = vshrl.u32 %v4754, 16
      %v4782 = vrot.slane %v4780, 7
      %v4783 = vshll.u32 %v4754, 16
      %v4785 = vor.u32 %v4782, %v4783
      %v4786 = vsel %vm839, %v4774, %v4785
      %v4788 = vshrl.u32 %v4755, 16
      %v4790 = vrot.slane %v4788, 7
      %v4791 = vshll.u32 %v4755, 16
      %v4793 = vor.u32 %v4790, %v4791
      %v4794 = vsel %vm839, %v4782, %v4793
      %v4797 = vsel %vm882, 0, %v4762
      %vm4798 = vsmask.f32 5376
      %vm4799 = vmand %vm3647, %vm4798
      %v4800 = vsel %vm4799, %v4794, 0
      %v4802 = vshrl.u32 %v4797, 16
      %v4804 = vshll.u32 %v4797, 16
      %v4806 = vrot.slane %v4804, 1
      %v4807 = vor.u32 %v4802, %v4806
      %v4809 = vshll.u32 %v4770, 16
      %v4811 = vrot.slane %v4809, 1
      %v4812 = vsel %vm885, %v4807, %v4811
      %v4813 = vshrl.u32 %v4770, 16
      %v4815 = vor.u32 %v4813, %v4811
      %v4817 = vshll.u32 %v4778, 16
      %v4819 = vrot.slane %v4817, 1
      %v4820 = vsel %vm885, %v4815, %v4819
      %v4821 = vshrl.u32 %v4778, 16
      %v4823 = vor.u32 %v4821, %v4819
      %v4825 = vshll.u32 %v4786, 16
      %v4827 = vrot.slane %v4825, 1
      %v4828 = vsel %vm885, %v4823, %v4827
      %v4829 = vshrl.u32 %v4786, 16
      %v4831 = vor.u32 %v4829, %v4827
      %v4833 = vshll.u32 %v4800, 16
      %v4835 = vrot.slane %v4833, 1
      %v4836 = vsel %vm885, %v4831, %v4835
      %v4837 = vshrl.u32 %v4800, 16
      %v4839 = vor.u32 %v4837, %v4835
      %4840 = vrot.lane.b32.xlu0 %v4812, 32
      %v4841 = vpop.permute.xlu0 %4840
      %4842 = vrot.lane.b32.xlu0 %v4820, 32
      %v4843 = vpop.permute.xlu0 %4842
      %4844 = vrot.lane.b32.xlu0 %v4828, 32
      %v4845 = vpop.permute.xlu0 %4844
      %4846 = vrot.lane.b32.xlu0 %v4836, 32
      %v4847 = vpop.permute.xlu0 %4846
      %4848 = vrot.lane.b32.xlu0 %v4839, 32
      %v4849 = vpop.permute.xlu0 %4848
      %v4852 = vrot.slane %v4797, 1
      %v4853 = vrot.slane %v4770, 1
      %v4854 = vsel %vm942, %v4852, %v4853
      %v4855 = vrot.slane %v4778, 1
      %v4856 = vsel %vm942, %v4853, %v4855
      %v4857 = vrot.slane %v4786, 1
      %v4858 = vsel %vm942, %v4855, %v4857
      %v4859 = vrot.slane %v4800, 1
      %v4860 = vsel %vm942, %v4857, %v4859
      %4861 = vrot.lane.b32.xlu0 %v4854, 64
      %v4862 = vpop.permute.xlu0 %4861
      %4863 = vrot.lane.b32.xlu0 %v4856, 64
      %v4864 = vpop.permute.xlu0 %4863
      %4865 = vrot.lane.b32.xlu0 %v4858, 64
      %v4866 = vpop.permute.xlu0 %4865
      %4867 = vrot.lane.b32.xlu0 %v4860, 64
      %v4868 = vpop.permute.xlu0 %4867
      %4869 = vrot.lane.b32.xlu0 %v4859, 64
      %v4870 = vpop.permute.xlu0 %4869
      %v4871 = vrot.slane %v4802, 1
      %v4872 = vrot.slane %v4804, 2
      %v4873 = vor.u32 %v4871, %v4872
      %v4874 = vrot.slane %v4813, 1
      %v4875 = vrot.slane %v4809, 2
      %v4876 = vor.u32 %v4874, %v4875
      %v4877 = vsel %vm3615, %v4873, %v4876
      %v4878 = vrot.slane %v4821, 1
      %v4879 = vrot.slane %v4817, 2
      %v4880 = vor.u32 %v4878, %v4879
      %v4881 = vsel %vm3615, %v4876, %v4880
      %v4882 = vrot.slane %v4829, 1
      %v4883 = vrot.slane %v4825, 2
      %v4884 = vor.u32 %v4882, %v4883
      %v4885 = vsel %vm3615, %v4880, %v4884
      %v4886 = vrot.slane %v4837, 1
      %v4887 = vrot.slane %v4833, 2
      %v4888 = vor.u32 %v4886, %v4887
      %v4889 = vsel %vm3615, %v4884, %v4888
      %4890 = vrot.lane.b32.xlu0 %v4877, 96
      %v4891 = vpop.permute.xlu0 %4890
      %4892 = vrot.lane.b32.xlu0 %v4881, 96
      %v4893 = vpop.permute.xlu0 %4892
      %4894 = vrot.lane.b32.xlu0 %v4885, 96
      %v4895 = vpop.permute.xlu0 %4894
      %4896 = vrot.lane.b32.xlu0 %v4889, 96
      %v4897 = vpop.permute.xlu0 %4896
      %4898 = vrot.lane.b32.xlu0 %v4888, 96
      %v4899 = vpop.permute.xlu0 %4898
      %v4900 = vrot.slane %v4797, 2
      %v4901 = vrot.slane %v4770, 2
      %v4902 = vsel %vm3647, %v4900, %v4901
      %v4903 = vrot.slane %v4778, 2
      %v4904 = vsel %vm3647, %v4901, %v4903
      %v4905 = vrot.slane %v4786, 2
      %v4906 = vsel %vm3647, %v4903, %v4905
      %v4907 = vrot.slane %v4800, 2
      %v4908 = vsel %vm3647, %v4905, %v4907
      %v4910 = vsel %vm768, %v4797, %v4841
      %v4912 = vsel %vm768, %v4770, %v4843
      %v4914 = vsel %vm768, %v4778, %v4845
      %v4916 = vsel %vm768, %v4786, %v4847
      %v4918 = vsel %vm768, %v4800, %v4849
      %v4920 = vsel %vm974, %v4910, %v4862
      %v4922 = vsel %vm974, %v4912, %v4864
      %v4924 = vsel %vm974, %v4914, %v4866
      %v4926 = vsel %vm974, %v4916, %v4868
      %v4928 = vsel %vm974, %v4918, %v4870
      %v4930 = vsel %vm1025, %v4920, %v4891
      %v4933 = vsel %vm1025, %v4922, %v4893
      %v4936 = vsel %vm1025, %v4924, %v4895
      %v4939 = vsel %vm1025, %v4926, %v4897
      %v4942 = vsel %vm1025, %v4928, %v4899
      %v4944 = vlaneseq
      %v4945 = vshrl.u32 %v4944, 7
      %v4946 = vsub.s32 0, %v4945
      %v4947 = vrot.slane %v4346, %v4946
      %v4968 = vunpack.c.l.b16 %v4326
      %v4969 = vunpack.c.l.b16 %v4327
      %v4970 = vunpack.c.l.b16 %v4328
      %v4971 = vunpack.c.l.b16 %v4329
      %v4972 = vunpack.c.l.b16 %v4330
      %v4973 = vunpack.c.l.b16 %v4331
      %v4974 = vunpack.c.l.b16 %v4332
      %v4975 = vunpack.c.l.b16 %v4333
      %v4976 = vunpack.c.l.b16 %v4334
      %v4977 = vunpack.c.l.b16 %v4335
      %v4978 = vunpack.c.l.b16 %v4336
      %v4979 = vunpack.c.l.b16 %v4337
      %v4980 = vunpack.c.l.b16 %v4338
      %v4981 = vunpack.c.l.b16 %v4339
      %v4982 = vunpack.c.l.b16 %v4340
      %v4983 = vunpack.c.l.b16 %v4341
      %v4984 = vunpack.c.l.b16 %v4342
      %v4985 = vunpack.c.l.b16 %v4343
      %v4986 = vunpack.c.l.b16 %v4344
      %v4987 = vunpack.c.l.b16 %v4345
      %v4988 = vpack.c.b16 %v4969, %v4968
      %v4989 = vpack.c.b16 %v4971, %v4970
      %v4990 = vpack.c.b16 %v4973, %v4972
      %v4991 = vpack.c.b16 %v4975, %v4974
      %v4992 = vpack.c.b16 %v4977, %v4976
      %v4993 = vpack.c.b16 %v4979, %v4978
      %v4994 = vpack.c.b16 %v4981, %v4980
      %v4995 = vpack.c.b16 %v4983, %v4982
      %v4996 = vpack.c.b16 %v4985, %v4984
      %v4997 = vpack.c.b16 %v4987, %v4986
      %v5009 = vsel %vm768, %v4902, 0
      %v5012 = vsel %vm768, %v4904, 0
      %v5015 = vsel %vm768, %v4906, 0
      %v5018 = vsel %vm768, %v4908, 0
      %v5021 = vsel %vm768, %v4907, 0
      %5023 = vmatprep.subr.bf16.mxu0 0
      %5024 = vmatpush1.bf16.msra.mxu0 %v4988
      %5025 = vmatprep.subr.bf16.mxu0 0
      %5026 = vmatpush1.bf16.msra.mxu0 %v4989
      %5027 = vmatprep.subr.bf16.mxu0 0
      %5028 = vmatpush1.bf16.msra.mxu0 %v4990
      %5029 = vmatprep.subr.bf16.mxu0 0
      %5030 = vmatpush1.bf16.msra.mxu0 %v4991
      %5031 = vmatprep.subr.bf16.mxu0 0
      %5032 = vmatpush1.bf16.msra.mxu0 %v4992
      %5033 = vmatprep.subr.bf16.mxu0 0
      %5034 = vmatpush1.bf16.msra.mxu0 %v4993
      %5035 = vmatprep.subr.bf16.mxu0 0
      %5036 = vmatpush1.bf16.msra.mxu0 %v4994
      %5037 = vmatprep.subr.bf16.mxu0 0
      %5038 = vmatpush1.bf16.msra.mxu0 %v4995
      %5039 = vmatprep.subr.bf16.mxu0 0
      %5040 = vmatpush1.bf16.msra.mxu0 %v4996
      %5041 = vmatprep.subr.bf16.mxu0 0
      %5042 = vmatpush1.bf16.msra.mxu0 %v4997
      %5043 = vmatprep.subr.bf16.mxu0 0
      %5044 = vmatpush1.bf16.msra.mxu0 0
      %5045 = vmatprep.subr.bf16.mxu0 0
      %5046 = vmatpush1.bf16.msra.mxu0 0
      %5047 = vmatprep.subr.bf16.mxu0 0
      %5048 = vmatpush1.bf16.msra.mxu0 0
      %5049 = vmatprep.subr.bf16.mxu0 0
      %5050 = vmatpush1.bf16.msra.mxu0 0
      %5051 = vmatprep.subr.bf16.mxu0 0
      %5052 = vmatpush1.bf16.msra.mxu0 0
      %5053 = vmatprep.subr.bf16.mxu0 0
      %5054 = vmatpush1.bf16.msra.mxu0 0
      %5055 = vmatprep.mubr.bf16.mxu0 %v5009
      %5056 = vmatmul.mubr.bf16.gmra.mrb[0].mxu0 %v4930
      %v5057 = vpop.f32.mrb[0].mxu0
      %v5058 = vadd.f32 %v4947, %v5057
      %v5059 = vpop.f32.mrb[0].mxu0
      %v5060 = vpop.f32.mrb[0].mxu0
      %v5061 = vadd.f32 %v4947, %v5060
      %v5062 = vpop.f32.mrb[0].mxu0
      %5063 = vmatprep.mubr.bf16.mxu0 %v5012
      %5064 = vmatmul.mubr.bf16.gmra.mrb[0].mxu0 %v4933
      %v5065 = vpop.f32.mrb[0].mxu0
      %v5066 = vadd.f32 %v4947, %v5065
      %v5067 = vpop.f32.mrb[0].mxu0
      %v5068 = vpop.f32.mrb[0].mxu0
      %v5069 = vadd.f32 %v4947, %v5068
      %v5070 = vpop.f32.mrb[0].mxu0
      %5071 = vmatprep.mubr.bf16.mxu0 %v5015
      %5072 = vmatmul.mubr.bf16.gmra.mrb[0].mxu0 %v4936
      %v5073 = vpop.f32.mrb[0].mxu0
      %v5074 = vadd.f32 %v4947, %v5073
      %v5075 = vpop.f32.mrb[0].mxu0
      %v5076 = vpop.f32.mrb[0].mxu0
      %v5077 = vadd.f32 %v4947, %v5076
      %v5078 = vpop.f32.mrb[0].mxu0
      %5079 = vmatprep.mubr.bf16.mxu0 %v5018
      %5080 = vmatmul.mubr.bf16.gmra.mrb[0].mxu0 %v4939
      %v5081 = vpop.f32.mrb[0].mxu0
      %v5082 = vadd.f32 %v4947, %v5081
      %v5083 = vpop.f32.mrb[0].mxu0
      %v5084 = vpop.f32.mrb[0].mxu0
      %v5085 = vadd.f32 %v4947, %v5084
      %v5086 = vpop.f32.mrb[0].mxu0
      %5087 = vmatprep.mubr.bf16.mxu0 %v5021
      %5088 = vmatmul.mubr.bf16.gmra.mrb[0].mxu0 %v4942
      %v5089 = vpop.f32.mrb[0].mxu0
      %v5090 = vadd.f32 %v4947, %v5089
      %v5091 = vpop.f32.mrb[0].mxu0
      %v5092 = vpop.f32.mrb[0].mxu0
      %v5093 = vpop.f32.mrb[0].mxu0
      %5094 = vdwg.mxu0
      %v5095 = vadd.f32 %v5058, %v4295
      %v5096 = vadd.f32 %v5061, %v4296
      %v5097 = vadd.f32 %v5066, %v4297
      %v5098 = vadd.f32 %v5069, %v4298
      %v5099 = vadd.f32 %v5074, %v4299
      %v5100 = vadd.f32 %v5077, %v4300
      %v5101 = vadd.f32 %v5082, %v4301
      %v5102 = vadd.f32 %v5085, %v4302
      %v5103 = vadd.f32 %v5090, %v4303
      %vm5104 = vcmp.gt.f32.partialorder %v5095, 0.0
      %vm5105 = vcmp.gt.f32.partialorder %v5096, 0.0
      %vm5106 = vcmp.gt.f32.partialorder %v5097, 0.0
      %vm5107 = vcmp.gt.f32.partialorder %v5098, 0.0
      %vm5108 = vcmp.gt.f32.partialorder %v5099, 0.0
      %vm5109 = vcmp.gt.f32.partialorder %v5100, 0.0
      %vm5110 = vcmp.gt.f32.partialorder %v5101, 0.0
      %vm5111 = vcmp.gt.f32.partialorder %v5102, 0.0
      %vm5112 = vcmp.gt.f32.partialorder %v5103, 0.0
      %v5113 = vmin.f32 %v5095, 0.0
      %v5114 = vmin.f32 %v5096, 0.0
      %v5115 = vmin.f32 %v5097, 0.0
      %v5116 = vmin.f32 %v5098, 0.0
      %v5117 = vmin.f32 %v5099, 0.0
      %v5118 = vmin.f32 %v5100, 0.0
      %v5119 = vmin.f32 %v5101, 0.0
      %v5120 = vmin.f32 %v5102, 0.0
      %v5121 = vmin.f32 %v5103, 0.0
      %v5122 = vmul.f32 %v5113, 1.442695
      %v5123 = vpow.pop %v5122
      %v5124 = vmul.f32 %v5114, 1.442695
      %v5125 = vpow.pop %v5124
      %v5126 = vmul.f32 %v5115, 1.442695
      %v5127 = vpow.pop %v5126
      %v5128 = vmul.f32 %v5116, 1.442695
      %v5129 = vpow.pop %v5128
      %v5130 = vmul.f32 %v5117, 1.442695
      %v5131 = vpow.pop %v5130
      %v5132 = vmul.f32 %v5118, 1.442695
      %v5133 = vpow.pop %v5132
      %v5134 = vmul.f32 %v5119, 1.442695
      %v5135 = vpow.pop %v5134
      %v5136 = vmul.f32 %v5120, 1.442695
      %v5137 = vpow.pop %v5136
      %v5138 = vmul.f32 %v5121, 1.442695
      %v5139 = vpow.pop %v5138
      %v5140 = vsub.f32 %v5123, 1.0
      %v5141 = vsub.f32 %v5125, 1.0
      %v5142 = vsub.f32 %v5127, 1.0
      %v5143 = vsub.f32 %v5129, 1.0
      %v5144 = vsub.f32 %v5131, 1.0
      %v5145 = vsub.f32 %v5133, 1.0
      %v5146 = vsub.f32 %v5135, 1.0
      %v5147 = vsub.f32 %v5137, 1.0
      %v5148 = vsub.f32 %v5139, 1.0
      %v5149 = vsel %vm5104, %v5095, %v5140
      %v5150 = vsel %vm5105, %v5096, %v5141
      %v5151 = vsel %vm5106, %v5097, %v5142
      %v5152 = vsel %vm5107, %v5098, %v5143
      %v5153 = vsel %vm5108, %v5099, %v5144
      %v5154 = vsel %vm5109, %v5100, %v5145
      %v5155 = vsel %vm5110, %v5101, %v5146
      %v5156 = vsel %vm5111, %v5102, %v5147
      %v5157 = vsel %vm5112, %v5103, %v5148
      %v5158 = vld [vmem:[%s1 + $0x350] sm:$0xf]
      %v5159 = vld [vmem:[%s1 + $0x354] sm:$0xf]
      %v5160 = vld [vmem:[%s1 + $0x358] sm:$0xf]
      %v5161 = vld [vmem:[%s1 + $0x35c] sm:$0xf]
      %v5162 = vld [vmem:[%s1 + $0x360] sm:$0xf]
      %v5163 = vld [vmem:[%s1 + $0x364] sm:$0xf]
      %v5164 = vld [vmem:[%s1 + $0x368] sm:$0xf]
      %v5165 = vld [vmem:[%s1 + $0x36c] sm:$0xf]
      %v5166 = vld [vmem:[%s1 + $0x370] sm:$0xf]
      %v5167 = vld [vmem:[%s1 + $0x374] sm:$0xf]
      %v5168 = vld [vmem:[%s1 + $0x378] sm:$0xf]
      %v5169 = vld [vmem:[%s1 + $0x37c] sm:$0xf]
      %v5170 = vld [vmem:[%s1 + $0x380] sm:$0xf]
      %v5171 = vld [vmem:[%s1 + $0x384] sm:$0xf]
      %v5172 = vld [vmem:[%s1 + $0x388] sm:$0xf]
      %v5173 = vld [vmem:[%s1 + $0x38c] sm:$0xf]
      %v5174 = vld [vmem:[%s1 + $0x390] sm:$0xf]
      %v5175 = vld [vmem:[%s1 + $0x394] sm:$0xf]
      %v5176 = vld [vmem:[%s1 + $0x398] sm:$0xf]
      %v5177 = vld [vmem:[%s1 + $0x39c] sm:$0xf]
      %v5178 = vld [vmem:[%s2 + $0xf] sm:$0x1]
      %v5179 = vld [vmem:[%s1 + $0x3a0] sm:$0xf]
      %v5180 = vld [vmem:[%s1 + $0x3a4] sm:$0xf]
      %v5181 = vld [vmem:[%s1 + $0x3a8] sm:$0xf]
      %v5182 = vld [vmem:[%s1 + $0x3ac] sm:$0xf]
      %v5183 = vld [vmem:[%s1 + $0x3b0] sm:$0xf]
      %v5184 = vld [vmem:[%s1 + $0x3b4] sm:$0xf]
      %v5185 = vld [vmem:[%s1 + $0x3b8] sm:$0xf]
      %v5186 = vld [vmem:[%s1 + $0x3bc] sm:$0xf]
      %v5187 = vld [vmem:[%s1 + $0x3c0] sm:$0xf]
      %v5188 = vld [vmem:[%s1 + $0x3c4] sm:$0xf]
      %v5189 = vld [vmem:[%s1 + $0x3c8] sm:$0xf]
      %v5190 = vld [vmem:[%s1 + $0x3cc] sm:$0xf]
      %v5191 = vld [vmem:[%s1 + $0x3d0] sm:$0xf]
      %v5192 = vld [vmem:[%s1 + $0x3d4] sm:$0xf]
      %v5193 = vld [vmem:[%s1 + $0x3d8] sm:$0xf]
      %v5194 = vld [vmem:[%s1 + $0x3dc] sm:$0xf]
      %v5195 = vld [vmem:[%s1 + $0x3e0] sm:$0xf]
      %v5196 = vld [vmem:[%s1 + $0x3e4] sm:$0xf]
      %v5197 = vld [vmem:[%s1 + $0x3e8] sm:$0xf]
      %v5198 = vld [vmem:[%s1 + $0x3ec] sm:$0xf]
      %v5199 = vld [vmem:[%s1 + $0x3f0] sm:$0xf]
      %v5200 = vld [vmem:[%s1 + $0x3f4] sm:$0xf]
      %v5201 = vld [vmem:[%s1 + $0x3f8] sm:$0xf]
      %v5202 = vld [vmem:[%s1 + $0x3fc] sm:$0xf]
      %v5203 = vld [vmem:[%s1 + $0x400] sm:$0xf]
      %v5204 = vld [vmem:[%s1 + $0x404] sm:$0xf]
      %v5205 = vld [vmem:[%s1 + $0x408] sm:$0xf]
      %v5206 = vld [vmem:[%s1 + $0x40c] sm:$0xf]
      %v5207 = vld [vmem:[%s1 + $0x410] sm:$0xf]
      %v5208 = vld [vmem:[%s1 + $0x414] sm:$0xf]
      %v5209 = vld [vmem:[%s2 + $0x10] sm:$0x1]
      %v5210 = vld [vmem:[%s1 + $0x418] sm:$0xf]
      %v5211 = vld [vmem:[%s1 + $0x41c] sm:$0xf]
      %v5212 = vld [vmem:[%s1 + $0x420] sm:$0xf]
      %v5213 = vld [vmem:[%s1 + $0x424] sm:$0xf]
      %v5214 = vld [vmem:[%s2 + $0x11] sm:$0x1]
      %v5215 = vpack.c.bf16 %v5150, %v5149
      %v5216 = vpack.c.bf16 %v5152, %v5151
      %v5217 = vpack.c.bf16 %v5154, %v5153
      %v5218 = vpack.c.bf16 %v5156, %v5155
      %v5219 = vpack.c.bf16 %v5157, %v5157
      %v5221 = vshrl.u32 %v5215, 16
      %v5223 = vrot.slane %v5221, 7
      %v5224 = vshll.u32 %v5215, 16
      %v5226 = vor.u32 %v5223, %v5224
      %v5228 = vshrl.u32 %v5216, 16
      %v5230 = vrot.slane %v5228, 7
      %v5231 = vshll.u32 %v5216, 16
      %v5233 = vor.u32 %v5230, %v5231
      %v5234 = vsel %vm839, %v5223, %v5233
      %v5236 = vshrl.u32 %v5217, 16
      %v5238 = vrot.slane %v5236, 7
      %v5239 = vshll.u32 %v5217, 16
      %v5241 = vor.u32 %v5238, %v5239
      %v5242 = vsel %vm839, %v5230, %v5241
      %v5244 = vshrl.u32 %v5218, 16
      %v5246 = vrot.slane %v5244, 7
      %v5247 = vshll.u32 %v5218, 16
      %v5249 = vor.u32 %v5246, %v5247
      %v5250 = vsel %vm839, %v5238, %v5249
      %v5252 = vshrl.u32 %v5219, 16
      %v5254 = vrot.slane %v5252, 7
      %v5255 = vshll.u32 %v5219, 16
      %v5257 = vor.u32 %v5254, %v5255
      %v5258 = vsel %vm839, %v5246, %v5257
      %v5261 = vsel %vm882, 0, %v5226
      %v5262 = vsel %vm2586, %v5258, 0
      %v5264 = vshrl.u32 %v5261, 16
      %v5266 = vshll.u32 %v5261, 16
      %v5268 = vrot.slane %v5266, 1
      %v5269 = vor.u32 %v5264, %v5268
      %v5271 = vshll.u32 %v5234, 16
      %v5273 = vrot.slane %v5271, 1
      %v5274 = vsel %vm885, %v5269, %v5273
      %v5275 = vshrl.u32 %v5234, 16
      %v5277 = vor.u32 %v5275, %v5273
      %v5279 = vshll.u32 %v5242, 16
      %v5281 = vrot.slane %v5279, 1
      %v5282 = vsel %vm885, %v5277, %v5281
      %v5283 = vshrl.u32 %v5242, 16
      %v5285 = vor.u32 %v5283, %v5281
      %v5287 = vshll.u32 %v5250, 16
      %v5289 = vrot.slane %v5287, 1
      %v5290 = vsel %vm885, %v5285, %v5289
      %v5291 = vshrl.u32 %v5250, 16
      %v5293 = vor.u32 %v5291, %v5289
      %v5295 = vshll.u32 %v5262, 16
      %v5297 = vrot.slane %v5295, 1
      %v5298 = vsel %vm885, %v5293, %v5297
      %v5299 = vshrl.u32 %v5262, 16
      %v5301 = vor.u32 %v5299, %v5297
      %5302 = vrot.lane.b32.xlu0 %v5274, 32
      %v5303 = vpop.permute.xlu0 %5302
      %5304 = vrot.lane.b32.xlu0 %v5282, 32
      %v5305 = vpop.permute.xlu0 %5304
      %5306 = vrot.lane.b32.xlu0 %v5290, 32
      %v5307 = vpop.permute.xlu0 %5306
      %5308 = vrot.lane.b32.xlu0 %v5298, 32
      %v5309 = vpop.permute.xlu0 %5308
      %5310 = vrot.lane.b32.xlu0 %v5301, 32
      %v5311 = vpop.permute.xlu0 %5310
      %v5314 = vrot.slane %v5261, 1
      %v5315 = vrot.slane %v5234, 1
      %v5316 = vsel %vm942, %v5314, %v5315
      %v5317 = vrot.slane %v5242, 1
      %v5318 = vsel %vm942, %v5315, %v5317
      %v5319 = vrot.slane %v5250, 1
      %v5320 = vsel %vm942, %v5317, %v5319
      %v5321 = vrot.slane %v5262, 1
      %v5322 = vsel %vm942, %v5319, %v5321
      %5323 = vrot.lane.b32.xlu0 %v5316, 64
      %v5324 = vpop.permute.xlu0 %5323
      %5325 = vrot.lane.b32.xlu0 %v5318, 64
      %v5326 = vpop.permute.xlu0 %5325
      %5327 = vrot.lane.b32.xlu0 %v5320, 64
      %v5328 = vpop.permute.xlu0 %5327
      %5329 = vrot.lane.b32.xlu0 %v5322, 64
      %v5330 = vpop.permute.xlu0 %5329
      %5331 = vrot.lane.b32.xlu0 %v5321, 64
      %v5332 = vpop.permute.xlu0 %5331
      %v5333 = vrot.slane %v5264, 1
      %v5334 = vrot.slane %v5266, 2
      %v5335 = vor.u32 %v5333, %v5334
      %v5336 = vrot.slane %v5275, 1
      %v5337 = vrot.slane %v5271, 2
      %v5338 = vor.u32 %v5336, %v5337
      %v5339 = vsel %vm3615, %v5335, %v5338
      %v5340 = vrot.slane %v5283, 1
      %v5341 = vrot.slane %v5279, 2
      %v5342 = vor.u32 %v5340, %v5341
      %v5343 = vsel %vm3615, %v5338, %v5342
      %v5344 = vrot.slane %v5291, 1
      %v5345 = vrot.slane %v5287, 2
      %v5346 = vor.u32 %v5344, %v5345
      %v5347 = vsel %vm3615, %v5342, %v5346
      %v5348 = vrot.slane %v5299, 1
      %v5349 = vrot.slane %v5295, 2
      %v5350 = vor.u32 %v5348, %v5349
      %v5351 = vsel %vm3615, %v5346, %v5350
      %5352 = vrot.lane.b32.xlu0 %v5339, 96
      %v5353 = vpop.permute.xlu0 %5352
      %5354 = vrot.lane.b32.xlu0 %v5343, 96
      %v5355 = vpop.permute.xlu0 %5354
      %5356 = vrot.lane.b32.xlu0 %v5347, 96
      %v5357 = vpop.permute.xlu0 %5356
      %5358 = vrot.lane.b32.xlu0 %v5351, 96
      %v5359 = vpop.permute.xlu0 %5358
      %5360 = vrot.lane.b32.xlu0 %v5350, 96
      %v5361 = vpop.permute.xlu0 %5360
      %v5362 = vrot.slane %v5261, 2
      %v5363 = vrot.slane %v5234, 2
      %v5364 = vsel %vm3647, %v5362, %v5363
      %v5365 = vrot.slane %v5242, 2
      %v5366 = vsel %vm3647, %v5363, %v5365
      %v5367 = vrot.slane %v5250, 2
      %v5368 = vsel %vm3647, %v5365, %v5367
      %v5369 = vrot.slane %v5262, 2
      %v5370 = vsel %vm3647, %v5367, %v5369
      %v5372 = vsel %vm768, %v5261, %v5303
      %v5374 = vsel %vm768, %v5234, %v5305
      %v5376 = vsel %vm768, %v5242, %v5307
      %v5378 = vsel %vm768, %v5250, %v5309
      %v5380 = vsel %vm768, %v5262, %v5311
      %v5382 = vsel %vm974, %v5372, %v5324
      %v5384 = vsel %vm974, %v5374, %v5326
      %v5386 = vsel %vm974, %v5376, %v5328
      %v5388 = vsel %vm974, %v5378, %v5330
      %v5390 = vsel %vm974, %v5380, %v5332
      %v5392 = vsel %vm1025, %v5382, %v5353
      %v5395 = vsel %vm1025, %v5384, %v5355
      %v5398 = vsel %vm1025, %v5386, %v5357
      %v5401 = vsel %vm1025, %v5388, %v5359
      %v5404 = vsel %vm1025, %v5390, %v5361
      %v5426 = vunpack.c.l.b16 %v5158
      %v5427 = vunpack.c.l.b16 %v5159
      %v5428 = vunpack.c.l.b16 %v5160
      %v5429 = vunpack.c.l.b16 %v5161
      %v5430 = vunpack.c.l.b16 %v5162
      %v5431 = vunpack.c.l.b16 %v5163
      %v5432 = vunpack.c.l.b16 %v5164
      %v5433 = vunpack.c.l.b16 %v5165
      %v5434 = vunpack.c.l.b16 %v5166
      %v5435 = vunpack.c.l.b16 %v5167
      %v5436 = vunpack.c.l.b16 %v5168
      %v5437 = vunpack.c.l.b16 %v5169
      %v5438 = vunpack.c.l.b16 %v5170
      %v5439 = vunpack.c.l.b16 %v5171
      %v5440 = vunpack.c.l.b16 %v5172
      %v5441 = vunpack.c.l.b16 %v5173
      %v5442 = vunpack.c.l.b16 %v5174
      %v5443 = vunpack.c.l.b16 %v5175
      %v5444 = vunpack.c.l.b16 %v5176
      %v5445 = vunpack.c.l.b16 %v5177
      %v5446 = vpack.c.b16 %v5427, %v5426
      %v5447 = vpack.c.b16 %v5429, %v5428
      %v5448 = vpack.c.b16 %v5431, %v5430
      %v5449 = vpack.c.b16 %v5433, %v5432
      %v5450 = vpack.c.b16 %v5435, %v5434
      %v5451 = vpack.c.b16 %v5437, %v5436
      %v5452 = vpack.c.b16 %v5439, %v5438
      %v5453 = vpack.c.b16 %v5441, %v5440
      %v5454 = vpack.c.b16 %v5443, %v5442
      %v5455 = vpack.c.b16 %v5445, %v5444
      %v5467 = vsel %vm768, %v5364, 0
      %v5470 = vsel %vm768, %v5366, 0
      %v5473 = vsel %vm768, %v5368, 0
      %v5476 = vsel %vm768, %v5370, 0
      %v5479 = vsel %vm768, %v5369, 0
      %5481 = vmatprep.subr.bf16.mxu0 0
      %5482 = vmatpush1.bf16.msra.mxu0 %v5446
      %5483 = vmatprep.subr.bf16.mxu0 0
      %5484 = vmatpush1.bf16.msra.mxu0 %v5447
      %5485 = vmatprep.subr.bf16.mxu0 0
      %5486 = vmatpush1.bf16.msra.mxu0 %v5448
      %5487 = vmatprep.subr.bf16.mxu0 0
      %5488 = vmatpush1.bf16.msra.mxu0 %v5449
      %5489 = vmatprep.subr.bf16.mxu0 0
      %5490 = vmatpush1.bf16.msra.mxu0 %v5450
      %5491 = vmatprep.subr.bf16.mxu0 0
      %5492 = vmatpush1.bf16.msra.mxu0 %v5451
      %5493 = vmatprep.subr.bf16.mxu0 0
      %5494 = vmatpush1.bf16.msra.mxu0 %v5452
      %5495 = vmatprep.subr.bf16.mxu0 0
      %5496 = vmatpush1.bf16.msra.mxu0 %v5453
      %5497 = vmatprep.subr.bf16.mxu0 0
      %5498 = vmatpush1.bf16.msra.mxu0 %v5454
      %5499 = vmatprep.subr.bf16.mxu0 0
      %5500 = vmatpush1.bf16.msra.mxu0 %v5455
      %5501 = vmatprep.subr.bf16.mxu0 0
      %5502 = vmatpush1.bf16.msra.mxu0 0
      %5503 = vmatprep.subr.bf16.mxu0 0
      %5504 = vmatpush1.bf16.msra.mxu0 0
      %5505 = vmatprep.subr.bf16.mxu0 0
      %5506 = vmatpush1.bf16.msra.mxu0 0
      %5507 = vmatprep.subr.bf16.mxu0 0
      %5508 = vmatpush1.bf16.msra.mxu0 0
      %5509 = vmatprep.subr.bf16.mxu0 0
      %5510 = vmatpush1.bf16.msra.mxu0 0
      %5511 = vmatprep.subr.bf16.mxu0 0
      %5512 = vmatpush1.bf16.msra.mxu0 0
      %5513 = vmatprep.mubr.bf16.mxu0 %v5467
      %5514 = vmatmul.mubr.bf16.gmra.mrb[0].mxu0 %v5392
      %v5515 = vpop.f32.mrb[0].mxu0
      %v5516 = vadd.f32 0.0, %v5515
      %v5517 = vpop.f32.mrb[0].mxu0
      %v5518 = vpop.f32.mrb[0].mxu0
      %v5519 = vadd.f32 0.0, %v5518
      %v5520 = vpop.f32.mrb[0].mxu0
      %5521 = vmatprep.mubr.bf16.mxu0 %v5470
      %5522 = vmatmul.mubr.bf16.gmra.mrb[0].mxu0 %v5395
      %v5523 = vpop.f32.mrb[0].mxu0
      %v5524 = vadd.f32 0.0, %v5523
      %v5525 = vpop.f32.mrb[0].mxu0
      %v5526 = vpop.f32.mrb[0].mxu0
      %v5527 = vadd.f32 0.0, %v5526
      %v5528 = vpop.f32.mrb[0].mxu0
      %5529 = vmatprep.mubr.bf16.mxu0 %v5473
      %5530 = vmatmul.mubr.bf16.gmra.mrb[0].mxu0 %v5398
      %v5531 = vpop.f32.mrb[0].mxu0
      %v5532 = vadd.f32 0.0, %v5531
      %v5533 = vpop.f32.mrb[0].mxu0
      %v5534 = vpop.f32.mrb[0].mxu0
      %v5535 = vadd.f32 0.0, %v5534
      %v5536 = vpop.f32.mrb[0].mxu0
      %5537 = vmatprep.mubr.bf16.mxu0 %v5476
      %5538 = vmatmul.mubr.bf16.gmra.mrb[0].mxu0 %v5401
      %v5539 = vpop.f32.mrb[0].mxu0
      %v5540 = vadd.f32 0.0, %v5539
      %v5541 = vpop.f32.mrb[0].mxu0
      %v5542 = vpop.f32.mrb[0].mxu0
      %v5543 = vadd.f32 0.0, %v5542
      %v5544 = vpop.f32.mrb[0].mxu0
      %5545 = vmatprep.mubr.bf16.mxu0 %v5479
      %5546 = vmatmul.mubr.bf16.gmra.mrb[0].mxu0 %v5404
      %v5547 = vpop.f32.mrb[0].mxu0
      %v5548 = vadd.f32 0.0, %v5547
      %v5549 = vpop.f32.mrb[0].mxu0
      %v5550 = vpop.f32.mrb[0].mxu0
      %v5551 = vpop.f32.mrb[0].mxu0
      %5552 = vdwg.mxu0
      %5553 = vst.msk [vmem:[#allocation3] sm:$0xff] %vm2500, %v5516
      %5554 = vst.msk [vmem:[#allocation3 + $0x8] sm:$0xff] %vm2500, %v5519
      %5555 = vst.msk [vmem:[#allocation3 + $0x10] sm:$0xff] %vm2500, %v5524
      %5556 = vst.msk [vmem:[#allocation3 + $0x18] sm:$0xff] %vm2500, %v5527
      %5557 = vst.msk [vmem:[#allocation3 + $0x20] sm:$0xff] %vm2500, %v5532
      %5558 = vst.msk [vmem:[#allocation3 + $0x28] sm:$0xff] %vm2500, %v5535
      %5559 = vst.msk [vmem:[#allocation3 + $0x30] sm:$0xff] %vm2500, %v5540
      %5560 = vst.msk [vmem:[#allocation3 + $0x38] sm:$0xff] %vm2500, %v5543
      %vm5561 = vcmask 390144
      %5562 = vst.msk [vmem:[#allocation3 + $0x40] sm:$0x3f] %vm5561, %v5548
      %v5563 = vld [vmem:[#allocation3] ss:$2 sm:$0xff]
      %s5564 = scalar_lea.vmem [#allocation3], 16
      %v5565 = vld [vmem:[%s5564] ss:$2 sm:$0xff]
      %s5566 = scalar_lea.vmem [#allocation3], 32
      %v5567 = vld [vmem:[%s5566] ss:$2 sm:$0xff]
      %s5568 = scalar_lea.vmem [#allocation3], 48
      %v5569 = vld [vmem:[%s5568] ss:$2 sm:$0xff]
      %s5570 = scalar_lea.vmem [#allocation3], 64
      %v5571 = vld [vmem:[%s5570] ss:$2 sm:$0x7]
      %v5572 = vlaneseq
      %v5573 = vshrl.u32 %v5572, 7
      %v5574 = vsub.s32 0, %v5573
      %v5575 = vrot.slane %v5178, %v5574
      %v5576 = vadd.f32 %v5563, %v5575
      %v5577 = vadd.f32 %v5565, %v5575
      %v5578 = vadd.f32 %v5567, %v5575
      %v5579 = vadd.f32 %v5569, %v5575
      %v5580 = vadd.f32 %v5571, %v5575
      %vm5581 = vcmp.gt.f32.partialorder %v5576, 0.0
      %vm5582 = vcmp.gt.f32.partialorder %v5577, 0.0
      %vm5583 = vcmp.gt.f32.partialorder %v5578, 0.0
      %vm5584 = vcmp.gt.f32.partialorder %v5579, 0.0
      %vm5585 = vcmp.gt.f32.partialorder %v5580, 0.0
      %v5586 = vmin.f32 %v5576, 0.0
      %v5587 = vmin.f32 %v5577, 0.0
      %v5588 = vmin.f32 %v5578, 0.0
      %v5589 = vmin.f32 %v5579, 0.0
      %v5590 = vmin.f32 %v5580, 0.0
      %v5591 = vmul.f32 %v5586, 1.442695
      %v5592 = vpow.pop %v5591
      %v5593 = vmul.f32 %v5587, 1.442695
      %v5594 = vpow.pop %v5593
      %v5595 = vmul.f32 %v5588, 1.442695
      %v5596 = vpow.pop %v5595
      %v5597 = vmul.f32 %v5589, 1.442695
      %v5598 = vpow.pop %v5597
      %v5599 = vmul.f32 %v5590, 1.442695
      %v5600 = vpow.pop %v5599
      %v5601 = vsub.f32 %v5592, 1.0
      %v5602 = vsub.f32 %v5594, 1.0
      %v5603 = vsub.f32 %v5596, 1.0
      %v5604 = vsub.f32 %v5598, 1.0
      %v5605 = vsub.f32 %v5600, 1.0
      %v5606 = vsel %vm5581, %v5576, %v5601
      %v5607 = vsel %vm5582, %v5577, %v5602
      %v5608 = vsel %vm5583, %v5578, %v5603
      %v5609 = vsel %vm5584, %v5579, %v5604
      %v5610 = vsel %vm5585, %v5580, %v5605
      %v5611 = vpack.c.bf16 %v5607, %v5606
      %v5612 = vpack.c.bf16 %v5609, %v5608
      %v5613 = vpack.c.bf16 %v5610, %v5610
      %v5615 = vshrl.u32 %v5611, 16
      %v5617 = vrot.slane %v5615, 7
      %v5618 = vshll.u32 %v5611, 16
      %v5620 = vor.u32 %v5617, %v5618
      %v5622 = vshrl.u32 %v5612, 16
      %v5624 = vrot.slane %v5622, 7
      %v5625 = vshll.u32 %v5612, 16
      %v5627 = vor.u32 %v5624, %v5625
      %v5628 = vsel %vm839, %v5617, %v5627
      %v5630 = vshrl.u32 %v5613, 16
      %v5632 = vrot.slane %v5630, 7
      %v5633 = vshll.u32 %v5613, 16
      %v5635 = vor.u32 %v5632, %v5633
      %v5636 = vsel %vm839, %v5624, %v5635
      %v5638 = vsel %vm882, 0, %v5620
      %v5641 = vsel %vm3528, %v5636, 0
      %v5643 = vshrl.u32 %v5638, 16
      %v5645 = vshll.u32 %v5638, 16
      %v5647 = vrot.slane %v5645, 1
      %v5648 = vor.u32 %v5643, %v5647
      %v5650 = vshll.u32 %v5628, 16
      %v5652 = vrot.slane %v5650, 1
      %v5653 = vsel %vm885, %v5648, %v5652
      %v5654 = vshrl.u32 %v5628, 16
      %v5656 = vor.u32 %v5654, %v5652
      %v5657 = vshll.u32 %v5641, 16
      %v5659 = vrot.slane %v5657, 1
      %v5660 = vsel %vm885, %v5656, %v5659
      %v5661 = vshrl.u32 %v5641, 16
      %5663 = vrot.lane.b32.xlu0 %v5653, 48
      %v5664 = vpop.permute.xlu0 %5663
      %5665 = vrot.lane.b32.xlu0 %v5660, 48
      %v5666 = vpop.permute.xlu0 %5665
      %5667 = vrot.lane.b32.xlu0 %v5661, 48
      %v5668 = vpop.permute.xlu0 %5667
      %v5671 = vrot.slane %v5638, 1
      %v5672 = vrot.slane %v5628, 1
      %v5673 = vsel %vm942, %v5671, %v5672
      %v5674 = vrot.slane %v5641, 1
      %v5675 = vsel %vm942, %v5672, %v5674
      %5676 = vrot.lane.b32.xlu0 %v5673, 96
      %v5677 = vpop.permute.xlu0 %5676
      %5678 = vrot.lane.b32.xlu0 %v5675, 96
      %v5679 = vpop.permute.xlu0 %5678
      %5680 = vrot.lane.b32.xlu0 %v5674, 96
      %v5681 = vpop.permute.xlu0 %5680
      %v5682 = vrot.slane %v5643, 1
      %v5683 = vrot.slane %v5645, 2
      %v5684 = vor.u32 %v5682, %v5683
      %v5685 = vrot.slane %v5654, 1
      %v5686 = vrot.slane %v5650, 2
      %v5687 = vor.u32 %v5685, %v5686
      %v5688 = vsel %vm3615, %v5684, %v5687
      %v5689 = vrot.slane %v5661, 1
      %v5690 = vrot.slane %v5657, 2
      %v5691 = vor.u32 %v5689, %v5690
      %v5692 = vsel %vm3615, %v5687, %v5691
      %5693 = vrot.lane.b32.xlu0 %v5688, 16
      %v5694 = vpop.permute.xlu0 %5693
      %5695 = vrot.lane.b32.xlu0 %v5692, 16
      %v5696 = vpop.permute.xlu0 %5695
      %5697 = vrot.lane.b32.xlu0 %v5689, 16
      %v5698 = vpop.permute.xlu0 %5697
      %v5699 = vrot.slane %v5638, 2
      %v5700 = vrot.slane %v5628, 2
      %v5701 = vsel %vm3647, %v5699, %v5700
      %v5702 = vrot.slane %v5641, 2
      %v5703 = vsel %vm3647, %v5700, %v5702
      %5704 = vrot.lane.b32.xlu0 %v5701, 64
      %v5705 = vpop.permute.xlu0 %5704
      %5706 = vrot.lane.b32.xlu0 %v5703, 64
      %v5707 = vpop.permute.xlu0 %5706
      %5708 = vrot.lane.b32.xlu0 %v5702, 64
      %v5709 = vpop.permute.xlu0 %5708
      %v5711 = vsel %vm2500, %v5638, %v5664
      %v5713 = vsel %vm2500, %v5628, %v5666
      %v5715 = vsel %vm2500, %v5641, %v5668
      %v5717 = vsel %vm1025, %v5711, %v5677
      %v5720 = vsel %vm1025, %v5713, %v5679
      %v5723 = vsel %vm1025, %v5715, %v5681
      %v5726 = vsel %vm2703, %v5677, %v5694
      %v5728 = vsel %vm2703, %v5679, %v5696
      %v5730 = vsel %vm2703, %v5681, %v5698
      %v5732 = vsel %vm974, %v5726, %v5705
      %v5734 = vsel %vm974, %v5728, %v5707
      %v5736 = vsel %vm974, %v5730, %v5709
      %v5737 = vlaneseq
      %v5738 = vshrl.u32 %v5737, 7
      %v5739 = vsub.s32 0, %v5738
      %v5740 = vrot.slane %v5209, %v5739
      %v5771 = vunpack.c.l.b16 %v5179
      %v5772 = vunpack.c.l.b16 %v5180
      %v5773 = vunpack.c.l.b16 %v5181
      %v5774 = vunpack.c.l.b16 %v5182
      %v5775 = vunpack.c.l.b16 %v5183
      %v5776 = vunpack.c.l.b16 %v5184
      %v5777 = vunpack.c.l.b16 %v5185
      %v5778 = vunpack.c.l.b16 %v5186
      %v5779 = vunpack.c.l.b16 %v5187
      %v5780 = vunpack.c.l.b16 %v5188
      %v5781 = vunpack.c.l.b16 %v5189
      %v5782 = vunpack.c.l.b16 %v5190
      %v5783 = vunpack.c.l.b16 %v5191
      %v5784 = vunpack.c.l.b16 %v5192
      %v5785 = vunpack.c.l.b16 %v5193
      %v5786 = vunpack.c.l.b16 %v5194
      %v5787 = vunpack.c.l.b16 %v5195
      %v5788 = vunpack.c.l.b16 %v5196
      %v5789 = vunpack.c.l.b16 %v5197
      %v5790 = vunpack.c.l.b16 %v5198
      %v5791 = vunpack.c.l.b16 %v5199
      %v5792 = vunpack.c.l.b16 %v5200
      %v5793 = vunpack.c.l.b16 %v5201
      %v5794 = vunpack.c.l.b16 %v5202
      %v5795 = vunpack.c.l.b16 %v5203
      %v5796 = vunpack.c.l.b16 %v5204
      %v5797 = vunpack.c.l.b16 %v5205
      %v5798 = vunpack.c.l.b16 %v5206
      %v5799 = vunpack.c.l.b16 %v5207
      %v5800 = vunpack.c.l.b16 %v5208
      %v5801 = vpack.c.b16 %v5772, %v5771
      %v5802 = vpack.c.b16 %v5774, %v5773
      %v5803 = vpack.c.b16 %v5776, %v5775
      %v5804 = vpack.c.b16 %v5778, %v5777
      %v5805 = vpack.c.b16 %v5780, %v5779
      %v5806 = vpack.c.b16 %v5782, %v5781
      %v5807 = vpack.c.b16 %v5784, %v5783
      %v5808 = vpack.c.b16 %v5786, %v5785
      %v5809 = vpack.c.b16 %v5788, %v5787
      %v5810 = vpack.c.b16 %v5790, %v5789
      %v5811 = vpack.c.b16 %v5792, %v5791
      %v5812 = vpack.c.b16 %v5794, %v5793
      %v5813 = vpack.c.b16 %v5796, %v5795
      %v5814 = vpack.c.b16 %v5798, %v5797
      %v5815 = vpack.c.b16 %v5800, %v5799
      %vm5831 = vcmask 916480
      %v5832 = vsel %vm5831, %v5732, 0
      %v5834 = vsel %vm5831, %v5734, 0
      %v5836 = vsel %vm5831, %v5736, 0
      %5838 = vmatprep.subr.bf16.mxu0 0
      %5839 = vmatpush1.bf16.msra.mxu0 %v5801
      %5840 = vmatprep.subr.bf16.mxu0 0
      %5841 = vmatpush1.bf16.msra.mxu0 %v5802
      %5842 = vmatprep.subr.bf16.mxu0 0
      %5843 = vmatpush1.bf16.msra.mxu0 %v5803
      %5844 = vmatprep.subr.bf16.mxu0 0
      %5845 = vmatpush1.bf16.msra.mxu0 %v5804
      %5846 = vmatprep.subr.bf16.mxu0 0
      %5847 = vmatpush1.bf16.msra.mxu0 %v5805
      %5848 = vmatprep.subr.bf16.mxu0 0
      %5849 = vmatpush1.bf16.msra.mxu0 %v5806
      %5850 = vmatprep.subr.bf16.mxu0 0
      %5851 = vmatpush1.bf16.msra.mxu0 %v5807
      %5852 = vmatprep.subr.bf16.mxu0 0
      %5853 = vmatpush1.bf16.msra.mxu0 %v5808
      %5854 = vmatprep.subr.bf16.mxu0 0
      %5855 = vmatpush1.bf16.msra.mxu0 %v5809
      %5856 = vmatprep.subr.bf16.mxu0 0
      %5857 = vmatpush1.bf16.msra.mxu0 %v5810
      %5858 = vmatprep.subr.bf16.mxu0 0
      %5859 = vmatpush1.bf16.msra.mxu0 %v5811
      %5860 = vmatprep.subr.bf16.mxu0 0
      %5861 = vmatpush1.bf16.msra.mxu0 %v5812
      %5862 = vmatprep.subr.bf16.mxu0 0
      %5863 = vmatpush1.bf16.msra.mxu0 %v5813
      %5864 = vmatprep.subr.bf16.mxu0 0
      %5865 = vmatpush1.bf16.msra.mxu0 %v5814
      %5866 = vmatprep.subr.bf16.mxu0 0
      %5867 = vmatpush1.bf16.msra.mxu0 %v5815
      %5868 = vmatprep.subr.bf16.mxu0 0
      %5869 = vmatpush1.bf16.msra.mxu0 0
      %5870 = vmatprep.mubr.bf16.mxu0 %v5832
      %5871 = vmatmul.mubr.bf16.gmra.mrb[0].mxu0 %v5717
      %v5872 = vpop.f32.mrb[0].mxu0
      %v5873 = vadd.f32 %v5740, %v5872
      %v5874 = vpop.f32.mrb[0].mxu0
      %v5875 = vpop.f32.mrb[0].mxu0
      %v5876 = vadd.f32 %v5740, %v5875
      %v5877 = vpop.f32.mrb[0].mxu0
      %5878 = vmatprep.mubr.bf16.mxu0 %v5834
      %5879 = vmatmul.mubr.bf16.gmra.mrb[0].mxu0 %v5720
      %v5880 = vpop.f32.mrb[0].mxu0
      %v5881 = vadd.f32 %v5740, %v5880
      %v5882 = vpop.f32.mrb[0].mxu0
      %v5883 = vpop.f32.mrb[0].mxu0
      %v5884 = vadd.f32 %v5740, %v5883
      %v5885 = vpop.f32.mrb[0].mxu0
      %5886 = vmatprep.mubr.bf16.mxu0 %v5836
      %5887 = vmatmul.mubr.bf16.gmra.mrb[0].mxu0 %v5723
      %v5888 = vpop.f32.mrb[0].mxu0
      %v5889 = vadd.f32 %v5740, %v5888
      %v5890 = vpop.f32.mrb[0].mxu0
      %v5891 = vpop.f32.mrb[0].mxu0
      %v5892 = vpop.f32.mrb[0].mxu0
      %5893 = vdwg.mxu0
      %v5898 = vunpack.c.l.b16 %v5210
      %v5899 = vunpack.c.l.b16 %v5211
      %v5900 = vunpack.c.l.b16 %v5212
      %v5901 = vunpack.c.l.b16 %v5213
      %v5902 = vpack.c.b16 %v5899, %v5898
      %v5903 = vpack.c.b16 %v5901, %v5900
      %v5906 = vsel %vm768, %v5215, 0
      %v5908 = vsel %vm768, %v5216, 0
      %v5910 = vsel %vm768, %v5217, 0
      %v5912 = vsel %vm768, %v5218, 0
      %v5914 = vsel %vm768, %v5219, 0
      %5916 = vmatprep.subr.bf16.mxu0 0
      %5917 = vmatpush1.bf16.msra.mxu0 %v5902
      %5918 = vmatprep.subr.bf16.mxu0 0
      %5919 = vmatpush1.bf16.msra.mxu0 %v5903
      %5920 = vmatprep.subr.bf16.mxu0 0
      %5921 = vmatpush1.bf16.msra.mxu0 0
      %5922 = vmatprep.subr.bf16.mxu0 0
      %5923 = vmatpush1.bf16.msra.mxu0 0
      %5924 = vmatprep.subr.bf16.mxu0 0
      %5925 = vmatpush1.bf16.msra.mxu0 0
      %5926 = vmatprep.subr.bf16.mxu0 0
      %5927 = vmatpush1.bf16.msra.mxu0 0
      %5928 = vmatprep.subr.bf16.mxu0 0
      %5929 = vmatpush1.bf16.msra.mxu0 0
      %5930 = vmatprep.subr.bf16.mxu0 0
      %5931 = vmatpush1.bf16.msra.mxu0 0
      %5932 = vmatprep.subr.bf16.mxu0 0
      %5933 = vmatpush1.bf16.msra.mxu0 0
      %5934 = vmatprep.subr.bf16.mxu0 0
      %5935 = vmatpush1.bf16.msra.mxu0 0
      %5936 = vmatprep.subr.bf16.mxu0 0
      %5937 = vmatpush1.bf16.msra.mxu0 0
      %5938 = vmatprep.subr.bf16.mxu0 0
      %5939 = vmatpush1.bf16.msra.mxu0 0
      %5940 = vmatprep.subr.bf16.mxu0 0
      %5941 = vmatpush1.bf16.msra.mxu0 0
      %5942 = vmatprep.subr.bf16.mxu0 0
      %5943 = vmatpush1.bf16.msra.mxu0 0
      %5944 = vmatprep.subr.bf16.mxu0 0
      %5945 = vmatpush1.bf16.msra.mxu0 0
      %5946 = vmatprep.subr.bf16.mxu0 0
      %5947 = vmatpush1.bf16.msra.mxu0 0
      %5948 = vmatprep.mubr.bf16.mxu0 0
      %5949 = vmatmul.mubr.bf16.gmra.mrb[0].mxu0 %v5906
      %v5950 = vpop.f32.mrb[0].mxu0
      %v5951 = vadd.f32 0.0, %v5950
      %v5952 = vpop.f32.mrb[0].mxu0
      %v5953 = vpop.f32.mrb[0].mxu0
      %v5954 = vadd.f32 0.0, %v5953
      %v5955 = vpop.f32.mrb[0].mxu0
      %5956 = vmatprep.mubr.bf16.mxu0 0
      %5957 = vmatmul.mubr.bf16.gmra.mrb[0].mxu0 %v5908
      %v5958 = vpop.f32.mrb[0].mxu0
      %v5959 = vadd.f32 0.0, %v5958
      %v5960 = vpop.f32.mrb[0].mxu0
      %v5961 = vpop.f32.mrb[0].mxu0
      %v5962 = vadd.f32 0.0, %v5961
      %v5963 = vpop.f32.mrb[0].mxu0
      %5964 = vmatprep.mubr.bf16.mxu0 0
      %5965 = vmatmul.mubr.bf16.gmra.mrb[0].mxu0 %v5910
      %v5966 = vpop.f32.mrb[0].mxu0
      %v5967 = vadd.f32 0.0, %v5966
      %v5968 = vpop.f32.mrb[0].mxu0
      %v5969 = vpop.f32.mrb[0].mxu0
      %v5970 = vadd.f32 0.0, %v5969
      %v5971 = vpop.f32.mrb[0].mxu0
      %5972 = vmatprep.mubr.bf16.mxu0 0
      %5973 = vmatmul.mubr.bf16.gmra.mrb[0].mxu0 %v5912
      %v5974 = vpop.f32.mrb[0].mxu0
      %v5975 = vadd.f32 0.0, %v5974
      %v5976 = vpop.f32.mrb[0].mxu0
      %v5977 = vpop.f32.mrb[0].mxu0
      %v5978 = vadd.f32 0.0, %v5977
      %v5979 = vpop.f32.mrb[0].mxu0
      %5980 = vmatprep.mubr.bf16.mxu0 0
      %5981 = vmatmul.mubr.bf16.gmra.mrb[0].mxu0 %v5914
      %v5982 = vpop.f32.mrb[0].mxu0
      %v5983 = vadd.f32 0.0, %v5982
      %v5984 = vpop.f32.mrb[0].mxu0
      %v5985 = vpop.f32.mrb[0].mxu0
      %v5986 = vpop.f32.mrb[0].mxu0
      %5987 = vdwg.mxu0
      %5988 = vst.msk [vmem:[#allocation3] sm:$0xff] %vm2500, %v5951
      %5989 = vst.msk [vmem:[#allocation3 + $0x8] sm:$0xff] %vm2500, %v5954
      %5990 = vst.msk [vmem:[#allocation3 + $0x10] sm:$0xff] %vm2500, %v5959
      %5991 = vst.msk [vmem:[#allocation3 + $0x18] sm:$0xff] %vm2500, %v5962
      %5992 = vst.msk [vmem:[#allocation3 + $0x20] sm:$0xff] %vm2500, %v5967
      %5993 = vst.msk [vmem:[#allocation3 + $0x28] sm:$0xff] %vm2500, %v5970
      %5994 = vst.msk [vmem:[#allocation3 + $0x30] sm:$0xff] %vm2500, %v5975
      %5995 = vst.msk [vmem:[#allocation3 + $0x38] sm:$0xff] %vm2500, %v5978
      %5996 = vst.msk [vmem:[#allocation3 + $0x40] sm:$0xff] %vm2500, %v5983
      %v5997 = vld [vmem:[#allocation3] ss:$2 sm:$0xff]
      %v5998 = vld [vmem:[%s5564] ss:$2 sm:$0xff]
      %v5999 = vld [vmem:[%s5566] ss:$2 sm:$0xff]
      %v6000 = vld [vmem:[%s5568] ss:$2 sm:$0xff]
      %v6001 = vld [vmem:[%s5570] ss:$2 sm:$0xf]
      %v6002 = vlaneseq
      %v6003 = vshrl.u32 %v6002, 7
      %v6004 = vsub.s32 0, %v6003
      %v6005 = vrot.slane %v5214, %v6004
      %v6006 = vadd.f32 %v5997, %v6005
      %v6007 = vadd.f32 %v5998, %v6005
      %v6008 = vadd.f32 %v5999, %v6005
      %v6009 = vadd.f32 %v6000, %v6005
      %v6010 = vadd.f32 %v6001, %v6005
      %v6011 = vadd.f32 %v5873, %v6006
      %v6012 = vadd.f32 %v5876, %v6007
      %v6013 = vadd.f32 %v5881, %v6008
      %v6014 = vadd.f32 %v5884, %v6009
      %v6015 = vadd.f32 %v5889, %v6010
      %vm6016 = vcmp.gt.f32.partialorder %v6011, 0.0
      %vm6017 = vcmp.gt.f32.partialorder %v6012, 0.0
      %vm6018 = vcmp.gt.f32.partialorder %v6013, 0.0
      %vm6019 = vcmp.gt.f32.partialorder %v6014, 0.0
      %vm6020 = vcmp.gt.f32.partialorder %v6015, 0.0
      %v6021 = vmin.f32 %v6011, 0.0
      %v6022 = vmin.f32 %v6012, 0.0
      %v6023 = vmin.f32 %v6013, 0.0
      %v6024 = vmin.f32 %v6014, 0.0
      %v6025 = vmin.f32 %v6015, 0.0
      %v6026 = vmul.f32 %v6021, 1.442695
      %v6027 = vpow.pop %v6026
      %v6028 = vmul.f32 %v6022, 1.442695
      %v6029 = vpow.pop %v6028
      %v6030 = vmul.f32 %v6023, 1.442695
      %v6031 = vpow.pop %v6030
      %v6032 = vmul.f32 %v6024, 1.442695
      %v6033 = vpow.pop %v6032
      %v6034 = vmul.f32 %v6025, 1.442695
      %v6035 = vpow.pop %v6034
      %v6036 = vsub.f32 %v6027, 1.0
      %v6037 = vsub.f32 %v6029, 1.0
      %v6038 = vsub.f32 %v6031, 1.0
      %v6039 = vsub.f32 %v6033, 1.0
      %v6040 = vsub.f32 %v6035, 1.0
      %v6041 = vsel %vm6016, %v6011, %v6036
      %v6042 = vsel %vm6017, %v6012, %v6037
      %v6043 = vsel %vm6018, %v6013, %v6038
      %v6044 = vsel %vm6019, %v6014, %v6039
      %v6045 = vsel %vm6020, %v6015, %v6040
      %v6046 = vld [vmem:[%s1 + $0x428] sm:$0xf]
      %v6047 = vld [vmem:[%s1 + $0x42c] sm:$0xf]
      %v6048 = vld [vmem:[%s1 + $0x430] sm:$0xf]
      %v6049 = vld [vmem:[%s1 + $0x434] sm:$0xf]
      %v6050 = vld [vmem:[%s1 + $0x438] sm:$0xf]
      %v6051 = vld [vmem:[%s1 + $0x43c] sm:$0xf]
      %v6052 = vld [vmem:[%s1 + $0x440] sm:$0xf]
      %v6053 = vld [vmem:[%s1 + $0x444] sm:$0xf]
      %v6054 = vld [vmem:[%s1 + $0x448] sm:$0xf]
      %v6055 = vld [vmem:[%s1 + $0x44c] sm:$0xf]
      %v6056 = vld [vmem:[%s1 + $0x450] sm:$0xf]
      %v6057 = vld [vmem:[%s1 + $0x454] sm:$0xf]
      %v6058 = vld [vmem:[%s1 + $0x458] sm:$0xf]
      %v6059 = vld [vmem:[%s1 + $0x45c] sm:$0xf]
      %v6060 = vld [vmem:[%s1 + $0x460] sm:$0xf]
      %v6061 = vld [vmem:[%s1 + $0x464] sm:$0xf]
      %v6062 = vld [vmem:[%s1 + $0x468] sm:$0xf]
      %v6063 = vld [vmem:[%s1 + $0x46c] sm:$0xf]
      %v6064 = vld [vmem:[%s1 + $0x470] sm:$0xf]
      %v6065 = vld [vmem:[%s1 + $0x474] sm:$0xf]
      %v6066 = vld [vmem:[%s1 + $0x478] sm:$0xf]
      %v6067 = vld [vmem:[%s1 + $0x47c] sm:$0xf]
      %v6068 = vld [vmem:[%s1 + $0x480] sm:$0xf]
      %v6069 = vld [vmem:[%s1 + $0x484] sm:$0xf]
      %v6070 = vld [vmem:[%s1 + $0x488] sm:$0xf]
      %v6071 = vld [vmem:[%s1 + $0x48c] sm:$0xf]
      %v6072 = vld [vmem:[%s1 + $0x490] sm:$0xf]
      %v6073 = vld [vmem:[%s1 + $0x494] sm:$0xf]
      %v6074 = vld [vmem:[%s1 + $0x498] sm:$0xf]
      %v6075 = vld [vmem:[%s1 + $0x49c] sm:$0xf]
      %v6076 = vld [vmem:[%s2 + $0x12] sm:$0x1]
      %v6077 = vld [vmem:[%s1 + $0x4a0] sm:$0xf]
      %v6078 = vld [vmem:[%s1 + $0x4a4] sm:$0xf]
      %v6079 = vld [vmem:[%s1 + $0x4a8] sm:$0xf]
      %v6080 = vld [vmem:[%s1 + $0x4ac] sm:$0xf]
      %v6081 = vld [vmem:[%s1 + $0x4b0] sm:$0xf]
      %v6082 = vld [vmem:[%s1 + $0x4b4] sm:$0xf]
      %v6083 = vld [vmem:[%s1 + $0x4b8] sm:$0xf]
      %v6084 = vld [vmem:[%s1 + $0x4bc] sm:$0xf]
      %v6085 = vld [vmem:[%s1 + $0x4c0] sm:$0xf]
      %v6086 = vld [vmem:[%s1 + $0x4c4] sm:$0xf]
      %v6087 = vld [vmem:[%s1 + $0x4c8] sm:$0xf]
      %v6088 = vld [vmem:[%s1 + $0x4cc] sm:$0xf]
      %v6089 = vld [vmem:[%s1 + $0x4d0] sm:$0xf]
      %v6090 = vld [vmem:[%s1 + $0x4d4] sm:$0xf]
      %v6091 = vld [vmem:[%s1 + $0x4d8] sm:$0xf]
      %v6092 = vld [vmem:[%s1 + $0x4dc] sm:$0xf]
      %v6093 = vld [vmem:[%s1 + $0x4e0] sm:$0xf]
      %v6094 = vld [vmem:[%s1 + $0x4e4] sm:$0xf]
      %v6095 = vld [vmem:[%s1 + $0x4e8] sm:$0xf]
      %v6096 = vld [vmem:[%s1 + $0x4ec] sm:$0xf]
      %v6097 = vld [vmem:[%s1 + $0x4f0] sm:$0xf]
      %v6098 = vld [vmem:[%s1 + $0x4f4] sm:$0xf]
      %v6099 = vld [vmem:[%s1 + $0x4f8] sm:$0xf]
      %v6100 = vld [vmem:[%s1 + $0x4fc] sm:$0xf]
      %v6101 = vld [vmem:[%s1 + $0x500] sm:$0xf]
      %v6102 = vld [vmem:[%s1 + $0x504] sm:$0xf]
      %v6103 = vld [vmem:[%s1 + $0x508] sm:$0xf]
      %v6104 = vld [vmem:[%s1 + $0x50c] sm:$0xf]
      %v6105 = vld [vmem:[%s1 + $0x510] sm:$0xf]
      %v6106 = vld [vmem:[%s1 + $0x514] sm:$0xf]
      %v6107 = vld [vmem:[%s1 + $0x518] sm:$0xf]
      %v6108 = vld [vmem:[%s1 + $0x51c] sm:$0xf]
      %v6109 = vld [vmem:[%s1 + $0x520] sm:$0xf]
      %v6110 = vld [vmem:[%s1 + $0x524] sm:$0xf]
      %v6111 = vld [vmem:[%s1 + $0x528] sm:$0xf]
      %v6112 = vld [vmem:[%s1 + $0x52c] sm:$0xf]
      %v6113 = vld [vmem:[%s1 + $0x530] sm:$0xf]
      %v6114 = vld [vmem:[%s1 + $0x534] sm:$0xf]
      %v6115 = vld [vmem:[%s1 + $0x538] sm:$0xf]
      %v6116 = vld [vmem:[%s1 + $0x53c] sm:$0xf]
      %v6117 = vld [vmem:[%s2 + $0x13] sm:$0x1]
      %v6118 = vld [vmem:[%s1 + $0x540] sm:$0xf]
      %v6119 = vld [vmem:[%s1 + $0x544] sm:$0xf]
      %v6120 = vld [vmem:[%s1 + $0x548] sm:$0xf]
      %v6121 = vld [vmem:[%s1 + $0x54c] sm:$0xf]
      %v6122 = vld [vmem:[%s1 + $0x550] sm:$0xf]
      %v6123 = vld [vmem:[%s1 + $0x554] sm:$0xf]
      %v6124 = vld [vmem:[%s2 + $0x14] sm:$0x1]
      %v6125 = vpack.c.bf16 %v6042, %v6041
      %v6126 = vpack.c.bf16 %v6044, %v6043
      %v6127 = vpack.c.bf16 %v6045, %v6045
      %v6129 = vshrl.u32 %v6125, 16
      %v6131 = vrot.slane %v6129, 7
      %v6132 = vshll.u32 %v6125, 16
      %v6134 = vor.u32 %v6131, %v6132
      %v6136 = vshrl.u32 %v6126, 16
      %v6138 = vrot.slane %v6136, 7
      %v6139 = vshll.u32 %v6126, 16
      %v6141 = vor.u32 %v6138, %v6139
      %v6142 = vsel %vm839, %v6131, %v6141
      %v6144 = vshll.u32 %v6127, 16
      %v6146 = vsel %vm839, %v6138, %v6144
      %v6148 = vsel %vm882, 0, %v6134
      %v6150 = vsel %vm539, %v6146, 0
      %v6152 = vshrl.u32 %v6148, 16
      %v6154 = vshll.u32 %v6148, 16
      %v6156 = vrot.slane %v6154, 1
      %v6157 = vor.u32 %v6152, %v6156
      %v6159 = vshll.u32 %v6142, 16
      %v6161 = vrot.slane %v6159, 1
      %v6162 = vsel %vm885, %v6157, %v6161
      %v6163 = vshrl.u32 %v6142, 16
      %v6165 = vor.u32 %v6163, %v6161
      %6166 = vrot.lane.b32.xlu0 %v6162, 48
      %v6167 = vpop.permute.xlu0 %6166
      %6168 = vrot.lane.b32.xlu0 %v6165, 48
      %v6169 = vpop.permute.xlu0 %6168
      %v6172 = vrot.slane %v6148, 1
      %v6173 = vrot.slane %v6142, 1
      %v6174 = vsel %vm942, %v6172, %v6173
      %v6175 = vrot.slane %v6150, 1
      %v6176 = vsel %vm942, %v6173, %v6175
      %6177 = vrot.lane.b32.xlu0 %v6174, 96
      %v6178 = vpop.permute.xlu0 %6177
      %6179 = vrot.lane.b32.xlu0 %v6176, 96
      %v6180 = vpop.permute.xlu0 %6179
      %v6181 = vrot.slane %v6152, 1
      %v6182 = vrot.slane %v6154, 2
      %v6183 = vor.u32 %v6181, %v6182
      %v6184 = vrot.slane %v6163, 1
      %v6185 = vrot.slane %v6159, 2
      %v6186 = vor.u32 %v6184, %v6185
      %v6187 = vsel %vm3615, %v6183, %v6186
      %v6188 = vshrl.u32 %v6150, 16
      %v6190 = vrot.slane %v6188, 1
      %v6191 = vshll.u32 %v6150, 16
      %v6193 = vrot.slane %v6191, 2
      %v6194 = vor.u32 %v6190, %v6193
      %v6195 = vsel %vm3615, %v6186, %v6194
      %6196 = vrot.lane.b32.xlu0 %v6187, 16
      %v6197 = vpop.permute.xlu0 %6196
      %6198 = vrot.lane.b32.xlu0 %v6195, 16
      %v6199 = vpop.permute.xlu0 %6198
      %v6200 = vrot.slane %v6148, 2
      %v6201 = vrot.slane %v6142, 2
      %v6202 = vsel %vm3647, %v6200, %v6201
      %v6203 = vrot.slane %v6150, 2
      %v6204 = vsel %vm3647, %v6201, %v6203
      %6205 = vrot.lane.b32.xlu0 %v6202, 64
      %v6206 = vpop.permute.xlu0 %6205
      %6207 = vrot.lane.b32.xlu0 %v6204, 64
      %v6208 = vpop.permute.xlu0 %6207
      %v6210 = vsel %vm2500, %v6148, %v6167
      %v6212 = vsel %vm2500, %v6142, %v6169
      %v6214 = vsel %vm1025, %v6210, %v6178
      %v6217 = vsel %vm1025, %v6212, %v6180
      %v6220 = vsel %vm2703, %v6178, %v6197
      %v6222 = vsel %vm2703, %v6180, %v6199
      %v6224 = vsel %vm974, %v6220, %v6206
      %v6226 = vsel %vm974, %v6222, %v6208
      %v6257 = vunpack.c.l.b16 %v6046
      %v6258 = vunpack.c.l.b16 %v6047
      %v6259 = vunpack.c.l.b16 %v6048
      %v6260 = vunpack.c.l.b16 %v6049
      %v6261 = vunpack.c.l.b16 %v6050
      %v6262 = vunpack.c.l.b16 %v6051
      %v6263 = vunpack.c.l.b16 %v6052
      %v6264 = vunpack.c.l.b16 %v6053
      %v6265 = vunpack.c.l.b16 %v6054
      %v6266 = vunpack.c.l.b16 %v6055
      %v6267 = vunpack.c.l.b16 %v6056
      %v6268 = vunpack.c.l.b16 %v6057
      %v6269 = vunpack.c.l.b16 %v6058
      %v6270 = vunpack.c.l.b16 %v6059
      %v6271 = vunpack.c.l.b16 %v6060
      %v6272 = vunpack.c.l.b16 %v6061
      %v6273 = vunpack.c.l.b16 %v6062
      %v6274 = vunpack.c.l.b16 %v6063
      %v6275 = vunpack.c.l.b16 %v6064
      %v6276 = vunpack.c.l.b16 %v6065
      %v6277 = vunpack.c.l.b16 %v6066
      %v6278 = vunpack.c.l.b16 %v6067
      %v6279 = vunpack.c.l.b16 %v6068
      %v6280 = vunpack.c.l.b16 %v6069
      %v6281 = vunpack.c.l.b16 %v6070
      %v6282 = vunpack.c.l.b16 %v6071
      %v6283 = vunpack.c.l.b16 %v6072
      %v6284 = vunpack.c.l.b16 %v6073
      %v6285 = vunpack.c.l.b16 %v6074
      %v6286 = vunpack.c.l.b16 %v6075
      %v6287 = vpack.c.b16 %v6258, %v6257
      %v6288 = vpack.c.b16 %v6260, %v6259
      %v6289 = vpack.c.b16 %v6262, %v6261
      %v6290 = vpack.c.b16 %v6264, %v6263
      %v6291 = vpack.c.b16 %v6266, %v6265
      %v6292 = vpack.c.b16 %v6268, %v6267
      %v6293 = vpack.c.b16 %v6270, %v6269
      %v6294 = vpack.c.b16 %v6272, %v6271
      %v6295 = vpack.c.b16 %v6274, %v6273
      %v6296 = vpack.c.b16 %v6276, %v6275
      %v6297 = vpack.c.b16 %v6278, %v6277
      %v6298 = vpack.c.b16 %v6280, %v6279
      %v6299 = vpack.c.b16 %v6282, %v6281
      %v6300 = vpack.c.b16 %v6284, %v6283
      %v6301 = vpack.c.b16 %v6286, %v6285
      %v6317 = vsel %vm5831, %v6224, 0
      %v6319 = vsel %vm5831, %v6226, 0
      %6321 = vmatprep.subr.bf16.mxu0 0
      %6322 = vmatpush1.bf16.msra.mxu0 %v6287
      %6323 = vmatprep.subr.bf16.mxu0 0
      %6324 = vmatpush1.bf16.msra.mxu0 %v6288
      %6325 = vmatprep.subr.bf16.mxu0 0
      %6326 = vmatpush1.bf16.msra.mxu0 %v6289
      %6327 = vmatprep.subr.bf16.mxu0 0
      %6328 = vmatpush1.bf16.msra.mxu0 %v6290
      %6329 = vmatprep.subr.bf16.mxu0 0
      %6330 = vmatpush1.bf16.msra.mxu0 %v6291
      %6331 = vmatprep.subr.bf16.mxu0 0
      %6332 = vmatpush1.bf16.msra.mxu0 %v6292
      %6333 = vmatprep.subr.bf16.mxu0 0
      %6334 = vmatpush1.bf16.msra.mxu0 %v6293
      %6335 = vmatprep.subr.bf16.mxu0 0
      %6336 = vmatpush1.bf16.msra.mxu0 %v6294
      %6337 = vmatprep.subr.bf16.mxu0 0
      %6338 = vmatpush1.bf16.msra.mxu0 %v6295
      %6339 = vmatprep.subr.bf16.mxu0 0
      %6340 = vmatpush1.bf16.msra.mxu0 %v6296
      %6341 = vmatprep.subr.bf16.mxu0 0
      %6342 = vmatpush1.bf16.msra.mxu0 %v6297
      %6343 = vmatprep.subr.bf16.mxu0 0
      %6344 = vmatpush1.bf16.msra.mxu0 %v6298
      %6345 = vmatprep.subr.bf16.mxu0 0
      %6346 = vmatpush1.bf16.msra.mxu0 %v6299
      %6347 = vmatprep.subr.bf16.mxu0 0
      %6348 = vmatpush1.bf16.msra.mxu0 %v6300
      %6349 = vmatprep.subr.bf16.mxu0 0
      %6350 = vmatpush1.bf16.msra.mxu0 %v6301
      %6351 = vmatprep.subr.bf16.mxu0 0
      %6352 = vmatpush1.bf16.msra.mxu0 0
      %6353 = vmatprep.mubr.bf16.mxu0 %v6317
      %6354 = vmatmul.mubr.bf16.gmra.mrb[0].mxu0 %v6214
      %v6355 = vpop.f32.mrb[0].mxu0
      %v6356 = vadd.f32 0.0, %v6355
      %v6357 = vpop.f32.mrb[0].mxu0
      %v6358 = vpop.f32.mrb[0].mxu0
      %v6359 = vadd.f32 0.0, %v6358
      %v6360 = vpop.f32.mrb[0].mxu0
      %6361 = vmatprep.mubr.bf16.mxu0 %v6319
      %6362 = vmatmul.mubr.bf16.gmra.mrb[0].mxu0 %v6217
      %v6363 = vpop.f32.mrb[0].mxu0
      %v6364 = vadd.f32 0.0, %v6363
      %v6365 = vpop.f32.mrb[0].mxu0
      %v6366 = vpop.f32.mrb[0].mxu0
      %v6367 = vadd.f32 0.0, %v6366
      %v6368 = vpop.f32.mrb[0].mxu0
      %6369 = vdwg.mxu0
      %6370 = vst.msk [vmem:[#allocation3] sm:$0xff] %vm974, %v6356
      %6371 = vst.msk [vmem:[#allocation3 + $0x8] sm:$0xff] %vm974, %v6359
      %6372 = vst.msk [vmem:[#allocation3 + $0x10] sm:$0xff] %vm974, %v6364
      %vm6373 = vcmask 522240
      %6374 = vst.msk [vmem:[#allocation3 + $0x18] sm:$0x7f] %vm6373, %v6367
      %v6375 = vld [vmem:[#allocation3] ss:$2 sm:$0xff]
      %v6376 = vld [vmem:[%s5564] ss:$2 sm:$0xff]
      %v6377 = vlaneseq
      %v6378 = vshrl.u32 %v6377, 7
      %v6379 = vsub.s32 0, %v6378
      %v6380 = vrot.slane %v6076, %v6379
      %v6381 = vadd.f32 %v6375, %v6380
      %v6382 = vadd.f32 %v6376, %v6380
      %vm6383 = vcmp.gt.f32.partialorder %v6381, 0.0
      %vm6384 = vcmp.gt.f32.partialorder %v6382, 0.0
      %v6385 = vmin.f32 %v6381, 0.0
      %v6386 = vmin.f32 %v6382, 0.0
      %v6387 = vmul.f32 %v6385, 1.442695
      %v6388 = vpow.pop %v6387
      %v6389 = vmul.f32 %v6386, 1.442695
      %v6390 = vpow.pop %v6389
      %v6391 = vsub.f32 %v6388, 1.0
      %v6392 = vsub.f32 %v6390, 1.0
      %v6393 = vsel %vm6383, %v6381, %v6391
      %v6394 = vsel %vm6384, %v6382, %v6392
      %v6395 = vpack.c.bf16 %v6394, %v6393
      %v6397 = vshrl.u32 %v6395, 16
      %v6399 = vrot.slane %v6397, 7
      %v6400 = vshll.u32 %v6395, 16
      %v6402 = vor.u32 %v6399, %v6400
      %v6405 = vsel %vm882, 0, %v6402
      %v6406 = vsel %vm882, %v6399, 0
      %v6408 = vshrl.u32 %v6405, 16
      %v6410 = vshll.u32 %v6405, 16
      %v6412 = vrot.slane %v6410, 1
      %v6413 = vor.u32 %v6408, %v6412
      %6414 = vrot.lane.b32.xlu0 %v6413, 64
      %v6415 = vpop.permute.xlu0 %6414
      %v6417 = vrot.slane %v6405, 1
      %v6418 = vrot.slane %v6408, 1
      %v6419 = vrot.slane %v6410, 2
      %v6420 = vor.u32 %v6418, %v6419
      %v6422 = vshll.u32 %v6406, 16
      %v6424 = vrot.slane %v6422, 2
      %v6425 = vsel %vm3615, %v6420, %v6424
      %6426 = vrot.lane.b32.xlu0 %v6425, 64
      %v6427 = vpop.permute.xlu0 %6426
      %v6429 = vrot.slane %v6405, 2
      %v6430 = vrot.slane %v6406, 2
      %v6431 = vsel %vm3647, %v6429, %v6430
      %v6433 = vsel %vm974, %v6405, %v6415
      %v6437 = vsel %vm974, %v6417, %v6427
      %v6439 = vlaneseq
      %v6440 = vshrl.u32 %v6439, 7
      %v6441 = vsub.s32 0, %v6440
      %v6442 = vrot.slane %v6117, %v6441
      %v6483 = vunpack.c.l.b16 %v6077
      %v6484 = vunpack.c.l.b16 %v6078
      %v6485 = vunpack.c.l.b16 %v6079
      %v6486 = vunpack.c.l.b16 %v6080
      %v6487 = vunpack.c.l.b16 %v6081
      %v6488 = vunpack.c.l.b16 %v6082
      %v6489 = vunpack.c.l.b16 %v6083
      %v6490 = vunpack.c.l.b16 %v6084
      %v6491 = vunpack.c.l.b16 %v6085
      %v6492 = vunpack.c.l.b16 %v6086
      %v6493 = vunpack.c.l.b16 %v6087
      %v6494 = vunpack.c.l.b16 %v6088
      %v6495 = vunpack.c.l.b16 %v6089
      %v6496 = vunpack.c.l.b16 %v6090
      %v6497 = vunpack.c.l.b16 %v6091
      %v6498 = vunpack.c.l.b16 %v6092
      %v6499 = vunpack.c.l.b16 %v6093
      %v6500 = vunpack.c.l.b16 %v6094
      %v6501 = vunpack.c.l.b16 %v6095
      %v6502 = vunpack.c.l.b16 %v6096
      %v6503 = vunpack.c.l.b16 %v6097
      %v6504 = vunpack.c.l.b16 %v6098
      %v6505 = vunpack.c.l.b16 %v6099
      %v6506 = vunpack.c.l.b16 %v6100
      %v6507 = vunpack.c.l.b16 %v6101
      %v6508 = vunpack.c.l.b16 %v6102
      %v6509 = vunpack.c.l.b16 %v6103
      %v6510 = vunpack.c.l.b16 %v6104
      %v6511 = vunpack.c.l.b16 %v6105
      %v6512 = vunpack.c.l.b16 %v6106
      %v6513 = vunpack.c.l.b16 %v6107
      %v6514 = vunpack.c.l.b16 %v6108
      %v6515 = vunpack.c.l.b16 %v6109
      %v6516 = vunpack.c.l.b16 %v6110
      %v6517 = vunpack.c.l.b16 %v6111
      %v6518 = vunpack.c.l.b16 %v6112
      %v6519 = vunpack.c.l.b16 %v6113
      %v6520 = vunpack.c.l.b16 %v6114
      %v6521 = vunpack.c.l.b16 %v6115
      %v6522 = vunpack.c.l.b16 %v6116
      %v6523 = vpack.c.b16 %v6484, %v6483
      %v6524 = vpack.c.b16 %v6486, %v6485
      %v6525 = vpack.c.b16 %v6488, %v6487
      %v6526 = vpack.c.b16 %v6490, %v6489
      %v6527 = vpack.c.b16 %v6492, %v6491
      %v6528 = vpack.c.b16 %v6494, %v6493
      %v6529 = vpack.c.b16 %v6496, %v6495
      %v6530 = vpack.c.b16 %v6498, %v6497
      %v6531 = vpack.c.b16 %v6500, %v6499
      %v6532 = vpack.c.b16 %v6502, %v6501
      %v6533 = vpack.c.b16 %v6504, %v6503
      %v6534 = vpack.c.b16 %v6506, %v6505
      %v6535 = vpack.c.b16 %v6508, %v6507
      %v6536 = vpack.c.b16 %v6510, %v6509
      %v6537 = vpack.c.b16 %v6512, %v6511
      %v6538 = vpack.c.b16 %v6514, %v6513
      %v6539 = vpack.c.b16 %v6516, %v6515
      %v6540 = vpack.c.b16 %v6518, %v6517
      %v6541 = vpack.c.b16 %v6520, %v6519
      %v6542 = vpack.c.b16 %v6522, %v6521
      %v6564 = vsel %vm974, %v6431, 0
      %6566 = vmatprep.subr.bf16.mxu0 0
      %6567 = vmatpush1.bf16.msra.mxu0 %v6523
      %6568 = vmatprep.subr.bf16.mxu0 0
      %6569 = vmatpush1.bf16.msra.mxu0 %v6524
      %6570 = vmatprep.subr.bf16.mxu0 0
      %6571 = vmatpush1.bf16.msra.mxu0 %v6525
      %6572 = vmatprep.subr.bf16.mxu0 0
      %6573 = vmatpush1.bf16.msra.mxu0 %v6526
      %6574 = vmatprep.subr.bf16.mxu0 0
      %6575 = vmatpush1.bf16.msra.mxu0 %v6527
      %6576 = vmatprep.subr.bf16.mxu0 0
      %6577 = vmatpush1.bf16.msra.mxu0 %v6528
      %6578 = vmatprep.subr.bf16.mxu0 0
      %6579 = vmatpush1.bf16.msra.mxu0 %v6529
      %6580 = vmatprep.subr.bf16.mxu0 0
      %6581 = vmatpush1.bf16.msra.mxu0 %v6530
      %6582 = vmatprep.subr.bf16.mxu0 0
      %6583 = vmatpush1.bf16.msra.mxu0 %v6531
      %6584 = vmatprep.subr.bf16.mxu0 0
      %6585 = vmatpush1.bf16.msra.mxu0 %v6532
      %6586 = vmatprep.subr.bf16.mxu0 0
      %6587 = vmatpush1.bf16.msra.mxu0 %v6533
      %6588 = vmatprep.subr.bf16.mxu0 0
      %6589 = vmatpush1.bf16.msra.mxu0 %v6534
      %6590 = vmatprep.subr.bf16.mxu0 0
      %6591 = vmatpush1.bf16.msra.mxu0 %v6535
      %6592 = vmatprep.subr.bf16.mxu0 0
      %6593 = vmatpush1.bf16.msra.mxu0 %v6536
      %6594 = vmatprep.subr.bf16.mxu0 0
      %6595 = vmatpush1.bf16.msra.mxu0 %v6537
      %6596 = vmatprep.subr.bf16.mxu0 0
      %6597 = vmatpush1.bf16.msra.mxu0 %v6538
      %6598 = vmatprep.mubr.bf16.mxu0 %v6437
      %6599 = vmatmul.mubr.bf16.gmra.mrb[0].mxu0 %v6433
      %v6600 = vpop.f32.mrb[0].mxu0
      %v6601 = vadd.f32 %v6442, %v6600
      %v6602 = vpop.f32.mrb[0].mxu0
      %v6603 = vpop.f32.mrb[0].mxu0
      %v6604 = vadd.f32 %v6442, %v6603
      %v6605 = vpop.f32.mrb[0].mxu0
      %6606 = vdwg.mxu0
      %6607 = vmatprep.subr.bf16.mxu0 0
      %6608 = vmatpush1.bf16.msra.mxu0 %v6539
      %6609 = vmatprep.subr.bf16.mxu0 0
      %6610 = vmatpush1.bf16.msra.mxu0 %v6540
      %6611 = vmatprep.subr.bf16.mxu0 0
      %6612 = vmatpush1.bf16.msra.mxu0 %v6541
      %6613 = vmatprep.subr.bf16.mxu0 0
      %6614 = vmatpush1.bf16.msra.mxu0 %v6542
      %6615 = vmatprep.subr.bf16.mxu0 0
      %6616 = vmatpush1.bf16.msra.mxu0 0
      %6617 = vmatprep.subr.bf16.mxu0 0
      %6618 = vmatpush1.bf16.msra.mxu0 0
      %6619 = vmatprep.subr.bf16.mxu0 0
      %6620 = vmatpush1.bf16.msra.mxu0 0
      %6621 = vmatprep.subr.bf16.mxu0 0
      %6622 = vmatpush1.bf16.msra.mxu0 0
      %6623 = vmatprep.subr.bf16.mxu0 0
      %6624 = vmatpush1.bf16.msra.mxu0 0
      %6625 = vmatprep.subr.bf16.mxu0 0
      %6626 = vmatpush1.bf16.msra.mxu0 0
      %6627 = vmatprep.subr.bf16.mxu0 0
      %6628 = vmatpush1.bf16.msra.mxu0 0
      %6629 = vmatprep.subr.bf16.mxu0 0
      %6630 = vmatpush1.bf16.msra.mxu0 0
      %6631 = vmatprep.subr.bf16.mxu0 0
      %6632 = vmatpush1.bf16.msra.mxu0 0
      %6633 = vmatprep.subr.bf16.mxu0 0
      %6634 = vmatpush1.bf16.msra.mxu0 0
      %6635 = vmatprep.subr.bf16.mxu0 0
      %6636 = vmatpush1.bf16.msra.mxu0 0
      %6637 = vmatprep.subr.bf16.mxu0 0
      %6638 = vmatpush1.bf16.msra.mxu0 0
      %6639 = vmatprep.mubr.bf16.mxu0 0
      %6640 = vmatmul.mubr.bf16.gmra.mrb[0].mxu0 %v6564
      %v6641 = vpop.f32.mrb[0].mxu0
      %v6642 = vadd.f32 %v6601, %v6641
      %v6643 = vpop.f32.mrb[0].mxu0
      %v6644 = vpop.f32.mrb[0].mxu0
      %v6645 = vadd.f32 %v6604, %v6644
      %v6646 = vpop.f32.mrb[0].mxu0
      %6647 = vdwg.mxu0
      %v6654 = vunpack.c.l.b16 %v6118
      %v6655 = vunpack.c.l.b16 %v6119
      %v6656 = vunpack.c.l.b16 %v6120
      %v6657 = vunpack.c.l.b16 %v6121
      %v6658 = vunpack.c.l.b16 %v6122
      %v6659 = vunpack.c.l.b16 %v6123
      %v6660 = vpack.c.b16 %v6655, %v6654
      %v6661 = vpack.c.b16 %v6657, %v6656
      %v6662 = vpack.c.b16 %v6659, %v6658
      %v6666 = vsel %vm2500, %v6125, 0
      %v6668 = vsel %vm2500, %v6126, 0
      %v6670 = vsel %vm2500, %v6127, 0
      %6672 = vmatprep.subr.bf16.mxu0 0
      %6673 = vmatpush1.bf16.msra.mxu0 %v6660
      %6674 = vmatprep.subr.bf16.mxu0 0
      %6675 = vmatpush1.bf16.msra.mxu0 %v6661
      %6676 = vmatprep.subr.bf16.mxu0 0
      %6677 = vmatpush1.bf16.msra.mxu0 %v6662
      %6678 = vmatprep.subr.bf16.mxu0 0
      %6679 = vmatpush1.bf16.msra.mxu0 0
      %6680 = vmatprep.subr.bf16.mxu0 0
      %6681 = vmatpush1.bf16.msra.mxu0 0
      %6682 = vmatprep.subr.bf16.mxu0 0
      %6683 = vmatpush1.bf16.msra.mxu0 0
      %6684 = vmatprep.subr.bf16.mxu0 0
      %6685 = vmatpush1.bf16.msra.mxu0 0
      %6686 = vmatprep.subr.bf16.mxu0 0
      %6687 = vmatpush1.bf16.msra.mxu0 0
      %6688 = vmatprep.subr.bf16.mxu0 0
      %6689 = vmatpush1.bf16.msra.mxu0 0
      %6690 = vmatprep.subr.bf16.mxu0 0
      %6691 = vmatpush1.bf16.msra.mxu0 0
      %6692 = vmatprep.subr.bf16.mxu0 0
      %6693 = vmatpush1.bf16.msra.mxu0 0
      %6694 = vmatprep.subr.bf16.mxu0 0
      %6695 = vmatpush1.bf16.msra.mxu0 0
      %6696 = vmatprep.subr.bf16.mxu0 0
      %6697 = vmatpush1.bf16.msra.mxu0 0
      %6698 = vmatprep.subr.bf16.mxu0 0
      %6699 = vmatpush1.bf16.msra.mxu0 0
      %6700 = vmatprep.subr.bf16.mxu0 0
      %6701 = vmatpush1.bf16.msra.mxu0 0
      %6702 = vmatprep.subr.bf16.mxu0 0
      %6703 = vmatpush1.bf16.msra.mxu0 0
      %6704 = vmatprep.mubr.bf16.mxu0 0
      %6705 = vmatmul.mubr.bf16.gmra.mrb[0].mxu0 %v6666
      %v6706 = vpop.f32.mrb[0].mxu0
      %v6707 = vadd.f32 0.0, %v6706
      %v6708 = vpop.f32.mrb[0].mxu0
      %v6709 = vpop.f32.mrb[0].mxu0
      %v6710 = vadd.f32 0.0, %v6709
      %v6711 = vpop.f32.mrb[0].mxu0
      %6712 = vmatprep.mubr.bf16.mxu0 0
      %6713 = vmatmul.mubr.bf16.gmra.mrb[0].mxu0 %v6668
      %v6714 = vpop.f32.mrb[0].mxu0
      %v6715 = vadd.f32 0.0, %v6714
      %v6716 = vpop.f32.mrb[0].mxu0
      %v6717 = vpop.f32.mrb[0].mxu0
      %v6718 = vadd.f32 0.0, %v6717
      %v6719 = vpop.f32.mrb[0].mxu0
      %6720 = vmatprep.mubr.bf16.mxu0 0
      %6721 = vmatmul.mubr.bf16.gmra.mrb[0].mxu0 %v6670
      %v6722 = vpop.f32.mrb[0].mxu0
      %v6723 = vadd.f32 0.0, %v6722
      %v6724 = vpop.f32.mrb[0].mxu0
      %v6725 = vpop.f32.mrb[0].mxu0
      %v6726 = vpop.f32.mrb[0].mxu0
      %6727 = vdwg.mxu0
      %6728 = vst.msk [vmem:[#allocation3] sm:$0xff] %vm974, %v6707
      %6729 = vst.msk [vmem:[#allocation3 + $0x8] sm:$0xff] %vm974, %v6710
      %6730 = vst.msk [vmem:[#allocation3 + $0x10] sm:$0xff] %vm974, %v6715
      %6731 = vst.msk [vmem:[#allocation3 + $0x18] sm:$0xff] %vm974, %v6718
      %vm6732 = vcmask 516096
      %6733 = vst.msk [vmem:[#allocation3 + $0x20] sm:$0x1] %vm6732, %v6723
      %v6734 = vld [vmem:[#allocation3] ss:$2 sm:$0xff]
      %v6735 = vld [vmem:[%s5564] ss:$2 sm:$0xff]
      %v6736 = vlaneseq
      %v6737 = vshrl.u32 %v6736, 7
      %v6738 = vsub.s32 0, %v6737
      %v6739 = vrot.slane %v6124, %v6738
      %v6740 = vadd.f32 %v6734, %v6739
      %v6741 = vadd.f32 %v6735, %v6739
      %v6742 = vadd.f32 %v6642, %v6740
      %v6743 = vadd.f32 %v6645, %v6741
      %vm6744 = vcmp.gt.f32.partialorder %v6742, 0.0
      %vm6745 = vcmp.gt.f32.partialorder %v6743, 0.0
      %v6746 = vmin.f32 %v6742, 0.0
      %v6747 = vmin.f32 %v6743, 0.0
      %v6748 = vmul.f32 %v6746, 1.442695
      %v6749 = vpow.pop %v6748
      %v6750 = vmul.f32 %v6747, 1.442695
      %v6751 = vpow.pop %v6750
      %v6752 = vsub.f32 %v6749, 1.0
      %v6753 = vsub.f32 %v6751, 1.0
      %v6754 = vsel %vm6744, %v6742, %v6752
      %v6755 = vsel %vm6745, %v6743, %v6753
      %v6757 = vrot.slane %v6754, 1
      %v6759 = vadd.f32 %v6754, %v6757
      %v6760 = vrot.slane %v6754, 2
      %v6762 = vadd.f32 %v6759, %v6760
      %v6763 = vrot.slane %v6754, 3
      %v6765 = vadd.f32 %v6762, %v6763
      %v6766 = vrot.slane %v6754, 4
      %v6768 = vadd.f32 %v6765, %v6766
      %v6770 = vrot.slane %v6754, 5
      %v6771 = vrot.slane %v6755, 5
      %v6772 = vsel %vm279, %v6770, %v6771
      %v6774 = vadd.f32 %v6768, %v6772
      %v6775 = vrot.slane %v6754, 6
      %v6776 = vrot.slane %v6755, 6
      %v6777 = vsel %vm3528, %v6775, %v6776
      %v6779 = vadd.f32 %v6774, %v6777
      %v6780 = vrot.slane %v6754, 7
      %v6781 = vrot.slane %v6755, 7
      %v6782 = vsel %vm539, %v6780, %v6781
      %v6784 = vadd.f32 %v6779, %v6782
      %v6785 = vadd.f32 %v6784, %v6755
      %v6786 = vrot.slane %v6755, 1
      %v6788 = vadd.f32 %v6785, %v6786
      %v6789 = vrot.slane %v6755, 2
      %v6791 = vadd.f32 %v6788, %v6789
      %v6792 = vmul.f32 %v6791, 0.09090909
      %vm6793 = vcmask 519168
      %6794 = vst.msk [vmem:[%s170 + $0x5] sm:$0xf] %vm6793, %v6792
      %v6795 = vld [vmem:[%s1 + $0x558] sm:$0xf]
      %v6796 = vld [vmem:[%s1 + $0x55c] sm:$0xf]
      %v6797 = vld [vmem:[%s1 + $0x560] sm:$0xf]
      %v6798 = vld [vmem:[%s1 + $0x564] sm:$0xf]
      %v6799 = vld [vmem:[%s1 + $0x568] sm:$0xf]
      %v6800 = vld [vmem:[%s1 + $0x56c] sm:$0xf]
      %v6801 = vld [vmem:[%s1 + $0x570] sm:$0xf]
      %v6802 = vld [vmem:[%s1 + $0x574] sm:$0xf]
      %v6803 = vld [vmem:[%s1 + $0x578] sm:$0xf]
      %v6804 = vld [vmem:[%s1 + $0x57c] sm:$0xf]
      %v6805 = vld [vmem:[%s1 + $0x580] sm:$0xf]
      %v6806 = vld [vmem:[%s1 + $0x584] sm:$0xf]
      %v6807 = vld [vmem:[%s1 + $0x588] sm:$0xf]
      %v6808 = vld [vmem:[%s1 + $0x58c] sm:$0xf]
      %v6809 = vld [vmem:[%s1 + $0x590] sm:$0xf]
      %v6810 = vld [vmem:[%s1 + $0x594] sm:$0xf]
      %v6811 = vld [vmem:[%s1 + $0x598] sm:$0xf]
      %v6812 = vld [vmem:[%s1 + $0x59c] sm:$0xf]
      %v6813 = vld [vmem:[%s1 + $0x5a0] sm:$0xf]
      %v6814 = vld [vmem:[%s1 + $0x5a4] sm:$0xf]
      %v6815 = vld [vmem:[%s1 + $0x5a8] sm:$0xf]
      %v6816 = vld [vmem:[%s1 + $0x5ac] sm:$0xf]
      %v6817 = vld [vmem:[%s1 + $0x5b0] sm:$0xf]
      %v6818 = vld [vmem:[%s1 + $0x5b4] sm:$0xf]
      %v6819 = vld [vmem:[%s1 + $0x5b8] sm:$0xf]
      %v6820 = vld [vmem:[%s1 + $0x5bc] sm:$0xf]
      %v6821 = vld [vmem:[%s1 + $0x5c0] sm:$0xf]
      %v6822 = vld [vmem:[%s1 + $0x5c4] sm:$0xf]
      %v6823 = vld [vmem:[%s2 + $0x15] sm:$0x1]
      %v6824 = vld [vmem:[%s1 + $0x5c8] sm:$0xf]
      %v6825 = vld [vmem:[%s1 + $0x5cc] sm:$0xf]
      %v6826 = vld [vmem:[%s1 + $0x5d0] sm:$0xf]
      %v6827 = vld [vmem:[%s1 + $0x5d4] sm:$0xf]
      %v6828 = vld [vmem:[%s1 + $0x5d8] sm:$0xf]
      %v6829 = vld [vmem:[%s1 + $0x5dc] sm:$0xf]
      %v6830 = vld [vmem:[%s1 + $0x5e0] sm:$0xf]
      %v6831 = vld [vmem:[%s1 + $0x5e4] sm:$0xf]
      %v6832 = vld [vmem:[%s1 + $0x5e8] sm:$0xf]
      %v6833 = vld [vmem:[%s1 + $0x5ec] sm:$0xf]
      %v6834 = vld [vmem:[%s1 + $0x5f0] sm:$0xf]
      %v6835 = vld [vmem:[%s1 + $0x5f4] sm:$0xf]
      %v6836 = vld [vmem:[%s1 + $0x5f8] sm:$0xf]
      %v6837 = vld [vmem:[%s1 + $0x5fc] sm:$0xf]
      %v6838 = vld [vmem:[%s1 + $0x600] sm:$0xf]
      %v6839 = vld [vmem:[%s1 + $0x604] sm:$0xf]
      %v6840 = vld [vmem:[%s1 + $0x608] sm:$0xf]
      %v6841 = vld [vmem:[%s1 + $0x60c] sm:$0xf]
      %v6842 = vld [vmem:[%s1 + $0x610] sm:$0xf]
      %v6843 = vld [vmem:[%s1 + $0x614] sm:$0xf]
      %v6844 = vld [vmem:[%s1 + $0x618] sm:$0xf]
      %v6845 = vld [vmem:[%s1 + $0x61c] sm:$0xf]
      %v6846 = vld [vmem:[%s1 + $0x620] sm:$0xf]
      %v6847 = vld [vmem:[%s1 + $0x624] sm:$0xf]
      %v6848 = vld [vmem:[%s1 + $0x628] sm:$0xf]
      %v6849 = vld [vmem:[%s1 + $0x62c] sm:$0xf]
      %v6850 = vld [vmem:[%s1 + $0x630] sm:$0xf]
      %v6851 = vld [vmem:[%s1 + $0x634] sm:$0xf]
      %v6852 = vld [vmem:[%s2 + $0x16] sm:$0x1]
      %6853 = vrot.lane.b32.xlu0 %v3633, 96
      %v6854 = vpop.permute.xlu0 %6853
      %v6855 = vrot.slane %v887, 2
      %v6856 = vrot.slane %v889, 3
      %v6857 = vor.u32 %v6855, %v6856
      %v6858 = vrot.slane %v898, 2
      %v6859 = vrot.slane %v894, 3
      %v6860 = vor.u32 %v6858, %v6859
      %v6861 = vsel %vm4798, %v6857, %v6860
      %v6862 = vrot.slane %v906, 2
      %v6863 = vrot.slane %v902, 3
      %v6864 = vor.u32 %v6862, %v6863
      %v6865 = vsel %vm4798, %v6860, %v6864
      %v6866 = vrot.slane %v914, 2
      %v6867 = vrot.slane %v910, 3
      %v6868 = vor.u32 %v6866, %v6867
      %v6869 = vsel %vm4798, %v6864, %v6868
      %v6870 = vrot.slane %v922, 2
      %v6871 = vrot.slane %v918, 3
      %v6872 = vor.u32 %v6870, %v6871
      %v6873 = vsel %vm4798, %v6868, %v6872
      %v6874 = vrot.slane %v926, 3
      %v6875 = vsel %vm4798, %v6872, %v6874
      %6876 = vrot.lane.b32.xlu0 %v6861, 32
      %v6877 = vpop.permute.xlu0 %6876
      %6878 = vrot.lane.b32.xlu0 %v6865, 32
      %v6879 = vpop.permute.xlu0 %6878
      %6880 = vrot.lane.b32.xlu0 %v6869, 32
      %v6881 = vpop.permute.xlu0 %6880
      %6882 = vrot.lane.b32.xlu0 %v6873, 32
      %v6883 = vpop.permute.xlu0 %6882
      %6884 = vrot.lane.b32.xlu0 %v6875, 32
      %v6885 = vpop.permute.xlu0 %6884
      %v6886 = vrot.slane %v883, 3
      %v6887 = vrot.slane %v854, 3
      %v6888 = vsel %vm2584, %v6886, %v6887
      %v6889 = vrot.slane %v862, 3
      %v6890 = vsel %vm2584, %v6887, %v6889
      %v6891 = vrot.slane %v870, 3
      %v6892 = vsel %vm2584, %v6889, %v6891
      %v6893 = vrot.slane %v878, 3
      %v6894 = vsel %vm2584, %v6891, %v6893
      %v6895 = vrot.slane %v884, 3
      %v6896 = vsel %vm2584, %v6893, %v6895
      %6897 = vrot.lane.b32.xlu0 %v6888, 64
      %v6898 = vpop.permute.xlu0 %6897
      %6899 = vrot.lane.b32.xlu0 %v6890, 64
      %v6900 = vpop.permute.xlu0 %6899
      %6901 = vrot.lane.b32.xlu0 %v6892, 64
      %v6902 = vpop.permute.xlu0 %6901
      %6903 = vrot.lane.b32.xlu0 %v6894, 64
      %v6904 = vpop.permute.xlu0 %6903
      %6905 = vrot.lane.b32.xlu0 %v6896, 64
      %v6906 = vpop.permute.xlu0 %6905
      %v6908 = vsel %vm1025, %v3662, %v6854
      %v6911 = vsel %vm768, %v3650, %v6877
      %v6913 = vsel %vm768, %v3652, %v6879
      %v6915 = vsel %vm768, %v3654, %v6881
      %v6917 = vsel %vm768, %v3656, %v6883
      %v6920 = vsel %vm768, %v3655, %v6885
      %v6922 = vsel %vm974, %v6911, %v6898
      %v6924 = vsel %vm974, %v6913, %v6900
      %v6926 = vsel %vm974, %v6915, %v6902
      %v6928 = vsel %vm974, %v6917, %v6904
      %v6930 = vsel %vm974, %v6920, %v6906
      %v6931 = vlaneseq
      %v6932 = vshrl.u32 %v6931, 7
      %v6933 = vsub.s32 0, %v6932
      %v6934 = vrot.slane %v6823, %v6933
      %v6963 = vunpack.c.l.b16 %v6795
      %v6964 = vunpack.c.l.b16 %v6796
      %v6965 = vunpack.c.l.b16 %v6797
      %v6966 = vunpack.c.l.b16 %v6798
      %v6967 = vunpack.c.l.b16 %v6799
      %v6968 = vunpack.c.l.b16 %v6800
      %v6969 = vunpack.c.l.b16 %v6801
      %v6970 = vunpack.c.l.b16 %v6802
      %v6971 = vunpack.c.l.b16 %v6803
      %v6972 = vunpack.c.l.b16 %v6804
      %v6973 = vunpack.c.l.b16 %v6805
      %v6974 = vunpack.c.l.b16 %v6806
      %v6975 = vunpack.c.l.b16 %v6807
      %v6976 = vunpack.c.l.b16 %v6808
      %v6977 = vunpack.c.l.b16 %v6809
      %v6978 = vunpack.c.l.b16 %v6810
      %v6979 = vunpack.c.l.b16 %v6811
      %v6980 = vunpack.c.l.b16 %v6812
      %v6981 = vunpack.c.l.b16 %v6813
      %v6982 = vunpack.c.l.b16 %v6814
      %v6983 = vunpack.c.l.b16 %v6815
      %v6984 = vunpack.c.l.b16 %v6816
      %v6985 = vunpack.c.l.b16 %v6817
      %v6986 = vunpack.c.l.b16 %v6818
      %v6987 = vunpack.c.l.b16 %v6819
      %v6988 = vunpack.c.l.b16 %v6820
      %v6989 = vunpack.c.l.b16 %v6821
      %v6990 = vunpack.c.l.b16 %v6822
      %v6991 = vpack.c.b16 %v6964, %v6963
      %v6992 = vpack.c.b16 %v6966, %v6965
      %v6993 = vpack.c.b16 %v6968, %v6967
      %v6994 = vpack.c.b16 %v6970, %v6969
      %v6995 = vpack.c.b16 %v6972, %v6971
      %v6996 = vpack.c.b16 %v6974, %v6973
      %v6997 = vpack.c.b16 %v6976, %v6975
      %v6998 = vpack.c.b16 %v6978, %v6977
      %v6999 = vpack.c.b16 %v6980, %v6979
      %v7000 = vpack.c.b16 %v6982, %v6981
      %v7001 = vpack.c.b16 %v6984, %v6983
      %v7002 = vpack.c.b16 %v6986, %v6985
      %v7003 = vpack.c.b16 %v6988, %v6987
      %v7004 = vpack.c.b16 %v6990, %v6989
      %v7019 = vsel %vm1025, %v6922, 0
      %v7021 = vsel %vm1025, %v6924, 0
      %v7023 = vsel %vm1025, %v6926, 0
      %v7025 = vsel %vm1025, %v6928, 0
      %v7027 = vsel %vm1025, %v6930, 0
      %7029 = vmatprep.subr.bf16.mxu0 0
      %7030 = vmatpush1.bf16.msra.mxu0 %v6991
      %7031 = vmatprep.subr.bf16.mxu0 0
      %7032 = vmatpush1.bf16.msra.mxu0 %v6992
      %7033 = vmatprep.subr.bf16.mxu0 0
      %7034 = vmatpush1.bf16.msra.mxu0 %v6993
      %7035 = vmatprep.subr.bf16.mxu0 0
      %7036 = vmatpush1.bf16.msra.mxu0 %v6994
      %7037 = vmatprep.subr.bf16.mxu0 0
      %7038 = vmatpush1.bf16.msra.mxu0 %v6995
      %7039 = vmatprep.subr.bf16.mxu0 0
      %7040 = vmatpush1.bf16.msra.mxu0 %v6996
      %7041 = vmatprep.subr.bf16.mxu0 0
      %7042 = vmatpush1.bf16.msra.mxu0 %v6997
      %7043 = vmatprep.subr.bf16.mxu0 0
      %7044 = vmatpush1.bf16.msra.mxu0 %v6998
      %7045 = vmatprep.subr.bf16.mxu0 0
      %7046 = vmatpush1.bf16.msra.mxu0 %v6999
      %7047 = vmatprep.subr.bf16.mxu0 0
      %7048 = vmatpush1.bf16.msra.mxu0 %v7000
      %7049 = vmatprep.subr.bf16.mxu0 0
      %7050 = vmatpush1.bf16.msra.mxu0 %v7001
      %7051 = vmatprep.subr.bf16.mxu0 0
      %7052 = vmatpush1.bf16.msra.mxu0 %v7002
      %7053 = vmatprep.subr.bf16.mxu0 0
      %7054 = vmatpush1.bf16.msra.mxu0 %v7003
      %7055 = vmatprep.subr.bf16.mxu0 0
      %7056 = vmatpush1.bf16.msra.mxu0 %v7004
      %7057 = vmatprep.subr.bf16.mxu0 0
      %7058 = vmatpush1.bf16.msra.mxu0 0
      %7059 = vmatprep.subr.bf16.mxu0 0
      %7060 = vmatpush1.bf16.msra.mxu0 0
      %7061 = vmatprep.mubr.bf16.mxu0 %v7019
      %7062 = vmatmul.mubr.bf16.gmra.mrb[0].mxu0 %v3664
      %v7063 = vpop.f32.mrb[0].mxu0
      %v7064 = vadd.f32 %v6934, %v7063
      %v7065 = vpop.f32.mrb[0].mxu0
      %v7066 = vpop.f32.mrb[0].mxu0
      %v7067 = vadd.f32 %v6934, %v7066
      %v7068 = vpop.f32.mrb[0].mxu0
      %7069 = vmatprep.mubr.bf16.mxu0 %v7021
      %7070 = vmatmul.mubr.bf16.gmra.mrb[0].mxu0 %v3667
      %v7071 = vpop.f32.mrb[0].mxu0
      %v7072 = vadd.f32 %v6934, %v7071
      %v7073 = vpop.f32.mrb[0].mxu0
      %v7074 = vpop.f32.mrb[0].mxu0
      %v7075 = vadd.f32 %v6934, %v7074
      %v7076 = vpop.f32.mrb[0].mxu0
      %7077 = vmatprep.mubr.bf16.mxu0 %v7023
      %7078 = vmatmul.mubr.bf16.gmra.mrb[0].mxu0 %v3670
      %v7079 = vpop.f32.mrb[0].mxu0
      %v7080 = vadd.f32 %v6934, %v7079
      %v7081 = vpop.f32.mrb[0].mxu0
      %v7082 = vpop.f32.mrb[0].mxu0
      %v7083 = vadd.f32 %v6934, %v7082
      %v7084 = vpop.f32.mrb[0].mxu0
      %7085 = vmatprep.mubr.bf16.mxu0 %v7025
      %7086 = vmatmul.mubr.bf16.gmra.mrb[0].mxu0 %v3673
      %v7087 = vpop.f32.mrb[0].mxu0
      %v7088 = vadd.f32 %v6934, %v7087
      %v7089 = vpop.f32.mrb[0].mxu0
      %v7090 = vpop.f32.mrb[0].mxu0
      %v7091 = vadd.f32 %v6934, %v7090
      %v7092 = vpop.f32.mrb[0].mxu0
      %7093 = vmatprep.mubr.bf16.mxu0 %v7027
      %7094 = vmatmul.mubr.bf16.gmra.mrb[0].mxu0 %v6908
      %v7095 = vpop.f32.mrb[0].mxu0
      %v7096 = vadd.f32 %v6934, %v7095
      %v7097 = vpop.f32.mrb[0].mxu0
      %v7098 = vpop.f32.mrb[0].mxu0
      %v7099 = vadd.f32 %v6934, %v7098
      %v7100 = vpop.f32.mrb[0].mxu0
      %7101 = vdwg.mxu0
      %vm7102 = vcmp.gt.f32.partialorder %v7064, 0.0
      %vm7103 = vcmp.gt.f32.partialorder %v7067, 0.0
      %vm7104 = vcmp.gt.f32.partialorder %v7072, 0.0
      %vm7105 = vcmp.gt.f32.partialorder %v7075, 0.0
      %vm7106 = vcmp.gt.f32.partialorder %v7080, 0.0
      %vm7107 = vcmp.gt.f32.partialorder %v7083, 0.0
      %vm7108 = vcmp.gt.f32.partialorder %v7088, 0.0
      %vm7109 = vcmp.gt.f32.partialorder %v7091, 0.0
      %vm7110 = vcmp.gt.f32.partialorder %v7096, 0.0
      %vm7111 = vcmp.gt.f32.partialorder %v7099, 0.0
      %v7112 = vmin.f32 %v7064, 0.0
      %v7113 = vmin.f32 %v7067, 0.0
      %v7114 = vmin.f32 %v7072, 0.0
      %v7115 = vmin.f32 %v7075, 0.0
      %v7116 = vmin.f32 %v7080, 0.0
      %v7117 = vmin.f32 %v7083, 0.0
      %v7118 = vmin.f32 %v7088, 0.0
      %v7119 = vmin.f32 %v7091, 0.0
      %v7120 = vmin.f32 %v7096, 0.0
      %v7121 = vmin.f32 %v7099, 0.0
      %v7122 = vmul.f32 %v7112, 1.442695
      %v7123 = vpow.pop %v7122
      %v7124 = vmul.f32 %v7113, 1.442695
      %v7125 = vpow.pop %v7124
      %v7126 = vmul.f32 %v7114, 1.442695
      %v7127 = vpow.pop %v7126
      %v7128 = vmul.f32 %v7115, 1.442695
      %v7129 = vpow.pop %v7128
      %v7130 = vmul.f32 %v7116, 1.442695
      %v7131 = vpow.pop %v7130
      %v7132 = vmul.f32 %v7117, 1.442695
      %v7133 = vpow.pop %v7132
      %v7134 = vmul.f32 %v7118, 1.442695
      %v7135 = vpow.pop %v7134
      %v7136 = vmul.f32 %v7119, 1.442695
      %v7137 = vpow.pop %v7136
      %v7138 = vmul.f32 %v7120, 1.442695
      %v7139 = vpow.pop %v7138
      %v7140 = vmul.f32 %v7121, 1.442695
      %v7141 = vpow.pop %v7140
      %v7142 = vsub.f32 %v7123, 1.0
      %v7143 = vsub.f32 %v7125, 1.0
      %v7144 = vsub.f32 %v7127, 1.0
      %v7145 = vsub.f32 %v7129, 1.0
      %v7146 = vsub.f32 %v7131, 1.0
      %v7147 = vsub.f32 %v7133, 1.0
      %v7148 = vsub.f32 %v7135, 1.0
      %v7149 = vsub.f32 %v7137, 1.0
      %v7150 = vsub.f32 %v7139, 1.0
      %v7151 = vsub.f32 %v7141, 1.0
      %v7152 = vsel %vm7102, %v7064, %v7142
      %v7153 = vsel %vm7103, %v7067, %v7143
      %v7154 = vsel %vm7104, %v7072, %v7144
      %v7155 = vsel %vm7105, %v7075, %v7145
      %v7156 = vsel %vm7106, %v7080, %v7146
      %v7157 = vsel %vm7107, %v7083, %v7147
      %v7158 = vsel %vm7108, %v7088, %v7148
      %v7159 = vsel %vm7109, %v7091, %v7149
      %v7160 = vsel %vm7110, %v7096, %v7150
      %v7161 = vsel %vm7111, %v7099, %v7151
      %v7162 = vpack.c.bf16 %v7153, %v7152
      %v7163 = vpack.c.bf16 %v7155, %v7154
      %v7164 = vpack.c.bf16 %v7157, %v7156
      %v7165 = vpack.c.bf16 %v7159, %v7158
      %v7166 = vpack.c.bf16 %v7161, %v7160
      %v7168 = vshrl.u32 %v7162, 16
      %v7170 = vrot.slane %v7168, 7
      %v7171 = vshll.u32 %v7162, 16
      %v7173 = vor.u32 %v7170, %v7171
      %v7175 = vshrl.u32 %v7163, 16
      %v7177 = vrot.slane %v7175, 7
      %v7178 = vshll.u32 %v7163, 16
      %v7180 = vor.u32 %v7177, %v7178
      %v7181 = vsel %vm839, %v7170, %v7180
      %v7183 = vshrl.u32 %v7164, 16
      %v7185 = vrot.slane %v7183, 7
      %v7186 = vshll.u32 %v7164, 16
      %v7188 = vor.u32 %v7185, %v7186
      %v7189 = vsel %vm839, %v7177, %v7188
      %v7191 = vshrl.u32 %v7165, 16
      %v7193 = vrot.slane %v7191, 7
      %v7194 = vshll.u32 %v7165, 16
      %v7196 = vor.u32 %v7193, %v7194
      %v7197 = vsel %vm839, %v7185, %v7196
      %v7199 = vshrl.u32 %v7166, 16
      %v7201 = vrot.slane %v7199, 7
      %v7202 = vshll.u32 %v7166, 16
      %v7204 = vor.u32 %v7201, %v7202
      %v7205 = vsel %vm839, %v7193, %v7204
      %v7208 = vsel %vm882, 0, %v7173
      %v7209 = vsel %vm4394, %v7205, 0
      %v7211 = vshrl.u32 %v7208, 16
      %v7213 = vshll.u32 %v7208, 16
      %v7215 = vrot.slane %v7213, 1
      %v7216 = vor.u32 %v7211, %v7215
      %v7218 = vshll.u32 %v7181, 16
      %v7220 = vrot.slane %v7218, 1
      %v7221 = vsel %vm885, %v7216, %v7220
      %v7222 = vshrl.u32 %v7181, 16
      %v7224 = vor.u32 %v7222, %v7220
      %v7226 = vshll.u32 %v7189, 16
      %v7228 = vrot.slane %v7226, 1
      %v7229 = vsel %vm885, %v7224, %v7228
      %v7230 = vshrl.u32 %v7189, 16
      %v7232 = vor.u32 %v7230, %v7228
      %v7234 = vshll.u32 %v7197, 16
      %v7236 = vrot.slane %v7234, 1
      %v7237 = vsel %vm885, %v7232, %v7236
      %v7238 = vshrl.u32 %v7197, 16
      %v7240 = vor.u32 %v7238, %v7236
      %v7242 = vshll.u32 %v7209, 16
      %v7244 = vrot.slane %v7242, 1
      %v7245 = vsel %vm885, %v7240, %v7244
      %v7246 = vshrl.u32 %v7209, 16
      %v7248 = vor.u32 %v7246, %v7244
      %7249 = vrot.lane.b32.xlu0 %v7221, 32
      %v7250 = vpop.permute.xlu0 %7249
      %7251 = vrot.lane.b32.xlu0 %v7229, 32
      %v7252 = vpop.permute.xlu0 %7251
      %7253 = vrot.lane.b32.xlu0 %v7237, 32
      %v7254 = vpop.permute.xlu0 %7253
      %7255 = vrot.lane.b32.xlu0 %v7245, 32
      %v7256 = vpop.permute.xlu0 %7255
      %7257 = vrot.lane.b32.xlu0 %v7248, 32
      %v7258 = vpop.permute.xlu0 %7257
      %v7261 = vrot.slane %v7208, 1
      %v7262 = vrot.slane %v7181, 1
      %v7263 = vsel %vm942, %v7261, %v7262
      %v7264 = vrot.slane %v7189, 1
      %v7265 = vsel %vm942, %v7262, %v7264
      %v7266 = vrot.slane %v7197, 1
      %v7267 = vsel %vm942, %v7264, %v7266
      %v7268 = vrot.slane %v7209, 1
      %v7269 = vsel %vm942, %v7266, %v7268
      %7270 = vrot.lane.b32.xlu0 %v7263, 64
      %v7271 = vpop.permute.xlu0 %7270
      %7272 = vrot.lane.b32.xlu0 %v7265, 64
      %v7273 = vpop.permute.xlu0 %7272
      %7274 = vrot.lane.b32.xlu0 %v7267, 64
      %v7275 = vpop.permute.xlu0 %7274
      %7276 = vrot.lane.b32.xlu0 %v7269, 64
      %v7277 = vpop.permute.xlu0 %7276
      %7278 = vrot.lane.b32.xlu0 %v7268, 64
      %v7279 = vpop.permute.xlu0 %7278
      %v7280 = vrot.slane %v7211, 1
      %v7281 = vrot.slane %v7213, 2
      %v7282 = vor.u32 %v7280, %v7281
      %v7283 = vrot.slane %v7222, 1
      %v7284 = vrot.slane %v7218, 2
      %v7285 = vor.u32 %v7283, %v7284
      %v7286 = vsel %vm3615, %v7282, %v7285
      %v7287 = vrot.slane %v7230, 1
      %v7288 = vrot.slane %v7226, 2
      %v7289 = vor.u32 %v7287, %v7288
      %v7290 = vsel %vm3615, %v7285, %v7289
      %v7291 = vrot.slane %v7238, 1
      %v7292 = vrot.slane %v7234, 2
      %v7293 = vor.u32 %v7291, %v7292
      %v7294 = vsel %vm3615, %v7289, %v7293
      %v7295 = vrot.slane %v7246, 1
      %v7296 = vrot.slane %v7242, 2
      %v7297 = vor.u32 %v7295, %v7296
      %v7298 = vsel %vm3615, %v7293, %v7297
      %7299 = vrot.lane.b32.xlu0 %v7286, 96
      %v7300 = vpop.permute.xlu0 %7299
      %7301 = vrot.lane.b32.xlu0 %v7290, 96
      %v7302 = vpop.permute.xlu0 %7301
      %7303 = vrot.lane.b32.xlu0 %v7294, 96
      %v7304 = vpop.permute.xlu0 %7303
      %7305 = vrot.lane.b32.xlu0 %v7298, 96
      %v7306 = vpop.permute.xlu0 %7305
      %7307 = vrot.lane.b32.xlu0 %v7297, 96
      %v7308 = vpop.permute.xlu0 %7307
      %v7309 = vrot.slane %v7208, 2
      %v7310 = vrot.slane %v7181, 2
      %v7311 = vsel %vm3647, %v7309, %v7310
      %v7312 = vrot.slane %v7189, 2
      %v7313 = vsel %vm3647, %v7310, %v7312
      %v7314 = vrot.slane %v7197, 2
      %v7315 = vsel %vm3647, %v7312, %v7314
      %v7316 = vrot.slane %v7209, 2
      %v7317 = vsel %vm3647, %v7314, %v7316
      %v7318 = vrot.slane %v7211, 2
      %v7319 = vrot.slane %v7213, 3
      %v7320 = vor.u32 %v7318, %v7319
      %v7321 = vrot.slane %v7222, 2
      %v7322 = vrot.slane %v7218, 3
      %v7323 = vor.u32 %v7321, %v7322
      %v7324 = vsel %vm4798, %v7320, %v7323
      %v7325 = vrot.slane %v7230, 2
      %v7326 = vrot.slane %v7226, 3
      %v7327 = vor.u32 %v7325, %v7326
      %v7328 = vsel %vm4798, %v7323, %v7327
      %v7329 = vrot.slane %v7238, 2
      %v7330 = vrot.slane %v7234, 3
      %v7331 = vor.u32 %v7329, %v7330
      %v7332 = vsel %vm4798, %v7327, %v7331
      %v7333 = vrot.slane %v7246, 2
      %v7334 = vrot.slane %v7242, 3
      %v7335 = vor.u32 %v7333, %v7334
      %v7336 = vsel %vm4798, %v7331, %v7335
      %7337 = vrot.lane.b32.xlu0 %v7324, 32
      %v7338 = vpop.permute.xlu0 %7337
      %7339 = vrot.lane.b32.xlu0 %v7328, 32
      %v7340 = vpop.permute.xlu0 %7339
      %7341 = vrot.lane.b32.xlu0 %v7332, 32
      %v7342 = vpop.permute.xlu0 %7341
      %7343 = vrot.lane.b32.xlu0 %v7336, 32
      %v7344 = vpop.permute.xlu0 %7343
      %7345 = vrot.lane.b32.xlu0 %v7335, 32
      %v7346 = vpop.permute.xlu0 %7345
      %v7347 = vrot.slane %v7208, 3
      %v7348 = vrot.slane %v7181, 3
      %v7349 = vsel %vm2584, %v7347, %v7348
      %v7350 = vrot.slane %v7189, 3
      %v7351 = vsel %vm2584, %v7348, %v7350
      %v7352 = vrot.slane %v7197, 3
      %v7353 = vsel %vm2584, %v7350, %v7352
      %v7354 = vrot.slane %v7209, 3
      %v7355 = vsel %vm2584, %v7352, %v7354
      %7356 = vrot.lane.b32.xlu0 %v7349, 64
      %v7357 = vpop.permute.xlu0 %7356
      %7358 = vrot.lane.b32.xlu0 %v7351, 64
      %v7359 = vpop.permute.xlu0 %7358
      %7360 = vrot.lane.b32.xlu0 %v7353, 64
      %v7361 = vpop.permute.xlu0 %7360
      %7362 = vrot.lane.b32.xlu0 %v7355, 64
      %v7363 = vpop.permute.xlu0 %7362
      %7364 = vrot.lane.b32.xlu0 %v7354, 64
      %v7365 = vpop.permute.xlu0 %7364
      %v7367 = vsel %vm768, %v7208, %v7250
      %v7369 = vsel %vm768, %v7181, %v7252
      %v7371 = vsel %vm768, %v7189, %v7254
      %v7373 = vsel %vm768, %v7197, %v7256
      %v7375 = vsel %vm768, %v7209, %v7258
      %v7377 = vsel %vm974, %v7367, %v7271
      %v7379 = vsel %vm974, %v7369, %v7273
      %v7381 = vsel %vm974, %v7371, %v7275
      %v7383 = vsel %vm974, %v7373, %v7277
      %v7385 = vsel %vm974, %v7375, %v7279
      %v7387 = vsel %vm1025, %v7377, %v7300
      %v7390 = vsel %vm1025, %v7379, %v7302
      %v7393 = vsel %vm1025, %v7381, %v7304
      %v7396 = vsel %vm1025, %v7383, %v7306
      %v7399 = vsel %vm1025, %v7385, %v7308
      %v7403 = vsel %vm768, %v7311, %v7338
      %v7406 = vsel %vm768, %v7313, %v7340
      %v7409 = vsel %vm768, %v7315, %v7342
      %v7412 = vsel %vm768, %v7317, %v7344
      %v7415 = vsel %vm768, %v7316, %v7346
      %v7417 = vsel %vm974, %v7403, %v7357
      %v7419 = vsel %vm974, %v7406, %v7359
      %v7421 = vsel %vm974, %v7409, %v7361
      %v7423 = vsel %vm974, %v7412, %v7363
      %v7425 = vsel %vm974, %v7415, %v7365
      %v7426 = vlaneseq
      %v7427 = vshrl.u32 %v7426, 7
      %v7428 = vsub.s32 0, %v7427
      %v7429 = vrot.slane %v6852, %v7428
      %v7458 = vunpack.c.l.b16 %v6824
      %v7459 = vunpack.c.l.b16 %v6825
      %v7460 = vunpack.c.l.b16 %v6826
      %v7461 = vunpack.c.l.b16 %v6827
      %v7462 = vunpack.c.l.b16 %v6828
      %v7463 = vunpack.c.l.b16 %v6829
      %v7464 = vunpack.c.l.b16 %v6830
      %v7465 = vunpack.c.l.b16 %v6831
      %v7466 = vunpack.c.l.b16 %v6832
      %v7467 = vunpack.c.l.b16 %v6833
      %v7468 = vunpack.c.l.b16 %v6834
      %v7469 = vunpack.c.l.b16 %v6835
      %v7470 = vunpack.c.l.b16 %v6836
      %v7471 = vunpack.c.l.b16 %v6837
      %v7472 = vunpack.c.l.b16 %v6838
      %v7473 = vunpack.c.l.b16 %v6839
      %v7474 = vunpack.c.l.b16 %v6840
      %v7475 = vunpack.c.l.b16 %v6841
      %v7476 = vunpack.c.l.b16 %v6842
      %v7477 = vunpack.c.l.b16 %v6843
      %v7478 = vunpack.c.l.b16 %v6844
      %v7479 = vunpack.c.l.b16 %v6845
      %v7480 = vunpack.c.l.b16 %v6846
      %v7481 = vunpack.c.l.b16 %v6847
      %v7482 = vunpack.c.l.b16 %v6848
      %v7483 = vunpack.c.l.b16 %v6849
      %v7484 = vunpack.c.l.b16 %v6850
      %v7485 = vunpack.c.l.b16 %v6851
      %v7486 = vpack.c.b16 %v7459, %v7458
      %v7487 = vpack.c.b16 %v7461, %v7460
      %v7488 = vpack.c.b16 %v7463, %v7462
      %v7489 = vpack.c.b16 %v7465, %v7464
      %v7490 = vpack.c.b16 %v7467, %v7466
      %v7491 = vpack.c.b16 %v7469, %v7468
      %v7492 = vpack.c.b16 %v7471, %v7470
      %v7493 = vpack.c.b16 %v7473, %v7472
      %v7494 = vpack.c.b16 %v7475, %v7474
      %v7495 = vpack.c.b16 %v7477, %v7476
      %v7496 = vpack.c.b16 %v7479, %v7478
      %v7497 = vpack.c.b16 %v7481, %v7480
      %v7498 = vpack.c.b16 %v7483, %v7482
      %v7499 = vpack.c.b16 %v7485, %v7484
      %v7514 = vsel %vm1025, %v7417, 0
      %v7516 = vsel %vm1025, %v7419, 0
      %v7518 = vsel %vm1025, %v7421, 0
      %v7520 = vsel %vm1025, %v7423, 0
      %v7522 = vsel %vm1025, %v7425, 0
      %7524 = vmatprep.subr.bf16.mxu0 0
      %7525 = vmatpush1.bf16.msra.mxu0 %v7486
      %7526 = vmatprep.subr.bf16.mxu0 0
      %7527 = vmatpush1.bf16.msra.mxu0 %v7487
      %7528 = vmatprep.subr.bf16.mxu0 0
      %7529 = vmatpush1.bf16.msra.mxu0 %v7488
      %7530 = vmatprep.subr.bf16.mxu0 0
      %7531 = vmatpush1.bf16.msra.mxu0 %v7489
      %7532 = vmatprep.subr.bf16.mxu0 0
      %7533 = vmatpush1.bf16.msra.mxu0 %v7490
      %7534 = vmatprep.subr.bf16.mxu0 0
      %7535 = vmatpush1.bf16.msra.mxu0 %v7491
      %7536 = vmatprep.subr.bf16.mxu0 0
      %7537 = vmatpush1.bf16.msra.mxu0 %v7492
      %7538 = vmatprep.subr.bf16.mxu0 0
      %7539 = vmatpush1.bf16.msra.mxu0 %v7493
      %7540 = vmatprep.subr.bf16.mxu0 0
      %7541 = vmatpush1.bf16.msra.mxu0 %v7494
      %7542 = vmatprep.subr.bf16.mxu0 0
      %7543 = vmatpush1.bf16.msra.mxu0 %v7495
      %7544 = vmatprep.subr.bf16.mxu0 0
      %7545 = vmatpush1.bf16.msra.mxu0 %v7496
      %7546 = vmatprep.subr.bf16.mxu0 0
      %7547 = vmatpush1.bf16.msra.mxu0 %v7497
      %7548 = vmatprep.subr.bf16.mxu0 0
      %7549 = vmatpush1.bf16.msra.mxu0 %v7498
      %7550 = vmatprep.subr.bf16.mxu0 0
      %7551 = vmatpush1.bf16.msra.mxu0 %v7499
      %7552 = vmatprep.subr.bf16.mxu0 0
      %7553 = vmatpush1.bf16.msra.mxu0 0
      %7554 = vmatprep.subr.bf16.mxu0 0
      %7555 = vmatpush1.bf16.msra.mxu0 0
      %7556 = vmatprep.mubr.bf16.mxu0 %v7514
      %7557 = vmatmul.mubr.bf16.gmra.mrb[0].mxu0 %v7387
      %v7558 = vpop.f32.mrb[0].mxu0
      %v7559 = vadd.f32 %v7429, %v7558
      %v7560 = vpop.f32.mrb[0].mxu0
      %v7561 = vpop.f32.mrb[0].mxu0
      %v7562 = vadd.f32 %v7429, %v7561
      %v7563 = vpop.f32.mrb[0].mxu0
      %7564 = vmatprep.mubr.bf16.mxu0 %v7516
      %7565 = vmatmul.mubr.bf16.gmra.mrb[0].mxu0 %v7390
      %v7566 = vpop.f32.mrb[0].mxu0
      %v7567 = vadd.f32 %v7429, %v7566
      %v7568 = vpop.f32.mrb[0].mxu0
      %v7569 = vpop.f32.mrb[0].mxu0
      %v7570 = vadd.f32 %v7429, %v7569
      %v7571 = vpop.f32.mrb[0].mxu0
      %7572 = vmatprep.mubr.bf16.mxu0 %v7518
      %7573 = vmatmul.mubr.bf16.gmra.mrb[0].mxu0 %v7393
      %v7574 = vpop.f32.mrb[0].mxu0
      %v7575 = vadd.f32 %v7429, %v7574
      %v7576 = vpop.f32.mrb[0].mxu0
      %v7577 = vpop.f32.mrb[0].mxu0
      %v7578 = vadd.f32 %v7429, %v7577
      %v7579 = vpop.f32.mrb[0].mxu0
      %7580 = vmatprep.mubr.bf16.mxu0 %v7520
      %7581 = vmatmul.mubr.bf16.gmra.mrb[0].mxu0 %v7396
      %v7582 = vpop.f32.mrb[0].mxu0
      %v7583 = vadd.f32 %v7429, %v7582
      %v7584 = vpop.f32.mrb[0].mxu0
      %v7585 = vpop.f32.mrb[0].mxu0
      %v7586 = vadd.f32 %v7429, %v7585
      %v7587 = vpop.f32.mrb[0].mxu0
      %7588 = vmatprep.mubr.bf16.mxu0 %v7522
      %7589 = vmatmul.mubr.bf16.gmra.mrb[0].mxu0 %v7399
      %v7590 = vpop.f32.mrb[0].mxu0
      %v7591 = vadd.f32 %v7429, %v7590
      %v7592 = vpop.f32.mrb[0].mxu0
      %v7593 = vpop.f32.mrb[0].mxu0
      %v7594 = vpop.f32.mrb[0].mxu0
      %7595 = vdwg.mxu0
      %v7596 = vadd.f32 %v7559, %v789
      %v7597 = vadd.f32 %v7562, %v791
      %v7598 = vadd.f32 %v7567, %v793
      %v7599 = vadd.f32 %v7570, %v795
      %v7600 = vadd.f32 %v7575, %v797
      %v7601 = vadd.f32 %v7578, %v799
      %v7602 = vadd.f32 %v7583, %v801
      %v7603 = vadd.f32 %v7586, %v803
      %v7604 = vadd.f32 %v7591, %v805
      %vm7605 = vcmp.gt.f32.partialorder %v7596, 0.0
      %vm7606 = vcmp.gt.f32.partialorder %v7597, 0.0
      %vm7607 = vcmp.gt.f32.partialorder %v7598, 0.0
      %vm7608 = vcmp.gt.f32.partialorder %v7599, 0.0
      %vm7609 = vcmp.gt.f32.partialorder %v7600, 0.0
      %vm7610 = vcmp.gt.f32.partialorder %v7601, 0.0
      %vm7611 = vcmp.gt.f32.partialorder %v7602, 0.0
      %vm7612 = vcmp.gt.f32.partialorder %v7603, 0.0
      %vm7613 = vcmp.gt.f32.partialorder %v7604, 0.0
      %v7614 = vmin.f32 %v7596, 0.0
      %v7615 = vmin.f32 %v7597, 0.0
      %v7616 = vmin.f32 %v7598, 0.0
      %v7617 = vmin.f32 %v7599, 0.0
      %v7618 = vmin.f32 %v7600, 0.0
      %v7619 = vmin.f32 %v7601, 0.0
      %v7620 = vmin.f32 %v7602, 0.0
      %v7621 = vmin.f32 %v7603, 0.0
      %v7622 = vmin.f32 %v7604, 0.0
      %v7623 = vmul.f32 %v7614, 1.442695
      %v7624 = vpow.pop %v7623
      %v7625 = vmul.f32 %v7615, 1.442695
      %v7626 = vpow.pop %v7625
      %v7627 = vmul.f32 %v7616, 1.442695
      %v7628 = vpow.pop %v7627
      %v7629 = vmul.f32 %v7617, 1.442695
      %v7630 = vpow.pop %v7629
      %v7631 = vmul.f32 %v7618, 1.442695
      %v7632 = vpow.pop %v7631
      %v7633 = vmul.f32 %v7619, 1.442695
      %v7634 = vpow.pop %v7633
      %v7635 = vmul.f32 %v7620, 1.442695
      %v7636 = vpow.pop %v7635
      %v7637 = vmul.f32 %v7621, 1.442695
      %v7638 = vpow.pop %v7637
      %v7639 = vmul.f32 %v7622, 1.442695
      %v7640 = vpow.pop %v7639
      %v7641 = vsub.f32 %v7624, 1.0
      %v7642 = vsub.f32 %v7626, 1.0
      %v7643 = vsub.f32 %v7628, 1.0
      %v7644 = vsub.f32 %v7630, 1.0
      %v7645 = vsub.f32 %v7632, 1.0
      %v7646 = vsub.f32 %v7634, 1.0
      %v7647 = vsub.f32 %v7636, 1.0
      %v7648 = vsub.f32 %v7638, 1.0
      %v7649 = vsub.f32 %v7640, 1.0
      %v7650 = vsel %vm7605, %v7596, %v7641
      %v7651 = vsel %vm7606, %v7597, %v7642
      %v7652 = vsel %vm7607, %v7598, %v7643
      %v7653 = vsel %vm7608, %v7599, %v7644
      %v7654 = vsel %vm7609, %v7600, %v7645
      %v7655 = vsel %vm7610, %v7601, %v7646
      %v7656 = vsel %vm7611, %v7602, %v7647
      %v7657 = vsel %vm7612, %v7603, %v7648
      %v7658 = vsel %vm7613, %v7604, %v7649
      %v7659 = vld [vmem:[%s1 + $0x638] sm:$0xf]
      %v7660 = vld [vmem:[%s1 + $0x63c] sm:$0xf]
      %v7661 = vld [vmem:[%s1 + $0x640] sm:$0xf]
      %v7662 = vld [vmem:[%s1 + $0x644] sm:$0xf]
      %v7663 = vld [vmem:[%s1 + $0x648] sm:$0xf]
      %v7664 = vld [vmem:[%s1 + $0x64c] sm:$0xf]
      %v7665 = vld [vmem:[%s1 + $0x650] sm:$0xf]
      %v7666 = vld [vmem:[%s1 + $0x654] sm:$0xf]
      %v7667 = vld [vmem:[%s1 + $0x658] sm:$0xf]
      %v7668 = vld [vmem:[%s1 + $0x65c] sm:$0xf]
      %v7669 = vld [vmem:[%s1 + $0x660] sm:$0xf]
      %v7670 = vld [vmem:[%s1 + $0x664] sm:$0xf]
      %v7671 = vld [vmem:[%s1 + $0x668] sm:$0xf]
      %v7672 = vld [vmem:[%s1 + $0x66c] sm:$0xf]
      %v7673 = vld [vmem:[%s1 + $0x670] sm:$0xf]
      %v7674 = vld [vmem:[%s1 + $0x674] sm:$0xf]
      %v7675 = vld [vmem:[%s1 + $0x678] sm:$0xf]
      %v7676 = vld [vmem:[%s1 + $0x67c] sm:$0xf]
      %v7677 = vld [vmem:[%s1 + $0x680] sm:$0xf]
      %v7678 = vld [vmem:[%s1 + $0x684] sm:$0xf]
      %v7679 = vld [vmem:[%s1 + $0x688] sm:$0xf]
      %v7680 = vld [vmem:[%s1 + $0x68c] sm:$0xf]
      %v7681 = vld [vmem:[%s1 + $0x690] sm:$0xf]
      %v7682 = vld [vmem:[%s1 + $0x694] sm:$0xf]
      %v7683 = vld [vmem:[%s1 + $0x698] sm:$0xf]
      %v7684 = vld [vmem:[%s1 + $0x69c] sm:$0xf]
      %v7685 = vld [vmem:[%s1 + $0x6a0] sm:$0xf]
      %v7686 = vld [vmem:[%s1 + $0x6a4] sm:$0xf]
      %v7687 = vld [vmem:[%s2 + $0x17] sm:$0x1]
      %v7688 = vld [vmem:[%s1 + $0x6a8] sm:$0xf]
      %v7689 = vld [vmem:[%s1 + $0x6ac] sm:$0xf]
      %v7690 = vld [vmem:[%s1 + $0x6b0] sm:$0xf]
      %v7691 = vld [vmem:[%s1 + $0x6b4] sm:$0xf]
      %v7692 = vld [vmem:[%s1 + $0x6b8] sm:$0xf]
      %v7693 = vld [vmem:[%s1 + $0x6bc] sm:$0xf]
      %v7694 = vld [vmem:[%s1 + $0x6c0] sm:$0xf]
      %v7695 = vld [vmem:[%s1 + $0x6c4] sm:$0xf]
      %v7696 = vld [vmem:[%s1 + $0x6c8] sm:$0xf]
      %v7697 = vld [vmem:[%s1 + $0x6cc] sm:$0xf]
      %v7698 = vld [vmem:[%s1 + $0x6d0] sm:$0xf]
      %v7699 = vld [vmem:[%s1 + $0x6d4] sm:$0xf]
      %v7700 = vld [vmem:[%s1 + $0x6d8] sm:$0xf]
      %v7701 = vld [vmem:[%s1 + $0x6dc] sm:$0xf]
      %v7702 = vld [vmem:[%s1 + $0x6e0] sm:$0xf]
      %v7703 = vld [vmem:[%s1 + $0x6e4] sm:$0xf]
      %v7704 = vld [vmem:[%s1 + $0x6e8] sm:$0xf]
      %v7705 = vld [vmem:[%s1 + $0x6ec] sm:$0xf]
      %v7706 = vld [vmem:[%s1 + $0x6f0] sm:$0xf]
      %v7707 = vld [vmem:[%s1 + $0x6f4] sm:$0xf]
      %v7708 = vld [vmem:[%s1 + $0x6f8] sm:$0xf]
      %v7709 = vld [vmem:[%s1 + $0x6fc] sm:$0xf]
      %v7710 = vld [vmem:[%s1 + $0x700] sm:$0xf]
      %v7711 = vld [vmem:[%s1 + $0x704] sm:$0xf]
      %v7712 = vld [vmem:[%s1 + $0x708] sm:$0xf]
      %v7713 = vld [vmem:[%s1 + $0x70c] sm:$0xf]
      %v7714 = vld [vmem:[%s1 + $0x710] sm:$0xf]
      %v7715 = vld [vmem:[%s1 + $0x714] sm:$0xf]
      %v7716 = vld [vmem:[%s2 + $0x18] sm:$0x1]
      %v7717 = vpack.c.bf16 %v7651, %v7650
      %v7718 = vpack.c.bf16 %v7653, %v7652
      %v7719 = vpack.c.bf16 %v7655, %v7654
      %v7720 = vpack.c.bf16 %v7657, %v7656
      %v7721 = vpack.c.bf16 %v7658, %v7658
      %v7723 = vshrl.u32 %v7717, 16
      %v7725 = vrot.slane %v7723, 7
      %v7726 = vshll.u32 %v7717, 16
      %v7728 = vor.u32 %v7725, %v7726
      %v7730 = vshrl.u32 %v7718, 16
      %v7732 = vrot.slane %v7730, 7
      %v7733 = vshll.u32 %v7718, 16
      %v7735 = vor.u32 %v7732, %v7733
      %v7736 = vsel %vm839, %v7725, %v7735
      %v7738 = vshrl.u32 %v7719, 16
      %v7740 = vrot.slane %v7738, 7
      %v7741 = vshll.u32 %v7719, 16
      %v7743 = vor.u32 %v7740, %v7741
      %v7744 = vsel %vm839, %v7732, %v7743
      %v7746 = vshrl.u32 %v7720, 16
      %v7748 = vrot.slane %v7746, 7
      %v7749 = vshll.u32 %v7720, 16
      %v7751 = vor.u32 %v7748, %v7749
      %v7752 = vsel %vm839, %v7740, %v7751
      %v7754 = vshrl.u32 %v7721, 16
      %v7756 = vrot.slane %v7754, 7
      %v7757 = vshll.u32 %v7721, 16
      %v7759 = vor.u32 %v7756, %v7757
      %v7760 = vsel %vm839, %v7748, %v7759
      %v7763 = vsel %vm882, 0, %v7728
      %v7764 = vsel %vm2586, %v7760, 0
      %v7766 = vshrl.u32 %v7763, 16
      %v7768 = vshll.u32 %v7763, 16
      %v7770 = vrot.slane %v7768, 1
      %v7771 = vor.u32 %v7766, %v7770
      %v7773 = vshll.u32 %v7736, 16
      %v7775 = vrot.slane %v7773, 1
      %v7776 = vsel %vm885, %v7771, %v7775
      %v7777 = vshrl.u32 %v7736, 16
      %v7779 = vor.u32 %v7777, %v7775
      %v7781 = vshll.u32 %v7744, 16
      %v7783 = vrot.slane %v7781, 1
      %v7784 = vsel %vm885, %v7779, %v7783
      %v7785 = vshrl.u32 %v7744, 16
      %v7787 = vor.u32 %v7785, %v7783
      %v7789 = vshll.u32 %v7752, 16
      %v7791 = vrot.slane %v7789, 1
      %v7792 = vsel %vm885, %v7787, %v7791
      %v7793 = vshrl.u32 %v7752, 16
      %v7795 = vor.u32 %v7793, %v7791
      %v7797 = vshll.u32 %v7764, 16
      %v7799 = vrot.slane %v7797, 1
      %v7800 = vsel %vm885, %v7795, %v7799
      %v7801 = vshrl.u32 %v7764, 16
      %v7803 = vor.u32 %v7801, %v7799
      %7804 = vrot.lane.b32.xlu0 %v7776, 32
      %v7805 = vpop.permute.xlu0 %7804
      %7806 = vrot.lane.b32.xlu0 %v7784, 32
      %v7807 = vpop.permute.xlu0 %7806
      %7808 = vrot.lane.b32.xlu0 %v7792, 32
      %v7809 = vpop.permute.xlu0 %7808
      %7810 = vrot.lane.b32.xlu0 %v7800, 32
      %v7811 = vpop.permute.xlu0 %7810
      %7812 = vrot.lane.b32.xlu0 %v7803, 32
      %v7813 = vpop.permute.xlu0 %7812
      %v7816 = vrot.slane %v7763, 1
      %v7817 = vrot.slane %v7736, 1
      %v7818 = vsel %vm942, %v7816, %v7817
      %v7819 = vrot.slane %v7744, 1
      %v7820 = vsel %vm942, %v7817, %v7819
      %v7821 = vrot.slane %v7752, 1
      %v7822 = vsel %vm942, %v7819, %v7821
      %v7823 = vrot.slane %v7764, 1
      %v7824 = vsel %vm942, %v7821, %v7823
      %7825 = vrot.lane.b32.xlu0 %v7818, 64
      %v7826 = vpop.permute.xlu0 %7825
      %7827 = vrot.lane.b32.xlu0 %v7820, 64
      %v7828 = vpop.permute.xlu0 %7827
      %7829 = vrot.lane.b32.xlu0 %v7822, 64
      %v7830 = vpop.permute.xlu0 %7829
      %7831 = vrot.lane.b32.xlu0 %v7824, 64
      %v7832 = vpop.permute.xlu0 %7831
      %7833 = vrot.lane.b32.xlu0 %v7823, 64
      %v7834 = vpop.permute.xlu0 %7833
      %v7835 = vrot.slane %v7766, 1
      %v7836 = vrot.slane %v7768, 2
      %v7837 = vor.u32 %v7835, %v7836
      %v7838 = vrot.slane %v7777, 1
      %v7839 = vrot.slane %v7773, 2
      %v7840 = vor.u32 %v7838, %v7839
      %v7841 = vsel %vm3615, %v7837, %v7840
      %v7842 = vrot.slane %v7785, 1
      %v7843 = vrot.slane %v7781, 2
      %v7844 = vor.u32 %v7842, %v7843
      %v7845 = vsel %vm3615, %v7840, %v7844
      %v7846 = vrot.slane %v7793, 1
      %v7847 = vrot.slane %v7789, 2
      %v7848 = vor.u32 %v7846, %v7847
      %v7849 = vsel %vm3615, %v7844, %v7848
      %v7850 = vrot.slane %v7801, 1
      %v7851 = vrot.slane %v7797, 2
      %v7852 = vor.u32 %v7850, %v7851
      %v7853 = vsel %vm3615, %v7848, %v7852
      %7854 = vrot.lane.b32.xlu0 %v7841, 96
      %v7855 = vpop.permute.xlu0 %7854
      %7856 = vrot.lane.b32.xlu0 %v7845, 96
      %v7857 = vpop.permute.xlu0 %7856
      %7858 = vrot.lane.b32.xlu0 %v7849, 96
      %v7859 = vpop.permute.xlu0 %7858
      %7860 = vrot.lane.b32.xlu0 %v7853, 96
      %v7861 = vpop.permute.xlu0 %7860
      %7862 = vrot.lane.b32.xlu0 %v7852, 96
      %v7863 = vpop.permute.xlu0 %7862
      %v7864 = vrot.slane %v7763, 2
      %v7865 = vrot.slane %v7736, 2
      %v7866 = vsel %vm3647, %v7864, %v7865
      %v7867 = vrot.slane %v7744, 2
      %v7868 = vsel %vm3647, %v7865, %v7867
      %v7869 = vrot.slane %v7752, 2
      %v7870 = vsel %vm3647, %v7867, %v7869
      %v7871 = vrot.slane %v7764, 2
      %v7872 = vsel %vm3647, %v7869, %v7871
      %v7873 = vrot.slane %v7766, 2
      %v7874 = vrot.slane %v7768, 3
      %v7875 = vor.u32 %v7873, %v7874
      %v7876 = vrot.slane %v7777, 2
      %v7877 = vrot.slane %v7773, 3
      %v7878 = vor.u32 %v7876, %v7877
      %v7879 = vsel %vm4798, %v7875, %v7878
      %v7880 = vrot.slane %v7785, 2
      %v7881 = vrot.slane %v7781, 3
      %v7882 = vor.u32 %v7880, %v7881
      %v7883 = vsel %vm4798, %v7878, %v7882
      %v7884 = vrot.slane %v7793, 2
      %v7885 = vrot.slane %v7789, 3
      %v7886 = vor.u32 %v7884, %v7885
      %v7887 = vsel %vm4798, %v7882, %v7886
      %v7888 = vrot.slane %v7801, 2
      %v7889 = vrot.slane %v7797, 3
      %v7890 = vor.u32 %v7888, %v7889
      %v7891 = vsel %vm4798, %v7886, %v7890
      %7892 = vrot.lane.b32.xlu0 %v7879, 32
      %v7893 = vpop.permute.xlu0 %7892
      %7894 = vrot.lane.b32.xlu0 %v7883, 32
      %v7895 = vpop.permute.xlu0 %7894
      %7896 = vrot.lane.b32.xlu0 %v7887, 32
      %v7897 = vpop.permute.xlu0 %7896
      %7898 = vrot.lane.b32.xlu0 %v7891, 32
      %v7899 = vpop.permute.xlu0 %7898
      %7900 = vrot.lane.b32.xlu0 %v7890, 32
      %v7901 = vpop.permute.xlu0 %7900
      %v7902 = vrot.slane %v7763, 3
      %v7903 = vrot.slane %v7736, 3
      %v7904 = vsel %vm2584, %v7902, %v7903
      %v7905 = vrot.slane %v7744, 3
      %v7906 = vsel %vm2584, %v7903, %v7905
      %v7907 = vrot.slane %v7752, 3
      %v7908 = vsel %vm2584, %v7905, %v7907
      %v7909 = vrot.slane %v7764, 3
      %v7910 = vsel %vm2584, %v7907, %v7909
      %7911 = vrot.lane.b32.xlu0 %v7904, 64
      %v7912 = vpop.permute.xlu0 %7911
      %7913 = vrot.lane.b32.xlu0 %v7906, 64
      %v7914 = vpop.permute.xlu0 %7913
      %7915 = vrot.lane.b32.xlu0 %v7908, 64
      %v7916 = vpop.permute.xlu0 %7915
      %7917 = vrot.lane.b32.xlu0 %v7910, 64
      %v7918 = vpop.permute.xlu0 %7917
      %7919 = vrot.lane.b32.xlu0 %v7909, 64
      %v7920 = vpop.permute.xlu0 %7919
      %v7922 = vsel %vm768, %v7763, %v7805
      %v7924 = vsel %vm768, %v7736, %v7807
      %v7926 = vsel %vm768, %v7744, %v7809
      %v7928 = vsel %vm768, %v7752, %v7811
      %v7930 = vsel %vm768, %v7764, %v7813
      %v7932 = vsel %vm974, %v7922, %v7826
      %v7934 = vsel %vm974, %v7924, %v7828
      %v7936 = vsel %vm974, %v7926, %v7830
      %v7938 = vsel %vm974, %v7928, %v7832
      %v7940 = vsel %vm974, %v7930, %v7834
      %v7942 = vsel %vm1025, %v7932, %v7855
      %v7945 = vsel %vm1025, %v7934, %v7857
      %v7948 = vsel %vm1025, %v7936, %v7859
      %v7951 = vsel %vm1025, %v7938, %v7861
      %v7954 = vsel %vm1025, %v7940, %v7863
      %v7958 = vsel %vm768, %v7866, %v7893
      %v7961 = vsel %vm768, %v7868, %v7895
      %v7964 = vsel %vm768, %v7870, %v7897
      %v7967 = vsel %vm768, %v7872, %v7899
      %v7970 = vsel %vm768, %v7871, %v7901
      %v7972 = vsel %vm974, %v7958, %v7912
      %v7974 = vsel %vm974, %v7961, %v7914
      %v7976 = vsel %vm974, %v7964, %v7916
      %v7978 = vsel %vm974, %v7967, %v7918
      %v7980 = vsel %vm974, %v7970, %v7920
      %v7981 = vlaneseq
      %v7982 = vshrl.u32 %v7981, 7
      %v7983 = vsub.s32 0, %v7982
      %v7984 = vrot.slane %v7687, %v7983
      %v8013 = vunpack.c.l.b16 %v7659
      %v8014 = vunpack.c.l.b16 %v7660
      %v8015 = vunpack.c.l.b16 %v7661
      %v8016 = vunpack.c.l.b16 %v7662
      %v8017 = vunpack.c.l.b16 %v7663
      %v8018 = vunpack.c.l.b16 %v7664
      %v8019 = vunpack.c.l.b16 %v7665
      %v8020 = vunpack.c.l.b16 %v7666
      %v8021 = vunpack.c.l.b16 %v7667
      %v8022 = vunpack.c.l.b16 %v7668
      %v8023 = vunpack.c.l.b16 %v7669
      %v8024 = vunpack.c.l.b16 %v7670
      %v8025 = vunpack.c.l.b16 %v7671
      %v8026 = vunpack.c.l.b16 %v7672
      %v8027 = vunpack.c.l.b16 %v7673
      %v8028 = vunpack.c.l.b16 %v7674
      %v8029 = vunpack.c.l.b16 %v7675
      %v8030 = vunpack.c.l.b16 %v7676
      %v8031 = vunpack.c.l.b16 %v7677
      %v8032 = vunpack.c.l.b16 %v7678
      %v8033 = vunpack.c.l.b16 %v7679
      %v8034 = vunpack.c.l.b16 %v7680
      %v8035 = vunpack.c.l.b16 %v7681
      %v8036 = vunpack.c.l.b16 %v7682
      %v8037 = vunpack.c.l.b16 %v7683
      %v8038 = vunpack.c.l.b16 %v7684
      %v8039 = vunpack.c.l.b16 %v7685
      %v8040 = vunpack.c.l.b16 %v7686
      %v8041 = vpack.c.b16 %v8014, %v8013
      %v8042 = vpack.c.b16 %v8016, %v8015
      %v8043 = vpack.c.b16 %v8018, %v8017
      %v8044 = vpack.c.b16 %v8020, %v8019
      %v8045 = vpack.c.b16 %v8022, %v8021
      %v8046 = vpack.c.b16 %v8024, %v8023
      %v8047 = vpack.c.b16 %v8026, %v8025
      %v8048 = vpack.c.b16 %v8028, %v8027
      %v8049 = vpack.c.b16 %v8030, %v8029
      %v8050 = vpack.c.b16 %v8032, %v8031
      %v8051 = vpack.c.b16 %v8034, %v8033
      %v8052 = vpack.c.b16 %v8036, %v8035
      %v8053 = vpack.c.b16 %v8038, %v8037
      %v8054 = vpack.c.b16 %v8040, %v8039
      %v8069 = vsel %vm1025, %v7972, 0
      %v8071 = vsel %vm1025, %v7974, 0
      %v8073 = vsel %vm1025, %v7976, 0
      %v8075 = vsel %vm1025, %v7978, 0
      %v8077 = vsel %vm1025, %v7980, 0
      %8079 = vmatprep.subr.bf16.mxu0 0
      %8080 = vmatpush1.bf16.msra.mxu0 %v8041
      %8081 = vmatprep.subr.bf16.mxu0 0
      %8082 = vmatpush1.bf16.msra.mxu0 %v8042
      %8083 = vmatprep.subr.bf16.mxu0 0
      %8084 = vmatpush1.bf16.msra.mxu0 %v8043
      %8085 = vmatprep.subr.bf16.mxu0 0
      %8086 = vmatpush1.bf16.msra.mxu0 %v8044
      %8087 = vmatprep.subr.bf16.mxu0 0
      %8088 = vmatpush1.bf16.msra.mxu0 %v8045
      %8089 = vmatprep.subr.bf16.mxu0 0
      %8090 = vmatpush1.bf16.msra.mxu0 %v8046
      %8091 = vmatprep.subr.bf16.mxu0 0
      %8092 = vmatpush1.bf16.msra.mxu0 %v8047
      %8093 = vmatprep.subr.bf16.mxu0 0
      %8094 = vmatpush1.bf16.msra.mxu0 %v8048
      %8095 = vmatprep.subr.bf16.mxu0 0
      %8096 = vmatpush1.bf16.msra.mxu0 %v8049
      %8097 = vmatprep.subr.bf16.mxu0 0
      %8098 = vmatpush1.bf16.msra.mxu0 %v8050
      %8099 = vmatprep.subr.bf16.mxu0 0
      %8100 = vmatpush1.bf16.msra.mxu0 %v8051
      %8101 = vmatprep.subr.bf16.mxu0 0
      %8102 = vmatpush1.bf16.msra.mxu0 %v8052
      %8103 = vmatprep.subr.bf16.mxu0 0
      %8104 = vmatpush1.bf16.msra.mxu0 %v8053
      %8105 = vmatprep.subr.bf16.mxu0 0
      %8106 = vmatpush1.bf16.msra.mxu0 %v8054
      %8107 = vmatprep.subr.bf16.mxu0 0
      %8108 = vmatpush1.bf16.msra.mxu0 0
      %8109 = vmatprep.subr.bf16.mxu0 0
      %8110 = vmatpush1.bf16.msra.mxu0 0
      %8111 = vmatprep.mubr.bf16.mxu0 %v8069
      %8112 = vmatmul.mubr.bf16.gmra.mrb[0].mxu0 %v7942
      %v8113 = vpop.f32.mrb[0].mxu0
      %v8114 = vadd.f32 %v7984, %v8113
      %v8115 = vpop.f32.mrb[0].mxu0
      %v8116 = vpop.f32.mrb[0].mxu0
      %v8117 = vadd.f32 %v7984, %v8116
      %v8118 = vpop.f32.mrb[0].mxu0
      %8119 = vmatprep.mubr.bf16.mxu0 %v8071
      %8120 = vmatmul.mubr.bf16.gmra.mrb[0].mxu0 %v7945
      %v8121 = vpop.f32.mrb[0].mxu0
      %v8122 = vadd.f32 %v7984, %v8121
      %v8123 = vpop.f32.mrb[0].mxu0
      %v8124 = vpop.f32.mrb[0].mxu0
      %v8125 = vadd.f32 %v7984, %v8124
      %v8126 = vpop.f32.mrb[0].mxu0
      %8127 = vmatprep.mubr.bf16.mxu0 %v8073
      %8128 = vmatmul.mubr.bf16.gmra.mrb[0].mxu0 %v7948
      %v8129 = vpop.f32.mrb[0].mxu0
      %v8130 = vadd.f32 %v7984, %v8129
      %v8131 = vpop.f32.mrb[0].mxu0
      %v8132 = vpop.f32.mrb[0].mxu0
      %v8133 = vadd.f32 %v7984, %v8132
      %v8134 = vpop.f32.mrb[0].mxu0
      %8135 = vmatprep.mubr.bf16.mxu0 %v8075
      %8136 = vmatmul.mubr.bf16.gmra.mrb[0].mxu0 %v7951
      %v8137 = vpop.f32.mrb[0].mxu0
      %v8138 = vadd.f32 %v7984, %v8137
      %v8139 = vpop.f32.mrb[0].mxu0
      %v8140 = vpop.f32.mrb[0].mxu0
      %v8141 = vadd.f32 %v7984, %v8140
      %v8142 = vpop.f32.mrb[0].mxu0
      %8143 = vmatprep.mubr.bf16.mxu0 %v8077
      %8144 = vmatmul.mubr.bf16.gmra.mrb[0].mxu0 %v7954
      %v8145 = vpop.f32.mrb[0].mxu0
      %v8146 = vadd.f32 %v7984, %v8145
      %v8147 = vpop.f32.mrb[0].mxu0
      %v8148 = vpop.f32.mrb[0].mxu0
      %v8149 = vpop.f32.mrb[0].mxu0
      %8150 = vdwg.mxu0
      %vm8151 = vcmp.gt.f32.partialorder %v8114, 0.0
      %vm8152 = vcmp.gt.f32.partialorder %v8117, 0.0
      %vm8153 = vcmp.gt.f32.partialorder %v8122, 0.0
      %vm8154 = vcmp.gt.f32.partialorder %v8125, 0.0
      %vm8155 = vcmp.gt.f32.partialorder %v8130, 0.0
      %vm8156 = vcmp.gt.f32.partialorder %v8133, 0.0
      %vm8157 = vcmp.gt.f32.partialorder %v8138, 0.0
      %vm8158 = vcmp.gt.f32.partialorder %v8141, 0.0
      %vm8159 = vcmp.gt.f32.partialorder %v8146, 0.0
      %v8160 = vmin.f32 %v8114, 0.0
      %v8161 = vmin.f32 %v8117, 0.0
      %v8162 = vmin.f32 %v8122, 0.0
      %v8163 = vmin.f32 %v8125, 0.0
      %v8164 = vmin.f32 %v8130, 0.0
      %v8165 = vmin.f32 %v8133, 0.0
      %v8166 = vmin.f32 %v8138, 0.0
      %v8167 = vmin.f32 %v8141, 0.0
      %v8168 = vmin.f32 %v8146, 0.0
      %v8169 = vmul.f32 %v8160, 1.442695
      %v8170 = vpow.pop %v8169
      %v8171 = vmul.f32 %v8161, 1.442695
      %v8172 = vpow.pop %v8171
      %v8173 = vmul.f32 %v8162, 1.442695
      %v8174 = vpow.pop %v8173
      %v8175 = vmul.f32 %v8163, 1.442695
      %v8176 = vpow.pop %v8175
      %v8177 = vmul.f32 %v8164, 1.442695
      %v8178 = vpow.pop %v8177
      %v8179 = vmul.f32 %v8165, 1.442695
      %v8180 = vpow.pop %v8179
      %v8181 = vmul.f32 %v8166, 1.442695
      %v8182 = vpow.pop %v8181
      %v8183 = vmul.f32 %v8167, 1.442695
      %v8184 = vpow.pop %v8183
      %v8185 = vmul.f32 %v8168, 1.442695
      %v8186 = vpow.pop %v8185
      %v8187 = vsub.f32 %v8170, 1.0
      %v8188 = vsub.f32 %v8172, 1.0
      %v8189 = vsub.f32 %v8174, 1.0
      %v8190 = vsub.f32 %v8176, 1.0
      %v8191 = vsub.f32 %v8178, 1.0
      %v8192 = vsub.f32 %v8180, 1.0
      %v8193 = vsub.f32 %v8182, 1.0
      %v8194 = vsub.f32 %v8184, 1.0
      %v8195 = vsub.f32 %v8186, 1.0
      %v8196 = vsel %vm8151, %v8114, %v8187
      %v8197 = vsel %vm8152, %v8117, %v8188
      %v8198 = vsel %vm8153, %v8122, %v8189
      %v8199 = vsel %vm8154, %v8125, %v8190
      %v8200 = vsel %vm8155, %v8130, %v8191
      %v8201 = vsel %vm8156, %v8133, %v8192
      %v8202 = vsel %vm8157, %v8138, %v8193
      %v8203 = vsel %vm8158, %v8141, %v8194
      %v8204 = vsel %vm8159, %v8146, %v8195
      %v8205 = vpack.c.bf16 %v8197, %v8196
      %v8206 = vpack.c.bf16 %v8199, %v8198
      %v8207 = vpack.c.bf16 %v8201, %v8200
      %v8208 = vpack.c.bf16 %v8203, %v8202
      %v8209 = vpack.c.bf16 %v8204, %v8204
      %v8211 = vshrl.u32 %v8205, 16
      %v8213 = vrot.slane %v8211, 7
      %v8214 = vshll.u32 %v8205, 16
      %v8216 = vor.u32 %v8213, %v8214
      %v8218 = vshrl.u32 %v8206, 16
      %v8220 = vrot.slane %v8218, 7
      %v8221 = vshll.u32 %v8206, 16
      %v8223 = vor.u32 %v8220, %v8221
      %v8224 = vsel %vm839, %v8213, %v8223
      %v8226 = vshrl.u32 %v8207, 16
      %v8228 = vrot.slane %v8226, 7
      %v8229 = vshll.u32 %v8207, 16
      %v8231 = vor.u32 %v8228, %v8229
      %v8232 = vsel %vm839, %v8220, %v8231
      %v8234 = vshrl.u32 %v8208, 16
      %v8236 = vrot.slane %v8234, 7
      %v8237 = vshll.u32 %v8208, 16
      %v8239 = vor.u32 %v8236, %v8237
      %v8240 = vsel %vm839, %v8228, %v8239
      %v8242 = vshrl.u32 %v8209, 16
      %v8244 = vrot.slane %v8242, 7
      %v8245 = vshll.u32 %v8209, 16
      %v8247 = vor.u32 %v8244, %v8245
      %v8248 = vsel %vm839, %v8236, %v8247
      %v8251 = vsel %vm882, 0, %v8216
      %v8252 = vsel %vm3229, %v8248, 0
      %v8254 = vshrl.u32 %v8251, 16
      %v8256 = vshll.u32 %v8251, 16
      %v8258 = vrot.slane %v8256, 1
      %v8259 = vor.u32 %v8254, %v8258
      %v8261 = vshll.u32 %v8224, 16
      %v8263 = vrot.slane %v8261, 1
      %v8264 = vsel %vm885, %v8259, %v8263
      %v8265 = vshrl.u32 %v8224, 16
      %v8267 = vor.u32 %v8265, %v8263
      %v8269 = vshll.u32 %v8232, 16
      %v8271 = vrot.slane %v8269, 1
      %v8272 = vsel %vm885, %v8267, %v8271
      %v8273 = vshrl.u32 %v8232, 16
      %v8275 = vor.u32 %v8273, %v8271
      %v8277 = vshll.u32 %v8240, 16
      %v8279 = vrot.slane %v8277, 1
      %v8280 = vsel %vm885, %v8275, %v8279
      %v8281 = vshrl.u32 %v8240, 16
      %v8283 = vor.u32 %v8281, %v8279
      %v8285 = vshll.u32 %v8252, 16
      %v8287 = vrot.slane %v8285, 1
      %v8288 = vsel %vm885, %v8283, %v8287
      %8289 = vrot.lane.b32.xlu0 %v8264, 32
      %v8290 = vpop.permute.xlu0 %8289
      %8291 = vrot.lane.b32.xlu0 %v8272, 32
      %v8292 = vpop.permute.xlu0 %8291
      %8293 = vrot.lane.b32.xlu0 %v8280, 32
      %v8294 = vpop.permute.xlu0 %8293
      %8295 = vrot.lane.b32.xlu0 %v8288, 32
      %v8296 = vpop.permute.xlu0 %8295
      %v8299 = vrot.slane %v8251, 1
      %v8300 = vrot.slane %v8224, 1
      %v8301 = vsel %vm942, %v8299, %v8300
      %v8302 = vrot.slane %v8232, 1
      %v8303 = vsel %vm942, %v8300, %v8302
      %v8304 = vrot.slane %v8240, 1
      %v8305 = vsel %vm942, %v8302, %v8304
      %v8306 = vrot.slane %v8252, 1
      %v8307 = vsel %vm942, %v8304, %v8306
      %8308 = vrot.lane.b32.xlu0 %v8301, 64
      %v8309 = vpop.permute.xlu0 %8308
      %8310 = vrot.lane.b32.xlu0 %v8303, 64
      %v8311 = vpop.permute.xlu0 %8310
      %8312 = vrot.lane.b32.xlu0 %v8305, 64
      %v8313 = vpop.permute.xlu0 %8312
      %8314 = vrot.lane.b32.xlu0 %v8307, 64
      %v8315 = vpop.permute.xlu0 %8314
      %v8316 = vrot.slane %v8254, 1
      %v8317 = vrot.slane %v8256, 2
      %v8318 = vor.u32 %v8316, %v8317
      %v8319 = vrot.slane %v8265, 1
      %v8320 = vrot.slane %v8261, 2
      %v8321 = vor.u32 %v8319, %v8320
      %v8322 = vsel %vm3615, %v8318, %v8321
      %v8323 = vrot.slane %v8273, 1
      %v8324 = vrot.slane %v8269, 2
      %v8325 = vor.u32 %v8323, %v8324
      %v8326 = vsel %vm3615, %v8321, %v8325
      %v8327 = vrot.slane %v8281, 1
      %v8328 = vrot.slane %v8277, 2
      %v8329 = vor.u32 %v8327, %v8328
      %v8330 = vsel %vm3615, %v8325, %v8329
      %v8331 = vshrl.u32 %v8252, 16
      %v8333 = vrot.slane %v8331, 1
      %v8334 = vrot.slane %v8285, 2
      %v8335 = vor.u32 %v8333, %v8334
      %v8336 = vsel %vm3615, %v8329, %v8335
      %8337 = vrot.lane.b32.xlu0 %v8322, 96
      %v8338 = vpop.permute.xlu0 %8337
      %8339 = vrot.lane.b32.xlu0 %v8326, 96
      %v8340 = vpop.permute.xlu0 %8339
      %8341 = vrot.lane.b32.xlu0 %v8330, 96
      %v8342 = vpop.permute.xlu0 %8341
      %8343 = vrot.lane.b32.xlu0 %v8336, 96
      %v8344 = vpop.permute.xlu0 %8343
      %v8345 = vrot.slane %v8251, 2
      %v8346 = vrot.slane %v8224, 2
      %v8347 = vsel %vm3647, %v8345, %v8346
      %v8348 = vrot.slane %v8232, 2
      %v8349 = vsel %vm3647, %v8346, %v8348
      %v8350 = vrot.slane %v8240, 2
      %v8351 = vsel %vm3647, %v8348, %v8350
      %v8352 = vrot.slane %v8252, 2
      %v8353 = vsel %vm3647, %v8350, %v8352
      %v8354 = vrot.slane %v8254, 2
      %v8355 = vrot.slane %v8256, 3
      %v8356 = vor.u32 %v8354, %v8355
      %v8357 = vrot.slane %v8265, 2
      %v8358 = vrot.slane %v8261, 3
      %v8359 = vor.u32 %v8357, %v8358
      %v8360 = vsel %vm4798, %v8356, %v8359
      %v8361 = vrot.slane %v8273, 2
      %v8362 = vrot.slane %v8269, 3
      %v8363 = vor.u32 %v8361, %v8362
      %v8364 = vsel %vm4798, %v8359, %v8363
      %v8365 = vrot.slane %v8281, 2
      %v8366 = vrot.slane %v8277, 3
      %v8367 = vor.u32 %v8365, %v8366
      %v8368 = vsel %vm4798, %v8363, %v8367
      %v8369 = vrot.slane %v8331, 2
      %v8370 = vrot.slane %v8285, 3
      %v8371 = vor.u32 %v8369, %v8370
      %v8372 = vsel %vm4798, %v8367, %v8371
      %8373 = vrot.lane.b32.xlu0 %v8360, 32
      %v8374 = vpop.permute.xlu0 %8373
      %8375 = vrot.lane.b32.xlu0 %v8364, 32
      %v8376 = vpop.permute.xlu0 %8375
      %8377 = vrot.lane.b32.xlu0 %v8368, 32
      %v8378 = vpop.permute.xlu0 %8377
      %8379 = vrot.lane.b32.xlu0 %v8372, 32
      %v8380 = vpop.permute.xlu0 %8379
      %v8381 = vrot.slane %v8251, 3
      %v8382 = vrot.slane %v8224, 3
      %v8383 = vsel %vm2584, %v8381, %v8382
      %v8384 = vrot.slane %v8232, 3
      %v8385 = vsel %vm2584, %v8382, %v8384
      %v8386 = vrot.slane %v8240, 3
      %v8387 = vsel %vm2584, %v8384, %v8386
      %v8388 = vrot.slane %v8252, 3
      %v8389 = vsel %vm2584, %v8386, %v8388
      %8390 = vrot.lane.b32.xlu0 %v8383, 64
      %v8391 = vpop.permute.xlu0 %8390
      %8392 = vrot.lane.b32.xlu0 %v8385, 64
      %v8393 = vpop.permute.xlu0 %8392
      %8394 = vrot.lane.b32.xlu0 %v8387, 64
      %v8395 = vpop.permute.xlu0 %8394
      %8396 = vrot.lane.b32.xlu0 %v8389, 64
      %v8397 = vpop.permute.xlu0 %8396
      %v8399 = vsel %vm768, %v8251, %v8290
      %v8401 = vsel %vm768, %v8224, %v8292
      %v8403 = vsel %vm768, %v8232, %v8294
      %v8405 = vsel %vm768, %v8240, %v8296
      %v8407 = vsel %vm974, %v8399, %v8309
      %v8409 = vsel %vm974, %v8401, %v8311
      %v8411 = vsel %vm974, %v8403, %v8313
      %v8413 = vsel %vm974, %v8405, %v8315
      %v8415 = vsel %vm1025, %v8407, %v8338
      %v8418 = vsel %vm1025, %v8409, %v8340
      %v8421 = vsel %vm1025, %v8411, %v8342
      %v8424 = vsel %vm1025, %v8413, %v8344
      %v8428 = vsel %vm768, %v8347, %v8374
      %v8431 = vsel %vm768, %v8349, %v8376
      %v8434 = vsel %vm768, %v8351, %v8378
      %v8437 = vsel %vm768, %v8353, %v8380
      %v8439 = vsel %vm974, %v8428, %v8391
      %v8441 = vsel %vm974, %v8431, %v8393
      %v8443 = vsel %vm974, %v8434, %v8395
      %v8445 = vsel %vm974, %v8437, %v8397
      %v8446 = vlaneseq
      %v8447 = vshrl.u32 %v8446, 7
      %v8448 = vsub.s32 0, %v8447
      %v8449 = vrot.slane %v7716, %v8448
      %v8478 = vunpack.c.l.b16 %v7688
      %v8479 = vunpack.c.l.b16 %v7689
      %v8480 = vunpack.c.l.b16 %v7690
      %v8481 = vunpack.c.l.b16 %v7691
      %v8482 = vunpack.c.l.b16 %v7692
      %v8483 = vunpack.c.l.b16 %v7693
      %v8484 = vunpack.c.l.b16 %v7694
      %v8485 = vunpack.c.l.b16 %v7695
      %v8486 = vunpack.c.l.b16 %v7696
      %v8487 = vunpack.c.l.b16 %v7697
      %v8488 = vunpack.c.l.b16 %v7698
      %v8489 = vunpack.c.l.b16 %v7699
      %v8490 = vunpack.c.l.b16 %v7700
      %v8491 = vunpack.c.l.b16 %v7701
      %v8492 = vunpack.c.l.b16 %v7702
      %v8493 = vunpack.c.l.b16 %v7703
      %v8494 = vunpack.c.l.b16 %v7704
      %v8495 = vunpack.c.l.b16 %v7705
      %v8496 = vunpack.c.l.b16 %v7706
      %v8497 = vunpack.c.l.b16 %v7707
      %v8498 = vunpack.c.l.b16 %v7708
      %v8499 = vunpack.c.l.b16 %v7709
      %v8500 = vunpack.c.l.b16 %v7710
      %v8501 = vunpack.c.l.b16 %v7711
      %v8502 = vunpack.c.l.b16 %v7712
      %v8503 = vunpack.c.l.b16 %v7713
      %v8504 = vunpack.c.l.b16 %v7714
      %v8505 = vunpack.c.l.b16 %v7715
      %v8506 = vpack.c.b16 %v8479, %v8478
      %v8507 = vpack.c.b16 %v8481, %v8480
      %v8508 = vpack.c.b16 %v8483, %v8482
      %v8509 = vpack.c.b16 %v8485, %v8484
      %v8510 = vpack.c.b16 %v8487, %v8486
      %v8511 = vpack.c.b16 %v8489, %v8488
      %v8512 = vpack.c.b16 %v8491, %v8490
      %v8513 = vpack.c.b16 %v8493, %v8492
      %v8514 = vpack.c.b16 %v8495, %v8494
      %v8515 = vpack.c.b16 %v8497, %v8496
      %v8516 = vpack.c.b16 %v8499, %v8498
      %v8517 = vpack.c.b16 %v8501, %v8500
      %v8518 = vpack.c.b16 %v8503, %v8502
      %v8519 = vpack.c.b16 %v8505, %v8504
      %v8534 = vsel %vm1025, %v8439, 0
      %v8536 = vsel %vm1025, %v8441, 0
      %v8538 = vsel %vm1025, %v8443, 0
      %v8540 = vsel %vm1025, %v8445, 0
      %8542 = vmatprep.subr.bf16.mxu0 0
      %8543 = vmatpush1.bf16.msra.mxu0 %v8506
      %8544 = vmatprep.subr.bf16.mxu0 0
      %8545 = vmatpush1.bf16.msra.mxu0 %v8507
      %8546 = vmatprep.subr.bf16.mxu0 0
      %8547 = vmatpush1.bf16.msra.mxu0 %v8508
      %8548 = vmatprep.subr.bf16.mxu0 0
      %8549 = vmatpush1.bf16.msra.mxu0 %v8509
      %8550 = vmatprep.subr.bf16.mxu0 0
      %8551 = vmatpush1.bf16.msra.mxu0 %v8510
      %8552 = vmatprep.subr.bf16.mxu0 0
      %8553 = vmatpush1.bf16.msra.mxu0 %v8511
      %8554 = vmatprep.subr.bf16.mxu0 0
      %8555 = vmatpush1.bf16.msra.mxu0 %v8512
      %8556 = vmatprep.subr.bf16.mxu0 0
      %8557 = vmatpush1.bf16.msra.mxu0 %v8513
      %8558 = vmatprep.subr.bf16.mxu0 0
      %8559 = vmatpush1.bf16.msra.mxu0 %v8514
      %8560 = vmatprep.subr.bf16.mxu0 0
      %8561 = vmatpush1.bf16.msra.mxu0 %v8515
      %8562 = vmatprep.subr.bf16.mxu0 0
      %8563 = vmatpush1.bf16.msra.mxu0 %v8516
      %8564 = vmatprep.subr.bf16.mxu0 0
      %8565 = vmatpush1.bf16.msra.mxu0 %v8517
      %8566 = vmatprep.subr.bf16.mxu0 0
      %8567 = vmatpush1.bf16.msra.mxu0 %v8518
      %8568 = vmatprep.subr.bf16.mxu0 0
      %8569 = vmatpush1.bf16.msra.mxu0 %v8519
      %8570 = vmatprep.subr.bf16.mxu0 0
      %8571 = vmatpush1.bf16.msra.mxu0 0
      %8572 = vmatprep.subr.bf16.mxu0 0
      %8573 = vmatpush1.bf16.msra.mxu0 0
      %8574 = vmatprep.mubr.bf16.mxu0 %v8534
      %8575 = vmatmul.mubr.bf16.gmra.mrb[0].mxu0 %v8415
      %v8576 = vpop.f32.mrb[0].mxu0
      %v8577 = vadd.f32 %v8449, %v8576
      %v8578 = vpop.f32.mrb[0].mxu0
      %v8579 = vpop.f32.mrb[0].mxu0
      %v8580 = vadd.f32 %v8449, %v8579
      %v8581 = vpop.f32.mrb[0].mxu0
      %8582 = vmatprep.mubr.bf16.mxu0 %v8536
      %8583 = vmatmul.mubr.bf16.gmra.mrb[0].mxu0 %v8418
      %v8584 = vpop.f32.mrb[0].mxu0
      %v8585 = vadd.f32 %v8449, %v8584
      %v8586 = vpop.f32.mrb[0].mxu0
      %v8587 = vpop.f32.mrb[0].mxu0
      %v8588 = vadd.f32 %v8449, %v8587
      %v8589 = vpop.f32.mrb[0].mxu0
      %8590 = vmatprep.mubr.bf16.mxu0 %v8538
      %8591 = vmatmul.mubr.bf16.gmra.mrb[0].mxu0 %v8421
      %v8592 = vpop.f32.mrb[0].mxu0
      %v8593 = vadd.f32 %v8449, %v8592
      %v8594 = vpop.f32.mrb[0].mxu0
      %v8595 = vpop.f32.mrb[0].mxu0
      %v8596 = vadd.f32 %v8449, %v8595
      %v8597 = vpop.f32.mrb[0].mxu0
      %8598 = vmatprep.mubr.bf16.mxu0 %v8540
      %8599 = vmatmul.mubr.bf16.gmra.mrb[0].mxu0 %v8424
      %v8600 = vpop.f32.mrb[0].mxu0
      %v8601 = vadd.f32 %v8449, %v8600
      %v8602 = vpop.f32.mrb[0].mxu0
      %v8603 = vpop.f32.mrb[0].mxu0
      %v8604 = vadd.f32 %v8449, %v8603
      %v8605 = vpop.f32.mrb[0].mxu0
      %8606 = vdwg.mxu0
      %v8607 = vadd.f32 %v8577, %v7650
      %v8608 = vadd.f32 %v8580, %v7651
      %v8609 = vadd.f32 %v8585, %v7652
      %v8610 = vadd.f32 %v8588, %v7653
      %v8611 = vadd.f32 %v8593, %v7654
      %v8612 = vadd.f32 %v8596, %v7655
      %v8613 = vadd.f32 %v8601, %v7656
      %v8614 = vadd.f32 %v8604, %v7657
      %vm8615 = vcmp.gt.f32.partialorder %v8607, 0.0
      %vm8616 = vcmp.gt.f32.partialorder %v8608, 0.0
      %vm8617 = vcmp.gt.f32.partialorder %v8609, 0.0
      %vm8618 = vcmp.gt.f32.partialorder %v8610, 0.0
      %vm8619 = vcmp.gt.f32.partialorder %v8611, 0.0
      %vm8620 = vcmp.gt.f32.partialorder %v8612, 0.0
      %vm8621 = vcmp.gt.f32.partialorder %v8613, 0.0
      %vm8622 = vcmp.gt.f32.partialorder %v8614, 0.0
      %v8623 = vmin.f32 %v8607, 0.0
      %v8624 = vmin.f32 %v8608, 0.0
      %v8625 = vmin.f32 %v8609, 0.0
      %v8626 = vmin.f32 %v8610, 0.0
      %v8627 = vmin.f32 %v8611, 0.0
      %v8628 = vmin.f32 %v8612, 0.0
      %v8629 = vmin.f32 %v8613, 0.0
      %v8630 = vmin.f32 %v8614, 0.0
      %v8631 = vmul.f32 %v8623, 1.442695
      %v8632 = vpow.pop %v8631
      %v8633 = vmul.f32 %v8624, 1.442695
      %v8634 = vpow.pop %v8633
      %v8635 = vmul.f32 %v8625, 1.442695
      %v8636 = vpow.pop %v8635
      %v8637 = vmul.f32 %v8626, 1.442695
      %v8638 = vpow.pop %v8637
      %v8639 = vmul.f32 %v8627, 1.442695
      %v8640 = vpow.pop %v8639
      %v8641 = vmul.f32 %v8628, 1.442695
      %v8642 = vpow.pop %v8641
      %v8643 = vmul.f32 %v8629, 1.442695
      %v8644 = vpow.pop %v8643
      %v8645 = vmul.f32 %v8630, 1.442695
      %v8646 = vpow.pop %v8645
      %v8647 = vsub.f32 %v8632, 1.0
      %v8648 = vsub.f32 %v8634, 1.0
      %v8649 = vsub.f32 %v8636, 1.0
      %v8650 = vsub.f32 %v8638, 1.0
      %v8651 = vsub.f32 %v8640, 1.0
      %v8652 = vsub.f32 %v8642, 1.0
      %v8653 = vsub.f32 %v8644, 1.0
      %v8654 = vsub.f32 %v8646, 1.0
      %v8655 = vsel %vm8615, %v8607, %v8647
      %v8656 = vsel %vm8616, %v8608, %v8648
      %v8657 = vsel %vm8617, %v8609, %v8649
      %v8658 = vsel %vm8618, %v8610, %v8650
      %v8659 = vsel %vm8619, %v8611, %v8651
      %v8660 = vsel %vm8620, %v8612, %v8652
      %v8661 = vsel %vm8621, %v8613, %v8653
      %v8662 = vsel %vm8622, %v8614, %v8654
      %v8663 = vld [vmem:[%s1 + $0x718] sm:$0xf]
      %v8664 = vld [vmem:[%s1 + $0x71c] sm:$0xf]
      %v8665 = vld [vmem:[%s1 + $0x720] sm:$0xf]
      %v8666 = vld [vmem:[%s1 + $0x724] sm:$0xf]
      %v8667 = vld [vmem:[%s1 + $0x728] sm:$0xf]
      %v8668 = vld [vmem:[%s1 + $0x72c] sm:$0xf]
      %v8669 = vld [vmem:[%s1 + $0x730] sm:$0xf]
      %v8670 = vld [vmem:[%s1 + $0x734] sm:$0xf]
      %v8671 = vld [vmem:[%s1 + $0x738] sm:$0xf]
      %v8672 = vld [vmem:[%s1 + $0x73c] sm:$0xf]
      %v8673 = vld [vmem:[%s1 + $0x740] sm:$0xf]
      %v8674 = vld [vmem:[%s1 + $0x744] sm:$0xf]
      %v8675 = vld [vmem:[%s1 + $0x748] sm:$0xf]
      %v8676 = vld [vmem:[%s1 + $0x74c] sm:$0xf]
      %v8677 = vld [vmem:[%s1 + $0x750] sm:$0xf]
      %v8678 = vld [vmem:[%s1 + $0x754] sm:$0xf]
      %v8679 = vld [vmem:[%s1 + $0x758] sm:$0xf]
      %v8680 = vld [vmem:[%s1 + $0x75c] sm:$0xf]
      %v8681 = vld [vmem:[%s1 + $0x760] sm:$0xf]
      %v8682 = vld [vmem:[%s1 + $0x764] sm:$0xf]
      %v8683 = vld [vmem:[%s1 + $0x768] sm:$0xf]
      %v8684 = vld [vmem:[%s1 + $0x76c] sm:$0xf]
      %v8685 = vld [vmem:[%s1 + $0x770] sm:$0xf]
      %v8686 = vld [vmem:[%s1 + $0x774] sm:$0xf]
      %v8687 = vld [vmem:[%s1 + $0x778] sm:$0xf]
      %v8688 = vld [vmem:[%s1 + $0x77c] sm:$0xf]
      %v8689 = vld [vmem:[%s1 + $0x780] sm:$0xf]
      %v8690 = vld [vmem:[%s1 + $0x784] sm:$0xf]
      %v8691 = vld [vmem:[%s2 + $0x19] sm:$0x1]
      %v8692 = vld [vmem:[%s1 + $0x788] sm:$0xf]
      %v8693 = vld [vmem:[%s1 + $0x78c] sm:$0xf]
      %v8694 = vld [vmem:[%s1 + $0x790] sm:$0xf]
      %v8695 = vld [vmem:[%s1 + $0x794] sm:$0xf]
      %v8696 = vld [vmem:[%s1 + $0x798] sm:$0xf]
      %v8697 = vld [vmem:[%s1 + $0x79c] sm:$0xf]
      %v8698 = vld [vmem:[%s1 + $0x7a0] sm:$0xf]
      %v8699 = vld [vmem:[%s1 + $0x7a4] sm:$0xf]
      %v8700 = vld [vmem:[%s1 + $0x7a8] sm:$0xf]
      %v8701 = vld [vmem:[%s1 + $0x7ac] sm:$0xf]
      %v8702 = vld [vmem:[%s1 + $0x7b0] sm:$0xf]
      %v8703 = vld [vmem:[%s1 + $0x7b4] sm:$0xf]
      %v8704 = vld [vmem:[%s1 + $0x7b8] sm:$0xf]
      %v8705 = vld [vmem:[%s1 + $0x7bc] sm:$0xf]
      %v8706 = vld [vmem:[%s1 + $0x7c0] sm:$0xf]
      %v8707 = vld [vmem:[%s1 + $0x7c4] sm:$0xf]
      %v8708 = vld [vmem:[%s1 + $0x7c8] sm:$0xf]
      %v8709 = vld [vmem:[%s1 + $0x7cc] sm:$0xf]
      %v8710 = vld [vmem:[%s1 + $0x7d0] sm:$0xf]
      %v8711 = vld [vmem:[%s1 + $0x7d4] sm:$0xf]
      %v8712 = vld [vmem:[%s1 + $0x7d8] sm:$0xf]
      %v8713 = vld [vmem:[%s1 + $0x7dc] sm:$0xf]
      %v8714 = vld [vmem:[%s1 + $0x7e0] sm:$0xf]
      %v8715 = vld [vmem:[%s1 + $0x7e4] sm:$0xf]
      %v8716 = vld [vmem:[%s1 + $0x7e8] sm:$0xf]
      %v8717 = vld [vmem:[%s1 + $0x7ec] sm:$0xf]
      %v8718 = vld [vmem:[%s1 + $0x7f0] sm:$0xf]
      %v8719 = vld [vmem:[%s1 + $0x7f4] sm:$0xf]
      %v8720 = vld [vmem:[%s1 + $0x7f8] sm:$0xf]
      %v8721 = vld [vmem:[%s1 + $0x7fc] sm:$0xf]
      %v8722 = vld [vmem:[%s1 + $0x800] sm:$0xf]
      %v8723 = vld [vmem:[%s1 + $0x804] sm:$0xf]
      %v8724 = vld [vmem:[%s1 + $0x808] sm:$0xf]
      %v8725 = vld [vmem:[%s1 + $0x80c] sm:$0xf]
      %v8726 = vld [vmem:[%s1 + $0x810] sm:$0xf]
      %v8727 = vld [vmem:[%s1 + $0x814] sm:$0xf]
      %v8728 = vld [vmem:[%s1 + $0x818] sm:$0xf]
      %v8729 = vld [vmem:[%s1 + $0x81c] sm:$0xf]
      %v8730 = vld [vmem:[%s1 + $0x820] sm:$0xf]
      %v8731 = vld [vmem:[%s1 + $0x824] sm:$0xf]
      %v8732 = vld [vmem:[%s1 + $0x828] sm:$0xf]
      %v8733 = vld [vmem:[%s1 + $0x82c] sm:$0xf]
      %v8734 = vld [vmem:[%s2 + $0x1a] sm:$0x1]
      %v8735 = vld [vmem:[%s1 + $0x830] sm:$0xf]
      %v8736 = vld [vmem:[%s1 + $0x834] sm:$0xf]
      %v8737 = vld [vmem:[%s1 + $0x838] sm:$0xf]
      %v8738 = vld [vmem:[%s1 + $0x83c] sm:$0xf]
      %v8739 = vld [vmem:[%s2 + $0x1b] sm:$0x1]
      %v8740 = vpack.c.bf16 %v8656, %v8655
      %v8741 = vpack.c.bf16 %v8658, %v8657
      %v8742 = vpack.c.bf16 %v8660, %v8659
      %v8743 = vpack.c.bf16 %v8662, %v8661
      %v8745 = vshrl.u32 %v8740, 16
      %v8747 = vrot.slane %v8745, 7
      %v8748 = vshll.u32 %v8740, 16
      %v8750 = vor.u32 %v8747, %v8748
      %v8752 = vshrl.u32 %v8741, 16
      %v8754 = vrot.slane %v8752, 7
      %v8755 = vshll.u32 %v8741, 16
      %v8757 = vor.u32 %v8754, %v8755
      %v8758 = vsel %vm839, %v8747, %v8757
      %v8760 = vshrl.u32 %v8742, 16
      %v8762 = vrot.slane %v8760, 7
      %v8763 = vshll.u32 %v8742, 16
      %v8765 = vor.u32 %v8762, %v8763
      %v8766 = vsel %vm839, %v8754, %v8765
      %v8768 = vshrl.u32 %v8743, 16
      %v8770 = vrot.slane %v8768, 7
      %v8771 = vshll.u32 %v8743, 16
      %v8773 = vor.u32 %v8770, %v8771
      %v8774 = vsel %vm839, %v8762, %v8773
      %v8777 = vsel %vm882, 0, %v8750
      %v8778 = vsel %vm882, %v8770, 0
      %v8780 = vshrl.u32 %v8777, 16
      %v8782 = vshll.u32 %v8777, 16
      %v8784 = vrot.slane %v8782, 1
      %v8785 = vor.u32 %v8780, %v8784
      %v8787 = vshll.u32 %v8758, 16
      %v8789 = vrot.slane %v8787, 1
      %v8790 = vsel %vm885, %v8785, %v8789
      %v8791 = vshrl.u32 %v8758, 16
      %v8793 = vor.u32 %v8791, %v8789
      %v8795 = vshll.u32 %v8766, 16
      %v8797 = vrot.slane %v8795, 1
      %v8798 = vsel %vm885, %v8793, %v8797
      %v8799 = vshrl.u32 %v8766, 16
      %v8801 = vor.u32 %v8799, %v8797
      %v8803 = vshll.u32 %v8774, 16
      %v8805 = vrot.slane %v8803, 1
      %v8806 = vsel %vm885, %v8801, %v8805
      %v8807 = vshrl.u32 %v8774, 16
      %v8809 = vor.u32 %v8807, %v8805
      %8810 = vrot.lane.b32.xlu0 %v8790, 32
      %v8811 = vpop.permute.xlu0 %8810
      %8812 = vrot.lane.b32.xlu0 %v8798, 32
      %v8813 = vpop.permute.xlu0 %8812
      %8814 = vrot.lane.b32.xlu0 %v8806, 32
      %v8815 = vpop.permute.xlu0 %8814
      %8816 = vrot.lane.b32.xlu0 %v8809, 32
      %v8817 = vpop.permute.xlu0 %8816
      %v8819 = vrot.slane %v8777, 1
      %v8820 = vrot.slane %v8758, 1
      %v8821 = vsel %vm942, %v8819, %v8820
      %v8822 = vrot.slane %v8766, 1
      %v8823 = vsel %vm942, %v8820, %v8822
      %v8824 = vrot.slane %v8774, 1
      %v8825 = vsel %vm942, %v8822, %v8824
      %8826 = vrot.lane.b32.xlu0 %v8821, 64
      %v8827 = vpop.permute.xlu0 %8826
      %8828 = vrot.lane.b32.xlu0 %v8823, 64
      %v8829 = vpop.permute.xlu0 %8828
      %8830 = vrot.lane.b32.xlu0 %v8825, 64
      %v8831 = vpop.permute.xlu0 %8830
      %8832 = vrot.lane.b32.xlu0 %v8824, 64
      %v8833 = vpop.permute.xlu0 %8832
      %v8834 = vrot.slane %v8780, 1
      %v8835 = vrot.slane %v8782, 2
      %v8836 = vor.u32 %v8834, %v8835
      %v8837 = vrot.slane %v8791, 1
      %v8838 = vrot.slane %v8787, 2
      %v8839 = vor.u32 %v8837, %v8838
      %v8840 = vsel %vm3615, %v8836, %v8839
      %v8841 = vrot.slane %v8799, 1
      %v8842 = vrot.slane %v8795, 2
      %v8843 = vor.u32 %v8841, %v8842
      %v8844 = vsel %vm3615, %v8839, %v8843
      %v8845 = vrot.slane %v8807, 1
      %v8846 = vrot.slane %v8803, 2
      %v8847 = vor.u32 %v8845, %v8846
      %v8848 = vsel %vm3615, %v8843, %v8847
      %8849 = vrot.lane.b32.xlu0 %v8840, 96
      %v8850 = vpop.permute.xlu0 %8849
      %8851 = vrot.lane.b32.xlu0 %v8844, 96
      %v8852 = vpop.permute.xlu0 %8851
      %8853 = vrot.lane.b32.xlu0 %v8848, 96
      %v8854 = vpop.permute.xlu0 %8853
      %8855 = vrot.lane.b32.xlu0 %v8847, 96
      %v8856 = vpop.permute.xlu0 %8855
      %v8857 = vrot.slane %v8777, 2
      %v8858 = vrot.slane %v8758, 2
      %v8859 = vsel %vm3647, %v8857, %v8858
      %v8860 = vrot.slane %v8766, 2
      %v8861 = vsel %vm3647, %v8858, %v8860
      %v8862 = vrot.slane %v8774, 2
      %v8863 = vsel %vm3647, %v8860, %v8862
      %v8864 = vrot.slane %v8780, 2
      %v8865 = vrot.slane %v8782, 3
      %v8866 = vor.u32 %v8864, %v8865
      %v8867 = vrot.slane %v8791, 2
      %v8868 = vrot.slane %v8787, 3
      %v8869 = vor.u32 %v8867, %v8868
      %v8870 = vsel %vm4798, %v8866, %v8869
      %v8871 = vrot.slane %v8799, 2
      %v8872 = vrot.slane %v8795, 3
      %v8873 = vor.u32 %v8871, %v8872
      %v8874 = vsel %vm4798, %v8869, %v8873
      %v8875 = vrot.slane %v8807, 2
      %v8876 = vrot.slane %v8803, 3
      %v8877 = vor.u32 %v8875, %v8876
      %v8878 = vsel %vm4798, %v8873, %v8877
      %v8880 = vshll.u32 %v8778, 16
      %v8882 = vrot.slane %v8880, 3
      %v8883 = vsel %vm4798, %v8877, %v8882
      %8884 = vrot.lane.b32.xlu0 %v8870, 32
      %v8885 = vpop.permute.xlu0 %8884
      %8886 = vrot.lane.b32.xlu0 %v8874, 32
      %v8887 = vpop.permute.xlu0 %8886
      %8888 = vrot.lane.b32.xlu0 %v8878, 32
      %v8889 = vpop.permute.xlu0 %8888
      %8890 = vrot.lane.b32.xlu0 %v8883, 32
      %v8891 = vpop.permute.xlu0 %8890
      %v8893 = vrot.slane %v8777, 3
      %v8894 = vrot.slane %v8758, 3
      %v8895 = vsel %vm2584, %v8893, %v8894
      %v8896 = vrot.slane %v8766, 3
      %v8897 = vsel %vm2584, %v8894, %v8896
      %v8898 = vrot.slane %v8774, 3
      %v8899 = vsel %vm2584, %v8896, %v8898
      %v8900 = vrot.slane %v8778, 3
      %v8901 = vsel %vm2584, %v8898, %v8900
      %8902 = vrot.lane.b32.xlu0 %v8895, 64
      %v8903 = vpop.permute.xlu0 %8902
      %8904 = vrot.lane.b32.xlu0 %v8897, 64
      %v8905 = vpop.permute.xlu0 %8904
      %8906 = vrot.lane.b32.xlu0 %v8899, 64
      %v8907 = vpop.permute.xlu0 %8906
      %8908 = vrot.lane.b32.xlu0 %v8901, 64
      %v8909 = vpop.permute.xlu0 %8908
      %v8911 = vsel %vm768, %v8777, %v8811
      %v8913 = vsel %vm768, %v8758, %v8813
      %v8915 = vsel %vm768, %v8766, %v8815
      %v8917 = vsel %vm768, %v8774, %v8817
      %v8919 = vsel %vm974, %v8911, %v8827
      %v8921 = vsel %vm974, %v8913, %v8829
      %v8923 = vsel %vm974, %v8915, %v8831
      %v8925 = vsel %vm974, %v8917, %v8833
      %v8927 = vsel %vm1025, %v8919, %v8850
      %v8930 = vsel %vm1025, %v8921, %v8852
      %v8933 = vsel %vm1025, %v8923, %v8854
      %v8936 = vsel %vm1025, %v8925, %v8856
      %v8940 = vsel %vm768, %v8859, %v8885
      %v8943 = vsel %vm768, %v8861, %v8887
      %v8946 = vsel %vm768, %v8863, %v8889
      %v8949 = vsel %vm768, %v8862, %v8891
      %v8951 = vsel %vm974, %v8940, %v8903
      %v8953 = vsel %vm974, %v8943, %v8905
      %v8955 = vsel %vm974, %v8946, %v8907
      %v8957 = vsel %vm974, %v8949, %v8909
      %v8986 = vunpack.c.l.b16 %v8663
      %v8987 = vunpack.c.l.b16 %v8664
      %v8988 = vunpack.c.l.b16 %v8665
      %v8989 = vunpack.c.l.b16 %v8666
      %v8990 = vunpack.c.l.b16 %v8667
      %v8991 = vunpack.c.l.b16 %v8668
      %v8992 = vunpack.c.l.b16 %v8669
      %v8993 = vunpack.c.l.b16 %v8670
      %v8994 = vunpack.c.l.b16 %v8671
      %v8995 = vunpack.c.l.b16 %v8672
      %v8996 = vunpack.c.l.b16 %v8673
      %v8997 = vunpack.c.l.b16 %v8674
      %v8998 = vunpack.c.l.b16 %v8675
      %v8999 = vunpack.c.l.b16 %v8676
      %v9000 = vunpack.c.l.b16 %v8677
      %v9001 = vunpack.c.l.b16 %v8678
      %v9002 = vunpack.c.l.b16 %v8679
      %v9003 = vunpack.c.l.b16 %v8680
      %v9004 = vunpack.c.l.b16 %v8681
      %v9005 = vunpack.c.l.b16 %v8682
      %v9006 = vunpack.c.l.b16 %v8683
      %v9007 = vunpack.c.l.b16 %v8684
      %v9008 = vunpack.c.l.b16 %v8685
      %v9009 = vunpack.c.l.b16 %v8686
      %v9010 = vunpack.c.l.b16 %v8687
      %v9011 = vunpack.c.l.b16 %v8688
      %v9012 = vunpack.c.l.b16 %v8689
      %v9013 = vunpack.c.l.b16 %v8690
      %v9014 = vpack.c.b16 %v8987, %v8986
      %v9015 = vpack.c.b16 %v8989, %v8988
      %v9016 = vpack.c.b16 %v8991, %v8990
      %v9017 = vpack.c.b16 %v8993, %v8992
      %v9018 = vpack.c.b16 %v8995, %v8994
      %v9019 = vpack.c.b16 %v8997, %v8996
      %v9020 = vpack.c.b16 %v8999, %v8998
      %v9021 = vpack.c.b16 %v9001, %v9000
      %v9022 = vpack.c.b16 %v9003, %v9002
      %v9023 = vpack.c.b16 %v9005, %v9004
      %v9024 = vpack.c.b16 %v9007, %v9006
      %v9025 = vpack.c.b16 %v9009, %v9008
      %v9026 = vpack.c.b16 %v9011, %v9010
      %v9027 = vpack.c.b16 %v9013, %v9012
      %v9042 = vsel %vm1025, %v8951, 0
      %v9044 = vsel %vm1025, %v8953, 0
      %v9046 = vsel %vm1025, %v8955, 0
      %v9048 = vsel %vm1025, %v8957, 0
      %9050 = vmatprep.subr.bf16.mxu0 0
      %9051 = vmatpush1.bf16.msra.mxu0 %v9014
      %9052 = vmatprep.subr.bf16.mxu0 0
      %9053 = vmatpush1.bf16.msra.mxu0 %v9015
      %9054 = vmatprep.subr.bf16.mxu0 0
      %9055 = vmatpush1.bf16.msra.mxu0 %v9016
      %9056 = vmatprep.subr.bf16.mxu0 0
      %9057 = vmatpush1.bf16.msra.mxu0 %v9017
      %9058 = vmatprep.subr.bf16.mxu0 0
      %9059 = vmatpush1.bf16.msra.mxu0 %v9018
      %9060 = vmatprep.subr.bf16.mxu0 0
      %9061 = vmatpush1.bf16.msra.mxu0 %v9019
      %9062 = vmatprep.subr.bf16.mxu0 0
      %9063 = vmatpush1.bf16.msra.mxu0 %v9020
      %9064 = vmatprep.subr.bf16.mxu0 0
      %9065 = vmatpush1.bf16.msra.mxu0 %v9021
      %9066 = vmatprep.subr.bf16.mxu0 0
      %9067 = vmatpush1.bf16.msra.mxu0 %v9022
      %9068 = vmatprep.subr.bf16.mxu0 0
      %9069 = vmatpush1.bf16.msra.mxu0 %v9023
      %9070 = vmatprep.subr.bf16.mxu0 0
      %9071 = vmatpush1.bf16.msra.mxu0 %v9024
      %9072 = vmatprep.subr.bf16.mxu0 0
      %9073 = vmatpush1.bf16.msra.mxu0 %v9025
      %9074 = vmatprep.subr.bf16.mxu0 0
      %9075 = vmatpush1.bf16.msra.mxu0 %v9026
      %9076 = vmatprep.subr.bf16.mxu0 0
      %9077 = vmatpush1.bf16.msra.mxu0 %v9027
      %9078 = vmatprep.subr.bf16.mxu0 0
      %9079 = vmatpush1.bf16.msra.mxu0 0
      %9080 = vmatprep.subr.bf16.mxu0 0
      %9081 = vmatpush1.bf16.msra.mxu0 0
      %9082 = vmatprep.mubr.bf16.mxu0 %v9042
      %9083 = vmatmul.mubr.bf16.gmra.mrb[0].mxu0 %v8927
      %v9084 = vpop.f32.mrb[0].mxu0
      %v9085 = vadd.f32 0.0, %v9084
      %v9086 = vpop.f32.mrb[0].mxu0
      %v9087 = vpop.f32.mrb[0].mxu0
      %v9088 = vadd.f32 0.0, %v9087
      %v9089 = vpop.f32.mrb[0].mxu0
      %9090 = vmatprep.mubr.bf16.mxu0 %v9044
      %9091 = vmatmul.mubr.bf16.gmra.mrb[0].mxu0 %v8930
      %v9092 = vpop.f32.mrb[0].mxu0
      %v9093 = vadd.f32 0.0, %v9092
      %v9094 = vpop.f32.mrb[0].mxu0
      %v9095 = vpop.f32.mrb[0].mxu0
      %v9096 = vadd.f32 0.0, %v9095
      %v9097 = vpop.f32.mrb[0].mxu0
      %9098 = vmatprep.mubr.bf16.mxu0 %v9046
      %9099 = vmatmul.mubr.bf16.gmra.mrb[0].mxu0 %v8933
      %v9100 = vpop.f32.mrb[0].mxu0
      %v9101 = vadd.f32 0.0, %v9100
      %v9102 = vpop.f32.mrb[0].mxu0
      %v9103 = vpop.f32.mrb[0].mxu0
      %v9104 = vadd.f32 0.0, %v9103
      %v9105 = vpop.f32.mrb[0].mxu0
      %9106 = vmatprep.mubr.bf16.mxu0 %v9048
      %9107 = vmatmul.mubr.bf16.gmra.mrb[0].mxu0 %v8936
      %v9108 = vpop.f32.mrb[0].mxu0
      %v9109 = vadd.f32 0.0, %v9108
      %v9110 = vpop.f32.mrb[0].mxu0
      %v9111 = vpop.f32.mrb[0].mxu0
      %v9112 = vadd.f32 0.0, %v9111
      %v9113 = vpop.f32.mrb[0].mxu0
      %9114 = vdwg.mxu0
      %9115 = vst.msk [vmem:[#allocation4] sm:$0xff] %vm2500, %v9085
      %9116 = vst.msk [vmem:[#allocation4 + $0x8] sm:$0xff] %vm2500, %v9088
      %9117 = vst.msk [vmem:[#allocation4 + $0x10] sm:$0xff] %vm2500, %v9093
      %9118 = vst.msk [vmem:[#allocation4 + $0x18] sm:$0xff] %vm2500, %v9096
      %9119 = vst.msk [vmem:[#allocation4 + $0x20] sm:$0xff] %vm2500, %v9101
      %9120 = vst.msk [vmem:[#allocation4 + $0x28] sm:$0xff] %vm2500, %v9104
      %9121 = vst.msk [vmem:[#allocation4 + $0x30] sm:$0xff] %vm2500, %v9109
      %vm9122 = vcmask 388096
      %9123 = vst.msk [vmem:[#allocation4 + $0x38] sm:$0xf] %vm9122, %v9112
      %v9124 = vld [vmem:[#allocation4] ss:$2 sm:$0xff]
      %s9125 = scalar_lea.vmem [#allocation4], 16
      %v9126 = vld [vmem:[%s9125] ss:$2 sm:$0xff]
      %s9127 = scalar_lea.vmem [#allocation4], 32
      %v9128 = vld [vmem:[%s9127] ss:$2 sm:$0xff]
      %s9129 = scalar_lea.vmem [#allocation4], 48
      %v9130 = vld [vmem:[%s9129] ss:$2 sm:$0x3f]
      %v9131 = vlaneseq
      %v9132 = vshrl.u32 %v9131, 7
      %v9133 = vsub.s32 0, %v9132
      %v9134 = vrot.slane %v8691, %v9133
      %v9135 = vadd.f32 %v9124, %v9134
      %v9136 = vadd.f32 %v9126, %v9134
      %v9137 = vadd.f32 %v9128, %v9134
      %v9138 = vadd.f32 %v9130, %v9134
      %vm9139 = vcmp.gt.f32.partialorder %v9135, 0.0
      %vm9140 = vcmp.gt.f32.partialorder %v9136, 0.0
      %vm9141 = vcmp.gt.f32.partialorder %v9137, 0.0
      %vm9142 = vcmp.gt.f32.partialorder %v9138, 0.0
      %v9143 = vmin.f32 %v9135, 0.0
      %v9144 = vmin.f32 %v9136, 0.0
      %v9145 = vmin.f32 %v9137, 0.0
      %v9146 = vmin.f32 %v9138, 0.0
      %v9147 = vmul.f32 %v9143, 1.442695
      %v9148 = vpow.pop %v9147
      %v9149 = vmul.f32 %v9144, 1.442695
      %v9150 = vpow.pop %v9149
      %v9151 = vmul.f32 %v9145, 1.442695
      %v9152 = vpow.pop %v9151
      %v9153 = vmul.f32 %v9146, 1.442695
      %v9154 = vpow.pop %v9153
      %v9155 = vsub.f32 %v9148, 1.0
      %v9156 = vsub.f32 %v9150, 1.0
      %v9157 = vsub.f32 %v9152, 1.0
      %v9158 = vsub.f32 %v9154, 1.0
      %v9159 = vsel %vm9139, %v9135, %v9155
      %v9160 = vsel %vm9140, %v9136, %v9156
      %v9161 = vsel %vm9141, %v9137, %v9157
      %v9162 = vsel %vm9142, %v9138, %v9158
      %v9163 = vpack.c.bf16 %v9160, %v9159
      %v9164 = vpack.c.bf16 %v9162, %v9161
      %v9166 = vshrl.u32 %v9163, 16
      %v9168 = vrot.slane %v9166, 7
      %v9169 = vshll.u32 %v9163, 16
      %v9171 = vor.u32 %v9168, %v9169
      %v9173 = vshrl.u32 %v9164, 16
      %v9175 = vrot.slane %v9173, 7
      %v9176 = vshll.u32 %v9164, 16
      %v9178 = vor.u32 %v9175, %v9176
      %v9179 = vsel %vm839, %v9168, %v9178
      %v9182 = vsel %vm882, 0, %v9171
      %v9183 = vsel %vm3938, %v9179, 0
      %v9185 = vshrl.u32 %v9182, 16
      %v9187 = vshll.u32 %v9182, 16
      %v9189 = vrot.slane %v9187, 1
      %v9190 = vor.u32 %v9185, %v9189
      %v9192 = vshll.u32 %v9183, 16
      %v9194 = vrot.slane %v9192, 1
      %v9195 = vsel %vm885, %v9190, %v9194
      %v9196 = vshrl.u32 %v9183, 16
      %v9198 = vor.u32 %v9196, %v9194
      %9199 = vrot.lane.b32.xlu0 %v9195, 48
      %v9200 = vpop.permute.xlu0 %9199
      %9201 = vrot.lane.b32.xlu0 %v9198, 48
      %v9202 = vpop.permute.xlu0 %9201
      %v9205 = vrot.slane %v9182, 1
      %v9206 = vrot.slane %v9183, 1
      %v9207 = vsel %vm942, %v9205, %v9206
      %9208 = vrot.lane.b32.xlu0 %v9207, 96
      %v9209 = vpop.permute.xlu0 %9208
      %9210 = vrot.lane.b32.xlu0 %v9206, 96
      %v9211 = vpop.permute.xlu0 %9210
      %v9212 = vrot.slane %v9185, 1
      %v9213 = vrot.slane %v9187, 2
      %v9214 = vor.u32 %v9212, %v9213
      %v9215 = vrot.slane %v9196, 1
      %v9216 = vrot.slane %v9192, 2
      %v9217 = vor.u32 %v9215, %v9216
      %v9218 = vsel %vm3615, %v9214, %v9217
      %9219 = vrot.lane.b32.xlu0 %v9218, 16
      %v9220 = vpop.permute.xlu0 %9219
      %9221 = vrot.lane.b32.xlu0 %v9217, 16
      %v9222 = vpop.permute.xlu0 %9221
      %v9223 = vrot.slane %v9182, 2
      %v9224 = vrot.slane %v9183, 2
      %v9225 = vsel %vm3647, %v9223, %v9224
      %9226 = vrot.lane.b32.xlu0 %v9225, 64
      %v9227 = vpop.permute.xlu0 %9226
      %9228 = vrot.lane.b32.xlu0 %v9224, 64
      %v9229 = vpop.permute.xlu0 %9228
      %v9230 = vrot.slane %v9185, 2
      %v9231 = vrot.slane %v9187, 3
      %v9232 = vor.u32 %v9230, %v9231
      %v9233 = vrot.slane %v9196, 2
      %v9234 = vrot.slane %v9192, 3
      %v9235 = vor.u32 %v9233, %v9234
      %v9236 = vsel %vm4798, %v9232, %v9235
      %9237 = vrot.lane.b32.xlu0 %v9236, 112
      %v9238 = vpop.permute.xlu0 %9237
      %9239 = vrot.lane.b32.xlu0 %v9235, 112
      %v9240 = vpop.permute.xlu0 %9239
      %v9241 = vrot.slane %v9182, 3
      %v9242 = vrot.slane %v9183, 3
      %v9243 = vsel %vm2584, %v9241, %v9242
      %9244 = vrot.lane.b32.xlu0 %v9243, 32
      %v9245 = vpop.permute.xlu0 %9244
      %9246 = vrot.lane.b32.xlu0 %v9242, 32
      %v9247 = vpop.permute.xlu0 %9246
      %v9249 = vsel %vm2500, %v9182, %v9200
      %v9251 = vsel %vm2500, %v9183, %v9202
      %v9253 = vsel %vm1025, %v9249, %v9209
      %v9256 = vsel %vm1025, %v9251, %v9211
      %v9259 = vsel %vm2703, %v9209, %v9220
      %v9261 = vsel %vm2703, %v9211, %v9222
      %v9263 = vsel %vm974, %v9259, %v9227
      %v9265 = vsel %vm974, %v9261, %v9229
      %v9267 = vsel %vm5831, %v9263, %v9238
      %v9270 = vsel %vm5831, %v9265, %v9240
      %v9273 = vsel %vm768, %v9238, %v9245
      %v9275 = vsel %vm768, %v9240, %v9247
      %v9276 = vlaneseq
      %v9277 = vshrl.u32 %v9276, 7
      %v9278 = vsub.s32 0, %v9277
      %v9279 = vrot.slane %v8734, %v9278
      %v9322 = vunpack.c.l.b16 %v8692
      %v9323 = vunpack.c.l.b16 %v8693
      %v9324 = vunpack.c.l.b16 %v8694
      %v9325 = vunpack.c.l.b16 %v8695
      %v9326 = vunpack.c.l.b16 %v8696
      %v9327 = vunpack.c.l.b16 %v8697
      %v9328 = vunpack.c.l.b16 %v8698
      %v9329 = vunpack.c.l.b16 %v8699
      %v9330 = vunpack.c.l.b16 %v8700
      %v9331 = vunpack.c.l.b16 %v8701
      %v9332 = vunpack.c.l.b16 %v8702
      %v9333 = vunpack.c.l.b16 %v8703
      %v9334 = vunpack.c.l.b16 %v8704
      %v9335 = vunpack.c.l.b16 %v8705
      %v9336 = vunpack.c.l.b16 %v8706
      %v9337 = vunpack.c.l.b16 %v8707
      %v9338 = vunpack.c.l.b16 %v8708
      %v9339 = vunpack.c.l.b16 %v8709
      %v9340 = vunpack.c.l.b16 %v8710
      %v9341 = vunpack.c.l.b16 %v8711
      %v9342 = vunpack.c.l.b16 %v8712
      %v9343 = vunpack.c.l.b16 %v8713
      %v9344 = vunpack.c.l.b16 %v8714
      %v9345 = vunpack.c.l.b16 %v8715
      %v9346 = vunpack.c.l.b16 %v8716
      %v9347 = vunpack.c.l.b16 %v8717
      %v9348 = vunpack.c.l.b16 %v8718
      %v9349 = vunpack.c.l.b16 %v8719
      %v9350 = vunpack.c.l.b16 %v8720
      %v9351 = vunpack.c.l.b16 %v8721
      %v9352 = vunpack.c.l.b16 %v8722
      %v9353 = vunpack.c.l.b16 %v8723
      %v9354 = vunpack.c.l.b16 %v8724
      %v9355 = vunpack.c.l.b16 %v8725
      %v9356 = vunpack.c.l.b16 %v8726
      %v9357 = vunpack.c.l.b16 %v8727
      %v9358 = vunpack.c.l.b16 %v8728
      %v9359 = vunpack.c.l.b16 %v8729
      %v9360 = vunpack.c.l.b16 %v8730
      %v9361 = vunpack.c.l.b16 %v8731
      %v9362 = vunpack.c.l.b16 %v8732
      %v9363 = vunpack.c.l.b16 %v8733
      %v9364 = vpack.c.b16 %v9323, %v9322
      %v9365 = vpack.c.b16 %v9325, %v9324
      %v9366 = vpack.c.b16 %v9327, %v9326
      %v9367 = vpack.c.b16 %v9329, %v9328
      %v9368 = vpack.c.b16 %v9331, %v9330
      %v9369 = vpack.c.b16 %v9333, %v9332
      %v9370 = vpack.c.b16 %v9335, %v9334
      %v9371 = vpack.c.b16 %v9337, %v9336
      %v9372 = vpack.c.b16 %v9339, %v9338
      %v9373 = vpack.c.b16 %v9341, %v9340
      %v9374 = vpack.c.b16 %v9343, %v9342
      %v9375 = vpack.c.b16 %v9345, %v9344
      %v9376 = vpack.c.b16 %v9347, %v9346
      %v9377 = vpack.c.b16 %v9349, %v9348
      %v9378 = vpack.c.b16 %v9351, %v9350
      %v9379 = vpack.c.b16 %v9353, %v9352
      %v9380 = vpack.c.b16 %v9355, %v9354
      %v9381 = vpack.c.b16 %v9357, %v9356
      %v9382 = vpack.c.b16 %v9359, %v9358
      %v9383 = vpack.c.b16 %v9361, %v9360
      %v9384 = vpack.c.b16 %v9363, %v9362
      %vm9406 = vcmask 654336
      %v9407 = vsel %vm9406, %v9273, 0
      %v9409 = vsel %vm9406, %v9275, 0
      %9411 = vmatprep.subr.bf16.mxu0 0
      %9412 = vmatpush1.bf16.msra.mxu0 %v9364
      %9413 = vmatprep.subr.bf16.mxu0 0
      %9414 = vmatpush1.bf16.msra.mxu0 %v9365
      %9415 = vmatprep.subr.bf16.mxu0 0
      %9416 = vmatpush1.bf16.msra.mxu0 %v9366
      %9417 = vmatprep.subr.bf16.mxu0 0
      %9418 = vmatpush1.bf16.msra.mxu0 %v9367
      %9419 = vmatprep.subr.bf16.mxu0 0
      %9420 = vmatpush1.bf16.msra.mxu0 %v9368
      %9421 = vmatprep.subr.bf16.mxu0 0
      %9422 = vmatpush1.bf16.msra.mxu0 %v9369
      %9423 = vmatprep.subr.bf16.mxu0 0
      %9424 = vmatpush1.bf16.msra.mxu0 %v9370
      %9425 = vmatprep.subr.bf16.mxu0 0
      %9426 = vmatpush1.bf16.msra.mxu0 %v9371
      %9427 = vmatprep.subr.bf16.mxu0 0
      %9428 = vmatpush1.bf16.msra.mxu0 %v9372
      %9429 = vmatprep.subr.bf16.mxu0 0
      %9430 = vmatpush1.bf16.msra.mxu0 %v9373
      %9431 = vmatprep.subr.bf16.mxu0 0
      %9432 = vmatpush1.bf16.msra.mxu0 %v9374
      %9433 = vmatprep.subr.bf16.mxu0 0
      %9434 = vmatpush1.bf16.msra.mxu0 %v9375
      %9435 = vmatprep.subr.bf16.mxu0 0
      %9436 = vmatpush1.bf16.msra.mxu0 %v9376
      %9437 = vmatprep.subr.bf16.mxu0 0
      %9438 = vmatpush1.bf16.msra.mxu0 %v9377
      %9439 = vmatprep.subr.bf16.mxu0 0
      %9440 = vmatpush1.bf16.msra.mxu0 %v9378
      %9441 = vmatprep.subr.bf16.mxu0 0
      %9442 = vmatpush1.bf16.msra.mxu0 %v9379
      %9443 = vmatprep.mubr.bf16.mxu0 %v9267
      %9444 = vmatmul.mubr.bf16.gmra.mrb[0].mxu0 %v9253
      %v9445 = vpop.f32.mrb[0].mxu0
      %v9446 = vadd.f32 %v9279, %v9445
      %v9447 = vpop.f32.mrb[0].mxu0
      %v9448 = vpop.f32.mrb[0].mxu0
      %v9449 = vadd.f32 %v9279, %v9448
      %v9450 = vpop.f32.mrb[0].mxu0
      %9451 = vmatprep.mubr.bf16.mxu0 %v9270
      %9452 = vmatmul.mubr.bf16.gmra.mrb[0].mxu0 %v9256
      %v9453 = vpop.f32.mrb[0].mxu0
      %v9454 = vadd.f32 %v9279, %v9453
      %v9455 = vpop.f32.mrb[0].mxu0
      %v9456 = vpop.f32.mrb[0].mxu0
      %v9457 = vadd.f32 %v9279, %v9456
      %v9458 = vpop.f32.mrb[0].mxu0
      %9459 = vdwg.mxu0
      %9460 = vmatprep.subr.bf16.mxu0 0
      %9461 = vmatpush1.bf16.msra.mxu0 %v9380
      %9462 = vmatprep.subr.bf16.mxu0 0
      %9463 = vmatpush1.bf16.msra.mxu0 %v9381
      %9464 = vmatprep.subr.bf16.mxu0 0
      %9465 = vmatpush1.bf16.msra.mxu0 %v9382
      %9466 = vmatprep.subr.bf16.mxu0 0
      %9467 = vmatpush1.bf16.msra.mxu0 %v9383
      %9468 = vmatprep.subr.bf16.mxu0 0
      %9469 = vmatpush1.bf16.msra.mxu0 %v9384
      %9470 = vmatprep.subr.bf16.mxu0 0
      %9471 = vmatpush1.bf16.msra.mxu0 0
      %9472 = vmatprep.subr.bf16.mxu0 0
      %9473 = vmatpush1.bf16.msra.mxu0 0
      %9474 = vmatprep.subr.bf16.mxu0 0
      %9475 = vmatpush1.bf16.msra.mxu0 0
      %9476 = vmatprep.subr.bf16.mxu0 0
      %9477 = vmatpush1.bf16.msra.mxu0 0
      %9478 = vmatprep.subr.bf16.mxu0 0
      %9479 = vmatpush1.bf16.msra.mxu0 0
      %9480 = vmatprep.subr.bf16.mxu0 0
      %9481 = vmatpush1.bf16.msra.mxu0 0
      %9482 = vmatprep.subr.bf16.mxu0 0
      %9483 = vmatpush1.bf16.msra.mxu0 0
      %9484 = vmatprep.subr.bf16.mxu0 0
      %9485 = vmatpush1.bf16.msra.mxu0 0
      %9486 = vmatprep.subr.bf16.mxu0 0
      %9487 = vmatpush1.bf16.msra.mxu0 0
      %9488 = vmatprep.subr.bf16.mxu0 0
      %9489 = vmatpush1.bf16.msra.mxu0 0
      %9490 = vmatprep.subr.bf16.mxu0 0
      %9491 = vmatpush1.bf16.msra.mxu0 0
      %9492 = vmatprep.mubr.bf16.mxu0 0
      %9493 = vmatmul.mubr.bf16.gmra.mrb[0].mxu0 %v9407
      %v9494 = vpop.f32.mrb[0].mxu0
      %v9495 = vadd.f32 %v9446, %v9494
      %v9496 = vpop.f32.mrb[0].mxu0
      %v9497 = vpop.f32.mrb[0].mxu0
      %v9498 = vadd.f32 %v9449, %v9497
      %v9499 = vpop.f32.mrb[0].mxu0
      %9500 = vmatprep.mubr.bf16.mxu0 0
      %9501 = vmatmul.mubr.bf16.gmra.mrb[0].mxu0 %v9409
      %v9502 = vpop.f32.mrb[0].mxu0
      %v9503 = vadd.f32 %v9454, %v9502
      %v9504 = vpop.f32.mrb[0].mxu0
      %v9505 = vpop.f32.mrb[0].mxu0
      %v9506 = vadd.f32 %v9457, %v9505
      %v9507 = vpop.f32.mrb[0].mxu0
      %9508 = vdwg.mxu0
      %v9513 = vunpack.c.l.b16 %v8735
      %v9514 = vunpack.c.l.b16 %v8736
      %v9515 = vunpack.c.l.b16 %v8737
      %v9516 = vunpack.c.l.b16 %v8738
      %v9517 = vpack.c.b16 %v9514, %v9513
      %v9518 = vpack.c.b16 %v9516, %v9515
      %v9521 = vsel %vm768, %v8740, 0
      %v9523 = vsel %vm768, %v8741, 0
      %v9525 = vsel %vm768, %v8742, 0
      %v9527 = vsel %vm768, %v8743, 0
      %9529 = vmatprep.subr.bf16.mxu0 0
      %9530 = vmatpush1.bf16.msra.mxu0 %v9517
      %9531 = vmatprep.subr.bf16.mxu0 0
      %9532 = vmatpush1.bf16.msra.mxu0 %v9518
      %9533 = vmatprep.subr.bf16.mxu0 0
      %9534 = vmatpush1.bf16.msra.mxu0 0
      %9535 = vmatprep.subr.bf16.mxu0 0
      %9536 = vmatpush1.bf16.msra.mxu0 0
      %9537 = vmatprep.subr.bf16.mxu0 0
      %9538 = vmatpush1.bf16.msra.mxu0 0
      %9539 = vmatprep.subr.bf16.mxu0 0
      %9540 = vmatpush1.bf16.msra.mxu0 0
      %9541 = vmatprep.subr.bf16.mxu0 0
      %9542 = vmatpush1.bf16.msra.mxu0 0
      %9543 = vmatprep.subr.bf16.mxu0 0
      %9544 = vmatpush1.bf16.msra.mxu0 0
      %9545 = vmatprep.subr.bf16.mxu0 0
      %9546 = vmatpush1.bf16.msra.mxu0 0
      %9547 = vmatprep.subr.bf16.mxu0 0
      %9548 = vmatpush1.bf16.msra.mxu0 0
      %9549 = vmatprep.subr.bf16.mxu0 0
      %9550 = vmatpush1.bf16.msra.mxu0 0
      %9551 = vmatprep.subr.bf16.mxu0 0
      %9552 = vmatpush1.bf16.msra.mxu0 0
      %9553 = vmatprep.subr.bf16.mxu0 0
      %9554 = vmatpush1.bf16.msra.mxu0 0
      %9555 = vmatprep.subr.bf16.mxu0 0
      %9556 = vmatpush1.bf16.msra.mxu0 0
      %9557 = vmatprep.subr.bf16.mxu0 0
      %9558 = vmatpush1.bf16.msra.mxu0 0
      %9559 = vmatprep.subr.bf16.mxu0 0
      %9560 = vmatpush1.bf16.msra.mxu0 0
      %9561 = vmatprep.mubr.bf16.mxu0 0
      %9562 = vmatmul.mubr.bf16.gmra.mrb[0].mxu0 %v9521
      %v9563 = vpop.f32.mrb[0].mxu0
      %v9564 = vadd.f32 0.0, %v9563
      %v9565 = vpop.f32.mrb[0].mxu0
      %v9566 = vpop.f32.mrb[0].mxu0
      %v9567 = vadd.f32 0.0, %v9566
      %v9568 = vpop.f32.mrb[0].mxu0
      %9569 = vmatprep.mubr.bf16.mxu0 0
      %9570 = vmatmul.mubr.bf16.gmra.mrb[0].mxu0 %v9523
      %v9571 = vpop.f32.mrb[0].mxu0
      %v9572 = vadd.f32 0.0, %v9571
      %v9573 = vpop.f32.mrb[0].mxu0
      %v9574 = vpop.f32.mrb[0].mxu0
      %v9575 = vadd.f32 0.0, %v9574
      %v9576 = vpop.f32.mrb[0].mxu0
      %9577 = vmatprep.mubr.bf16.mxu0 0
      %9578 = vmatmul.mubr.bf16.gmra.mrb[0].mxu0 %v9525
      %v9579 = vpop.f32.mrb[0].mxu0
      %v9580 = vadd.f32 0.0, %v9579
      %v9581 = vpop.f32.mrb[0].mxu0
      %v9582 = vpop.f32.mrb[0].mxu0
      %v9583 = vadd.f32 0.0, %v9582
      %v9584 = vpop.f32.mrb[0].mxu0
      %9585 = vmatprep.mubr.bf16.mxu0 0
      %9586 = vmatmul.mubr.bf16.gmra.mrb[0].mxu0 %v9527
      %v9587 = vpop.f32.mrb[0].mxu0
      %v9588 = vadd.f32 0.0, %v9587
      %v9589 = vpop.f32.mrb[0].mxu0
      %v9590 = vpop.f32.mrb[0].mxu0
      %v9591 = vadd.f32 0.0, %v9590
      %v9592 = vpop.f32.mrb[0].mxu0
      %9593 = vdwg.mxu0
      %9594 = vst.msk [vmem:[#allocation4] sm:$0xff] %vm2500, %v9564
      %9595 = vst.msk [vmem:[#allocation4 + $0x8] sm:$0xff] %vm2500, %v9567
      %9596 = vst.msk [vmem:[#allocation4 + $0x10] sm:$0xff] %vm2500, %v9572
      %9597 = vst.msk [vmem:[#allocation4 + $0x18] sm:$0xff] %vm2500, %v9575
      %9598 = vst.msk [vmem:[#allocation4 + $0x20] sm:$0xff] %vm2500, %v9580
      %9599 = vst.msk [vmem:[#allocation4 + $0x28] sm:$0xff] %vm2500, %v9583
      %9600 = vst.msk [vmem:[#allocation4 + $0x30] sm:$0xff] %vm2500, %v9588
      %9601 = vst.msk [vmem:[#allocation4 + $0x38] sm:$0xff] %vm2500, %v9591
      %v9602 = vld [vmem:[#allocation4] ss:$2 sm:$0xff]
      %v9603 = vld [vmem:[%s9125] ss:$2 sm:$0xff]
      %v9604 = vld [vmem:[%s9127] ss:$2 sm:$0xff]
      %v9605 = vld [vmem:[%s9129] ss:$2 sm:$0xff]
      %v9606 = vlaneseq
      %v9607 = vshrl.u32 %v9606, 7
      %v9608 = vsub.s32 0, %v9607
      %v9609 = vrot.slane %v8739, %v9608
      %v9610 = vadd.f32 %v9602, %v9609
      %v9611 = vadd.f32 %v9603, %v9609
      %v9612 = vadd.f32 %v9604, %v9609
      %v9613 = vadd.f32 %v9605, %v9609
      %v9614 = vadd.f32 %v9495, %v9610
      %v9615 = vadd.f32 %v9498, %v9611
      %v9616 = vadd.f32 %v9503, %v9612
      %v9617 = vadd.f32 %v9506, %v9613
      %vm9618 = vcmp.gt.f32.partialorder %v9614, 0.0
      %vm9619 = vcmp.gt.f32.partialorder %v9615, 0.0
      %vm9620 = vcmp.gt.f32.partialorder %v9616, 0.0
      %vm9621 = vcmp.gt.f32.partialorder %v9617, 0.0
      %v9622 = vmin.f32 %v9614, 0.0
      %v9623 = vmin.f32 %v9615, 0.0
      %v9624 = vmin.f32 %v9616, 0.0
      %v9625 = vmin.f32 %v9617, 0.0
      %v9626 = vmul.f32 %v9622, 1.442695
      %v9627 = vpow.pop %v9626
      %v9628 = vmul.f32 %v9623, 1.442695
      %v9629 = vpow.pop %v9628
      %v9630 = vmul.f32 %v9624, 1.442695
      %v9631 = vpow.pop %v9630
      %v9632 = vmul.f32 %v9625, 1.442695
      %v9633 = vpow.pop %v9632
      %v9634 = vsub.f32 %v9627, 1.0
      %v9635 = vsub.f32 %v9629, 1.0
      %v9636 = vsub.f32 %v9631, 1.0
      %v9637 = vsub.f32 %v9633, 1.0
      %v9638 = vsel %vm9618, %v9614, %v9634
      %v9639 = vsel %vm9619, %v9615, %v9635
      %v9640 = vsel %vm9620, %v9616, %v9636
      %v9641 = vsel %vm9621, %v9617, %v9637
      %v9642 = vld [vmem:[%s1 + $0x840] sm:$0xf]
      %v9643 = vld [vmem:[%s1 + $0x844] sm:$0xf]
      %v9644 = vld [vmem:[%s1 + $0x848] sm:$0xf]
      %v9645 = vld [vmem:[%s1 + $0x84c] sm:$0xf]
      %v9646 = vld [vmem:[%s1 + $0x850] sm:$0xf]
      %v9647 = vld [vmem:[%s1 + $0x854] sm:$0xf]
      %v9648 = vld [vmem:[%s1 + $0x858] sm:$0xf]
      %v9649 = vld [vmem:[%s1 + $0x85c] sm:$0xf]
      %v9650 = vld [vmem:[%s1 + $0x860] sm:$0xf]
      %v9651 = vld [vmem:[%s1 + $0x864] sm:$0xf]
      %v9652 = vld [vmem:[%s1 + $0x868] sm:$0xf]
      %v9653 = vld [vmem:[%s1 + $0x86c] sm:$0xf]
      %v9654 = vld [vmem:[%s1 + $0x870] sm:$0xf]
      %v9655 = vld [vmem:[%s1 + $0x874] sm:$0xf]
      %v9656 = vld [vmem:[%s1 + $0x878] sm:$0xf]
      %v9657 = vld [vmem:[%s1 + $0x87c] sm:$0xf]
      %v9658 = vld [vmem:[%s1 + $0x880] sm:$0xf]
      %v9659 = vld [vmem:[%s1 + $0x884] sm:$0xf]
      %v9660 = vld [vmem:[%s1 + $0x888] sm:$0xf]
      %v9661 = vld [vmem:[%s1 + $0x88c] sm:$0xf]
      %v9662 = vld [vmem:[%s1 + $0x890] sm:$0xf]
      %v9663 = vld [vmem:[%s1 + $0x894] sm:$0xf]
      %v9664 = vld [vmem:[%s1 + $0x898] sm:$0xf]
      %v9665 = vld [vmem:[%s1 + $0x89c] sm:$0xf]
      %v9666 = vld [vmem:[%s1 + $0x8a0] sm:$0xf]
      %v9667 = vld [vmem:[%s1 + $0x8a4] sm:$0xf]
      %v9668 = vld [vmem:[%s1 + $0x8a8] sm:$0xf]
      %v9669 = vld [vmem:[%s1 + $0x8ac] sm:$0xf]
      %v9670 = vld [vmem:[%s1 + $0x8b0] sm:$0xf]
      %v9671 = vld [vmem:[%s1 + $0x8b4] sm:$0xf]
      %v9672 = vld [vmem:[%s1 + $0x8b8] sm:$0xf]
      %v9673 = vld [vmem:[%s1 + $0x8bc] sm:$0xf]
      %v9674 = vld [vmem:[%s1 + $0x8c0] sm:$0xf]
      %v9675 = vld [vmem:[%s1 + $0x8c4] sm:$0xf]
      %v9676 = vld [vmem:[%s1 + $0x8c8] sm:$0xf]
      %v9677 = vld [vmem:[%s1 + $0x8cc] sm:$0xf]
      %v9678 = vld [vmem:[%s1 + $0x8d0] sm:$0xf]
      %v9679 = vld [vmem:[%s1 + $0x8d4] sm:$0xf]
      %v9680 = vld [vmem:[%s1 + $0x8d8] sm:$0xf]
      %v9681 = vld [vmem:[%s1 + $0x8dc] sm:$0xf]
      %v9682 = vld [vmem:[%s1 + $0x8e0] sm:$0xf]
      %v9683 = vld [vmem:[%s1 + $0x8e4] sm:$0xf]
      %v9684 = vld [vmem:[%s2 + $0x1c] sm:$0x1]
      %v9685 = vld [vmem:[%s1 + $0x8e8] sm:$0xf]
      %v9686 = vld [vmem:[%s1 + $0x8ec] sm:$0xf]
      %v9687 = vld [vmem:[%s1 + $0x8f0] sm:$0xf]
      %v9688 = vld [vmem:[%s1 + $0x8f4] sm:$0xf]
      %v9689 = vld [vmem:[%s1 + $0x8f8] sm:$0xf]
      %v9690 = vld [vmem:[%s1 + $0x8fc] sm:$0xf]
      %v9691 = vld [vmem:[%s1 + $0x900] sm:$0xf]
      %v9692 = vld [vmem:[%s1 + $0x904] sm:$0xf]
      %v9693 = vld [vmem:[%s1 + $0x908] sm:$0xf]
      %v9694 = vld [vmem:[%s1 + $0x90c] sm:$0xf]
      %v9695 = vld [vmem:[%s1 + $0x910] sm:$0xf]
      %v9696 = vld [vmem:[%s1 + $0x914] sm:$0xf]
      %v9697 = vld [vmem:[%s1 + $0x918] sm:$0xf]
      %v9698 = vld [vmem:[%s1 + $0x91c] sm:$0xf]
      %v9699 = vld [vmem:[%s1 + $0x920] sm:$0xf]
      %v9700 = vld [vmem:[%s1 + $0x924] sm:$0xf]
      %v9701 = vld [vmem:[%s1 + $0x928] sm:$0xf]
      %v9702 = vld [vmem:[%s1 + $0x92c] sm:$0xf]
      %v9703 = vld [vmem:[%s1 + $0x930] sm:$0xf]
      %v9704 = vld [vmem:[%s1 + $0x934] sm:$0xf]
      %v9705 = vld [vmem:[%s1 + $0x938] sm:$0xf]
      %v9706 = vld [vmem:[%s1 + $0x93c] sm:$0xf]
      %v9707 = vld [vmem:[%s1 + $0x940] sm:$0xf]
      %v9708 = vld [vmem:[%s1 + $0x944] sm:$0xf]
      %v9709 = vld [vmem:[%s1 + $0x948] sm:$0xf]
      %v9710 = vld [vmem:[%s1 + $0x94c] sm:$0xf]
      %v9711 = vld [vmem:[%s1 + $0x950] sm:$0xf]
      %v9712 = vld [vmem:[%s1 + $0x954] sm:$0xf]
      %v9713 = vld [vmem:[%s1 + $0x958] sm:$0xf]
      %v9714 = vld [vmem:[%s1 + $0x95c] sm:$0xf]
      %v9715 = vld [vmem:[%s1 + $0x960] sm:$0xf]
      %v9716 = vld [vmem:[%s1 + $0x964] sm:$0xf]
      %v9717 = vld [vmem:[%s1 + $0x968] sm:$0xf]
      %v9718 = vld [vmem:[%s1 + $0x96c] sm:$0xf]
      %v9719 = vld [vmem:[%s1 + $0x970] sm:$0xf]
      %v9720 = vld [vmem:[%s1 + $0x974] sm:$0xf]
      %v9721 = vld [vmem:[%s1 + $0x978] sm:$0xf]
      %v9722 = vld [vmem:[%s1 + $0x97c] sm:$0xf]
      %v9723 = vld [vmem:[%s1 + $0x980] sm:$0xf]
      %v9724 = vld [vmem:[%s1 + $0x984] sm:$0xf]
      %v9725 = vld [vmem:[%s1 + $0x988] sm:$0xf]
      %v9726 = vld [vmem:[%s1 + $0x98c] sm:$0xf]
      %v9727 = vld [vmem:[%s1 + $0x990] sm:$0xf]
      %v9728 = vld [vmem:[%s1 + $0x994] sm:$0xf]
      %v9729 = vld [vmem:[%s1 + $0x998] sm:$0xf]
      %v9730 = vld [vmem:[%s1 + $0x99c] sm:$0xf]
      %v9731 = vld [vmem:[%s1 + $0x9a0] sm:$0xf]
      %v9732 = vld [vmem:[%s1 + $0x9a4] sm:$0xf]
      %v9733 = vld [vmem:[%s1 + $0x9a8] sm:$0xf]
      %v9734 = vld [vmem:[%s1 + $0x9ac] sm:$0xf]
      %v9735 = vld [vmem:[%s1 + $0x9b0] sm:$0xf]
      %v9736 = vld [vmem:[%s1 + $0x9b4] sm:$0xf]
      %v9737 = vld [vmem:[%s1 + $0x9b8] sm:$0xf]
      %v9738 = vld [vmem:[%s1 + $0x9bc] sm:$0xf]
      %v9739 = vld [vmem:[%s1 + $0x9c0] sm:$0xf]
      %v9740 = vld [vmem:[%s1 + $0x9c4] sm:$0xf]
      %v9741 = vld [vmem:[%s2 + $0x1d] sm:$0x1]
      %v9742 = vld [vmem:[%s1 + $0x9c8] sm:$0xf]
      %v9743 = vld [vmem:[%s1 + $0x9cc] sm:$0xf]
      %v9744 = vld [vmem:[%s1 + $0x9d0] sm:$0xf]
      %v9745 = vld [vmem:[%s1 + $0x9d4] sm:$0xf]
      %v9746 = vld [vmem:[%s1 + $0x9d8] sm:$0xf]
      %v9747 = vld [vmem:[%s1 + $0x9dc] sm:$0xf]
      %v9748 = vld [vmem:[%s2 + $0x1e] sm:$0x1]
      %v9749 = vpack.c.bf16 %v9639, %v9638
      %v9750 = vpack.c.bf16 %v9641, %v9640
      %v9752 = vshrl.u32 %v9749, 16
      %v9754 = vrot.slane %v9752, 7
      %v9755 = vshll.u32 %v9749, 16
      %v9757 = vor.u32 %v9754, %v9755
      %v9759 = vshrl.u32 %v9750, 16
      %v9761 = vrot.slane %v9759, 7
      %v9762 = vshll.u32 %v9750, 16
      %v9764 = vor.u32 %v9761, %v9762
      %v9765 = vsel %vm839, %v9754, %v9764
      %v9768 = vsel %vm882, 0, %v9757
      %v9769 = vsel %vm4799, %v9765, 0
      %v9771 = vshrl.u32 %v9768, 16
      %v9773 = vshll.u32 %v9768, 16
      %v9775 = vrot.slane %v9773, 1
      %v9776 = vor.u32 %v9771, %v9775
      %v9778 = vshll.u32 %v9769, 16
      %v9780 = vrot.slane %v9778, 1
      %v9781 = vsel %vm885, %v9776, %v9780
      %v9782 = vshrl.u32 %v9769, 16
      %v9784 = vor.u32 %v9782, %v9780
      %9785 = vrot.lane.b32.xlu0 %v9781, 48
      %v9786 = vpop.permute.xlu0 %9785
      %9787 = vrot.lane.b32.xlu0 %v9784, 48
      %v9788 = vpop.permute.xlu0 %9787
      %v9791 = vrot.slane %v9768, 1
      %v9792 = vrot.slane %v9769, 1
      %v9793 = vsel %vm942, %v9791, %v9792
      %9794 = vrot.lane.b32.xlu0 %v9793, 96
      %v9795 = vpop.permute.xlu0 %9794
      %9796 = vrot.lane.b32.xlu0 %v9792, 96
      %v9797 = vpop.permute.xlu0 %9796
      %v9798 = vrot.slane %v9771, 1
      %v9799 = vrot.slane %v9773, 2
      %v9800 = vor.u32 %v9798, %v9799
      %v9801 = vrot.slane %v9782, 1
      %v9802 = vrot.slane %v9778, 2
      %v9803 = vor.u32 %v9801, %v9802
      %v9804 = vsel %vm3615, %v9800, %v9803
      %9805 = vrot.lane.b32.xlu0 %v9804, 16
      %v9806 = vpop.permute.xlu0 %9805
      %9807 = vrot.lane.b32.xlu0 %v9803, 16
      %v9808 = vpop.permute.xlu0 %9807
      %v9809 = vrot.slane %v9768, 2
      %v9810 = vrot.slane %v9769, 2
      %v9811 = vsel %vm3647, %v9809, %v9810
      %9812 = vrot.lane.b32.xlu0 %v9811, 64
      %v9813 = vpop.permute.xlu0 %9812
      %9814 = vrot.lane.b32.xlu0 %v9810, 64
      %v9815 = vpop.permute.xlu0 %9814
      %v9816 = vrot.slane %v9771, 2
      %v9817 = vrot.slane %v9773, 3
      %v9818 = vor.u32 %v9816, %v9817
      %v9819 = vrot.slane %v9782, 2
      %v9820 = vrot.slane %v9778, 3
      %v9821 = vor.u32 %v9819, %v9820
      %v9822 = vsel %vm4798, %v9818, %v9821
      %9823 = vrot.lane.b32.xlu0 %v9822, 112
      %v9824 = vpop.permute.xlu0 %9823
      %9825 = vrot.lane.b32.xlu0 %v9821, 112
      %v9826 = vpop.permute.xlu0 %9825
      %v9827 = vrot.slane %v9768, 3
      %v9828 = vrot.slane %v9769, 3
      %v9829 = vsel %vm2584, %v9827, %v9828
      %9830 = vrot.lane.b32.xlu0 %v9829, 32
      %v9831 = vpop.permute.xlu0 %9830
      %9832 = vrot.lane.b32.xlu0 %v9828, 32
      %v9833 = vpop.permute.xlu0 %9832
      %v9835 = vsel %vm2500, %v9768, %v9786
      %v9837 = vsel %vm2500, %v9769, %v9788
      %v9839 = vsel %vm1025, %v9835, %v9795
      %v9842 = vsel %vm1025, %v9837, %v9797
      %v9845 = vsel %vm2703, %v9795, %v9806
      %v9847 = vsel %vm2703, %v9797, %v9808
      %v9849 = vsel %vm974, %v9845, %v9813
      %v9851 = vsel %vm974, %v9847, %v9815
      %v9853 = vsel %vm5831, %v9849, %v9824
      %v9856 = vsel %vm5831, %v9851, %v9826
      %v9859 = vsel %vm768, %v9824, %v9831
      %v9861 = vsel %vm768, %v9826, %v9833
      %v9904 = vunpack.c.l.b16 %v9642
      %v9905 = vunpack.c.l.b16 %v9643
      %v9906 = vunpack.c.l.b16 %v9644
      %v9907 = vunpack.c.l.b16 %v9645
      %v9908 = vunpack.c.l.b16 %v9646
      %v9909 = vunpack.c.l.b16 %v9647
      %v9910 = vunpack.c.l.b16 %v9648
      %v9911 = vunpack.c.l.b16 %v9649
      %v9912 = vunpack.c.l.b16 %v9650
      %v9913 = vunpack.c.l.b16 %v9651
      %v9914 = vunpack.c.l.b16 %v9652
      %v9915 = vunpack.c.l.b16 %v9653
      %v9916 = vunpack.c.l.b16 %v9654
      %v9917 = vunpack.c.l.b16 %v9655
      %v9918 = vunpack.c.l.b16 %v9656
      %v9919 = vunpack.c.l.b16 %v9657
      %v9920 = vunpack.c.l.b16 %v9658
      %v9921 = vunpack.c.l.b16 %v9659
      %v9922 = vunpack.c.l.b16 %v9660
      %v9923 = vunpack.c.l.b16 %v9661
      %v9924 = vunpack.c.l.b16 %v9662
      %v9925 = vunpack.c.l.b16 %v9663
      %v9926 = vunpack.c.l.b16 %v9664
      %v9927 = vunpack.c.l.b16 %v9665
      %v9928 = vunpack.c.l.b16 %v9666
      %v9929 = vunpack.c.l.b16 %v9667
      %v9930 = vunpack.c.l.b16 %v9668
      %v9931 = vunpack.c.l.b16 %v9669
      %v9932 = vunpack.c.l.b16 %v9670
      %v9933 = vunpack.c.l.b16 %v9671
      %v9934 = vunpack.c.l.b16 %v9672
      %v9935 = vunpack.c.l.b16 %v9673
      %v9936 = vunpack.c.l.b16 %v9674
      %v9937 = vunpack.c.l.b16 %v9675
      %v9938 = vunpack.c.l.b16 %v9676
      %v9939 = vunpack.c.l.b16 %v9677
      %v9940 = vunpack.c.l.b16 %v9678
      %v9941 = vunpack.c.l.b16 %v9679
      %v9942 = vunpack.c.l.b16 %v9680
      %v9943 = vunpack.c.l.b16 %v9681
      %v9944 = vunpack.c.l.b16 %v9682
      %v9945 = vunpack.c.l.b16 %v9683
      %v9946 = vpack.c.b16 %v9905, %v9904
      %v9947 = vpack.c.b16 %v9907, %v9906
      %v9948 = vpack.c.b16 %v9909, %v9908
      %v9949 = vpack.c.b16 %v9911, %v9910
      %v9950 = vpack.c.b16 %v9913, %v9912
      %v9951 = vpack.c.b16 %v9915, %v9914
      %v9952 = vpack.c.b16 %v9917, %v9916
      %v9953 = vpack.c.b16 %v9919, %v9918
      %v9954 = vpack.c.b16 %v9921, %v9920
      %v9955 = vpack.c.b16 %v9923, %v9922
      %v9956 = vpack.c.b16 %v9925, %v9924
      %v9957 = vpack.c.b16 %v9927, %v9926
      %v9958 = vpack.c.b16 %v9929, %v9928
      %v9959 = vpack.c.b16 %v9931, %v9930
      %v9960 = vpack.c.b16 %v9933, %v9932
      %v9961 = vpack.c.b16 %v9935, %v9934
      %v9962 = vpack.c.b16 %v9937, %v9936
      %v9963 = vpack.c.b16 %v9939, %v9938
      %v9964 = vpack.c.b16 %v9941, %v9940
      %v9965 = vpack.c.b16 %v9943, %v9942
      %v9966 = vpack.c.b16 %v9945, %v9944
      %v9988 = vsel %vm9406, %v9859, 0
      %v9990 = vsel %vm9406, %v9861, 0
      %9992 = vmatprep.subr.bf16.mxu0 0
      %9993 = vmatpush1.bf16.msra.mxu0 %v9946
      %9994 = vmatprep.subr.bf16.mxu0 0
      %9995 = vmatpush1.bf16.msra.mxu0 %v9947
      %9996 = vmatprep.subr.bf16.mxu0 0
      %9997 = vmatpush1.bf16.msra.mxu0 %v9948
      %9998 = vmatprep.subr.bf16.mxu0 0
      %9999 = vmatpush1.bf16.msra.mxu0 %v9949
      %10000 = vmatprep.subr.bf16.mxu0 0
      %10001 = vmatpush1.bf16.msra.mxu0 %v9950
      %10002 = vmatprep.subr.bf16.mxu0 0
      %10003 = vmatpush1.bf16.msra.mxu0 %v9951
      %10004 = vmatprep.subr.bf16.mxu0 0
      %10005 = vmatpush1.bf16.msra.mxu0 %v9952
      %10006 = vmatprep.subr.bf16.mxu0 0
      %10007 = vmatpush1.bf16.msra.mxu0 %v9953
      %10008 = vmatprep.subr.bf16.mxu0 0
      %10009 = vmatpush1.bf16.msra.mxu0 %v9954
      %10010 = vmatprep.subr.bf16.mxu0 0
      %10011 = vmatpush1.bf16.msra.mxu0 %v9955
      %10012 = vmatprep.subr.bf16.mxu0 0
      %10013 = vmatpush1.bf16.msra.mxu0 %v9956
      %10014 = vmatprep.subr.bf16.mxu0 0
      %10015 = vmatpush1.bf16.msra.mxu0 %v9957
      %10016 = vmatprep.subr.bf16.mxu0 0
      %10017 = vmatpush1.bf16.msra.mxu0 %v9958
      %10018 = vmatprep.subr.bf16.mxu0 0
      %10019 = vmatpush1.bf16.msra.mxu0 %v9959
      %10020 = vmatprep.subr.bf16.mxu0 0
      %10021 = vmatpush1.bf16.msra.mxu0 %v9960
      %10022 = vmatprep.subr.bf16.mxu0 0
      %10023 = vmatpush1.bf16.msra.mxu0 %v9961
      %10024 = vmatprep.mubr.bf16.mxu0 %v9853
      %10025 = vmatmul.mubr.bf16.gmra.mrb[0].mxu0 %v9839
      %v10026 = vpop.f32.mrb[0].mxu0
      %v10027 = vadd.f32 0.0, %v10026
      %v10028 = vpop.f32.mrb[0].mxu0
      %v10029 = vpop.f32.mrb[0].mxu0
      %v10030 = vadd.f32 0.0, %v10029
      %v10031 = vpop.f32.mrb[0].mxu0
      %10032 = vmatprep.mubr.bf16.mxu0 %v9856
      %10033 = vmatmul.mubr.bf16.gmra.mrb[0].mxu0 %v9842
      %v10034 = vpop.f32.mrb[0].mxu0
      %v10035 = vadd.f32 0.0, %v10034
      %v10036 = vpop.f32.mrb[0].mxu0
      %v10037 = vpop.f32.mrb[0].mxu0
      %v10038 = vpop.f32.mrb[0].mxu0
      %10039 = vdwg.mxu0
      %10040 = vmatprep.subr.bf16.mxu0 0
      %10041 = vmatpush1.bf16.msra.mxu0 %v9962
      %10042 = vmatprep.subr.bf16.mxu0 0
      %10043 = vmatpush1.bf16.msra.mxu0 %v9963
      %10044 = vmatprep.subr.bf16.mxu0 0
      %10045 = vmatpush1.bf16.msra.mxu0 %v9964
      %10046 = vmatprep.subr.bf16.mxu0 0
      %10047 = vmatpush1.bf16.msra.mxu0 %v9965
      %10048 = vmatprep.subr.bf16.mxu0 0
      %10049 = vmatpush1.bf16.msra.mxu0 %v9966
      %10050 = vmatprep.subr.bf16.mxu0 0
      %10051 = vmatpush1.bf16.msra.mxu0 0
      %10052 = vmatprep.subr.bf16.mxu0 0
      %10053 = vmatpush1.bf16.msra.mxu0 0
      %10054 = vmatprep.subr.bf16.mxu0 0
      %10055 = vmatpush1.bf16.msra.mxu0 0
      %10056 = vmatprep.subr.bf16.mxu0 0
      %10057 = vmatpush1.bf16.msra.mxu0 0
      %10058 = vmatprep.subr.bf16.mxu0 0
      %10059 = vmatpush1.bf16.msra.mxu0 0
      %10060 = vmatprep.subr.bf16.mxu0 0
      %10061 = vmatpush1.bf16.msra.mxu0 0
      %10062 = vmatprep.subr.bf16.mxu0 0
      %10063 = vmatpush1.bf16.msra.mxu0 0
      %10064 = vmatprep.subr.bf16.mxu0 0
      %10065 = vmatpush1.bf16.msra.mxu0 0
      %10066 = vmatprep.subr.bf16.mxu0 0
      %10067 = vmatpush1.bf16.msra.mxu0 0
      %10068 = vmatprep.subr.bf16.mxu0 0
      %10069 = vmatpush1.bf16.msra.mxu0 0
      %10070 = vmatprep.subr.bf16.mxu0 0
      %10071 = vmatpush1.bf16.msra.mxu0 0
      %10072 = vmatprep.mubr.bf16.mxu0 0
      %10073 = vmatmul.mubr.bf16.gmra.mrb[0].mxu0 %v9988
      %v10074 = vpop.f32.mrb[0].mxu0
      %v10075 = vadd.f32 %v10027, %v10074
      %v10076 = vpop.f32.mrb[0].mxu0
      %v10077 = vpop.f32.mrb[0].mxu0
      %v10078 = vadd.f32 %v10030, %v10077
      %v10079 = vpop.f32.mrb[0].mxu0
      %10080 = vmatprep.mubr.bf16.mxu0 0
      %10081 = vmatmul.mubr.bf16.gmra.mrb[0].mxu0 %v9990
      %v10082 = vpop.f32.mrb[0].mxu0
      %v10083 = vadd.f32 %v10035, %v10082
      %v10084 = vpop.f32.mrb[0].mxu0
      %v10085 = vpop.f32.mrb[0].mxu0
      %v10086 = vpop.f32.mrb[0].mxu0
      %10087 = vdwg.mxu0
      %10088 = vst.msk [vmem:[#allocation4] sm:$0xff] %vm974, %v10075
      %10089 = vst.msk [vmem:[#allocation4 + $0x8] sm:$0xff] %vm974, %v10078
      %vm10090 = vcmask 521216
      %10091 = vst.msk [vmem:[#allocation4 + $0x10] sm:$0x3f] %vm10090, %v10083
      %v10092 = vld [vmem:[#allocation4] ss:$2 sm:$0xff]
      %v10093 = vld [vmem:[%s9125] ss:$2 sm:$0x7]
      %v10094 = vlaneseq
      %v10095 = vshrl.u32 %v10094, 7
      %v10096 = vsub.s32 0, %v10095
      %v10097 = vrot.slane %v9684, %v10096
      %v10098 = vadd.f32 %v10092, %v10097
      %v10099 = vadd.f32 %v10093, %v10097
      %vm10100 = vcmp.gt.f32.partialorder %v10098, 0.0
      %vm10101 = vcmp.gt.f32.partialorder %v10099, 0.0
      %v10102 = vmin.f32 %v10098, 0.0
      %v10103 = vmin.f32 %v10099, 0.0
      %v10104 = vmul.f32 %v10102, 1.442695
      %v10105 = vpow.pop %v10104
      %v10106 = vmul.f32 %v10103, 1.442695
      %v10107 = vpow.pop %v10106
      %v10108 = vsub.f32 %v10105, 1.0
      %v10109 = vsub.f32 %v10107, 1.0
      %v10110 = vsel %vm10100, %v10098, %v10108
      %v10111 = vsel %vm10101, %v10099, %v10109
      %v10112 = vpack.c.bf16 %v10111, %v10110
      %v10114 = vshrl.u32 %v10112, 16
      %v10116 = vrot.slane %v10114, 7
      %v10117 = vshll.u32 %v10112, 16
      %v10119 = vor.u32 %v10116, %v10117
      %v10121 = vsel %vm882, 0, %v10119
      %v10123 = vsel %vm686, %v10121, 0
      %v10124 = vshrl.u32 %v10123, 16
      %v10126 = vshll.u32 %v10123, 16
      %v10128 = vrot.slane %v10126, 1
      %v10129 = vor.u32 %v10124, %v10128
      %10130 = vrot.lane.b32.xlu0 %v10129, 64
      %v10131 = vpop.permute.xlu0 %10130
      %v10133 = vrot.slane %v10123, 1
      %v10134 = vrot.slane %v10124, 1
      %v10135 = vrot.slane %v10126, 2
      %v10136 = vor.u32 %v10134, %v10135
      %10137 = vrot.lane.b32.xlu0 %v10136, 64
      %v10138 = vpop.permute.xlu0 %10137
      %v10139 = vrot.slane %v10123, 2
      %v10140 = vrot.slane %v10124, 2
      %v10141 = vrot.slane %v10126, 3
      %v10142 = vor.u32 %v10140, %v10141
      %10143 = vrot.lane.b32.xlu0 %v10142, 64
      %v10144 = vpop.permute.xlu0 %10143
      %v10145 = vrot.slane %v10123, 3
      %v10147 = vsel %vm974, %v10123, %v10131
      %v10151 = vsel %vm974, %v10133, %v10138
      %v10155 = vsel %vm974, %v10139, %v10144
      %v10157 = vlaneseq
      %v10158 = vshrl.u32 %v10157, 7
      %v10159 = vsub.s32 0, %v10158
      %v10160 = vrot.slane %v9741, %v10159
      %v10217 = vunpack.c.l.b16 %v9685
      %v10218 = vunpack.c.l.b16 %v9686
      %v10219 = vunpack.c.l.b16 %v9687
      %v10220 = vunpack.c.l.b16 %v9688
      %v10221 = vunpack.c.l.b16 %v9689
      %v10222 = vunpack.c.l.b16 %v9690
      %v10223 = vunpack.c.l.b16 %v9691
      %v10224 = vunpack.c.l.b16 %v9692
      %v10225 = vunpack.c.l.b16 %v9693
      %v10226 = vunpack.c.l.b16 %v9694
      %v10227 = vunpack.c.l.b16 %v9695
      %v10228 = vunpack.c.l.b16 %v9696
      %v10229 = vunpack.c.l.b16 %v9697
      %v10230 = vunpack.c.l.b16 %v9698
      %v10231 = vunpack.c.l.b16 %v9699
      %v10232 = vunpack.c.l.b16 %v9700
      %v10233 = vunpack.c.l.b16 %v9701
      %v10234 = vunpack.c.l.b16 %v9702
      %v10235 = vunpack.c.l.b16 %v9703
      %v10236 = vunpack.c.l.b16 %v9704
      %v10237 = vunpack.c.l.b16 %v9705
      %v10238 = vunpack.c.l.b16 %v9706
      %v10239 = vunpack.c.l.b16 %v9707
      %v10240 = vunpack.c.l.b16 %v9708
      %v10241 = vunpack.c.l.b16 %v9709
      %v10242 = vunpack.c.l.b16 %v9710
      %v10243 = vunpack.c.l.b16 %v9711
      %v10244 = vunpack.c.l.b16 %v9712
      %v10245 = vunpack.c.l.b16 %v9713
      %v10246 = vunpack.c.l.b16 %v9714
      %v10247 = vunpack.c.l.b16 %v9715
      %v10248 = vunpack.c.l.b16 %v9716
      %v10249 = vunpack.c.l.b16 %v9717
      %v10250 = vunpack.c.l.b16 %v9718
      %v10251 = vunpack.c.l.b16 %v9719
      %v10252 = vunpack.c.l.b16 %v9720
      %v10253 = vunpack.c.l.b16 %v9721
      %v10254 = vunpack.c.l.b16 %v9722
      %v10255 = vunpack.c.l.b16 %v9723
      %v10256 = vunpack.c.l.b16 %v9724
      %v10257 = vunpack.c.l.b16 %v9725
      %v10258 = vunpack.c.l.b16 %v9726
      %v10259 = vunpack.c.l.b16 %v9727
      %v10260 = vunpack.c.l.b16 %v9728
      %v10261 = vunpack.c.l.b16 %v9729
      %v10262 = vunpack.c.l.b16 %v9730
      %v10263 = vunpack.c.l.b16 %v9731
      %v10264 = vunpack.c.l.b16 %v9732
      %v10265 = vunpack.c.l.b16 %v9733
      %v10266 = vunpack.c.l.b16 %v9734
      %v10267 = vunpack.c.l.b16 %v9735
      %v10268 = vunpack.c.l.b16 %v9736
      %v10269 = vunpack.c.l.b16 %v9737
      %v10270 = vunpack.c.l.b16 %v9738
      %v10271 = vunpack.c.l.b16 %v9739
      %v10272 = vunpack.c.l.b16 %v9740
      %v10273 = vpack.c.b16 %v10218, %v10217
      %v10274 = vpack.c.b16 %v10220, %v10219
      %v10275 = vpack.c.b16 %v10222, %v10221
      %v10276 = vpack.c.b16 %v10224, %v10223
      %v10277 = vpack.c.b16 %v10226, %v10225
      %v10278 = vpack.c.b16 %v10228, %v10227
      %v10279 = vpack.c.b16 %v10230, %v10229
      %v10280 = vpack.c.b16 %v10232, %v10231
      %v10281 = vpack.c.b16 %v10234, %v10233
      %v10282 = vpack.c.b16 %v10236, %v10235
      %v10283 = vpack.c.b16 %v10238, %v10237
      %v10284 = vpack.c.b16 %v10240, %v10239
      %v10285 = vpack.c.b16 %v10242, %v10241
      %v10286 = vpack.c.b16 %v10244, %v10243
      %v10287 = vpack.c.b16 %v10246, %v10245
      %v10288 = vpack.c.b16 %v10248, %v10247
      %v10289 = vpack.c.b16 %v10250, %v10249
      %v10290 = vpack.c.b16 %v10252, %v10251
      %v10291 = vpack.c.b16 %v10254, %v10253
      %v10292 = vpack.c.b16 %v10256, %v10255
      %v10293 = vpack.c.b16 %v10258, %v10257
      %v10294 = vpack.c.b16 %v10260, %v10259
      %v10295 = vpack.c.b16 %v10262, %v10261
      %v10296 = vpack.c.b16 %v10264, %v10263
      %v10297 = vpack.c.b16 %v10266, %v10265
      %v10298 = vpack.c.b16 %v10268, %v10267
      %v10299 = vpack.c.b16 %v10270, %v10269
      %v10300 = vpack.c.b16 %v10272, %v10271
      %v10330 = vsel %vm974, %v10145, 0
      %10332 = vmatprep.subr.bf16.mxu0 0
      %10333 = vmatpush1.bf16.msra.mxu0 %v10273
      %10334 = vmatprep.subr.bf16.mxu0 0
      %10335 = vmatpush1.bf16.msra.mxu0 %v10274
      %10336 = vmatprep.subr.bf16.mxu0 0
      %10337 = vmatpush1.bf16.msra.mxu0 %v10275
      %10338 = vmatprep.subr.bf16.mxu0 0
      %10339 = vmatpush1.bf16.msra.mxu0 %v10276
      %10340 = vmatprep.subr.bf16.mxu0 0
      %10341 = vmatpush1.bf16.msra.mxu0 %v10277
      %10342 = vmatprep.subr.bf16.mxu0 0
      %10343 = vmatpush1.bf16.msra.mxu0 %v10278
      %10344 = vmatprep.subr.bf16.mxu0 0
      %10345 = vmatpush1.bf16.msra.mxu0 %v10279
      %10346 = vmatprep.subr.bf16.mxu0 0
      %10347 = vmatpush1.bf16.msra.mxu0 %v10280
      %10348 = vmatprep.subr.bf16.mxu0 0
      %10349 = vmatpush1.bf16.msra.mxu0 %v10281
      %10350 = vmatprep.subr.bf16.mxu0 0
      %10351 = vmatpush1.bf16.msra.mxu0 %v10282
      %10352 = vmatprep.subr.bf16.mxu0 0
      %10353 = vmatpush1.bf16.msra.mxu0 %v10283
      %10354 = vmatprep.subr.bf16.mxu0 0
      %10355 = vmatpush1.bf16.msra.mxu0 %v10284
      %10356 = vmatprep.subr.bf16.mxu0 0
      %10357 = vmatpush1.bf16.msra.mxu0 %v10285
      %10358 = vmatprep.subr.bf16.mxu0 0
      %10359 = vmatpush1.bf16.msra.mxu0 %v10286
      %10360 = vmatprep.subr.bf16.mxu0 0
      %10361 = vmatpush1.bf16.msra.mxu0 %v10287
      %10362 = vmatprep.subr.bf16.mxu0 0
      %10363 = vmatpush1.bf16.msra.mxu0 %v10288
      %10364 = vmatprep.mubr.bf16.mxu0 %v10151
      %10365 = vmatmul.mubr.bf16.gmra.mrb[0].mxu0 %v10147
      %v10366 = vpop.f32.mrb[0].mxu0
      %v10367 = vadd.f32 %v10160, %v10366
      %v10368 = vpop.f32.mrb[0].mxu0
      %v10369 = vpop.f32.mrb[0].mxu0
      %v10370 = vpop.f32.mrb[0].mxu0
      %10371 = vdwg.mxu0
      %10372 = vmatprep.subr.bf16.mxu0 0
      %10373 = vmatpush1.bf16.msra.mxu0 %v10289
      %10374 = vmatprep.subr.bf16.mxu0 0
      %10375 = vmatpush1.bf16.msra.mxu0 %v10290
      %10376 = vmatprep.subr.bf16.mxu0 0
      %10377 = vmatpush1.bf16.msra.mxu0 %v10291
      %10378 = vmatprep.subr.bf16.mxu0 0
      %10379 = vmatpush1.bf16.msra.mxu0 %v10292
      %10380 = vmatprep.subr.bf16.mxu0 0
      %10381 = vmatpush1.bf16.msra.mxu0 %v10293
      %10382 = vmatprep.subr.bf16.mxu0 0
      %10383 = vmatpush1.bf16.msra.mxu0 %v10294
      %10384 = vmatprep.subr.bf16.mxu0 0
      %10385 = vmatpush1.bf16.msra.mxu0 %v10295
      %10386 = vmatprep.subr.bf16.mxu0 0
      %10387 = vmatpush1.bf16.msra.mxu0 %v10296
      %10388 = vmatprep.subr.bf16.mxu0 0
      %10389 = vmatpush1.bf16.msra.mxu0 %v10297
      %10390 = vmatprep.subr.bf16.mxu0 0
      %10391 = vmatpush1.bf16.msra.mxu0 %v10298
      %10392 = vmatprep.subr.bf16.mxu0 0
      %10393 = vmatpush1.bf16.msra.mxu0 %v10299
      %10394 = vmatprep.subr.bf16.mxu0 0
      %10395 = vmatpush1.bf16.msra.mxu0 %v10300
      %10396 = vmatprep.subr.bf16.mxu0 0
      %10397 = vmatpush1.bf16.msra.mxu0 0
      %10398 = vmatprep.subr.bf16.mxu0 0
      %10399 = vmatpush1.bf16.msra.mxu0 0
      %10400 = vmatprep.subr.bf16.mxu0 0
      %10401 = vmatpush1.bf16.msra.mxu0 0
      %10402 = vmatprep.subr.bf16.mxu0 0
      %10403 = vmatpush1.bf16.msra.mxu0 0
      %10404 = vmatprep.mubr.bf16.mxu0 %v10330
      %10405 = vmatmul.mubr.bf16.gmra.mrb[0].mxu0 %v10155
      %v10406 = vpop.f32.mrb[0].mxu0
      %v10407 = vadd.f32 %v10367, %v10406
      %v10408 = vpop.f32.mrb[0].mxu0
      %v10409 = vpop.f32.mrb[0].mxu0
      %v10410 = vpop.f32.mrb[0].mxu0
      %10411 = vdwg.mxu0
      %v10418 = vunpack.c.l.b16 %v9742
      %v10419 = vunpack.c.l.b16 %v9743
      %v10420 = vunpack.c.l.b16 %v9744
      %v10421 = vunpack.c.l.b16 %v9745
      %v10422 = vunpack.c.l.b16 %v9746
      %v10423 = vunpack.c.l.b16 %v9747
      %v10424 = vpack.c.b16 %v10419, %v10418
      %v10425 = vpack.c.b16 %v10421, %v10420
      %v10426 = vpack.c.b16 %v10423, %v10422
      %v10430 = vsel %vm2500, %v9749, 0
      %v10432 = vsel %vm2500, %v9750, 0
      %10434 = vmatprep.subr.bf16.mxu0 0
      %10435 = vmatpush1.bf16.msra.mxu0 %v10424
      %10436 = vmatprep.subr.bf16.mxu0 0
      %10437 = vmatpush1.bf16.msra.mxu0 %v10425
      %10438 = vmatprep.subr.bf16.mxu0 0
      %10439 = vmatpush1.bf16.msra.mxu0 %v10426
      %10440 = vmatprep.subr.bf16.mxu0 0
      %10441 = vmatpush1.bf16.msra.mxu0 0
      %10442 = vmatprep.subr.bf16.mxu0 0
      %10443 = vmatpush1.bf16.msra.mxu0 0
      %10444 = vmatprep.subr.bf16.mxu0 0
      %10445 = vmatpush1.bf16.msra.mxu0 0
      %10446 = vmatprep.subr.bf16.mxu0 0
      %10447 = vmatpush1.bf16.msra.mxu0 0
      %10448 = vmatprep.subr.bf16.mxu0 0
      %10449 = vmatpush1.bf16.msra.mxu0 0
      %10450 = vmatprep.subr.bf16.mxu0 0
      %10451 = vmatpush1.bf16.msra.mxu0 0
      %10452 = vmatprep.subr.bf16.mxu0 0
      %10453 = vmatpush1.bf16.msra.mxu0 0
      %10454 = vmatprep.subr.bf16.mxu0 0
      %10455 = vmatpush1.bf16.msra.mxu0 0
      %10456 = vmatprep.subr.bf16.mxu0 0
      %10457 = vmatpush1.bf16.msra.mxu0 0
      %10458 = vmatprep.subr.bf16.mxu0 0
      %10459 = vmatpush1.bf16.msra.mxu0 0
      %10460 = vmatprep.subr.bf16.mxu0 0
      %10461 = vmatpush1.bf16.msra.mxu0 0
      %10462 = vmatprep.subr.bf16.mxu0 0
      %10463 = vmatpush1.bf16.msra.mxu0 0
      %10464 = vmatprep.subr.bf16.mxu0 0
      %10465 = vmatpush1.bf16.msra.mxu0 0
      %10466 = vmatprep.mubr.bf16.mxu0 0
      %10467 = vmatmul.mubr.bf16.gmra.mrb[0].mxu0 %v10430
      %v10468 = vpop.f32.mrb[0].mxu0
      %v10469 = vadd.f32 0.0, %v10468
      %v10470 = vpop.f32.mrb[0].mxu0
      %v10471 = vpop.f32.mrb[0].mxu0
      %v10472 = vadd.f32 0.0, %v10471
      %v10473 = vpop.f32.mrb[0].mxu0
      %10474 = vmatprep.mubr.bf16.mxu0 0
      %10475 = vmatmul.mubr.bf16.gmra.mrb[0].mxu0 %v10432
      %v10476 = vpop.f32.mrb[0].mxu0
      %v10477 = vadd.f32 0.0, %v10476
      %v10478 = vpop.f32.mrb[0].mxu0
      %v10479 = vpop.f32.mrb[0].mxu0
      %v10480 = vadd.f32 0.0, %v10479
      %v10481 = vpop.f32.mrb[0].mxu0
      %10482 = vdwg.mxu0
      %10483 = vst.msk [vmem:[#allocation4] sm:$0xff] %vm974, %v10469
      %10484 = vst.msk [vmem:[#allocation4 + $0x8] sm:$0xff] %vm974, %v10472
      %10485 = vst.msk [vmem:[#allocation4 + $0x10] sm:$0xff] %vm974, %v10477
      %vm10486 = vcmask 517120
      %10487 = vst.msk [vmem:[#allocation4 + $0x18] sm:$0x3] %vm10486, %v10480
      %v10488 = vld [vmem:[#allocation4] ss:$2 sm:$0xff]
      %v10489 = vlaneseq
      %v10490 = vshrl.u32 %v10489, 7
      %v10491 = vsub.s32 0, %v10490
      %v10492 = vrot.slane %v9748, %v10491
      %v10493 = vadd.f32 %v10488, %v10492
      %v10494 = vadd.f32 %v10407, %v10493
      %vm10495 = vcmp.gt.f32.partialorder %v10494, 0.0
      %v10496 = vmin.f32 %v10494, 0.0
      %v10497 = vmul.f32 %v10496, 1.442695
      %v10498 = vpow.pop %v10497
      %v10499 = vsub.f32 %v10498, 1.0
      %v10500 = vsel %vm10495, %v10494, %v10499
      %v10502 = vrot.slane %v10500, 1
      %v10504 = vadd.f32 %v10500, %v10502
      %v10505 = vrot.slane %v10500, 2
      %v10507 = vadd.f32 %v10504, %v10505
      %v10508 = vrot.slane %v10500, 3
      %v10510 = vadd.f32 %v10507, %v10508
      %v10511 = vrot.slane %v10500, 4
      %v10513 = vadd.f32 %v10510, %v10511
      %v10514 = vrot.slane %v10500, 5
      %v10516 = vadd.f32 %v10513, %v10514
      %v10517 = vmul.f32 %v10516, 0.16666667
      %10518 = vst.msk [vmem:[%s170 + $0x9] sm:$0x3] %vm10486, %v10517
      %p10519 = scmp.lt.s32.totalorder %s14, 1
      %s10520 = scalar_select %p10519, %s14, 1
      %s10521 = smul.addr %s10520, 2
      %s10522 = smul.addr %s10521, 8
      %s10523 = scalar_lea.vmem %s3, %s10522
      // Predicated region
      $region33: #{backbone_forward.1} parent=31 // pred_check
        %p10524 = pneg %p100
      $region34: #{backbone_forward.1} parent=31 // pred_check_branch
        %10526 = sbr.rel (%p10524) target = $region36
      $region35: #{backbone_forward.1} parent=31 // pred_region
        _
      $region36: #{backbone_forward.1} parent=31 // pred_fallthru
        _
    $region32: #{backbone_forward.1} parent=5 // pred_fallthru
      _
    %p10527 = scmp.le.s32.totalorder 2, %s9
    // Predicated region
    $region37: #{backbone_forward.1} parent=5 // pred_check
      %p10528 = pneg %p10527
    $region38: #{backbone_forward.1} parent=5 // pred_check_branch
      %10530 = sbr.rel (%p10528) target = $region40
    $region39: #{backbone_forward.1} parent=5 // pred_region
      %s10531 = ssub.s32 %s9, 2
      // Predicated region
      $region41: #{backbone_forward.1} parent=39 // pred_check
        %p10532 = pneg %p106
      $region42: #{backbone_forward.1} parent=39 // pred_check_branch
        %10534 = sbr.rel (%p10532) target = $region44
      $region43: #{backbone_forward.1} parent=39 // pred_region
        %p10535 = scmp.lt.s32.totalorder %s15, 1
        %s10536 = scalar_select %p10535, %s15, 1
        %s10537 = smul.addr %s10536, 2
        %s10538 = smul.addr %s10537, 8
        %s10539 = scalar_lea.vmem %s3, %s10538
      $region44: #{backbone_forward.1} parent=39 // pred_fallthru
        _
    $region40: #{backbone_forward.1} parent=5 // pred_fallthru
      _
  $region6: #{backbone_forward.1} parent=0 // loop_footer
    %s13 = sadd.s32 1, %s9
  $region7: #{backbone_forward.1} parent=0 // loop_footer_branch
    %8 = sbr.rel target = $region3
  $region8: #{backbone_forward.1} parent=0 // loop_exit
    _

</llo_original>
